<compile_context>
chip_gen: v7x
topology: tpu7x:2x2x1
jax: 0.10.0
libtpu: 0.0.40
codegen_flags: <defaults>
</compile_context>

<pallas_src>
import functools
import math

import jax
import jax.numpy as jnp
from jax import lax
from jax.experimental import pallas as pl
from jax.experimental.pallas import tpu as pltpu


def _bottle2neck_kernel(x_ref, w1_ref, s1_ref, b1_ref,
                        wcol_ref, sc_ref, bc_ref,
                        w3_ref, s3_ref, b3_ref,
                        o_ref, pad_ref,
                        *, widthP, scale):
    Nb, H, W, Cin = x_ref.shape
    nums = scale - 1
    Cout = w3_ref.shape[1]
    M = Nb * H * W

    x = x_ref[...]                                   # (Nb, H, W, Cin) f32
    xf = x.reshape(M, Cin)

    # conv1 (1x1, no bias) + bn1 + relu  -- bf16 MXU operands, f32 accumulate.
    h1 = jnp.dot(xf.astype(jnp.bfloat16), w1_ref[...],
                 preferred_element_type=jnp.float32)
    h1 = jnp.maximum(h1 * s1_ref[...] + b1_ref[...], 0.0)      # (M, widthP*scale) f32

    wcol = wcol_ref[...]        # (nums, 9*widthP, widthP) bf16, im2col weight layout
    sc = sc_ref[...]            # (nums, widthP) f32
    bc = bc_ref[...]            # (nums, widthP) f32

    # Zero the padded-image scratch once: border stays zero for all splits,
    # interior is fully overwritten every iteration.
    pad_ref[...] = jnp.zeros(pad_ref.shape, pad_ref.dtype)

    # Hierarchical 3x3 branch (Res2Net split / add / conv / bn / relu).
    outs = []
    sp = None
    for i in range(nums):
        spx_i = h1[:, i * widthP:(i + 1) * widthP]              # (M, widthP) f32
        sp = spx_i if i == 0 else sp + spx_i
        pad_ref[:, 1:H + 1, 1:W + 1, :] = (
            sp.astype(jnp.bfloat16).reshape(Nb, H, W, widthP))
        # im2col: gather the 9 shifted windows into one slab, single MXU matmul.
        cols = jnp.concatenate(
            [pad_ref[:, dh:dh + H, dw:dw + W, :].reshape(M, widthP)
             for dh in range(3) for dw in range(3)],
            axis=-1)                                            # (M, 9*widthP) bf16
        y = jnp.dot(cols, wcol[i], preferred_element_type=jnp.float32)
        sp = jnp.maximum(y * sc[i:i + 1, :] + bc[i:i + 1, :], 0.0)   # (M, widthP) f32
        outs.append(sp)
    # last split passes through untouched ('normal' stype, scale != 1)
    outs.append(h1[:, nums * widthP:scale * widthP])

    # conv3 (1x1): single K = widthP*scale matmul over the concatenated splits.
    cat = jnp.concatenate(outs, axis=-1).astype(jnp.bfloat16)   # (M, widthP*scale)
    h3 = jnp.dot(cat, w3_ref[...], preferred_element_type=jnp.float32)
    h3 = h3 * s3_ref[...] + b3_ref[...]

    # residual add (downsample is None so Cin == Cout) + final relu, all f32.
    out = jnp.maximum(h3 + xf, 0.0)
    o_ref[...] = out.reshape(Nb, H, W, Cout)


def bottle2neck_forward(x_nchw, kp):
    x = jnp.transpose(x_nchw, (0, 2, 3, 1)).astype(jnp.float32)   # NCHW -> NHWC
    N, H, W, Cin = x.shape
    widthP, scale = kp["widthP"], kp["scale"]
    Cout = kp["w3"].shape[1]

    # Block enough images per grid step that the matmul M-dim is >= 256.
    Nb = max(1, min(N, 256 // max(1, H * W)))
    while N % Nb:
        Nb -= 1
    grid = (N // Nb,)

    def full(a):
        return pl.BlockSpec(a.shape, lambda n, _nd=a.ndim: (0,) * _nd)

    kernel = functools.partial(_bottle2neck_kernel, widthP=widthP, scale=scale)
    out = pl.pallas_call(
        kernel,
        out_shape=jax.ShapeDtypeStruct((N, H, W, Cout), jnp.float32),
        grid_spec=pltpu.PrefetchScalarGridSpec(
            num_scalar_prefetch=0,
            grid=grid,
            in_specs=[
                pl.BlockSpec((Nb, H, W, Cin), lambda n: (n, 0, 0, 0)),
                full(kp["w1"]), full(kp["s1"]), full(kp["b1"]),
                full(kp["wcol"]), full(kp["sc"]), full(kp["bc"]),
                full(kp["w3"]), full(kp["s3"]), full(kp["b3"]),
            ],
            out_specs=pl.BlockSpec((Nb, H, W, Cout), lambda n: (n, 0, 0, 0)),
            scratch_shapes=[pltpu.VMEM((Nb, H + 2, W + 2, widthP), jnp.bfloat16)],
        ),
        compiler_params=pltpu.CompilerParams(dimension_semantics=("parallel",)),
    )(x, kp["w1"], kp["s1"], kp["b1"],
      kp["wcol"], kp["sc"], kp["bc"],
      kp["w3"], kp["s3"], kp["b3"])
    return jnp.transpose(out, (0, 3, 1, 2))                      # NHWC -> NCHW


def init_params(inplanes, planes, baseWidth=26, scale=4, key=jax.random.PRNGKey(42)):
    """Raw (unpadded, f32) parameters matching the PyTorch module in eval mode."""
    width = int(math.floor(planes * (baseWidth / 64.0)))
    nums = scale - 1
    WS = width * scale
    Cout = planes * 4
    assert inplanes == Cout, "downsample=None requires inplanes == planes * expansion"
    eps = 1e-5
    ks = jax.random.split(key, 20)

    def bn(kg, kb, km, kv, shape):
        gamma = jax.random.uniform(kg, shape, jnp.float32, 0.5, 1.5)
        beta = 0.1 * jax.random.normal(kb, shape, jnp.float32)
        mean = 0.1 * jax.random.normal(km, shape, jnp.float32)
        var = jax.random.uniform(kv, shape, jnp.float32, 0.5, 1.5)
        s = gamma / jnp.sqrt(var + eps)
        b = beta - mean * s
        return s, b

    w1 = 0.1 * jax.random.normal(ks[0], (inplanes, WS), jnp.float32)              # (Cin, WS)
    s1, b1 = bn(ks[1], ks[2], ks[3], ks[4], (WS,))
    wc = 0.1 * jax.random.normal(ks[5], (nums, 3, 3, width, width), jnp.float32)  # HWIO per split
    sc, bc = bn(ks[6], ks[7], ks[8], ks[9], (nums, width))
    w3 = 0.1 * jax.random.normal(ks[10], (WS, Cout), jnp.float32)                 # (WS, Cout)
    s3, b3 = bn(ks[11], ks[12], ks[13], ks[14], (Cout,))

    return dict(width=width, scale=scale,
                w1=w1, s1=s1, b1=b1, wc=wc, sc=sc, bc=bc, w3=w3, s3=s3, b3=b3)


def prepare_kernel_params(p):
    """Pad per-split channels to a multiple of 8 and pre-arrange weights for the kernel.

    Zero padding keeps the real channels bit-identical (zero conv weights, zero BN
    bias on padded channels). MXU operands are cast to bf16; BN scale/bias stay f32.
    """
    width, scale = p["width"], p["scale"]
    nums = scale - 1
    widthP = max(8, -(-width // 8) * 8)
    Cin = p["w1"].shape[0]
    Cout = p["w3"].shape[1]
    WSP = widthP * scale

    # conv1 weight + folded bn1, padded per split then flattened to (Cin, widthP*scale)
    w1p = jnp.zeros((Cin, scale, widthP), jnp.float32)
    w1p = w1p.at[:, :, :width].set(p["w1"].reshape(Cin, scale, width)).reshape(Cin, WSP)
    s1p = jnp.zeros((scale, widthP), jnp.float32)
    s1p = s1p.at[:, :width].set(p["s1"].reshape(scale, width)).reshape(1, WSP)
    b1p = jnp.zeros((scale, widthP), jnp.float32)
    b1p = b1p.at[:, :width].set(p["b1"].reshape(scale, width)).reshape(1, WSP)

    # 3x3 conv weights -> im2col layout (nums, 9*widthP, widthP), rows ordered (kh, kw, cin)
    wcp = jnp.zeros((nums, 3, 3, widthP, widthP), jnp.float32)
    wcp = wcp.at[:, :, :, :width, :width].set(p["wc"])
    wcol = wcp.reshape(nums, 9 * widthP, widthP)

    scp = jnp.zeros((nums, widthP), jnp.float32).at[:, :width].set(p["sc"])
    bcp = jnp.zeros((nums, widthP), jnp.float32).at[:, :width].set(p["bc"])

    # conv3 weight rows padded per split
    w3p = jnp.zeros((scale, widthP, Cout), jnp.float32)
    w3p = w3p.at[:, :width, :].set(p["w3"].reshape(scale, width, Cout)).reshape(WSP, Cout)

    return dict(widthP=widthP, scale=scale,
                w1=w1p.astype(jnp.bfloat16), s1=s1p, b1=b1p,
                wcol=wcol.astype(jnp.bfloat16), sc=scp, bc=bcp,
                w3=w3p.astype(jnp.bfloat16),
                s3=p["s3"].reshape(1, Cout), b3=p["b3"].reshape(1, Cout))


def ref_forward(x_nchw, p, *, bf16_matmul=True):
    """Pure-JAX reference matching the PyTorch forward.

    With bf16_matmul=True the matmul/conv operands are rounded to bf16 exactly as
    the kernel does (accumulation stays f32), so the comparison isolates kernel
    correctness from bf16 quantization noise.
    """
    cast = (lambda a: a.astype(jnp.bfloat16)) if bf16_matmul else (lambda a: a)
    x = jnp.transpose(x_nchw, (0, 2, 3, 1)).astype(jnp.float32)
    width, scale = p["width"], p["scale"]
    nums = scale - 1
    h1 = jnp.einsum('nhwc,cd->nhwd', cast(x), cast(p["w1"]),
                    preferred_element_type=jnp.float32)
    h1 = jnp.maximum(h1 * p["s1"] + p["b1"], 0.0)
    chunks = [h1[..., i * width:(i + 1) * width] for i in range(scale)]
    outs = []
    sp = None
    for i in range(nums):
        sp = chunks[i] if i == 0 else sp + chunks[i]
        y = lax.conv_general_dilated(cast(sp), cast(p["wc"][i]), (1, 1), 'SAME',
                                     dimension_numbers=('NHWC', 'HWIO', 'NHWC'),
                                     preferred_element_type=jnp.float32)
        sp = jnp.maximum(y * p["sc"][i] + p["bc"][i], 0.0)
        outs.append(sp)
    outs.append(chunks[-1])
    cat = jnp.concatenate(outs, axis=-1)
    h3 = jnp.einsum('nhwc,cd->nhwd', cast(cat), cast(p["w3"]),
                    preferred_element_type=jnp.float32)
    h3 = h3 * p["s3"] + p["b3"]
    out = jnp.maximum(h3 + x, 0.0)
    return jnp.transpose(out, (0, 3, 1, 2))


if __name__ == "__main__":
    N, H, W = 4, 16, 16
    planes = 32                     # width = floor(32*26/64) = 13 -> padded to 16
    inplanes = planes * 4           # = 128 so the identity residual is valid (no downsample)

    raw = init_params(inplanes, planes, key=jax.random.PRNGKey(42))
    kparams = prepare_kernel_params(raw)

    x = jax.random.normal(jax.random.PRNGKey(0), (N, inplanes, H, W), jnp.float32)

    out = bottle2neck_forward(x, kparams)
    out = jax.block_until_ready(out)
    assert out.shape == (N, planes * 4, H, W)

    # Reference with the same bf16 operand rounding (f32 accumulation) -> tight check.
    ref = ref_forward(x, raw, bf16_matmul=True)
    assert jnp.allclose(out, ref, rtol=2e-2, atol=2e-2), "mismatch vs reference"
    print("KERNEL_OK")
</pallas_src>

<mosaic_0001>
module attributes {stable_mosaic.version = 11 : i64} {
  func.func @_bottle2neck_kernel(%arg0: i32, %arg1: memref<1x16x16x128xf32, #tpu.memory_space<vmem>>, %arg2: memref<128x64xbf16, #tpu.memory_space<vmem>>, %arg3: memref<1x64xf32, #tpu.memory_space<vmem>>, %arg4: memref<1x64xf32, #tpu.memory_space<vmem>>, %arg5: memref<3x144x16xbf16, #tpu.memory_space<vmem>>, %arg6: memref<3x16xf32, #tpu.memory_space<vmem>>, %arg7: memref<3x16xf32, #tpu.memory_space<vmem>>, %arg8: memref<64x128xbf16, #tpu.memory_space<vmem>>, %arg9: memref<1x128xf32, #tpu.memory_space<vmem>>, %arg10: memref<1x128xf32, #tpu.memory_space<vmem>>, %arg11: memref<1x16x16x128xf32, #tpu.memory_space<vmem>>, %arg12: memref<1x18x18x16xbf16, #tpu.memory_space<vmem>>) attributes {dimension_semantics = [#tpu.dimension_semantics<parallel>], iteration_bounds = array<i64: 4>, scalar_prefetch = 0 : i64, scratch_operands = 1 : i64, tpu.core_type = #tpu.core_type<tc>, window_params = [{transform_indices = @transform_0, window_bounds = array<i64: 1, 16, 16, 128>}, {pipeline_mode = #tpu.pipeline_mode<synchronous>, transform_indices = @transform_1, window_bounds = array<i64: 128, 64>}, {pipeline_mode = #tpu.pipeline_mode<synchronous>, transform_indices = @transform_2, window_bounds = array<i64: 1, 64>}, {pipeline_mode = #tpu.pipeline_mode<synchronous>, transform_indices = @transform_3, window_bounds = array<i64: 1, 64>}, {pipeline_mode = #tpu.pipeline_mode<synchronous>, transform_indices = @transform_4, window_bounds = array<i64: 3, 144, 16>}, {pipeline_mode = #tpu.pipeline_mode<synchronous>, transform_indices = @transform_5, window_bounds = array<i64: 3, 16>}, {pipeline_mode = #tpu.pipeline_mode<synchronous>, transform_indices = @transform_6, window_bounds = array<i64: 3, 16>}, {pipeline_mode = #tpu.pipeline_mode<synchronous>, transform_indices = @transform_7, window_bounds = array<i64: 64, 128>}, {pipeline_mode = #tpu.pipeline_mode<synchronous>, transform_indices = @transform_8, window_bounds = array<i64: 1, 128>}, {pipeline_mode = #tpu.pipeline_mode<synchronous>, transform_indices = @transform_9, window_bounds = array<i64: 1, 128>}, {transform_indices = @transform_10, window_bounds = array<i64: 1, 16, 16, 128>}]} {
    %c0 = arith.constant 0 : index
    %c0_0 = arith.constant 0 : index
    %c0_1 = arith.constant 0 : index
    %c0_2 = arith.constant 0 : index
    %0 = vector.load %arg1[%c0, %c0_0, %c0_1, %c0_2] : memref<1x16x16x128xf32, #tpu.memory_space<vmem>>, vector<1x16x16x128xf32>
    %1 = vector.shape_cast %0 : vector<1x16x16x128xf32> to vector<256x128xf32>
    %2 = arith.truncf %1 : vector<256x128xf32> to vector<256x128xbf16>
    %c0_3 = arith.constant 0 : index
    %c0_4 = arith.constant 0 : index
    %3 = vector.load %arg2[%c0_3, %c0_4] : memref<128x64xbf16, #tpu.memory_space<vmem>>, vector<128x64xbf16>
    %cst = arith.constant dense<0.000000e+00> : vector<256x64xf32>
    %4 = tpu.matmul %2, %3, %cst {dimension_numbers = #tpu.dot_dimension_numbers<[1], [0], [0], [1], [0, 0, 1, 1], [], []>} : vector<256x128xbf16>, vector<128x64xbf16>, vector<256x64xf32> -> vector<256x64xf32>
    %c0_5 = arith.constant 0 : index
    %c0_6 = arith.constant 0 : index
    %5 = vector.load %arg3[%c0_5, %c0_6] : memref<1x64xf32, #tpu.memory_space<vmem>>, vector<1x64xf32>
    %6 = vector.broadcast %5 : vector<1x64xf32> to vector<256x64xf32>
    %7 = arith.mulf %4, %6 : vector<256x64xf32>
    %c0_7 = arith.constant 0 : index
    %c0_8 = arith.constant 0 : index
    %8 = vector.load %arg4[%c0_7, %c0_8] : memref<1x64xf32, #tpu.memory_space<vmem>>, vector<1x64xf32>
    %9 = vector.broadcast %8 : vector<1x64xf32> to vector<256x64xf32>
    %10 = arith.addf %7, %9 : vector<256x64xf32>
    %cst_9 = arith.constant 0.000000e+00 : f32
    %11 = vector.broadcast %cst_9 : f32 to vector<256x64xf32>
    %12 = arith.maximumf %10, %11 : vector<256x64xf32>
    %c0_10 = arith.constant 0 : index
    %c0_11 = arith.constant 0 : index
    %c0_12 = arith.constant 0 : index
    %13 = vector.load %arg5[%c0_10, %c0_11, %c0_12] : memref<3x144x16xbf16, #tpu.memory_space<vmem>>, vector<3x144x16xbf16>
    %c0_13 = arith.constant 0 : index
    %c0_14 = arith.constant 0 : index
    %14 = vector.load %arg6[%c0_13, %c0_14] : memref<3x16xf32, #tpu.memory_space<vmem>>, vector<3x16xf32>
    %c0_15 = arith.constant 0 : index
    %c0_16 = arith.constant 0 : index
    %15 = vector.load %arg7[%c0_15, %c0_16] : memref<3x16xf32, #tpu.memory_space<vmem>>, vector<3x16xf32>
    %cst_17 = arith.constant 0.000000e+00 : bf16
    %16 = vector.broadcast %cst_17 : bf16 to vector<1x18x18x16xbf16>
    %c0_18 = arith.constant 0 : index
    %c0_19 = arith.constant 0 : index
    %c0_20 = arith.constant 0 : index
    %c0_21 = arith.constant 0 : index
    %17 = vector.load %arg12[%c0_18, %c0_19, %c0_20, %c0_21] : memref<1x18x18x16xbf16, #tpu.memory_space<vmem>>, vector<1x18x18x16xbf16>
    tpu.vector_store %arg12[%c0_18, %c0_19, %c0_20, %c0_21], %16 {strides = array<i32>} : memref<1x18x18x16xbf16, #tpu.memory_space<vmem>>, vector<1x18x18x16xbf16>,
    %18 = vector.extract_strided_slice %12 {offsets = [0, 0], sizes = [256, 16], strides = [1, 1]} : vector<256x64xf32> to vector<256x16xf32>
    %19 = arith.truncf %18 : vector<256x16xf32> to vector<256x16xbf16>
    %20 = vector.shape_cast %19 : vector<256x16xbf16> to vector<1x16x16x16xbf16>
    %c0_22 = arith.constant 0 : index
    %c1 = arith.constant 1 : index
    %c1_23 = arith.constant 1 : index
    %c0_24 = arith.constant 0 : index
    %21 = vector.load %arg12[%c0_22, %c1, %c1_23, %c0_24] : memref<1x18x18x16xbf16, #tpu.memory_space<vmem>>, vector<1x16x16x16xbf16>
    tpu.vector_store %arg12[%c0_22, %c1, %c1_23, %c0_24], %20 {strides = array<i32>} : memref<1x18x18x16xbf16, #tpu.memory_space<vmem>>, vector<1x16x16x16xbf16>,
    %c0_25 = arith.constant 0 : index
    %c0_26 = arith.constant 0 : index
    %c0_27 = arith.constant 0 : index
    %c0_28 = arith.constant 0 : index
    %22 = vector.load %arg12[%c0_25, %c0_26, %c0_27, %c0_28] : memref<1x18x18x16xbf16, #tpu.memory_space<vmem>>, vector<1x16x16x16xbf16>
    %23 = vector.shape_cast %22 : vector<1x16x16x16xbf16> to vector<256x16xbf16>
    %c0_29 = arith.constant 0 : index
    %c0_30 = arith.constant 0 : index
    %c1_31 = arith.constant 1 : index
    %c0_32 = arith.constant 0 : index
    %24 = vector.load %arg12[%c0_29, %c0_30, %c1_31, %c0_32] : memref<1x18x18x16xbf16, #tpu.memory_space<vmem>>, vector<1x16x16x16xbf16>
    %25 = vector.shape_cast %24 : vector<1x16x16x16xbf16> to vector<256x16xbf16>
    %c0_33 = arith.constant 0 : index
    %c0_34 = arith.constant 0 : index
    %c2 = arith.constant 2 : index
    %c0_35 = arith.constant 0 : index
    %26 = vector.load %arg12[%c0_33, %c0_34, %c2, %c0_35] : memref<1x18x18x16xbf16, #tpu.memory_space<vmem>>, vector<1x16x16x16xbf16>
    %27 = vector.shape_cast %26 : vector<1x16x16x16xbf16> to vector<256x16xbf16>
    %c0_36 = arith.constant 0 : index
    %c1_37 = arith.constant 1 : index
    %c0_38 = arith.constant 0 : index
    %c0_39 = arith.constant 0 : index
    %28 = vector.load %arg12[%c0_36, %c1_37, %c0_38, %c0_39] : memref<1x18x18x16xbf16, #tpu.memory_space<vmem>>, vector<1x16x16x16xbf16>
    %29 = vector.shape_cast %28 : vector<1x16x16x16xbf16> to vector<256x16xbf16>
    %c0_40 = arith.constant 0 : index
    %c1_41 = arith.constant 1 : index
    %c1_42 = arith.constant 1 : index
    %c0_43 = arith.constant 0 : index
    %30 = vector.load %arg12[%c0_40, %c1_41, %c1_42, %c0_43] : memref<1x18x18x16xbf16, #tpu.memory_space<vmem>>, vector<1x16x16x16xbf16>
    %31 = vector.shape_cast %30 : vector<1x16x16x16xbf16> to vector<256x16xbf16>
    %c0_44 = arith.constant 0 : index
    %c1_45 = arith.constant 1 : index
    %c2_46 = arith.constant 2 : index
    %c0_47 = arith.constant 0 : index
    %32 = vector.load %arg12[%c0_44, %c1_45, %c2_46, %c0_47] : memref<1x18x18x16xbf16, #tpu.memory_space<vmem>>, vector<1x16x16x16xbf16>
    %33 = vector.shape_cast %32 : vector<1x16x16x16xbf16> to vector<256x16xbf16>
    %c0_48 = arith.constant 0 : index
    %c2_49 = arith.constant 2 : index
    %c0_50 = arith.constant 0 : index
    %c0_51 = arith.constant 0 : index
    %34 = vector.load %arg12[%c0_48, %c2_49, %c0_50, %c0_51] : memref<1x18x18x16xbf16, #tpu.memory_space<vmem>>, vector<1x16x16x16xbf16>
    %35 = vector.shape_cast %34 : vector<1x16x16x16xbf16> to vector<256x16xbf16>
    %c0_52 = arith.constant 0 : index
    %c2_53 = arith.constant 2 : index
    %c1_54 = arith.constant 1 : index
    %c0_55 = arith.constant 0 : index
    %36 = vector.load %arg12[%c0_52, %c2_53, %c1_54, %c0_55] : memref<1x18x18x16xbf16, #tpu.memory_space<vmem>>, vector<1x16x16x16xbf16>
    %37 = vector.shape_cast %36 : vector<1x16x16x16xbf16> to vector<256x16xbf16>
    %c0_56 = arith.constant 0 : index
    %c2_57 = arith.constant 2 : index
    %c2_58 = arith.constant 2 : index
    %c0_59 = arith.constant 0 : index
    %38 = vector.load %arg12[%c0_56, %c2_57, %c2_58, %c0_59] : memref<1x18x18x16xbf16, #tpu.memory_space<vmem>>, vector<1x16x16x16xbf16>
    %39 = vector.shape_cast %38 : vector<1x16x16x16xbf16> to vector<256x16xbf16>
    %40 = tpu.concatenate %23, %25, %27, %29, %31, %33, %35, %37, %39 in 1 : vector<256x16xbf16>, vector<256x16xbf16>, vector<256x16xbf16>, vector<256x16xbf16>, vector<256x16xbf16>, vector<256x16xbf16>, vector<256x16xbf16>, vector<256x16xbf16>, vector<256x16xbf16> -> vector<256x144xbf16>
    %41 = vector.extract_strided_slice %13 {offsets = [0, 0, 0], sizes = [1, 144, 16], strides = [1, 1, 1]} : vector<3x144x16xbf16> to vector<1x144x16xbf16>
    %42 = vector.shape_cast %41 : vector<1x144x16xbf16> to vector<144x16xbf16>
    %cst_60 = arith.constant dense<0.000000e+00> : vector<256x16xf32>
    %43 = tpu.matmul %40, %42, %cst_60 {dimension_numbers = #tpu.dot_dimension_numbers<[1], [0], [0], [1], [0, 0, 1, 1], [], []>} : vector<256x144xbf16>, vector<144x16xbf16>, vector<256x16xf32> -> vector<256x16xf32>
    %44 = vector.extract_strided_slice %14 {offsets = [0, 0], sizes = [1, 16], strides = [1, 1]} : vector<3x16xf32> to vector<1x16xf32>
    %45 = vector.broadcast %44 : vector<1x16xf32> to vector<256x16xf32>
    %46 = arith.mulf %43, %45 : vector<256x16xf32>
    %47 = vector.extract_strided_slice %15 {offsets = [0, 0], sizes = [1, 16], strides = [1, 1]} : vector<3x16xf32> to vector<1x16xf32>
    %48 = vector.broadcast %47 : vector<1x16xf32> to vector<256x16xf32>
    %49 = arith.addf %46, %48 : vector<256x16xf32>
    %cst_61 = arith.constant 0.000000e+00 : f32
    %50 = vector.broadcast %cst_61 : f32 to vector<256x16xf32>
    %51 = arith.maximumf %49, %50 : vector<256x16xf32>
    %52 = vector.extract_strided_slice %12 {offsets = [0, 16], sizes = [256, 16], strides = [1, 1]} : vector<256x64xf32> to vector<256x16xf32>
    %53 = arith.addf %51, %52 : vector<256x16xf32>
    %54 = arith.truncf %53 : vector<256x16xf32> to vector<256x16xbf16>
    %55 = vector.shape_cast %54 : vector<256x16xbf16> to vector<1x16x16x16xbf16>
    %c0_62 = arith.constant 0 : index
    %c1_63 = arith.constant 1 : index
    %c1_64 = arith.constant 1 : index
    %c0_65 = arith.constant 0 : index
    %56 = vector.load %arg12[%c0_62, %c1_63, %c1_64, %c0_65] : memref<1x18x18x16xbf16, #tpu.memory_space<vmem>>, vector<1x16x16x16xbf16>
    tpu.vector_store %arg12[%c0_62, %c1_63, %c1_64, %c0_65], %55 {strides = array<i32>} : memref<1x18x18x16xbf16, #tpu.memory_space<vmem>>, vector<1x16x16x16xbf16>,
    %c0_66 = arith.constant 0 : index
    %c0_67 = arith.constant 0 : index
    %c0_68 = arith.constant 0 : index
    %c0_69 = arith.constant 0 : index
    %57 = vector.load %arg12[%c0_66, %c0_67, %c0_68, %c0_69] : memref<1x18x18x16xbf16, #tpu.memory_space<vmem>>, vector<1x16x16x16xbf16>
    %58 = vector.shape_cast %57 : vector<1x16x16x16xbf16> to vector<256x16xbf16>
    %c0_70 = arith.constant 0 : index
    %c0_71 = arith.constant 0 : index
    %c1_72 = arith.constant 1 : index
    %c0_73 = arith.constant 0 : index
    %59 = vector.load %arg12[%c0_70, %c0_71, %c1_72, %c0_73] : memref<1x18x18x16xbf16, #tpu.memory_space<vmem>>, vector<1x16x16x16xbf16>
    %60 = vector.shape_cast %59 : vector<1x16x16x16xbf16> to vector<256x16xbf16>
    %c0_74 = arith.constant 0 : index
    %c0_75 = arith.constant 0 : index
    %c2_76 = arith.constant 2 : index
    %c0_77 = arith.constant 0 : index
    %61 = vector.load %arg12[%c0_74, %c0_75, %c2_76, %c0_77] : memref<1x18x18x16xbf16, #tpu.memory_space<vmem>>, vector<1x16x16x16xbf16>
    %62 = vector.shape_cast %61 : vector<1x16x16x16xbf16> to vector<256x16xbf16>
    %c0_78 = arith.constant 0 : index
    %c1_79 = arith.constant 1 : index
    %c0_80 = arith.constant 0 : index
    %c0_81 = arith.constant 0 : index
    %63 = vector.load %arg12[%c0_78, %c1_79, %c0_80, %c0_81] : memref<1x18x18x16xbf16, #tpu.memory_space<vmem>>, vector<1x16x16x16xbf16>
    %64 = vector.shape_cast %63 : vector<1x16x16x16xbf16> to vector<256x16xbf16>
    %c0_82 = arith.constant 0 : index
    %c1_83 = arith.constant 1 : index
    %c1_84 = arith.constant 1 : index
    %c0_85 = arith.constant 0 : index
    %65 = vector.load %arg12[%c0_82, %c1_83, %c1_84, %c0_85] : memref<1x18x18x16xbf16, #tpu.memory_space<vmem>>, vector<1x16x16x16xbf16>
    %66 = vector.shape_cast %65 : vector<1x16x16x16xbf16> to vector<256x16xbf16>
    %c0_86 = arith.constant 0 : index
    %c1_87 = arith.constant 1 : index
    %c2_88 = arith.constant 2 : index
    %c0_89 = arith.constant 0 : index
    %67 = vector.load %arg12[%c0_86, %c1_87, %c2_88, %c0_89] : memref<1x18x18x16xbf16, #tpu.memory_space<vmem>>, vector<1x16x16x16xbf16>
    %68 = vector.shape_cast %67 : vector<1x16x16x16xbf16> to vector<256x16xbf16>
    %c0_90 = arith.constant 0 : index
    %c2_91 = arith.constant 2 : index
    %c0_92 = arith.constant 0 : index
    %c0_93 = arith.constant 0 : index
    %69 = vector.load %arg12[%c0_90, %c2_91, %c0_92, %c0_93] : memref<1x18x18x16xbf16, #tpu.memory_space<vmem>>, vector<1x16x16x16xbf16>
    %70 = vector.shape_cast %69 : vector<1x16x16x16xbf16> to vector<256x16xbf16>
    %c0_94 = arith.constant 0 : index
    %c2_95 = arith.constant 2 : index
    %c1_96 = arith.constant 1 : index
    %c0_97 = arith.constant 0 : index
    %71 = vector.load %arg12[%c0_94, %c2_95, %c1_96, %c0_97] : memref<1x18x18x16xbf16, #tpu.memory_space<vmem>>, vector<1x16x16x16xbf16>
    %72 = vector.shape_cast %71 : vector<1x16x16x16xbf16> to vector<256x16xbf16>
    %c0_98 = arith.constant 0 : index
    %c2_99 = arith.constant 2 : index
    %c2_100 = arith.constant 2 : index
    %c0_101 = arith.constant 0 : index
    %73 = vector.load %arg12[%c0_98, %c2_99, %c2_100, %c0_101] : memref<1x18x18x16xbf16, #tpu.memory_space<vmem>>, vector<1x16x16x16xbf16>
    %74 = vector.shape_cast %73 : vector<1x16x16x16xbf16> to vector<256x16xbf16>
    %75 = tpu.concatenate %58, %60, %62, %64, %66, %68, %70, %72, %74 in 1 : vector<256x16xbf16>, vector<256x16xbf16>, vector<256x16xbf16>, vector<256x16xbf16>, vector<256x16xbf16>, vector<256x16xbf16>, vector<256x16xbf16>, vector<256x16xbf16>, vector<256x16xbf16> -> vector<256x144xbf16>
    %76 = vector.extract_strided_slice %13 {offsets = [1, 0, 0], sizes = [1, 144, 16], strides = [1, 1, 1]} : vector<3x144x16xbf16> to vector<1x144x16xbf16>
    %77 = vector.shape_cast %76 : vector<1x144x16xbf16> to vector<144x16xbf16>
    %cst_102 = arith.constant dense<0.000000e+00> : vector<256x16xf32>
    %78 = tpu.matmul %75, %77, %cst_102 {dimension_numbers = #tpu.dot_dimension_numbers<[1], [0], [0], [1], [0, 0, 1, 1], [], []>} : vector<256x144xbf16>, vector<144x16xbf16>, vector<256x16xf32> -> vector<256x16xf32>
    %79 = vector.extract_strided_slice %14 {offsets = [1, 0], sizes = [1, 16], strides = [1, 1]} : vector<3x16xf32> to vector<1x16xf32>
    %80 = vector.broadcast %79 : vector<1x16xf32> to vector<256x16xf32>
    %81 = arith.mulf %78, %80 : vector<256x16xf32>
    %82 = vector.extract_strided_slice %15 {offsets = [1, 0], sizes = [1, 16], strides = [1, 1]} : vector<3x16xf32> to vector<1x16xf32>
    %83 = vector.broadcast %82 : vector<1x16xf32> to vector<256x16xf32>
    %84 = arith.addf %81, %83 : vector<256x16xf32>
    %cst_103 = arith.constant 0.000000e+00 : f32
    %85 = vector.broadcast %cst_103 : f32 to vector<256x16xf32>
    %86 = arith.maximumf %84, %85 : vector<256x16xf32>
    %87 = vector.extract_strided_slice %12 {offsets = [0, 32], sizes = [256, 16], strides = [1, 1]} : vector<256x64xf32> to vector<256x16xf32>
    %88 = arith.addf %86, %87 : vector<256x16xf32>
    %89 = arith.truncf %88 : vector<256x16xf32> to vector<256x16xbf16>
    %90 = vector.shape_cast %89 : vector<256x16xbf16> to vector<1x16x16x16xbf16>
    %c0_104 = arith.constant 0 : index
    %c1_105 = arith.constant 1 : index
    %c1_106 = arith.constant 1 : index
    %c0_107 = arith.constant 0 : index
    %91 = vector.load %arg12[%c0_104, %c1_105, %c1_106, %c0_107] : memref<1x18x18x16xbf16, #tpu.memory_space<vmem>>, vector<1x16x16x16xbf16>
    tpu.vector_store %arg12[%c0_104, %c1_105, %c1_106, %c0_107], %90 {strides = array<i32>} : memref<1x18x18x16xbf16, #tpu.memory_space<vmem>>, vector<1x16x16x16xbf16>,
    %c0_108 = arith.constant 0 : index
    %c0_109 = arith.constant 0 : index
    %c0_110 = arith.constant 0 : index
    %c0_111 = arith.constant 0 : index
    %92 = vector.load %arg12[%c0_108, %c0_109, %c0_110, %c0_111] : memref<1x18x18x16xbf16, #tpu.memory_space<vmem>>, vector<1x16x16x16xbf16>
    %93 = vector.shape_cast %92 : vector<1x16x16x16xbf16> to vector<256x16xbf16>
    %c0_112 = arith.constant 0 : index
    %c0_113 = arith.constant 0 : index
    %c1_114 = arith.constant 1 : index
    %c0_115 = arith.constant 0 : index
    %94 = vector.load %arg12[%c0_112, %c0_113, %c1_114, %c0_115] : memref<1x18x18x16xbf16, #tpu.memory_space<vmem>>, vector<1x16x16x16xbf16>
    %95 = vector.shape_cast %94 : vector<1x16x16x16xbf16> to vector<256x16xbf16>
    %c0_116 = arith.constant 0 : index
    %c0_117 = arith.constant 0 : index
    %c2_118 = arith.constant 2 : index
    %c0_119 = arith.constant 0 : index
    %96 = vector.load %arg12[%c0_116, %c0_117, %c2_118, %c0_119] : memref<1x18x18x16xbf16, #tpu.memory_space<vmem>>, vector<1x16x16x16xbf16>
    %97 = vector.shape_cast %96 : vector<1x16x16x16xbf16> to vector<256x16xbf16>
    %c0_120 = arith.constant 0 : index
    %c1_121 = arith.constant 1 : index
    %c0_122 = arith.constant 0 : index
    %c0_123 = arith.constant 0 : index
    %98 = vector.load %arg12[%c0_120, %c1_121, %c0_122, %c0_123] : memref<1x18x18x16xbf16, #tpu.memory_space<vmem>>, vector<1x16x16x16xbf16>
    %99 = vector.shape_cast %98 : vector<1x16x16x16xbf16> to vector<256x16xbf16>
    %c0_124 = arith.constant 0 : index
    %c1_125 = arith.constant 1 : index
    %c1_126 = arith.constant 1 : index
    %c0_127 = arith.constant 0 : index
    %100 = vector.load %arg12[%c0_124, %c1_125, %c1_126, %c0_127] : memref<1x18x18x16xbf16, #tpu.memory_space<vmem>>, vector<1x16x16x16xbf16>
    %101 = vector.shape_cast %100 : vector<1x16x16x16xbf16> to vector<256x16xbf16>
    %c0_128 = arith.constant 0 : index
    %c1_129 = arith.constant 1 : index
    %c2_130 = arith.constant 2 : index
    %c0_131 = arith.constant 0 : index
    %102 = vector.load %arg12[%c0_128, %c1_129, %c2_130, %c0_131] : memref<1x18x18x16xbf16, #tpu.memory_space<vmem>>, vector<1x16x16x16xbf16>
    %103 = vector.shape_cast %102 : vector<1x16x16x16xbf16> to vector<256x16xbf16>
    %c0_132 = arith.constant 0 : index
    %c2_133 = arith.constant 2 : index
    %c0_134 = arith.constant 0 : index
    %c0_135 = arith.constant 0 : index
    %104 = vector.load %arg12[%c0_132, %c2_133, %c0_134, %c0_135] : memref<1x18x18x16xbf16, #tpu.memory_space<vmem>>, vector<1x16x16x16xbf16>
    %105 = vector.shape_cast %104 : vector<1x16x16x16xbf16> to vector<256x16xbf16>
    %c0_136 = arith.constant 0 : index
    %c2_137 = arith.constant 2 : index
    %c1_138 = arith.constant 1 : index
    %c0_139 = arith.constant 0 : index
    %106 = vector.load %arg12[%c0_136, %c2_137, %c1_138, %c0_139] : memref<1x18x18x16xbf16, #tpu.memory_space<vmem>>, vector<1x16x16x16xbf16>
    %107 = vector.shape_cast %106 : vector<1x16x16x16xbf16> to vector<256x16xbf16>
    %c0_140 = arith.constant 0 : index
    %c2_141 = arith.constant 2 : index
    %c2_142 = arith.constant 2 : index
    %c0_143 = arith.constant 0 : index
    %108 = vector.load %arg12[%c0_140, %c2_141, %c2_142, %c0_143] : memref<1x18x18x16xbf16, #tpu.memory_space<vmem>>, vector<1x16x16x16xbf16>
    %109 = vector.shape_cast %108 : vector<1x16x16x16xbf16> to vector<256x16xbf16>
    %110 = tpu.concatenate %93, %95, %97, %99, %101, %103, %105, %107, %109 in 1 : vector<256x16xbf16>, vector<256x16xbf16>, vector<256x16xbf16>, vector<256x16xbf16>, vector<256x16xbf16>, vector<256x16xbf16>, vector<256x16xbf16>, vector<256x16xbf16>, vector<256x16xbf16> -> vector<256x144xbf16>
    %111 = vector.extract_strided_slice %13 {offsets = [2, 0, 0], sizes = [1, 144, 16], strides = [1, 1, 1]} : vector<3x144x16xbf16> to vector<1x144x16xbf16>
    %112 = vector.shape_cast %111 : vector<1x144x16xbf16> to vector<144x16xbf16>
    %cst_144 = arith.constant dense<0.000000e+00> : vector<256x16xf32>
    %113 = tpu.matmul %110, %112, %cst_144 {dimension_numbers = #tpu.dot_dimension_numbers<[1], [0], [0], [1], [0, 0, 1, 1], [], []>} : vector<256x144xbf16>, vector<144x16xbf16>, vector<256x16xf32> -> vector<256x16xf32>
    %114 = vector.extract_strided_slice %14 {offsets = [2, 0], sizes = [1, 16], strides = [1, 1]} : vector<3x16xf32> to vector<1x16xf32>
    %115 = vector.broadcast %114 : vector<1x16xf32> to vector<256x16xf32>
    %116 = arith.mulf %113, %115 : vector<256x16xf32>
    %117 = vector.extract_strided_slice %15 {offsets = [2, 0], sizes = [1, 16], strides = [1, 1]} : vector<3x16xf32> to vector<1x16xf32>
    %118 = vector.broadcast %117 : vector<1x16xf32> to vector<256x16xf32>
    %119 = arith.addf %116, %118 : vector<256x16xf32>
    %cst_145 = arith.constant 0.000000e+00 : f32
    %120 = vector.broadcast %cst_145 : f32 to vector<256x16xf32>
    %121 = arith.maximumf %119, %120 : vector<256x16xf32>
    %122 = vector.extract_strided_slice %12 {offsets = [0, 48], sizes = [256, 16], strides = [1, 1]} : vector<256x64xf32> to vector<256x16xf32>
    %123 = tpu.concatenate %51, %86, %121, %122 in 1 : vector<256x16xf32>, vector<256x16xf32>, vector<256x16xf32>, vector<256x16xf32> -> vector<256x64xf32>
    %124 = arith.truncf %123 : vector<256x64xf32> to vector<256x64xbf16>
    %c0_146 = arith.constant 0 : index
    %c0_147 = arith.constant 0 : index
    %125 = vector.load %arg8[%c0_146, %c0_147] : memref<64x128xbf16, #tpu.memory_space<vmem>>, vector<64x128xbf16>
    %cst_148 = arith.constant dense<0.000000e+00> : vector<256x128xf32>
    %126 = tpu.matmul %124, %125, %cst_148 {dimension_numbers = #tpu.dot_dimension_numbers<[1], [0], [0], [1], [0, 0, 1, 1], [], []>} : vector<256x64xbf16>, vector<64x128xbf16>, vector<256x128xf32> -> vector<256x128xf32>
    %c0_149 = arith.constant 0 : index
    %c0_150 = arith.constant 0 : index
    %127 = vector.load %arg9[%c0_149, %c0_150] : memref<1x128xf32, #tpu.memory_space<vmem>>, vector<1x128xf32>
    %128 = vector.broadcast %127 : vector<1x128xf32> to vector<256x128xf32>
    %129 = arith.mulf %126, %128 : vector<256x128xf32>
    %c0_151 = arith.constant 0 : index
    %c0_152 = arith.constant 0 : index
    %130 = vector.load %arg10[%c0_151, %c0_152] : memref<1x128xf32, #tpu.memory_space<vmem>>, vector<1x128xf32>
    %131 = vector.broadcast %130 : vector<1x128xf32> to vector<256x128xf32>
    %132 = arith.addf %129, %131 : vector<256x128xf32>
    %133 = arith.addf %132, %1 : vector<256x128xf32>
    %cst_153 = arith.constant 0.000000e+00 : f32
    %134 = vector.broadcast %cst_153 : f32 to vector<256x128xf32>
    %135 = arith.maximumf %133, %134 : vector<256x128xf32>
    %136 = vector.shape_cast %135 : vector<256x128xf32> to vector<1x16x16x128xf32>
    %c0_154 = arith.constant 0 : index
    %c0_155 = arith.constant 0 : index
    %c0_156 = arith.constant 0 : index
    %c0_157 = arith.constant 0 : index
    %137 = vector.load %arg11[%c0_154, %c0_155, %c0_156, %c0_157] : memref<1x16x16x128xf32, #tpu.memory_space<vmem>>, vector<1x16x16x128xf32>
    tpu.vector_store %arg11[%c0_154, %c0_155, %c0_156, %c0_157], %136 {strides = array<i32>} : memref<1x16x16x128xf32, #tpu.memory_space<vmem>>, vector<1x16x16x128xf32>,
    return
  }
  func.func @transform_0(%arg0: i32) -> (i32, i32, i32, i32) {
    %c0_i32 = arith.constant 0 : i32
    %c0_i32_0 = arith.constant 0 : i32
    %c0_i32_1 = arith.constant 0 : i32
    %c0_i32_2 = arith.constant 0 : i32
    return %arg0, %c0_i32, %c0_i32_0, %c0_i32_1 : i32, i32, i32, i32
  }
  func.func @transform_1(%arg0: i32) -> (i32, i32) {
    %c0_i32 = arith.constant 0 : i32
    %c0_i32_0 = arith.constant 0 : i32
    %c0_i32_1 = arith.constant 0 : i32
    return %c0_i32, %c0_i32_0 : i32, i32
  }
  func.func @transform_2(%arg0: i32) -> (i32, i32) {
    %c0_i32 = arith.constant 0 : i32
    %c0_i32_0 = arith.constant 0 : i32
    %c0_i32_1 = arith.constant 0 : i32
    return %c0_i32, %c0_i32_0 : i32, i32
  }
  func.func @transform_3(%arg0: i32) -> (i32, i32) {
    %c0_i32 = arith.constant 0 : i32
    %c0_i32_0 = arith.constant 0 : i32
    %c0_i32_1 = arith.constant 0 : i32
    return %c0_i32, %c0_i32_0 : i32, i32
  }
  func.func @transform_4(%arg0: i32) -> (i32, i32, i32) {
    %c0_i32 = arith.constant 0 : i32
    %c0_i32_0 = arith.constant 0 : i32
    %c0_i32_1 = arith.constant 0 : i32
    %c0_i32_2 = arith.constant 0 : i32
    return %c0_i32, %c0_i32_0, %c0_i32_1 : i32, i32, i32
  }
  func.func @transform_5(%arg0: i32) -> (i32, i32) {
    %c0_i32 = arith.constant 0 : i32
    %c0_i32_0 = arith.constant 0 : i32
    %c0_i32_1 = arith.constant 0 : i32
    return %c0_i32, %c0_i32_0 : i32, i32
  }
  func.func @transform_6(%arg0: i32) -> (i32, i32) {
    %c0_i32 = arith.constant 0 : i32
    %c0_i32_0 = arith.constant 0 : i32
    %c0_i32_1 = arith.constant 0 : i32
    return %c0_i32, %c0_i32_0 : i32, i32
  }
  func.func @transform_7(%arg0: i32) -> (i32, i32) {
    %c0_i32 = arith.constant 0 : i32
    %c0_i32_0 = arith.constant 0 : i32
    %c0_i32_1 = arith.constant 0 : i32
    return %c0_i32, %c0_i32_0 : i32, i32
  }
  func.func @transform_8(%arg0: i32) -> (i32, i32) {
    %c0_i32 = arith.constant 0 : i32
    %c0_i32_0 = arith.constant 0 : i32
    %c0_i32_1 = arith.constant 0 : i32
    return %c0_i32, %c0_i32_0 : i32, i32
  }
  func.func @transform_9(%arg0: i32) -> (i32, i32) {
    %c0_i32 = arith.constant 0 : i32
    %c0_i32_0 = arith.constant 0 : i32
    %c0_i32_1 = arith.constant 0 : i32
    return %c0_i32, %c0_i32_0 : i32, i32
  }
  func.func @transform_10(%arg0: i32) -> (i32, i32, i32, i32) {
    %c0_i32 = arith.constant 0 : i32
    %c0_i32_0 = arith.constant 0 : i32
    %c0_i32_1 = arith.constant 0 : i32
    %c0_i32_2 = arith.constant 0 : i32
    return %arg0, %c0_i32, %c0_i32_0, %c0_i32_1 : i32, i32, i32, i32
  }
}

</mosaic_0001>

<llo_original>
// kernel: tpu_custom_call.1
$region0: #{tpu_custom_call.1}
  #allocation0 [shape = 'u32[]', space=smem, size = 0x4, offset = 0x4, fixed_abs, tag = 'smem constant byte address 0x4 - core index']
  #allocation1 [shape = 'u32[144,128]{1,0:T(1,128)}', space=vmem, size = 0x12000, scoped, tag = 'internal scratch']
  #allocation2 [shape = 'bf16[1,18,18,16]{3,2,1,0:T(8,128)(2,1)}', space=vmem, size = 0x1b000, scoped, tag = 'scratch operand']
  %s0 = inlined_call_operand.hbm [shape: f32[4,16,16,128], index: 0, kind: input, shape index: {}]
  %s1 = inlined_call_operand.vmem [shape: bf16[128,64], index: 1, kind: input, shape index: {}]
  %s2 = inlined_call_operand.vmem [shape: f32[1,64], index: 2, kind: input, shape index: {}]
  %s3 = inlined_call_operand.vmem [shape: f32[1,64], index: 3, kind: input, shape index: {}]
  %s4 = inlined_call_operand.vmem [shape: bf16[3,144,16], index: 4, kind: input, shape index: {}]
  %s5 = inlined_call_operand.vmem [shape: f32[3,16], index: 5, kind: input, shape index: {}]
  %s6 = inlined_call_operand.vmem [shape: f32[3,16], index: 6, kind: input, shape index: {}]
  %s7 = inlined_call_operand.vmem [shape: bf16[64,128], index: 7, kind: input, shape index: {}]
  %s8 = inlined_call_operand.vmem [shape: f32[1,128], index: 8, kind: input, shape index: {}]
  %s9 = inlined_call_operand.vmem [shape: f32[1,128], index: 9, kind: input, shape index: {}]
  %s10 = inlined_call_operand.hbm [shape: f32[4,16,16,128], index: 10, kind: output, shape index: {}]
  %s11 = sld [smem:[#allocation0]]
  $region77: #{tpu_custom_call.1} parent=0
    _
  %s13 = ssub.s32 1, %s11
  %s14 = scalar_select 0, %s13, %s11
  $region1: #{tpu_custom_call.1} parent=0
    #allocation3 [shape = 'u8[262144]{0}', space=vmem, size = 0x40000, scoped, tag = 'input window, operand 0']
    #allocation4 [shape = 's32[2]{0}', space=sflag, size = 0x8, scoped, tag = 'scoped memory for tpu_custom_call.1']
    #allocation5 [shape = 's32[2]{0}', space=sflag, size = 0x8, scoped, tag = 'scoped memory for tpu_custom_call.1']
    #allocation6 [shape = 'u8[262144]{0}', space=vmem, size = 0x40000, scoped, tag = 'output window, operand 0']
    %15 = vsyncpa [#allocation4], 0
    %s16 = scalar_lea.sflag [#allocation4], 1
    %17 = vsyncpa %s16, 0
    %18 = vsyncpa [#allocation5], 0
    %s19 = scalar_lea.sflag [#allocation5], 1
    %20 = vsyncpa %s19, 0
    loop: start=0, step=1, limit=6
    $region2: #{tpu_custom_call.1} parent=1 // loop_pre_header
      _
    $region3: #{tpu_custom_call.1} parent=1 // loop_header
      %s22 = sphi 0, %s26
      %p23 = scmp.ge.s32.totalorder %s22, 6
      %s32 = sphi 0, %s34
      %s35 = sphi 0, %s32
      %s36 = sphi 0, %s35
      %s52 = sphi 0, %s36
      %s56 = sphi 0, %s56
      %s58 = sphi 0, %s56
      %s59 = sphi 0, %s58
      %s73 = sphi 0, %s59
      %s77 = sphi 0, %s77
      %s79 = sphi 0, %s77
      %s80 = sphi 0, %s79
      %s94 = sphi 0, %s80
      %s98 = sphi 0, %s98
      %s100 = sphi 0, %s98
      %s101 = sphi 0, %s100
      %s115 = sphi 0, %s101
      %s119 = sphi 0, %s119
      %s121 = sphi 0, %s119
      %s122 = sphi 0, %s121
      %s136 = sphi 0, %s122
      %s140 = sphi 0, %s140
      %s142 = sphi 0, %s140
      %s143 = sphi 0, %s142
      %s157 = sphi 0, %s143
      %s161 = sphi 0, %s161
      %s163 = sphi 0, %s161
      %s164 = sphi 0, %s163
      %s178 = sphi 0, %s164
      %s182 = sphi 0, %s182
      %s184 = sphi 0, %s182
      %s185 = sphi 0, %s184
      %s199 = sphi 0, %s185
      %s203 = sphi 0, %s203
      %s205 = sphi 0, %s203
      %s206 = sphi 0, %s205
      %s220 = sphi 0, %s206
      %s224 = sphi 0, %s224
      %s226 = sphi 0, %s224
      %s227 = sphi 0, %s226
      %s241 = sphi 0, %s227
      %s247 = sphi 0, %s249
      %s250 = sphi 0, %s247
      %s251 = sphi 0, %s250
      %s267 = sphi 0, %s251
    $region4: #{tpu_custom_call.1} parent=1 // loop_header_branch
      %25 = sbr.rel (%p23) target = $region8
    $region5: #{tpu_custom_call.1} parent=1 // loop_body
      %s27 = ssub.s32 %s22, 1
      %s28 = ssub.s32 %s22, 2
      %s29 = sadd.s32 %s22, 1
      %s30 = ssub.s32 %s22, %s29
      %p31 = scmp.eq.s32.totalorder %s30, 0
      %s33 = sadd.s32 %s32, 1
      %s34 = scalar_select %p31, %s32, %s33
      %p37 = pneg %p31
      %p38 = scmp.eq.s32.totalorder %s22, 3
      %p39 = por %p37, %p38
      %p40 = scmp.ne.s32.totalorder %s32, %s35
      %p41 = scmp.eq.s32.totalorder %s22, 0
      %p42 = por %p40, %p41
      %p43 = scmp.ne.s32.totalorder %s32, %s35
      %p44 = scmp.eq.s32.totalorder %s27, 3
      %p45 = por %p43, %p44
      %p46 = scmp.ne.s32.totalorder %s35, %s36
      %p47 = scmp.eq.s32.totalorder %s27, 0
      %p48 = por %p46, %p47
      %p49 = scmp.ne.s32.totalorder %s35, %s36
      %p50 = scmp.eq.s32.totalorder %s28, 3
      %p51 = por %p49, %p50
      %p53 = scmp.ne.s32.totalorder %s36, %s52
      %p54 = scmp.eq.s32.totalorder %s28, 0
      %p55 = por %p53, %p54
      %s57 = sadd.s32 %s56, 1
      %p60 = scmp.eq.s32.totalorder %s22, 3
      %p61 = scmp.ne.s32.totalorder %s56, %s58
      %p62 = scmp.eq.s32.totalorder %s22, 0
      %p63 = por %p61, %p62
      %p64 = scmp.ne.s32.totalorder %s56, %s58
      %p65 = scmp.eq.s32.totalorder %s27, 3
      %p66 = por %p64, %p65
      %p67 = scmp.ne.s32.totalorder %s58, %s59
      %p68 = scmp.eq.s32.totalorder %s27, 0
      %p69 = por %p67, %p68
      %p70 = scmp.ne.s32.totalorder %s58, %s59
      %p71 = scmp.eq.s32.totalorder %s28, 3
      %p72 = por %p70, %p71
      %p74 = scmp.ne.s32.totalorder %s59, %s73
      %p75 = scmp.eq.s32.totalorder %s28, 0
      %p76 = por %p74, %p75
      %s78 = sadd.s32 %s77, 1
      %p81 = scmp.eq.s32.totalorder %s22, 3
      %p82 = scmp.ne.s32.totalorder %s77, %s79
      %p83 = scmp.eq.s32.totalorder %s22, 0
      %p84 = por %p82, %p83
      %p85 = scmp.ne.s32.totalorder %s77, %s79
      %p86 = scmp.eq.s32.totalorder %s27, 3
      %p87 = por %p85, %p86
      %p88 = scmp.ne.s32.totalorder %s79, %s80
      %p89 = scmp.eq.s32.totalorder %s27, 0
      %p90 = por %p88, %p89
      %p91 = scmp.ne.s32.totalorder %s79, %s80
      %p92 = scmp.eq.s32.totalorder %s28, 3
      %p93 = por %p91, %p92
      %p95 = scmp.ne.s32.totalorder %s80, %s94
      %p96 = scmp.eq.s32.totalorder %s28, 0
      %p97 = por %p95, %p96
      %s99 = sadd.s32 %s98, 1
      %p102 = scmp.eq.s32.totalorder %s22, 3
      %p103 = scmp.ne.s32.totalorder %s98, %s100
      %p104 = scmp.eq.s32.totalorder %s22, 0
      %p105 = por %p103, %p104
      %p106 = scmp.ne.s32.totalorder %s98, %s100
      %p107 = scmp.eq.s32.totalorder %s27, 3
      %p108 = por %p106, %p107
      %p109 = scmp.ne.s32.totalorder %s100, %s101
      %p110 = scmp.eq.s32.totalorder %s27, 0
      %p111 = por %p109, %p110
      %p112 = scmp.ne.s32.totalorder %s100, %s101
      %p113 = scmp.eq.s32.totalorder %s28, 3
      %p114 = por %p112, %p113
      %p116 = scmp.ne.s32.totalorder %s101, %s115
      %p117 = scmp.eq.s32.totalorder %s28, 0
      %p118 = por %p116, %p117
      %s120 = sadd.s32 %s119, 1
      %p123 = scmp.eq.s32.totalorder %s22, 3
      %p124 = scmp.ne.s32.totalorder %s119, %s121
      %p125 = scmp.eq.s32.totalorder %s22, 0
      %p126 = por %p124, %p125
      %p127 = scmp.ne.s32.totalorder %s119, %s121
      %p128 = scmp.eq.s32.totalorder %s27, 3
      %p129 = por %p127, %p128
      %p130 = scmp.ne.s32.totalorder %s121, %s122
      %p131 = scmp.eq.s32.totalorder %s27, 0
      %p132 = por %p130, %p131
      %p133 = scmp.ne.s32.totalorder %s121, %s122
      %p134 = scmp.eq.s32.totalorder %s28, 3
      %p135 = por %p133, %p134
      %p137 = scmp.ne.s32.totalorder %s122, %s136
      %p138 = scmp.eq.s32.totalorder %s28, 0
      %p139 = por %p137, %p138
      %s141 = sadd.s32 %s140, 1
      %p144 = scmp.eq.s32.totalorder %s22, 3
      %p145 = scmp.ne.s32.totalorder %s140, %s142
      %p146 = scmp.eq.s32.totalorder %s22, 0
      %p147 = por %p145, %p146
      %p148 = scmp.ne.s32.totalorder %s140, %s142
      %p149 = scmp.eq.s32.totalorder %s27, 3
      %p150 = por %p148, %p149
      %p151 = scmp.ne.s32.totalorder %s142, %s143
      %p152 = scmp.eq.s32.totalorder %s27, 0
      %p153 = por %p151, %p152
      %p154 = scmp.ne.s32.totalorder %s142, %s143
      %p155 = scmp.eq.s32.totalorder %s28, 3
      %p156 = por %p154, %p155
      %p158 = scmp.ne.s32.totalorder %s143, %s157
      %p159 = scmp.eq.s32.totalorder %s28, 0
      %p160 = por %p158, %p159
      %s162 = sadd.s32 %s161, 1
      %p165 = scmp.eq.s32.totalorder %s22, 3
      %p166 = scmp.ne.s32.totalorder %s161, %s163
      %p167 = scmp.eq.s32.totalorder %s22, 0
      %p168 = por %p166, %p167
      %p169 = scmp.ne.s32.totalorder %s161, %s163
      %p170 = scmp.eq.s32.totalorder %s27, 3
      %p171 = por %p169, %p170
      %p172 = scmp.ne.s32.totalorder %s163, %s164
      %p173 = scmp.eq.s32.totalorder %s27, 0
      %p174 = por %p172, %p173
      %p175 = scmp.ne.s32.totalorder %s163, %s164
      %p176 = scmp.eq.s32.totalorder %s28, 3
      %p177 = por %p175, %p176
      %p179 = scmp.ne.s32.totalorder %s164, %s178
      %p180 = scmp.eq.s32.totalorder %s28, 0
      %p181 = por %p179, %p180
      %s183 = sadd.s32 %s182, 1
      %p186 = scmp.eq.s32.totalorder %s22, 3
      %p187 = scmp.ne.s32.totalorder %s182, %s184
      %p188 = scmp.eq.s32.totalorder %s22, 0
      %p189 = por %p187, %p188
      %p190 = scmp.ne.s32.totalorder %s182, %s184
      %p191 = scmp.eq.s32.totalorder %s27, 3
      %p192 = por %p190, %p191
      %p193 = scmp.ne.s32.totalorder %s184, %s185
      %p194 = scmp.eq.s32.totalorder %s27, 0
      %p195 = por %p193, %p194
      %p196 = scmp.ne.s32.totalorder %s184, %s185
      %p197 = scmp.eq.s32.totalorder %s28, 3
      %p198 = por %p196, %p197
      %p200 = scmp.ne.s32.totalorder %s185, %s199
      %p201 = scmp.eq.s32.totalorder %s28, 0
      %p202 = por %p200, %p201
      %s204 = sadd.s32 %s203, 1
      %p207 = scmp.eq.s32.totalorder %s22, 3
      %p208 = scmp.ne.s32.totalorder %s203, %s205
      %p209 = scmp.eq.s32.totalorder %s22, 0
      %p210 = por %p208, %p209
      %p211 = scmp.ne.s32.totalorder %s203, %s205
      %p212 = scmp.eq.s32.totalorder %s27, 3
      %p213 = por %p211, %p212
      %p214 = scmp.ne.s32.totalorder %s205, %s206
      %p215 = scmp.eq.s32.totalorder %s27, 0
      %p216 = por %p214, %p215
      %p217 = scmp.ne.s32.totalorder %s205, %s206
      %p218 = scmp.eq.s32.totalorder %s28, 3
      %p219 = por %p217, %p218
      %p221 = scmp.ne.s32.totalorder %s206, %s220
      %p222 = scmp.eq.s32.totalorder %s28, 0
      %p223 = por %p221, %p222
      %s225 = sadd.s32 %s224, 1
      %p228 = scmp.eq.s32.totalorder %s22, 3
      %p229 = scmp.ne.s32.totalorder %s224, %s226
      %p230 = scmp.eq.s32.totalorder %s22, 0
      %p231 = por %p229, %p230
      %p232 = scmp.ne.s32.totalorder %s224, %s226
      %p233 = scmp.eq.s32.totalorder %s27, 3
      %p234 = por %p232, %p233
      %p235 = scmp.ne.s32.totalorder %s226, %s227
      %p236 = scmp.eq.s32.totalorder %s27, 0
      %p237 = por %p235, %p236
      %p238 = scmp.ne.s32.totalorder %s226, %s227
      %p239 = scmp.eq.s32.totalorder %s28, 3
      %p240 = por %p238, %p239
      %p242 = scmp.ne.s32.totalorder %s227, %s241
      %p243 = scmp.eq.s32.totalorder %s28, 0
      %p244 = por %p242, %p243
      %s245 = ssub.s32 %s22, %s29
      %p246 = scmp.eq.s32.totalorder %s245, 0
      %s248 = sadd.s32 %s247, 1
      %s249 = scalar_select %p246, %s247, %s248
      %p252 = pneg %p246
      %p253 = scmp.eq.s32.totalorder %s22, 3
      %p254 = por %p252, %p253
      %p255 = scmp.ne.s32.totalorder %s247, %s250
      %p256 = scmp.eq.s32.totalorder %s22, 0
      %p257 = por %p255, %p256
      %p258 = scmp.ne.s32.totalorder %s247, %s250
      %p259 = scmp.eq.s32.totalorder %s27, 3
      %p260 = por %p258, %p259
      %p261 = scmp.ne.s32.totalorder %s250, %s251
      %p262 = scmp.eq.s32.totalorder %s27, 0
      %p263 = por %p261, %p262
      %p264 = scmp.ne.s32.totalorder %s250, %s251
      %p265 = scmp.eq.s32.totalorder %s28, 3
      %p266 = por %p264, %p265
      %p268 = scmp.ne.s32.totalorder %s251, %s267
      %p269 = scmp.eq.s32.totalorder %s28, 0
      %p270 = por %p268, %p269
      %p271 = scmp.le.s32.totalorder 1, %s22
      %p272 = scmp.lt.s32.totalorder %s22, 5
      %p273 = pnand %p271, %p272
      %p274 = pneg %p273
      // Predicated region
      $region9: #{tpu_custom_call.1} parent=5 // pred_check
        _
      $region10: #{tpu_custom_call.1} parent=5 // pred_check_branch
        %276 = sbr.rel (%p273) target = $region12
      $region11: #{tpu_custom_call.1} parent=5 // pred_region
        %s277 = ssub.s32 %s22, 1
        // Predicated region
        $region13: #{tpu_custom_call.1} parent=11 // pred_check
          %p278 = pneg %p69
        $region14: #{tpu_custom_call.1} parent=11 // pred_check_branch
          %280 = sbr.rel (%p278) target = $region16
        $region15: #{tpu_custom_call.1} parent=11 // pred_region
          _
        $region16: #{tpu_custom_call.1} parent=11 // pred_fallthru
          _
        // Predicated region
        $region17: #{tpu_custom_call.1} parent=11 // pred_check
          %p281 = pneg %p90
        $region18: #{tpu_custom_call.1} parent=11 // pred_check_branch
          %283 = sbr.rel (%p281) target = $region20
        $region19: #{tpu_custom_call.1} parent=11 // pred_region
          _
        $region20: #{tpu_custom_call.1} parent=11 // pred_fallthru
          _
        // Predicated region
        $region21: #{tpu_custom_call.1} parent=11 // pred_check
          %p284 = pneg %p111
        $region22: #{tpu_custom_call.1} parent=11 // pred_check_branch
          %286 = sbr.rel (%p284) target = $region24
        $region23: #{tpu_custom_call.1} parent=11 // pred_region
          _
        $region24: #{tpu_custom_call.1} parent=11 // pred_fallthru
          _
        // Predicated region
        $region25: #{tpu_custom_call.1} parent=11 // pred_check
          %p287 = pneg %p132
        $region26: #{tpu_custom_call.1} parent=11 // pred_check_branch
          %289 = sbr.rel (%p287) target = $region28
        $region27: #{tpu_custom_call.1} parent=11 // pred_region
          _
        $region28: #{tpu_custom_call.1} parent=11 // pred_fallthru
          _
        // Predicated region
        $region29: #{tpu_custom_call.1} parent=11 // pred_check
          %p290 = pneg %p153
        $region30: #{tpu_custom_call.1} parent=11 // pred_check_branch
          %292 = sbr.rel (%p290) target = $region32
        $region31: #{tpu_custom_call.1} parent=11 // pred_region
          _
        $region32: #{tpu_custom_call.1} parent=11 // pred_fallthru
          _
        // Predicated region
        $region33: #{tpu_custom_call.1} parent=11 // pred_check
          %p293 = pneg %p174
        $region34: #{tpu_custom_call.1} parent=11 // pred_check_branch
          %295 = sbr.rel (%p293) target = $region36
        $region35: #{tpu_custom_call.1} parent=11 // pred_region
          _
        $region36: #{tpu_custom_call.1} parent=11 // pred_fallthru
          _
        // Predicated region
        $region37: #{tpu_custom_call.1} parent=11 // pred_check
          %p296 = pneg %p195
        $region38: #{tpu_custom_call.1} parent=11 // pred_check_branch
          %298 = sbr.rel (%p296) target = $region40
        $region39: #{tpu_custom_call.1} parent=11 // pred_region
          _
        $region40: #{tpu_custom_call.1} parent=11 // pred_fallthru
          _
        // Predicated region
        $region41: #{tpu_custom_call.1} parent=11 // pred_check
          %p299 = pneg %p216
        $region42: #{tpu_custom_call.1} parent=11 // pred_check_branch
          %301 = sbr.rel (%p299) target = $region44
        $region43: #{tpu_custom_call.1} parent=11 // pred_region
          _
        $region44: #{tpu_custom_call.1} parent=11 // pred_fallthru
          _
        // Predicated region
        $region45: #{tpu_custom_call.1} parent=11 // pred_check
          %p302 = pneg %p237
        $region46: #{tpu_custom_call.1} parent=11 // pred_check_branch
          %304 = sbr.rel (%p302) target = $region48
        $region47: #{tpu_custom_call.1} parent=11 // pred_region
          _
        $region48: #{tpu_custom_call.1} parent=11 // pred_fallthru
          _
      $region12: #{tpu_custom_call.1} parent=5 // pred_fallthru
        _
      %p305 = scmp.lt.s32.totalorder %s22, 4
      // Predicated region
      $region49: #{tpu_custom_call.1} parent=5 // pred_check
        %p306 = pneg %p305
      $region50: #{tpu_custom_call.1} parent=5 // pred_check_branch
        %308 = sbr.rel (%p306) target = $region52
      $region51: #{tpu_custom_call.1} parent=5 // pred_region
        // Predicated region
        $region53: #{tpu_custom_call.1} parent=51 // pred_check
          %p309 = pneg %p42
        $region54: #{tpu_custom_call.1} parent=51 // pred_check_branch
          %311 = sbr.rel (%p309) target = $region56
        $region55: #{tpu_custom_call.1} parent=51 // pred_region
          %s312 = sand.u32 %s32, 1
          %s313 = scalar_lea.sflag [#allocation4], %s312
          %s314 = sand.u32 %s32, 1
          %s315 = smul.addr %s314, 256
          %s316 = scalar_lea.vmem [#allocation3], %s315
          %s318 = ssub.s32 4096, 4096
          %319 = vsyncadd %s313, %s318
          %s320 = smul.addr %s22, 32
          %s321 = smul.addr %s320, 128
          %s322 = scalar_lea.hbm %s0, %s321
          %s323 = sshll.u32 %s316, 4
          %s324 = int_to_ptr.vmem [resolvable:$true] %s323
          %329 = dma.hbm_to_vmem [thread:$0]  %s322, 4096, %s324, %s313, 128, 128, 8
        $region56: #{tpu_custom_call.1} parent=51 // pred_fallthru
          _
      $region52: #{tpu_custom_call.1} parent=5 // pred_fallthru
        _
      %p330 = scmp.le.s32.totalorder 1, %s22
      %p331 = scmp.lt.s32.totalorder %s22, 5
      %p332 = pnand %p330, %p331
      %p333 = pneg %p332
      // Predicated region
      $region57: #{tpu_custom_call.1} parent=5 // pred_check
        _
      $region58: #{tpu_custom_call.1} parent=5 // pred_check_branch
        %335 = sbr.rel (%p332) target = $region60
      $region59: #{tpu_custom_call.1} parent=5 // pred_region
        %s336 = ssub.s32 %s22, 1
        %s337 = sand.u32 %s35, 1
        %s338 = scalar_lea.sflag [#allocation4], %s337
        %s339 = sand.u32 %s35, 1
        %s340 = smul.addr %s339, 256
        %s341 = scalar_lea.vmem [#allocation3], %s340
        // Predicated region
        $region61: #{tpu_custom_call.1} parent=59 // pred_check
          %p342 = pneg %p48
        $region62: #{tpu_custom_call.1} parent=59 // pred_check_branch
          %344 = sbr.rel (%p342) target = $region64
        $region63: #{tpu_custom_call.1} parent=59 // pred_region
          %345 = dma.done %s338, 4096
        $region64: #{tpu_custom_call.1} parent=59 // pred_fallthru
          _
        %s346 = sand.u32 %s35, 1
        %s347 = scalar_lea.sflag [#allocation4], %s346
        %s348 = sand.u32 %s35, 1
        %s349 = smul.addr %s348, 256
        %s350 = scalar_lea.vmem [#allocation3], %s349
        %p351 = pneg %p48
        %p352 = pneg %p45
        %p353 = pneg %p69
        %p354 = pneg %p66
        %p355 = pneg %p90
        %p356 = pneg %p87
        %p357 = pneg %p111
        %p358 = pneg %p108
        %p359 = pneg %p132
        %p360 = pneg %p129
        %p361 = pneg %p153
        %p362 = pneg %p150
        %p363 = pneg %p174
        %p364 = pneg %p171
        %p365 = pneg %p195
        %p366 = pneg %p192
        %p367 = pneg %p216
        %p368 = pneg %p213
        %p369 = pneg %p237
        %p370 = pneg %p234
        %p371 = pneg %p263
        %p372 = pneg %p260
        %s373 = sand.u32 %s250, 1
        %s374 = scalar_lea.sflag [#allocation5], %s373
        %s375 = sand.u32 %s250, 1
        %s376 = smul.addr %s375, 256
        %s377 = scalar_lea.vmem [#allocation6], %s376
        %v379 = vld [vmem:[%s341] sm:$0xff]
        %v380 = vld [vmem:[%s341 + $0x8] sm:$0xff]
        %v381 = vld [vmem:[%s341 + $0x10] sm:$0xff]
        %v382 = vld [vmem:[%s341 + $0x18] sm:$0xff]
        %v383 = vld [vmem:[%s341 + $0x20] sm:$0xff]
        %v384 = vld [vmem:[%s341 + $0x28] sm:$0xff]
        %v385 = vld [vmem:[%s341 + $0x30] sm:$0xff]
        %v386 = vld [vmem:[%s341 + $0x38] sm:$0xff]
        %v387 = vld [vmem:[%s341 + $0x40] sm:$0xff]
        %v388 = vld [vmem:[%s341 + $0x48] sm:$0xff]
        %v389 = vld [vmem:[%s341 + $0x50] sm:$0xff]
        %v390 = vld [vmem:[%s341 + $0x58] sm:$0xff]
        %v391 = vld [vmem:[%s341 + $0x60] sm:$0xff]
        %v392 = vld [vmem:[%s341 + $0x68] sm:$0xff]
        %v393 = vld [vmem:[%s341 + $0x70] sm:$0xff]
        %v394 = vld [vmem:[%s341 + $0x78] sm:$0xff]
        %v395 = vld [vmem:[%s341 + $0x80] sm:$0xff]
        %v396 = vld [vmem:[%s341 + $0x88] sm:$0xff]
        %v397 = vld [vmem:[%s341 + $0x90] sm:$0xff]
        %v398 = vld [vmem:[%s341 + $0x98] sm:$0xff]
        %v399 = vld [vmem:[%s341 + $0xa0] sm:$0xff]
        %v400 = vld [vmem:[%s341 + $0xa8] sm:$0xff]
        %v401 = vld [vmem:[%s341 + $0xb0] sm:$0xff]
        %v402 = vld [vmem:[%s341 + $0xb8] sm:$0xff]
        %v403 = vld [vmem:[%s341 + $0xc0] sm:$0xff]
        %v404 = vld [vmem:[%s341 + $0xc8] sm:$0xff]
        %v405 = vld [vmem:[%s341 + $0xd0] sm:$0xff]
        %v406 = vld [vmem:[%s341 + $0xd8] sm:$0xff]
        %v407 = vld [vmem:[%s341 + $0xe0] sm:$0xff]
        %v408 = vld [vmem:[%s341 + $0xe8] sm:$0xff]
        %v409 = vld [vmem:[%s341 + $0xf0] sm:$0xff]
        %v410 = vld [vmem:[%s341 + $0xf8] sm:$0xff]
        %v411 = vpack.c.bf16 %v380, %v379
        %v412 = vpack.c.bf16 %v382, %v381
        %v413 = vpack.c.bf16 %v384, %v383
        %v414 = vpack.c.bf16 %v386, %v385
        %v415 = vpack.c.bf16 %v388, %v387
        %v416 = vpack.c.bf16 %v390, %v389
        %v417 = vpack.c.bf16 %v392, %v391
        %v418 = vpack.c.bf16 %v394, %v393
        %v419 = vpack.c.bf16 %v396, %v395
        %v420 = vpack.c.bf16 %v398, %v397
        %v421 = vpack.c.bf16 %v400, %v399
        %v422 = vpack.c.bf16 %v402, %v401
        %v423 = vpack.c.bf16 %v404, %v403
        %v424 = vpack.c.bf16 %v406, %v405
        %v425 = vpack.c.bf16 %v408, %v407
        %v426 = vpack.c.bf16 %v410, %v409
        %v427 = vld [vmem:[%s1] sm:$0xf]
        %v428 = vld [vmem:[%s1 + $0x4] sm:$0xf]
        %v429 = vld [vmem:[%s1 + $0x8] sm:$0xf]
        %v430 = vld [vmem:[%s1 + $0xc] sm:$0xf]
        %v431 = vld [vmem:[%s1 + $0x10] sm:$0xf]
        %v432 = vld [vmem:[%s1 + $0x14] sm:$0xf]
        %v433 = vld [vmem:[%s1 + $0x18] sm:$0xf]
        %v434 = vld [vmem:[%s1 + $0x1c] sm:$0xf]
        %v435 = vld [vmem:[%s1 + $0x20] sm:$0xf]
        %v436 = vld [vmem:[%s1 + $0x24] sm:$0xf]
        %v437 = vld [vmem:[%s1 + $0x28] sm:$0xf]
        %v438 = vld [vmem:[%s1 + $0x2c] sm:$0xf]
        %v439 = vld [vmem:[%s1 + $0x30] sm:$0xf]
        %v440 = vld [vmem:[%s1 + $0x34] sm:$0xf]
        %v441 = vld [vmem:[%s1 + $0x38] sm:$0xf]
        %v442 = vld [vmem:[%s1 + $0x3c] sm:$0xf]
        %v459 = vunpack.c.l.b16 %v427
        %v460 = vunpack.c.l.b16 %v428
        %v461 = vunpack.c.l.b16 %v429
        %v462 = vunpack.c.l.b16 %v430
        %v463 = vunpack.c.l.b16 %v431
        %v464 = vunpack.c.l.b16 %v432
        %v465 = vunpack.c.l.b16 %v433
        %v466 = vunpack.c.l.b16 %v434
        %v467 = vunpack.c.l.b16 %v435
        %v468 = vunpack.c.l.b16 %v436
        %v469 = vunpack.c.l.b16 %v437
        %v470 = vunpack.c.l.b16 %v438
        %v471 = vunpack.c.l.b16 %v439
        %v472 = vunpack.c.l.b16 %v440
        %v473 = vunpack.c.l.b16 %v441
        %v474 = vunpack.c.l.b16 %v442
        %v475 = vpack.c.b16 %v460, %v459
        %v476 = vpack.c.b16 %v462, %v461
        %v477 = vpack.c.b16 %v464, %v463
        %v478 = vpack.c.b16 %v466, %v465
        %v479 = vpack.c.b16 %v468, %v467
        %v480 = vpack.c.b16 %v470, %v469
        %v481 = vpack.c.b16 %v472, %v471
        %v482 = vpack.c.b16 %v474, %v473
        %491 = vmatprep.subr.bf16.mxu0 0
        %492 = vmatpush1.bf16.msra.mxu0 %v475
        %493 = vmatprep.subr.bf16.mxu0 0
        %494 = vmatpush1.bf16.msra.mxu0 %v476
        %495 = vmatprep.subr.bf16.mxu0 0
        %496 = vmatpush1.bf16.msra.mxu0 %v477
        %497 = vmatprep.subr.bf16.mxu0 0
        %498 = vmatpush1.bf16.msra.mxu0 %v478
        %499 = vmatprep.subr.bf16.mxu0 0
        %500 = vmatpush1.bf16.msra.mxu0 %v479
        %501 = vmatprep.subr.bf16.mxu0 0
        %502 = vmatpush1.bf16.msra.mxu0 %v480
        %503 = vmatprep.subr.bf16.mxu0 0
        %504 = vmatpush1.bf16.msra.mxu0 %v481
        %505 = vmatprep.subr.bf16.mxu0 0
        %506 = vmatpush1.bf16.msra.mxu0 %v482
        %507 = vmatprep.subr.bf16.mxu0 0
        %508 = vmatpush1.bf16.msra.mxu0 0
        %509 = vmatprep.subr.bf16.mxu0 0
        %510 = vmatpush1.bf16.msra.mxu0 0
        %511 = vmatprep.subr.bf16.mxu0 0
        %512 = vmatpush1.bf16.msra.mxu0 0
        %513 = vmatprep.subr.bf16.mxu0 0
        %514 = vmatpush1.bf16.msra.mxu0 0
        %515 = vmatprep.subr.bf16.mxu0 0
        %516 = vmatpush1.bf16.msra.mxu0 0
        %517 = vmatprep.subr.bf16.mxu0 0
        %518 = vmatpush1.bf16.msra.mxu0 0
        %519 = vmatprep.subr.bf16.mxu0 0
        %520 = vmatpush1.bf16.msra.mxu0 0
        %521 = vmatprep.subr.bf16.mxu0 0
        %522 = vmatpush1.bf16.msra.mxu0 0
        %523 = vmatprep.mubr.bf16.mxu0 0
        %524 = vmatmul.mubr.bf16.gmra.mrb[0].mxu0 %v411
        %v525 = vpop.f32.mrb[0].mxu0
        %v526 = vadd.f32 0.0, %v525
        %v527 = vpop.f32.mrb[0].mxu0
        %v528 = vpop.f32.mrb[0].mxu0
        %v529 = vadd.f32 0.0, %v528
        %v530 = vpop.f32.mrb[0].mxu0
        %531 = vmatprep.mubr.bf16.mxu0 0
        %532 = vmatmul.mubr.bf16.gmra.mrb[0].mxu0 %v412
        %v533 = vpop.f32.mrb[0].mxu0
        %v534 = vadd.f32 0.0, %v533
        %v535 = vpop.f32.mrb[0].mxu0
        %v536 = vpop.f32.mrb[0].mxu0
        %v537 = vadd.f32 0.0, %v536
        %v538 = vpop.f32.mrb[0].mxu0
        %539 = vmatprep.mubr.bf16.mxu0 0
        %540 = vmatmul.mubr.bf16.gmra.mrb[0].mxu0 %v413
        %v541 = vpop.f32.mrb[0].mxu0
        %v542 = vadd.f32 0.0, %v541
        %v543 = vpop.f32.mrb[0].mxu0
        %v544 = vpop.f32.mrb[0].mxu0
        %v545 = vadd.f32 0.0, %v544
        %v546 = vpop.f32.mrb[0].mxu0
        %547 = vmatprep.mubr.bf16.mxu0 0
        %548 = vmatmul.mubr.bf16.gmra.mrb[0].mxu0 %v414
        %v549 = vpop.f32.mrb[0].mxu0
        %v550 = vadd.f32 0.0, %v549
        %v551 = vpop.f32.mrb[0].mxu0
        %v552 = vpop.f32.mrb[0].mxu0
        %v553 = vadd.f32 0.0, %v552
        %v554 = vpop.f32.mrb[0].mxu0
        %555 = vmatprep.mubr.bf16.mxu0 0
        %556 = vmatmul.mubr.bf16.gmra.mrb[0].mxu0 %v415
        %v557 = vpop.f32.mrb[0].mxu0
        %v558 = vadd.f32 0.0, %v557
        %v559 = vpop.f32.mrb[0].mxu0
        %v560 = vpop.f32.mrb[0].mxu0
        %v561 = vadd.f32 0.0, %v560
        %v562 = vpop.f32.mrb[0].mxu0
        %563 = vmatprep.mubr.bf16.mxu0 0
        %564 = vmatmul.mubr.bf16.gmra.mrb[0].mxu0 %v416
        %v565 = vpop.f32.mrb[0].mxu0
        %v566 = vadd.f32 0.0, %v565
        %v567 = vpop.f32.mrb[0].mxu0
        %v568 = vpop.f32.mrb[0].mxu0
        %v569 = vadd.f32 0.0, %v568
        %v570 = vpop.f32.mrb[0].mxu0
        %571 = vmatprep.mubr.bf16.mxu0 0
        %572 = vmatmul.mubr.bf16.gmra.mrb[0].mxu0 %v417
        %v573 = vpop.f32.mrb[0].mxu0
        %v574 = vadd.f32 0.0, %v573
        %v575 = vpop.f32.mrb[0].mxu0
        %v576 = vpop.f32.mrb[0].mxu0
        %v577 = vadd.f32 0.0, %v576
        %v578 = vpop.f32.mrb[0].mxu0
        %579 = vmatprep.mubr.bf16.mxu0 0
        %580 = vmatmul.mubr.bf16.gmra.mrb[0].mxu0 %v418
        %v581 = vpop.f32.mrb[0].mxu0
        %v582 = vadd.f32 0.0, %v581
        %v583 = vpop.f32.mrb[0].mxu0
        %v584 = vpop.f32.mrb[0].mxu0
        %v585 = vadd.f32 0.0, %v584
        %v586 = vpop.f32.mrb[0].mxu0
        %587 = vmatprep.mubr.bf16.mxu0 0
        %588 = vmatmul.mubr.bf16.gmra.mrb[0].mxu0 %v419
        %v589 = vpop.f32.mrb[0].mxu0
        %v590 = vadd.f32 0.0, %v589
        %v591 = vpop.f32.mrb[0].mxu0
        %v592 = vpop.f32.mrb[0].mxu0
        %v593 = vadd.f32 0.0, %v592
        %v594 = vpop.f32.mrb[0].mxu0
        %595 = vmatprep.mubr.bf16.mxu0 0
        %596 = vmatmul.mubr.bf16.gmra.mrb[0].mxu0 %v420
        %v597 = vpop.f32.mrb[0].mxu0
        %v598 = vadd.f32 0.0, %v597
        %v599 = vpop.f32.mrb[0].mxu0
        %v600 = vpop.f32.mrb[0].mxu0
        %v601 = vadd.f32 0.0, %v600
        %v602 = vpop.f32.mrb[0].mxu0
        %603 = vmatprep.mubr.bf16.mxu0 0
        %604 = vmatmul.mubr.bf16.gmra.mrb[0].mxu0 %v421
        %v605 = vpop.f32.mrb[0].mxu0
        %v606 = vadd.f32 0.0, %v605
        %v607 = vpop.f32.mrb[0].mxu0
        %v608 = vpop.f32.mrb[0].mxu0
        %v609 = vadd.f32 0.0, %v608
        %v610 = vpop.f32.mrb[0].mxu0
        %611 = vmatprep.mubr.bf16.mxu0 0
        %612 = vmatmul.mubr.bf16.gmra.mrb[0].mxu0 %v422
        %v613 = vpop.f32.mrb[0].mxu0
        %v614 = vadd.f32 0.0, %v613
        %v615 = vpop.f32.mrb[0].mxu0
        %v616 = vpop.f32.mrb[0].mxu0
        %v617 = vadd.f32 0.0, %v616
        %v618 = vpop.f32.mrb[0].mxu0
        %619 = vmatprep.mubr.bf16.mxu0 0
        %620 = vmatmul.mubr.bf16.gmra.mrb[0].mxu0 %v423
        %v621 = vpop.f32.mrb[0].mxu0
        %v622 = vadd.f32 0.0, %v621
        %v623 = vpop.f32.mrb[0].mxu0
        %v624 = vpop.f32.mrb[0].mxu0
        %v625 = vadd.f32 0.0, %v624
        %v626 = vpop.f32.mrb[0].mxu0
        %627 = vmatprep.mubr.bf16.mxu0 0
        %628 = vmatmul.mubr.bf16.gmra.mrb[0].mxu0 %v424
        %v629 = vpop.f32.mrb[0].mxu0
        %v630 = vadd.f32 0.0, %v629
        %v631 = vpop.f32.mrb[0].mxu0
        %v632 = vpop.f32.mrb[0].mxu0
        %v633 = vadd.f32 0.0, %v632
        %v634 = vpop.f32.mrb[0].mxu0
        %635 = vmatprep.mubr.bf16.mxu0 0
        %636 = vmatmul.mubr.bf16.gmra.mrb[0].mxu0 %v425
        %v637 = vpop.f32.mrb[0].mxu0
        %v638 = vadd.f32 0.0, %v637
        %v639 = vpop.f32.mrb[0].mxu0
        %v640 = vpop.f32.mrb[0].mxu0
        %v641 = vadd.f32 0.0, %v640
        %v642 = vpop.f32.mrb[0].mxu0
        %643 = vmatprep.mubr.bf16.mxu0 0
        %644 = vmatmul.mubr.bf16.gmra.mrb[0].mxu0 %v426
        %v645 = vpop.f32.mrb[0].mxu0
        %v646 = vadd.f32 0.0, %v645
        %v647 = vpop.f32.mrb[0].mxu0
        %v648 = vpop.f32.mrb[0].mxu0
        %v649 = vadd.f32 0.0, %v648
        %v650 = vpop.f32.mrb[0].mxu0
        %651 = vdwg.mxu0
        %v652 = vld [vmem:[%s2] sm:$0x1]
        %v654 = vlaneseq
        %v655 = vshrl.u32 %v654, 7
        %v656 = vsub.s32 0, %v655
        %v657 = vrot.slane %v652, %v656
        %v659 = vmul.f32 %v526, %v657
        %v660 = vmul.f32 %v529, %v657
        %v661 = vmul.f32 %v534, %v657
        %v662 = vmul.f32 %v537, %v657
        %v663 = vmul.f32 %v542, %v657
        %v664 = vmul.f32 %v545, %v657
        %v665 = vmul.f32 %v550, %v657
        %v666 = vmul.f32 %v553, %v657
        %v667 = vmul.f32 %v558, %v657
        %v668 = vmul.f32 %v561, %v657
        %v669 = vmul.f32 %v566, %v657
        %v670 = vmul.f32 %v569, %v657
        %v671 = vmul.f32 %v574, %v657
        %v672 = vmul.f32 %v577, %v657
        %v673 = vmul.f32 %v582, %v657
        %v674 = vmul.f32 %v585, %v657
        %v675 = vmul.f32 %v590, %v657
        %v676 = vmul.f32 %v593, %v657
        %v677 = vmul.f32 %v598, %v657
        %v678 = vmul.f32 %v601, %v657
        %v679 = vmul.f32 %v606, %v657
        %v680 = vmul.f32 %v609, %v657
        %v681 = vmul.f32 %v614, %v657
        %v682 = vmul.f32 %v617, %v657
        %v683 = vmul.f32 %v622, %v657
        %v684 = vmul.f32 %v625, %v657
        %v685 = vmul.f32 %v630, %v657
        %v686 = vmul.f32 %v633, %v657
        %v687 = vmul.f32 %v638, %v657
        %v688 = vmul.f32 %v641, %v657
        %v689 = vmul.f32 %v646, %v657
        %v690 = vmul.f32 %v649, %v657
        %v691 = vld [vmem:[%s3] sm:$0x1]
        %v693 = vlaneseq
        %v694 = vshrl.u32 %v693, 7
        %v695 = vsub.s32 0, %v694
        %v696 = vrot.slane %v691, %v695
        %v698 = vadd.f32 %v659, %v696
        %v699 = vadd.f32 %v660, %v696
        %v700 = vadd.f32 %v661, %v696
        %v701 = vadd.f32 %v662, %v696
        %v702 = vadd.f32 %v663, %v696
        %v703 = vadd.f32 %v664, %v696
        %v704 = vadd.f32 %v665, %v696
        %v705 = vadd.f32 %v666, %v696
        %v706 = vadd.f32 %v667, %v696
        %v707 = vadd.f32 %v668, %v696
        %v708 = vadd.f32 %v669, %v696
        %v709 = vadd.f32 %v670, %v696
        %v710 = vadd.f32 %v671, %v696
        %v711 = vadd.f32 %v672, %v696
        %v712 = vadd.f32 %v673, %v696
        %v713 = vadd.f32 %v674, %v696
        %v714 = vadd.f32 %v675, %v696
        %v715 = vadd.f32 %v676, %v696
        %v716 = vadd.f32 %v677, %v696
        %v717 = vadd.f32 %v678, %v696
        %v718 = vadd.f32 %v679, %v696
        %v719 = vadd.f32 %v680, %v696
        %v720 = vadd.f32 %v681, %v696
        %v721 = vadd.f32 %v682, %v696
        %v722 = vadd.f32 %v683, %v696
        %v723 = vadd.f32 %v684, %v696
        %v724 = vadd.f32 %v685, %v696
        %v725 = vadd.f32 %v686, %v696
        %v726 = vadd.f32 %v687, %v696
        %v727 = vadd.f32 %v688, %v696
        %v728 = vadd.f32 %v689, %v696
        %v729 = vadd.f32 %v690, %v696
        %v730 = vmax.f32 %v698, 0.0
        %v731 = vmax.f32 %v699, 0.0
        %v732 = vmax.f32 %v700, 0.0
        %v733 = vmax.f32 %v701, 0.0
        %v734 = vmax.f32 %v702, 0.0
        %v735 = vmax.f32 %v703, 0.0
        %v736 = vmax.f32 %v704, 0.0
        %v737 = vmax.f32 %v705, 0.0
        %v738 = vmax.f32 %v706, 0.0
        %v739 = vmax.f32 %v707, 0.0
        %v740 = vmax.f32 %v708, 0.0
        %v741 = vmax.f32 %v709, 0.0
        %v742 = vmax.f32 %v710, 0.0
        %v743 = vmax.f32 %v711, 0.0
        %v744 = vmax.f32 %v712, 0.0
        %v745 = vmax.f32 %v713, 0.0
        %v746 = vmax.f32 %v714, 0.0
        %v747 = vmax.f32 %v715, 0.0
        %v748 = vmax.f32 %v716, 0.0
        %v749 = vmax.f32 %v717, 0.0
        %v750 = vmax.f32 %v718, 0.0
        %v751 = vmax.f32 %v719, 0.0
        %v752 = vmax.f32 %v720, 0.0
        %v753 = vmax.f32 %v721, 0.0
        %v754 = vmax.f32 %v722, 0.0
        %v755 = vmax.f32 %v723, 0.0
        %v756 = vmax.f32 %v724, 0.0
        %v757 = vmax.f32 %v725, 0.0
        %v758 = vmax.f32 %v726, 0.0
        %v759 = vmax.f32 %v727, 0.0
        %v760 = vmax.f32 %v728, 0.0
        %v761 = vmax.f32 %v729, 0.0
        %v762 = vld [vmem:[%s4] sm:$0xf]
        %v763 = vld [vmem:[%s4 + $0x4] sm:$0xf]
        %v764 = vld [vmem:[%s4 + $0x8] sm:$0xf]
        %v765 = vld [vmem:[%s4 + $0xc] sm:$0xf]
        %v766 = vld [vmem:[%s4 + $0x10] sm:$0xf]
        %v767 = vld [vmem:[%s4 + $0x14] sm:$0xf]
        %v768 = vld [vmem:[%s4 + $0x18] sm:$0xf]
        %v769 = vld [vmem:[%s4 + $0x1c] sm:$0xf]
        %v770 = vld [vmem:[%s4 + $0x20] sm:$0xf]
        %v771 = vld [vmem:[%s4 + $0x24] sm:$0xf]
        %v772 = vld [vmem:[%s4 + $0x28] sm:$0xf]
        %v773 = vld [vmem:[%s4 + $0x2c] sm:$0xf]
        %v774 = vld [vmem:[%s4 + $0x30] sm:$0xf]
        %v775 = vld [vmem:[%s4 + $0x34] sm:$0xf]
        %v776 = vld [vmem:[%s4 + $0x38] sm:$0xf]
        %v777 = vld [vmem:[%s4 + $0x3c] sm:$0xf]
        %v778 = vld [vmem:[%s4 + $0x40] sm:$0xf]
        %v779 = vld [vmem:[%s4 + $0x44] sm:$0xf]
        %v780 = vld [vmem:[%s4 + $0x48] sm:$0xf]
        %v781 = vld [vmem:[%s4 + $0x4c] sm:$0xf]
        %v782 = vld [vmem:[%s4 + $0x50] sm:$0xf]
        %v783 = vld [vmem:[%s4 + $0x54] sm:$0xf]
        %v784 = vld [vmem:[%s4 + $0x58] sm:$0xf]
        %v785 = vld [vmem:[%s4 + $0x5c] sm:$0xf]
        %v786 = vld [vmem:[%s4 + $0x60] sm:$0xf]
        %v787 = vld [vmem:[%s4 + $0x64] sm:$0xf]
        %v788 = vld [vmem:[%s4 + $0x68] sm:$0xf]
        %v789 = vld [vmem:[%s4 + $0x6c] sm:$0xf]
        %v790 = vld [vmem:[%s4 + $0x70] sm:$0xf]
        %v791 = vld [vmem:[%s4 + $0x74] sm:$0xf]
        %v792 = vld [vmem:[%s4 + $0x78] sm:$0xf]
        %v793 = vld [vmem:[%s4 + $0x7c] sm:$0xf]
        %v794 = vld [vmem:[%s4 + $0x80] sm:$0xf]
        %v795 = vld [vmem:[%s4 + $0x84] sm:$0xf]
        %v796 = vld [vmem:[%s4 + $0x88] sm:$0xf]
        %v797 = vld [vmem:[%s4 + $0x8c] sm:$0xf]
        %v798 = vld [vmem:[%s4 + $0x90] sm:$0xf]
        %v799 = vld [vmem:[%s4 + $0x94] sm:$0xf]
        %v800 = vld [vmem:[%s4 + $0x98] sm:$0xf]
        %v801 = vld [vmem:[%s4 + $0x9c] sm:$0xf]
        %v802 = vld [vmem:[%s4 + $0xa0] sm:$0xf]
        %v803 = vld [vmem:[%s4 + $0xa4] sm:$0xf]
        %v804 = vld [vmem:[%s4 + $0xa8] sm:$0xf]
        %v805 = vld [vmem:[%s4 + $0xac] sm:$0xf]
        %v806 = vld [vmem:[%s4 + $0xb0] sm:$0xf]
        %v807 = vld [vmem:[%s4 + $0xb4] sm:$0xf]
        %v808 = vld [vmem:[%s4 + $0xb8] sm:$0xf]
        %v809 = vld [vmem:[%s4 + $0xbc] sm:$0xf]
        %v810 = vld [vmem:[%s4 + $0xc0] sm:$0xf]
        %v811 = vld [vmem:[%s4 + $0xc4] sm:$0xf]
        %v812 = vld [vmem:[%s4 + $0xc8] sm:$0xf]
        %v813 = vld [vmem:[%s4 + $0xcc] sm:$0xf]
        %v814 = vld [vmem:[%s4 + $0xd0] sm:$0xf]
        %v815 = vld [vmem:[%s4 + $0xd4] sm:$0xf]
        %v816 = vld [vmem:[%s5] sm:$0x7]
        %v817 = vld [vmem:[%s6] sm:$0x7]
        %vm818 = vcmask 125952
        %819 = vst.msk [vmem:[#allocation2] sm:$0xf] %vm818, 0
        %820 = vst.msk [vmem:[#allocation2 + $0x4] sm:$0xf] %vm818, 0
        %vm821 = vcmask 122880
        %822 = vst.msk [vmem:[#allocation2 + $0x8] sm:$0x1] %vm821, 0
        %823 = vst.msk [vmem:[#allocation2 + $0xc] sm:$0xf] %vm818, 0
        %824 = vst.msk [vmem:[#allocation2 + $0x10] sm:$0xf] %vm818, 0
        %825 = vst.msk [vmem:[#allocation2 + $0x14] sm:$0x1] %vm821, 0
        %826 = vst.msk [vmem:[#allocation2 + $0x18] sm:$0xf] %vm818, 0
        %827 = vst.msk [vmem:[#allocation2 + $0x1c] sm:$0xf] %vm818, 0
        %828 = vst.msk [vmem:[#allocation2 + $0x20] sm:$0x1] %vm821, 0
        %829 = vst.msk [vmem:[#allocation2 + $0x24] sm:$0xf] %vm818, 0
        %830 = vst.msk [vmem:[#allocation2 + $0x28] sm:$0xf] %vm818, 0
        %831 = vst.msk [vmem:[#allocation2 + $0x2c] sm:$0x1] %vm821, 0
        %832 = vst.msk [vmem:[#allocation2 + $0x30] sm:$0xf] %vm818, 0
        %833 = vst.msk [vmem:[#allocation2 + $0x34] sm:$0xf] %vm818, 0
        %834 = vst.msk [vmem:[#allocation2 + $0x38] sm:$0x1] %vm821, 0
        %835 = vst.msk [vmem:[#allocation2 + $0x3c] sm:$0xf] %vm818, 0
        %836 = vst.msk [vmem:[#allocation2 + $0x40] sm:$0xf] %vm818, 0
        %837 = vst.msk [vmem:[#allocation2 + $0x44] sm:$0x1] %vm821, 0
        %838 = vst.msk [vmem:[#allocation2 + $0x48] sm:$0xf] %vm818, 0
        %839 = vst.msk [vmem:[#allocation2 + $0x4c] sm:$0xf] %vm818, 0
        %840 = vst.msk [vmem:[#allocation2 + $0x50] sm:$0x1] %vm821, 0
        %841 = vst.msk [vmem:[#allocation2 + $0x54] sm:$0xf] %vm818, 0
        %842 = vst.msk [vmem:[#allocation2 + $0x58] sm:$0xf] %vm818, 0
        %843 = vst.msk [vmem:[#allocation2 + $0x5c] sm:$0x1] %vm821, 0
        %844 = vst.msk [vmem:[#allocation2 + $0x60] sm:$0xf] %vm818, 0
        %845 = vst.msk [vmem:[#allocation2 + $0x64] sm:$0xf] %vm818, 0
        %846 = vst.msk [vmem:[#allocation2 + $0x68] sm:$0x1] %vm821, 0
        %847 = vst.msk [vmem:[#allocation2 + $0x6c] sm:$0xf] %vm818, 0
        %848 = vst.msk [vmem:[#allocation2 + $0x70] sm:$0xf] %vm818, 0
        %849 = vst.msk [vmem:[#allocation2 + $0x74] sm:$0x1] %vm821, 0
        %850 = vst.msk [vmem:[#allocation2 + $0x78] sm:$0xf] %vm818, 0
        %851 = vst.msk [vmem:[#allocation2 + $0x7c] sm:$0xf] %vm818, 0
        %852 = vst.msk [vmem:[#allocation2 + $0x80] sm:$0x1] %vm821, 0
        %853 = vst.msk [vmem:[#allocation2 + $0x84] sm:$0xf] %vm818, 0
        %854 = vst.msk [vmem:[#allocation2 + $0x88] sm:$0xf] %vm818, 0
        %855 = vst.msk [vmem:[#allocation2 + $0x8c] sm:$0x1] %vm821, 0
        %856 = vst.msk [vmem:[#allocation2 + $0x90] sm:$0xf] %vm818, 0
        %857 = vst.msk [vmem:[#allocation2 + $0x94] sm:$0xf] %vm818, 0
        %858 = vst.msk [vmem:[#allocation2 + $0x98] sm:$0x1] %vm821, 0
        %859 = vst.msk [vmem:[#allocation2 + $0x9c] sm:$0xf] %vm818, 0
        %860 = vst.msk [vmem:[#allocation2 + $0xa0] sm:$0xf] %vm818, 0
        %861 = vst.msk [vmem:[#allocation2 + $0xa4] sm:$0x1] %vm821, 0
        %862 = vst.msk [vmem:[#allocation2 + $0xa8] sm:$0xf] %vm818, 0
        %863 = vst.msk [vmem:[#allocation2 + $0xac] sm:$0xf] %vm818, 0
        %864 = vst.msk [vmem:[#allocation2 + $0xb0] sm:$0x1] %vm821, 0
        %865 = vst.msk [vmem:[#allocation2 + $0xb4] sm:$0xf] %vm818, 0
        %866 = vst.msk [vmem:[#allocation2 + $0xb8] sm:$0xf] %vm818, 0
        %867 = vst.msk [vmem:[#allocation2 + $0xbc] sm:$0x1] %vm821, 0
        %868 = vst.msk [vmem:[#allocation2 + $0xc0] sm:$0xf] %vm818, 0
        %869 = vst.msk [vmem:[#allocation2 + $0xc4] sm:$0xf] %vm818, 0
        %870 = vst.msk [vmem:[#allocation2 + $0xc8] sm:$0x1] %vm821, 0
        %871 = vst.msk [vmem:[#allocation2 + $0xcc] sm:$0xf] %vm818, 0
        %872 = vst.msk [vmem:[#allocation2 + $0xd0] sm:$0xf] %vm818, 0
        %873 = vst.msk [vmem:[#allocation2 + $0xd4] sm:$0x1] %vm821, 0
        %v874 = vpack.c.bf16 %v731, %v730
        %v875 = vpack.c.bf16 %v733, %v732
        %v876 = vpack.c.bf16 %v735, %v734
        %v877 = vpack.c.bf16 %v737, %v736
        %v878 = vpack.c.bf16 %v739, %v738
        %v879 = vpack.c.bf16 %v741, %v740
        %v880 = vpack.c.bf16 %v743, %v742
        %v881 = vpack.c.bf16 %v745, %v744
        %v882 = vpack.c.bf16 %v747, %v746
        %v883 = vpack.c.bf16 %v749, %v748
        %v884 = vpack.c.bf16 %v751, %v750
        %v885 = vpack.c.bf16 %v753, %v752
        %v886 = vpack.c.bf16 %v755, %v754
        %v887 = vpack.c.bf16 %v757, %v756
        %v888 = vpack.c.bf16 %v759, %v758
        %v889 = vpack.c.bf16 %v761, %v760
        %v906 = vunpack.c.l.b16 %v874
        %v907 = vunpack.c.h.b16 %v874
        %v908 = vunpack.c.l.b16 %v875
        %v909 = vunpack.c.h.b16 %v875
        %v910 = vunpack.c.l.b16 %v876
        %v911 = vunpack.c.h.b16 %v876
        %v912 = vunpack.c.l.b16 %v877
        %v913 = vunpack.c.h.b16 %v877
        %v914 = vunpack.c.l.b16 %v878
        %v915 = vunpack.c.h.b16 %v878
        %v916 = vunpack.c.l.b16 %v879
        %v917 = vunpack.c.h.b16 %v879
        %v918 = vunpack.c.l.b16 %v880
        %v919 = vunpack.c.h.b16 %v880
        %v920 = vunpack.c.l.b16 %v881
        %v921 = vunpack.c.h.b16 %v881
        %v922 = vunpack.c.l.b16 %v882
        %v923 = vunpack.c.h.b16 %v882
        %v924 = vunpack.c.l.b16 %v883
        %v925 = vunpack.c.h.b16 %v883
        %v926 = vunpack.c.l.b16 %v884
        %v927 = vunpack.c.h.b16 %v884
        %v928 = vunpack.c.l.b16 %v885
        %v929 = vunpack.c.h.b16 %v885
        %v930 = vunpack.c.l.b16 %v886
        %v931 = vunpack.c.h.b16 %v886
        %v932 = vunpack.c.l.b16 %v887
        %v933 = vunpack.c.h.b16 %v887
        %v934 = vunpack.c.l.b16 %v888
        %v935 = vunpack.c.h.b16 %v888
        %v936 = vunpack.c.l.b16 %v889
        %v937 = vunpack.c.h.b16 %v889
        %v938 = vpack.c.b16 %v906, %v906
        %v939 = vpack.c.b16 %v907, %v907
        %v940 = vpack.c.b16 %v908, %v908
        %v941 = vpack.c.b16 %v909, %v909
        %v942 = vpack.c.b16 %v910, %v910
        %v943 = vpack.c.b16 %v911, %v911
        %v944 = vpack.c.b16 %v912, %v912
        %v945 = vpack.c.b16 %v913, %v913
        %v946 = vpack.c.b16 %v914, %v914
        %v947 = vpack.c.b16 %v915, %v915
        %v948 = vpack.c.b16 %v916, %v916
        %v949 = vpack.c.b16 %v917, %v917
        %v950 = vpack.c.b16 %v918, %v918
        %v951 = vpack.c.b16 %v919, %v919
        %v952 = vpack.c.b16 %v920, %v920
        %v953 = vpack.c.b16 %v921, %v921
        %v954 = vpack.c.b16 %v922, %v922
        %v955 = vpack.c.b16 %v923, %v923
        %v956 = vpack.c.b16 %v924, %v924
        %v957 = vpack.c.b16 %v925, %v925
        %v958 = vpack.c.b16 %v926, %v926
        %v959 = vpack.c.b16 %v927, %v927
        %v960 = vpack.c.b16 %v928, %v928
        %v961 = vpack.c.b16 %v929, %v929
        %v962 = vpack.c.b16 %v930, %v930
        %v963 = vpack.c.b16 %v931, %v931
        %v964 = vpack.c.b16 %v932, %v932
        %v965 = vpack.c.b16 %v933, %v933
        %v966 = vpack.c.b16 %v934, %v934
        %v967 = vpack.c.b16 %v935, %v935
        %v968 = vpack.c.b16 %v936, %v936
        %v969 = vpack.c.b16 %v937, %v937
        %vm970 = vsmask.f32 256
        %vm971 = vsmask.f32 4368
        %vm972 = vmor %vm970, %vm971
        %v974 = vshrl.u32 %v938, 16
        %v976 = vrot.slane %v974, 7
        %v977 = vshll.u32 %v938, 16
        %v979 = vor.u32 %v976, %v977
        %v980 = vrot.slane %v976, 4
        %v982 = vshrl.u32 %v939, 16
        %v984 = vrot.slane %v982, 7
        %v985 = vshll.u32 %v939, 16
        %v987 = vor.u32 %v984, %v985
        %v988 = vsel %vm972, %v980, %v987
        %v989 = vrot.slane %v984, 4
        %v991 = vshrl.u32 %v940, 16
        %v993 = vrot.slane %v991, 7
        %v994 = vshll.u32 %v940, 16
        %v996 = vor.u32 %v993, %v994
        %v997 = vrot.slane %v993, 4
        %v999 = vshrl.u32 %v941, 16
        %v1001 = vrot.slane %v999, 7
        %v1002 = vshll.u32 %v941, 16
        %v1004 = vor.u32 %v1001, %v1002
        %v1005 = vsel %vm972, %v997, %v1004
        %v1006 = vrot.slane %v1001, 4
        %v1008 = vshrl.u32 %v942, 16
        %v1010 = vrot.slane %v1008, 7
        %v1011 = vshll.u32 %v942, 16
        %v1013 = vor.u32 %v1010, %v1011
        %v1014 = vrot.slane %v1010, 4
        %v1016 = vshrl.u32 %v943, 16
        %v1018 = vrot.slane %v1016, 7
        %v1019 = vshll.u32 %v943, 16
        %v1021 = vor.u32 %v1018, %v1019
        %v1022 = vsel %vm972, %v1014, %v1021
        %v1023 = vrot.slane %v1018, 4
        %v1025 = vshrl.u32 %v944, 16
        %v1027 = vrot.slane %v1025, 7
        %v1028 = vshll.u32 %v944, 16
        %v1030 = vor.u32 %v1027, %v1028
        %v1031 = vrot.slane %v1027, 4
        %v1033 = vshrl.u32 %v945, 16
        %v1035 = vrot.slane %v1033, 7
        %v1036 = vshll.u32 %v945, 16
        %v1038 = vor.u32 %v1035, %v1036
        %v1039 = vsel %vm972, %v1031, %v1038
        %v1040 = vrot.slane %v1035, 4
        %v1042 = vshrl.u32 %v946, 16
        %v1044 = vrot.slane %v1042, 7
        %v1045 = vshll.u32 %v946, 16
        %v1047 = vor.u32 %v1044, %v1045
        %v1048 = vrot.slane %v1044, 4
        %v1050 = vshrl.u32 %v947, 16
        %v1052 = vrot.slane %v1050, 7
        %v1053 = vshll.u32 %v947, 16
        %v1055 = vor.u32 %v1052, %v1053
        %v1056 = vsel %vm972, %v1048, %v1055
        %v1057 = vrot.slane %v1052, 4
        %v1059 = vshrl.u32 %v948, 16
        %v1061 = vrot.slane %v1059, 7
        %v1062 = vshll.u32 %v948, 16
        %v1064 = vor.u32 %v1061, %v1062
        %v1065 = vrot.slane %v1061, 4
        %v1067 = vshrl.u32 %v949, 16
        %v1069 = vrot.slane %v1067, 7
        %v1070 = vshll.u32 %v949, 16
        %v1072 = vor.u32 %v1069, %v1070
        %v1073 = vsel %vm972, %v1065, %v1072
        %v1074 = vrot.slane %v1069, 4
        %v1076 = vshrl.u32 %v950, 16
        %v1078 = vrot.slane %v1076, 7
        %v1079 = vshll.u32 %v950, 16
        %v1081 = vor.u32 %v1078, %v1079
        %v1082 = vrot.slane %v1078, 4
        %v1084 = vshrl.u32 %v951, 16
        %v1086 = vrot.slane %v1084, 7
        %v1087 = vshll.u32 %v951, 16
        %v1089 = vor.u32 %v1086, %v1087
        %v1090 = vsel %vm972, %v1082, %v1089
        %v1091 = vrot.slane %v1086, 4
        %v1093 = vshrl.u32 %v952, 16
        %v1095 = vrot.slane %v1093, 7
        %v1096 = vshll.u32 %v952, 16
        %v1098 = vor.u32 %v1095, %v1096
        %v1099 = vrot.slane %v1095, 4
        %v1101 = vshrl.u32 %v953, 16
        %v1103 = vrot.slane %v1101, 7
        %v1104 = vshll.u32 %v953, 16
        %v1106 = vor.u32 %v1103, %v1104
        %v1107 = vsel %vm972, %v1099, %v1106
        %v1108 = vrot.slane %v1103, 4
        %v1110 = vshrl.u32 %v954, 16
        %v1112 = vrot.slane %v1110, 7
        %v1113 = vshll.u32 %v954, 16
        %v1115 = vor.u32 %v1112, %v1113
        %v1116 = vrot.slane %v1112, 4
        %v1118 = vshrl.u32 %v955, 16
        %v1120 = vrot.slane %v1118, 7
        %v1121 = vshll.u32 %v955, 16
        %v1123 = vor.u32 %v1120, %v1121
        %v1124 = vsel %vm972, %v1116, %v1123
        %v1125 = vrot.slane %v1120, 4
        %v1127 = vshrl.u32 %v956, 16
        %v1129 = vrot.slane %v1127, 7
        %v1130 = vshll.u32 %v956, 16
        %v1132 = vor.u32 %v1129, %v1130
        %v1133 = vrot.slane %v1129, 4
        %v1135 = vshrl.u32 %v957, 16
        %v1137 = vrot.slane %v1135, 7
        %v1138 = vshll.u32 %v957, 16
        %v1140 = vor.u32 %v1137, %v1138
        %v1141 = vsel %vm972, %v1133, %v1140
        %v1142 = vrot.slane %v1137, 4
        %v1144 = vshrl.u32 %v958, 16
        %v1146 = vrot.slane %v1144, 7
        %v1147 = vshll.u32 %v958, 16
        %v1149 = vor.u32 %v1146, %v1147
        %v1150 = vrot.slane %v1146, 4
        %v1152 = vshrl.u32 %v959, 16
        %v1154 = vrot.slane %v1152, 7
        %v1155 = vshll.u32 %v959, 16
        %v1157 = vor.u32 %v1154, %v1155
        %v1158 = vsel %vm972, %v1150, %v1157
        %v1159 = vrot.slane %v1154, 4
        %v1161 = vshrl.u32 %v960, 16
        %v1163 = vrot.slane %v1161, 7
        %v1164 = vshll.u32 %v960, 16
        %v1166 = vor.u32 %v1163, %v1164
        %v1167 = vrot.slane %v1163, 4
        %v1169 = vshrl.u32 %v961, 16
        %v1171 = vrot.slane %v1169, 7
        %v1172 = vshll.u32 %v961, 16
        %v1174 = vor.u32 %v1171, %v1172
        %v1175 = vsel %vm972, %v1167, %v1174
        %v1176 = vrot.slane %v1171, 4
        %v1178 = vshrl.u32 %v962, 16
        %v1180 = vrot.slane %v1178, 7
        %v1181 = vshll.u32 %v962, 16
        %v1183 = vor.u32 %v1180, %v1181
        %v1184 = vrot.slane %v1180, 4
        %v1186 = vshrl.u32 %v963, 16
        %v1188 = vrot.slane %v1186, 7
        %v1189 = vshll.u32 %v963, 16
        %v1191 = vor.u32 %v1188, %v1189
        %v1192 = vsel %vm972, %v1184, %v1191
        %v1193 = vrot.slane %v1188, 4
        %v1195 = vshrl.u32 %v964, 16
        %v1197 = vrot.slane %v1195, 7
        %v1198 = vshll.u32 %v964, 16
        %v1200 = vor.u32 %v1197, %v1198
        %v1201 = vrot.slane %v1197, 4
        %v1203 = vshrl.u32 %v965, 16
        %v1205 = vrot.slane %v1203, 7
        %v1206 = vshll.u32 %v965, 16
        %v1208 = vor.u32 %v1205, %v1206
        %v1209 = vsel %vm972, %v1201, %v1208
        %v1210 = vrot.slane %v1205, 4
        %v1212 = vshrl.u32 %v966, 16
        %v1214 = vrot.slane %v1212, 7
        %v1215 = vshll.u32 %v966, 16
        %v1217 = vor.u32 %v1214, %v1215
        %v1218 = vrot.slane %v1214, 4
        %v1220 = vshrl.u32 %v967, 16
        %v1222 = vrot.slane %v1220, 7
        %v1223 = vshll.u32 %v967, 16
        %v1225 = vor.u32 %v1222, %v1223
        %v1226 = vsel %vm972, %v1218, %v1225
        %v1227 = vrot.slane %v1222, 4
        %v1229 = vshrl.u32 %v968, 16
        %v1231 = vrot.slane %v1229, 7
        %v1232 = vshll.u32 %v968, 16
        %v1234 = vor.u32 %v1231, %v1232
        %v1235 = vrot.slane %v1231, 4
        %v1237 = vshrl.u32 %v969, 16
        %v1239 = vrot.slane %v1237, 7
        %v1240 = vshll.u32 %v969, 16
        %v1242 = vor.u32 %v1239, %v1240
        %v1243 = vsel %vm972, %v1235, %v1242
        %v1244 = vrot.slane %v1239, 4
        %s1293 = scalar_lea.vmem [#allocation2], 12
        %vm1294 = vcmask 125952
        %vm1295 = vsmask.f32 7938
        %vm1296 = vmand %vm1294, %vm1295
        %v1297 = vld [vmem:[%s1293] sm:$0xf]
        %v1298 = vsel %vm1296, %v979, %v1297
        %1299 = vst [vmem:[%s1293] sm:$0xf] %v1298
        %1300 = vst.msk [vmem:[%s1293 + $0x4] sm:$0xf] %vm818, %v988
        %vm1301 = vcmask 122880
        %vm1302 = vmand %vm1301, %vm970
        %v1303 = vld [vmem:[%s1293 + $0x8] sm:$0x1]
        %v1304 = vsel %vm1302, %v989, %v1303
        %1305 = vst [vmem:[%s1293 + $0x8] sm:$0x1] %v1304
        %v1306 = vld [vmem:[%s1293 + $0xc] sm:$0xf]
        %v1307 = vsel %vm1296, %v996, %v1306
        %1308 = vst [vmem:[%s1293 + $0xc] sm:$0xf] %v1307
        %1309 = vst.msk [vmem:[%s1293 + $0x10] sm:$0xf] %vm818, %v1005
        %v1310 = vld [vmem:[%s1293 + $0x14] sm:$0x1]
        %v1311 = vsel %vm1302, %v1006, %v1310
        %1312 = vst [vmem:[%s1293 + $0x14] sm:$0x1] %v1311
        %v1313 = vld [vmem:[%s1293 + $0x18] sm:$0xf]
        %v1314 = vsel %vm1296, %v1013, %v1313
        %1315 = vst [vmem:[%s1293 + $0x18] sm:$0xf] %v1314
        %1316 = vst.msk [vmem:[%s1293 + $0x1c] sm:$0xf] %vm818, %v1022
        %v1317 = vld [vmem:[%s1293 + $0x20] sm:$0x1]
        %v1318 = vsel %vm1302, %v1023, %v1317
        %1319 = vst [vmem:[%s1293 + $0x20] sm:$0x1] %v1318
        %v1320 = vld [vmem:[%s1293 + $0x24] sm:$0xf]
        %v1321 = vsel %vm1296, %v1030, %v1320
        %1322 = vst [vmem:[%s1293 + $0x24] sm:$0xf] %v1321
        %1323 = vst.msk [vmem:[%s1293 + $0x28] sm:$0xf] %vm818, %v1039
        %v1324 = vld [vmem:[%s1293 + $0x2c] sm:$0x1]
        %v1325 = vsel %vm1302, %v1040, %v1324
        %1326 = vst [vmem:[%s1293 + $0x2c] sm:$0x1] %v1325
        %v1327 = vld [vmem:[%s1293 + $0x30] sm:$0xf]
        %v1328 = vsel %vm1296, %v1047, %v1327
        %1329 = vst [vmem:[%s1293 + $0x30] sm:$0xf] %v1328
        %1330 = vst.msk [vmem:[%s1293 + $0x34] sm:$0xf] %vm818, %v1056
        %v1331 = vld [vmem:[%s1293 + $0x38] sm:$0x1]
        %v1332 = vsel %vm1302, %v1057, %v1331
        %1333 = vst [vmem:[%s1293 + $0x38] sm:$0x1] %v1332
        %v1334 = vld [vmem:[%s1293 + $0x3c] sm:$0xf]
        %v1335 = vsel %vm1296, %v1064, %v1334
        %1336 = vst [vmem:[%s1293 + $0x3c] sm:$0xf] %v1335
        %1337 = vst.msk [vmem:[%s1293 + $0x40] sm:$0xf] %vm818, %v1073
        %v1338 = vld [vmem:[%s1293 + $0x44] sm:$0x1]
        %v1339 = vsel %vm1302, %v1074, %v1338
        %1340 = vst [vmem:[%s1293 + $0x44] sm:$0x1] %v1339
        %v1341 = vld [vmem:[%s1293 + $0x48] sm:$0xf]
        %v1342 = vsel %vm1296, %v1081, %v1341
        %1343 = vst [vmem:[%s1293 + $0x48] sm:$0xf] %v1342
        %1344 = vst.msk [vmem:[%s1293 + $0x4c] sm:$0xf] %vm818, %v1090
        %v1345 = vld [vmem:[%s1293 + $0x50] sm:$0x1]
        %v1346 = vsel %vm1302, %v1091, %v1345
        %1347 = vst [vmem:[%s1293 + $0x50] sm:$0x1] %v1346
        %v1348 = vld [vmem:[%s1293 + $0x54] sm:$0xf]
        %v1349 = vsel %vm1296, %v1098, %v1348
        %1350 = vst [vmem:[%s1293 + $0x54] sm:$0xf] %v1349
        %1351 = vst.msk [vmem:[%s1293 + $0x58] sm:$0xf] %vm818, %v1107
        %v1352 = vld [vmem:[%s1293 + $0x5c] sm:$0x1]
        %v1353 = vsel %vm1302, %v1108, %v1352
        %1354 = vst [vmem:[%s1293 + $0x5c] sm:$0x1] %v1353
        %v1355 = vld [vmem:[%s1293 + $0x60] sm:$0xf]
        %v1356 = vsel %vm1296, %v1115, %v1355
        %1357 = vst [vmem:[%s1293 + $0x60] sm:$0xf] %v1356
        %1358 = vst.msk [vmem:[%s1293 + $0x64] sm:$0xf] %vm818, %v1124
        %v1359 = vld [vmem:[%s1293 + $0x68] sm:$0x1]
        %v1360 = vsel %vm1302, %v1125, %v1359
        %1361 = vst [vmem:[%s1293 + $0x68] sm:$0x1] %v1360
        %v1362 = vld [vmem:[%s1293 + $0x6c] sm:$0xf]
        %v1363 = vsel %vm1296, %v1132, %v1362
        %1364 = vst [vmem:[%s1293 + $0x6c] sm:$0xf] %v1363
        %1365 = vst.msk [vmem:[%s1293 + $0x70] sm:$0xf] %vm818, %v1141
        %v1366 = vld [vmem:[%s1293 + $0x74] sm:$0x1]
        %v1367 = vsel %vm1302, %v1142, %v1366
        %1368 = vst [vmem:[%s1293 + $0x74] sm:$0x1] %v1367
        %v1369 = vld [vmem:[%s1293 + $0x78] sm:$0xf]
        %v1370 = vsel %vm1296, %v1149, %v1369
        %1371 = vst [vmem:[%s1293 + $0x78] sm:$0xf] %v1370
        %1372 = vst.msk [vmem:[%s1293 + $0x7c] sm:$0xf] %vm818, %v1158
        %v1373 = vld [vmem:[%s1293 + $0x80] sm:$0x1]
        %v1374 = vsel %vm1302, %v1159, %v1373
        %1375 = vst [vmem:[%s1293 + $0x80] sm:$0x1] %v1374
        %v1376 = vld [vmem:[%s1293 + $0x84] sm:$0xf]
        %v1377 = vsel %vm1296, %v1166, %v1376
        %1378 = vst [vmem:[%s1293 + $0x84] sm:$0xf] %v1377
        %1379 = vst.msk [vmem:[%s1293 + $0x88] sm:$0xf] %vm818, %v1175
        %v1380 = vld [vmem:[%s1293 + $0x8c] sm:$0x1]
        %v1381 = vsel %vm1302, %v1176, %v1380
        %1382 = vst [vmem:[%s1293 + $0x8c] sm:$0x1] %v1381
        %v1383 = vld [vmem:[%s1293 + $0x90] sm:$0xf]
        %v1384 = vsel %vm1296, %v1183, %v1383
        %1385 = vst [vmem:[%s1293 + $0x90] sm:$0xf] %v1384
        %1386 = vst.msk [vmem:[%s1293 + $0x94] sm:$0xf] %vm818, %v1192
        %v1387 = vld [vmem:[%s1293 + $0x98] sm:$0x1]
        %v1388 = vsel %vm1302, %v1193, %v1387
        %1389 = vst [vmem:[%s1293 + $0x98] sm:$0x1] %v1388
        %v1390 = vld [vmem:[%s1293 + $0x9c] sm:$0xf]
        %v1391 = vsel %vm1296, %v1200, %v1390
        %1392 = vst [vmem:[%s1293 + $0x9c] sm:$0xf] %v1391
        %1393 = vst.msk [vmem:[%s1293 + $0xa0] sm:$0xf] %vm818, %v1209
        %v1394 = vld [vmem:[%s1293 + $0xa4] sm:$0x1]
        %v1395 = vsel %vm1302, %v1210, %v1394
        %1396 = vst [vmem:[%s1293 + $0xa4] sm:$0x1] %v1395
        %v1397 = vld [vmem:[%s1293 + $0xa8] sm:$0xf]
        %v1398 = vsel %vm1296, %v1217, %v1397
        %1399 = vst [vmem:[%s1293 + $0xa8] sm:$0xf] %v1398
        %1400 = vst.msk [vmem:[%s1293 + $0xac] sm:$0xf] %vm818, %v1226
        %v1401 = vld [vmem:[%s1293 + $0xb0] sm:$0x1]
        %v1402 = vsel %vm1302, %v1227, %v1401
        %1403 = vst [vmem:[%s1293 + $0xb0] sm:$0x1] %v1402
        %v1404 = vld [vmem:[%s1293 + $0xb4] sm:$0xf]
        %v1405 = vsel %vm1296, %v1234, %v1404
        %1406 = vst [vmem:[%s1293 + $0xb4] sm:$0xf] %v1405
        %1407 = vst.msk [vmem:[%s1293 + $0xb8] sm:$0xf] %vm818, %v1243
        %v1408 = vld [vmem:[%s1293 + $0xbc] sm:$0x1]
        %v1409 = vsel %vm1302, %v1244, %v1408
        %1410 = vst [vmem:[%s1293 + $0xbc] sm:$0x1] %v1409
        %v1411 = vld [vmem:[#allocation2] sm:$0xf]
        %v1412 = vld [vmem:[#allocation2 + $0x4] sm:$0xf]
        %v1413 = vld [vmem:[#allocation2 + $0xc] sm:$0xf]
        %v1414 = vld [vmem:[#allocation2 + $0x10] sm:$0xf]
        %v1415 = vld [vmem:[#allocation2 + $0x18] sm:$0xf]
        %v1416 = vld [vmem:[#allocation2 + $0x1c] sm:$0xf]
        %v1417 = vld [vmem:[#allocation2 + $0x24] sm:$0xf]
        %v1418 = vld [vmem:[#allocation2 + $0x28] sm:$0xf]
        %v1419 = vld [vmem:[#allocation2 + $0x30] sm:$0xf]
        %v1420 = vld [vmem:[#allocation2 + $0x34] sm:$0xf]
        %v1421 = vld [vmem:[#allocation2 + $0x3c] sm:$0xf]
        %v1422 = vld [vmem:[#allocation2 + $0x40] sm:$0xf]
        %v1423 = vld [vmem:[#allocation2 + $0x48] sm:$0xf]
        %v1424 = vld [vmem:[#allocation2 + $0x4c] sm:$0xf]
        %v1425 = vld [vmem:[#allocation2 + $0x54] sm:$0xf]
        %v1426 = vld [vmem:[#allocation2 + $0x58] sm:$0xf]
        %v1427 = vld [vmem:[#allocation2 + $0x60] sm:$0xf]
        %v1428 = vld [vmem:[#allocation2 + $0x64] sm:$0xf]
        %v1429 = vld [vmem:[#allocation2 + $0x6c] sm:$0xf]
        %v1430 = vld [vmem:[#allocation2 + $0x70] sm:$0xf]
        %v1431 = vld [vmem:[#allocation2 + $0x78] sm:$0xf]
        %v1432 = vld [vmem:[#allocation2 + $0x7c] sm:$0xf]
        %v1433 = vld [vmem:[#allocation2 + $0x84] sm:$0xf]
        %v1434 = vld [vmem:[#allocation2 + $0x88] sm:$0xf]
        %v1435 = vld [vmem:[#allocation2 + $0x90] sm:$0xf]
        %v1436 = vld [vmem:[#allocation2 + $0x94] sm:$0xf]
        %v1437 = vld [vmem:[#allocation2 + $0x9c] sm:$0xf]
        %v1438 = vld [vmem:[#allocation2 + $0xa0] sm:$0xf]
        %v1439 = vld [vmem:[#allocation2 + $0xa8] sm:$0xf]
        %v1440 = vld [vmem:[#allocation2 + $0xac] sm:$0xf]
        %v1441 = vld [vmem:[#allocation2 + $0xb4] sm:$0xf]
        %v1442 = vld [vmem:[#allocation2 + $0xb8] sm:$0xf]
        %v1443 = vld [vmem:[#allocation2 + $0x8] sm:$0x1]
        %v1444 = vld [vmem:[#allocation2 + $0x14] sm:$0x1]
        %v1445 = vld [vmem:[#allocation2 + $0x20] sm:$0x1]
        %v1446 = vld [vmem:[#allocation2 + $0x2c] sm:$0x1]
        %v1447 = vld [vmem:[#allocation2 + $0x38] sm:$0x1]
        %v1448 = vld [vmem:[#allocation2 + $0x44] sm:$0x1]
        %v1449 = vld [vmem:[#allocation2 + $0x50] sm:$0x1]
        %v1450 = vld [vmem:[#allocation2 + $0x5c] sm:$0x1]
        %v1451 = vld [vmem:[#allocation2 + $0x68] sm:$0x1]
        %v1452 = vld [vmem:[#allocation2 + $0x74] sm:$0x1]
        %v1453 = vld [vmem:[#allocation2 + $0x80] sm:$0x1]
        %v1454 = vld [vmem:[#allocation2 + $0x8c] sm:$0x1]
        %v1455 = vld [vmem:[#allocation2 + $0x98] sm:$0x1]
        %v1456 = vld [vmem:[#allocation2 + $0xa4] sm:$0x1]
        %v1457 = vld [vmem:[#allocation2 + $0xb0] sm:$0x1]
        %v1458 = vld [vmem:[#allocation2 + $0xbc] sm:$0x1]
        %vm1459 = vsmask.f32 3328
        %vm1460 = vsmask.f32 7440
        %vm1461 = vmor %vm1459, %vm1460
        %v1463 = vshrl.u32 %v1411, 16
        %v1465 = vrot.slane %v1463, 4
        %v1466 = vshll.u32 %v1411, 16
        %v1468 = vrot.slane %v1466, 5
        %v1469 = vor.u32 %v1465, %v1468
        %v1470 = vrot.slane %v1469, 4
        %v1472 = vshll.u32 %v1412, 16
        %v1474 = vrot.slane %v1472, 5
        %v1475 = vsel %vm1461, %v1470, %v1474
        %v1476 = vshrl.u32 %v1412, 16
        %v1478 = vrot.slane %v1476, 4
        %v1479 = vor.u32 %v1478, %v1474
        %v1480 = vrot.slane %v1479, 4
        %v1482 = vshll.u32 %v1443, 16
        %v1484 = vrot.slane %v1482, 5
        %v1485 = vsel %vm1461, %v1480, %v1484
        %v1487 = vshrl.u32 %v1413, 16
        %v1489 = vrot.slane %v1487, 4
        %v1490 = vshll.u32 %v1413, 16
        %v1492 = vrot.slane %v1490, 5
        %v1493 = vor.u32 %v1489, %v1492
        %v1494 = vrot.slane %v1493, 4
        %v1496 = vshll.u32 %v1414, 16
        %v1498 = vrot.slane %v1496, 5
        %v1499 = vsel %vm1461, %v1494, %v1498
        %v1500 = vshrl.u32 %v1414, 16
        %v1502 = vrot.slane %v1500, 4
        %v1503 = vor.u32 %v1502, %v1498
        %v1504 = vrot.slane %v1503, 4
        %v1506 = vshll.u32 %v1444, 16
        %v1508 = vrot.slane %v1506, 5
        %v1509 = vsel %vm1461, %v1504, %v1508
        %v1511 = vshrl.u32 %v1415, 16
        %v1513 = vrot.slane %v1511, 4
        %v1514 = vshll.u32 %v1415, 16
        %v1516 = vrot.slane %v1514, 5
        %v1517 = vor.u32 %v1513, %v1516
        %v1518 = vrot.slane %v1517, 4
        %v1520 = vshll.u32 %v1416, 16
        %v1522 = vrot.slane %v1520, 5
        %v1523 = vsel %vm1461, %v1518, %v1522
        %v1524 = vshrl.u32 %v1416, 16
        %v1526 = vrot.slane %v1524, 4
        %v1527 = vor.u32 %v1526, %v1522
        %v1528 = vrot.slane %v1527, 4
        %v1530 = vshll.u32 %v1445, 16
        %v1532 = vrot.slane %v1530, 5
        %v1533 = vsel %vm1461, %v1528, %v1532
        %v1535 = vshrl.u32 %v1417, 16
        %v1537 = vrot.slane %v1535, 4
        %v1538 = vshll.u32 %v1417, 16
        %v1540 = vrot.slane %v1538, 5
        %v1541 = vor.u32 %v1537, %v1540
        %v1542 = vrot.slane %v1541, 4
        %v1544 = vshll.u32 %v1418, 16
        %v1546 = vrot.slane %v1544, 5
        %v1547 = vsel %vm1461, %v1542, %v1546
        %v1548 = vshrl.u32 %v1418, 16
        %v1550 = vrot.slane %v1548, 4
        %v1551 = vor.u32 %v1550, %v1546
        %v1552 = vrot.slane %v1551, 4
        %v1554 = vshll.u32 %v1446, 16
        %v1556 = vrot.slane %v1554, 5
        %v1557 = vsel %vm1461, %v1552, %v1556
        %v1559 = vshrl.u32 %v1419, 16
        %v1561 = vrot.slane %v1559, 4
        %v1562 = vshll.u32 %v1419, 16
        %v1564 = vrot.slane %v1562, 5
        %v1565 = vor.u32 %v1561, %v1564
        %v1566 = vrot.slane %v1565, 4
        %v1568 = vshll.u32 %v1420, 16
        %v1570 = vrot.slane %v1568, 5
        %v1571 = vsel %vm1461, %v1566, %v1570
        %v1572 = vshrl.u32 %v1420, 16
        %v1574 = vrot.slane %v1572, 4
        %v1575 = vor.u32 %v1574, %v1570
        %v1576 = vrot.slane %v1575, 4
        %v1578 = vshll.u32 %v1447, 16
        %v1580 = vrot.slane %v1578, 5
        %v1581 = vsel %vm1461, %v1576, %v1580
        %v1583 = vshrl.u32 %v1421, 16
        %v1585 = vrot.slane %v1583, 4
        %v1586 = vshll.u32 %v1421, 16
        %v1588 = vrot.slane %v1586, 5
        %v1589 = vor.u32 %v1585, %v1588
        %v1590 = vrot.slane %v1589, 4
        %v1592 = vshll.u32 %v1422, 16
        %v1594 = vrot.slane %v1592, 5
        %v1595 = vsel %vm1461, %v1590, %v1594
        %v1596 = vshrl.u32 %v1422, 16
        %v1598 = vrot.slane %v1596, 4
        %v1599 = vor.u32 %v1598, %v1594
        %v1600 = vrot.slane %v1599, 4
        %v1602 = vshll.u32 %v1448, 16
        %v1604 = vrot.slane %v1602, 5
        %v1605 = vsel %vm1461, %v1600, %v1604
        %v1607 = vshrl.u32 %v1423, 16
        %v1609 = vrot.slane %v1607, 4
        %v1610 = vshll.u32 %v1423, 16
        %v1612 = vrot.slane %v1610, 5
        %v1613 = vor.u32 %v1609, %v1612
        %v1614 = vrot.slane %v1613, 4
        %v1616 = vshll.u32 %v1424, 16
        %v1618 = vrot.slane %v1616, 5
        %v1619 = vsel %vm1461, %v1614, %v1618
        %v1620 = vshrl.u32 %v1424, 16
        %v1622 = vrot.slane %v1620, 4
        %v1623 = vor.u32 %v1622, %v1618
        %v1624 = vrot.slane %v1623, 4
        %v1626 = vshll.u32 %v1449, 16
        %v1628 = vrot.slane %v1626, 5
        %v1629 = vsel %vm1461, %v1624, %v1628
        %v1631 = vshrl.u32 %v1425, 16
        %v1633 = vrot.slane %v1631, 4
        %v1634 = vshll.u32 %v1425, 16
        %v1636 = vrot.slane %v1634, 5
        %v1637 = vor.u32 %v1633, %v1636
        %v1638 = vrot.slane %v1637, 4
        %v1640 = vshll.u32 %v1426, 16
        %v1642 = vrot.slane %v1640, 5
        %v1643 = vsel %vm1461, %v1638, %v1642
        %v1644 = vshrl.u32 %v1426, 16
        %v1646 = vrot.slane %v1644, 4
        %v1647 = vor.u32 %v1646, %v1642
        %v1648 = vrot.slane %v1647, 4
        %v1650 = vshll.u32 %v1450, 16
        %v1652 = vrot.slane %v1650, 5
        %v1653 = vsel %vm1461, %v1648, %v1652
        %v1655 = vshrl.u32 %v1427, 16
        %v1657 = vrot.slane %v1655, 4
        %v1658 = vshll.u32 %v1427, 16
        %v1660 = vrot.slane %v1658, 5
        %v1661 = vor.u32 %v1657, %v1660
        %v1662 = vrot.slane %v1661, 4
        %v1664 = vshll.u32 %v1428, 16
        %v1666 = vrot.slane %v1664, 5
        %v1667 = vsel %vm1461, %v1662, %v1666
        %v1668 = vshrl.u32 %v1428, 16
        %v1670 = vrot.slane %v1668, 4
        %v1671 = vor.u32 %v1670, %v1666
        %v1672 = vrot.slane %v1671, 4
        %v1674 = vshll.u32 %v1451, 16
        %v1676 = vrot.slane %v1674, 5
        %v1677 = vsel %vm1461, %v1672, %v1676
        %v1679 = vshrl.u32 %v1429, 16
        %v1681 = vrot.slane %v1679, 4
        %v1682 = vshll.u32 %v1429, 16
        %v1684 = vrot.slane %v1682, 5
        %v1685 = vor.u32 %v1681, %v1684
        %v1686 = vrot.slane %v1685, 4
        %v1688 = vshll.u32 %v1430, 16
        %v1690 = vrot.slane %v1688, 5
        %v1691 = vsel %vm1461, %v1686, %v1690
        %v1692 = vshrl.u32 %v1430, 16
        %v1694 = vrot.slane %v1692, 4
        %v1695 = vor.u32 %v1694, %v1690
        %v1696 = vrot.slane %v1695, 4
        %v1698 = vshll.u32 %v1452, 16
        %v1700 = vrot.slane %v1698, 5
        %v1701 = vsel %vm1461, %v1696, %v1700
        %v1703 = vshrl.u32 %v1431, 16
        %v1705 = vrot.slane %v1703, 4
        %v1706 = vshll.u32 %v1431, 16
        %v1708 = vrot.slane %v1706, 5
        %v1709 = vor.u32 %v1705, %v1708
        %v1710 = vrot.slane %v1709, 4
        %v1712 = vshll.u32 %v1432, 16
        %v1714 = vrot.slane %v1712, 5
        %v1715 = vsel %vm1461, %v1710, %v1714
        %v1716 = vshrl.u32 %v1432, 16
        %v1718 = vrot.slane %v1716, 4
        %v1719 = vor.u32 %v1718, %v1714
        %v1720 = vrot.slane %v1719, 4
        %v1722 = vshll.u32 %v1453, 16
        %v1724 = vrot.slane %v1722, 5
        %v1725 = vsel %vm1461, %v1720, %v1724
        %v1727 = vshrl.u32 %v1433, 16
        %v1729 = vrot.slane %v1727, 4
        %v1730 = vshll.u32 %v1433, 16
        %v1732 = vrot.slane %v1730, 5
        %v1733 = vor.u32 %v1729, %v1732
        %v1734 = vrot.slane %v1733, 4
        %v1736 = vshll.u32 %v1434, 16
        %v1738 = vrot.slane %v1736, 5
        %v1739 = vsel %vm1461, %v1734, %v1738
        %v1740 = vshrl.u32 %v1434, 16
        %v1742 = vrot.slane %v1740, 4
        %v1743 = vor.u32 %v1742, %v1738
        %v1744 = vrot.slane %v1743, 4
        %v1746 = vshll.u32 %v1454, 16
        %v1748 = vrot.slane %v1746, 5
        %v1749 = vsel %vm1461, %v1744, %v1748
        %v1751 = vshrl.u32 %v1435, 16
        %v1753 = vrot.slane %v1751, 4
        %v1754 = vshll.u32 %v1435, 16
        %v1756 = vrot.slane %v1754, 5
        %v1757 = vor.u32 %v1753, %v1756
        %v1758 = vrot.slane %v1757, 4
        %v1760 = vshll.u32 %v1436, 16
        %v1762 = vrot.slane %v1760, 5
        %v1763 = vsel %vm1461, %v1758, %v1762
        %v1764 = vshrl.u32 %v1436, 16
        %v1766 = vrot.slane %v1764, 4
        %v1767 = vor.u32 %v1766, %v1762
        %v1768 = vrot.slane %v1767, 4
        %v1770 = vshll.u32 %v1455, 16
        %v1772 = vrot.slane %v1770, 5
        %v1773 = vsel %vm1461, %v1768, %v1772
        %v1775 = vshrl.u32 %v1437, 16
        %v1777 = vrot.slane %v1775, 4
        %v1778 = vshll.u32 %v1437, 16
        %v1780 = vrot.slane %v1778, 5
        %v1781 = vor.u32 %v1777, %v1780
        %v1782 = vrot.slane %v1781, 4
        %v1784 = vshll.u32 %v1438, 16
        %v1786 = vrot.slane %v1784, 5
        %v1787 = vsel %vm1461, %v1782, %v1786
        %v1788 = vshrl.u32 %v1438, 16
        %v1790 = vrot.slane %v1788, 4
        %v1791 = vor.u32 %v1790, %v1786
        %v1792 = vrot.slane %v1791, 4
        %v1794 = vshll.u32 %v1456, 16
        %v1796 = vrot.slane %v1794, 5
        %v1797 = vsel %vm1461, %v1792, %v1796
        %v1799 = vshrl.u32 %v1439, 16
        %v1801 = vrot.slane %v1799, 4
        %v1802 = vshll.u32 %v1439, 16
        %v1804 = vrot.slane %v1802, 5
        %v1805 = vor.u32 %v1801, %v1804
        %v1806 = vrot.slane %v1805, 4
        %v1808 = vshll.u32 %v1440, 16
        %v1810 = vrot.slane %v1808, 5
        %v1811 = vsel %vm1461, %v1806, %v1810
        %v1812 = vshrl.u32 %v1440, 16
        %v1814 = vrot.slane %v1812, 4
        %v1815 = vor.u32 %v1814, %v1810
        %v1816 = vrot.slane %v1815, 4
        %v1818 = vshll.u32 %v1457, 16
        %v1820 = vrot.slane %v1818, 5
        %v1821 = vsel %vm1461, %v1816, %v1820
        %v1823 = vshrl.u32 %v1441, 16
        %v1825 = vrot.slane %v1823, 4
        %v1826 = vshll.u32 %v1441, 16
        %v1828 = vrot.slane %v1826, 5
        %v1829 = vor.u32 %v1825, %v1828
        %v1830 = vrot.slane %v1829, 4
        %v1832 = vshll.u32 %v1442, 16
        %v1834 = vrot.slane %v1832, 5
        %v1835 = vsel %vm1461, %v1830, %v1834
        %v1836 = vshrl.u32 %v1442, 16
        %v1838 = vrot.slane %v1836, 4
        %v1839 = vor.u32 %v1838, %v1834
        %v1840 = vrot.slane %v1839, 4
        %v1842 = vshll.u32 %v1458, 16
        %v1844 = vrot.slane %v1842, 5
        %v1845 = vsel %vm1461, %v1840, %v1844
        %v1846 = vld [vmem:[#allocation2] sm:$0xe]
        %v1847 = vld [vmem:[#allocation2 + $0xc] sm:$0xe]
        %v1848 = vld [vmem:[#allocation2 + $0x18] sm:$0xe]
        %v1849 = vld [vmem:[#allocation2 + $0x24] sm:$0xe]
        %v1850 = vld [vmem:[#allocation2 + $0x30] sm:$0xe]
        %v1851 = vld [vmem:[#allocation2 + $0x3c] sm:$0xe]
        %v1852 = vld [vmem:[#allocation2 + $0x48] sm:$0xe]
        %v1853 = vld [vmem:[#allocation2 + $0x54] sm:$0xe]
        %v1854 = vld [vmem:[#allocation2 + $0x60] sm:$0xe]
        %v1855 = vld [vmem:[#allocation2 + $0x6c] sm:$0xe]
        %v1856 = vld [vmem:[#allocation2 + $0x78] sm:$0xe]
        %v1857 = vld [vmem:[#allocation2 + $0x84] sm:$0xe]
        %v1858 = vld [vmem:[#allocation2 + $0x90] sm:$0xe]
        %v1859 = vld [vmem:[#allocation2 + $0x9c] sm:$0xe]
        %v1860 = vld [vmem:[#allocation2 + $0xa8] sm:$0xe]
        %v1861 = vld [vmem:[#allocation2 + $0xb4] sm:$0xe]
        %vm1910 = vcmask 1042432
        %vm1911 = vcmask 1046532
        %vm1912 = vmor %vm1910, %vm1911
        %v1913 = vrot.slane %v1846, 5
        %v1914 = vrot.slane %v1913, 4
        %v1915 = vrot.slane %v1412, 5
        %v1916 = vsel %vm1912, %v1914, %v1915
        %v1917 = vrot.slane %v1915, 4
        %v1918 = vrot.slane %v1443, 5
        %v1919 = vsel %vm1912, %v1917, %v1918
        %v1920 = vrot.slane %v1847, 5
        %v1921 = vrot.slane %v1920, 4
        %v1922 = vrot.slane %v1414, 5
        %v1923 = vsel %vm1912, %v1921, %v1922
        %v1924 = vrot.slane %v1922, 4
        %v1925 = vrot.slane %v1444, 5
        %v1926 = vsel %vm1912, %v1924, %v1925
        %v1927 = vrot.slane %v1848, 5
        %v1928 = vrot.slane %v1927, 4
        %v1929 = vrot.slane %v1416, 5
        %v1930 = vsel %vm1912, %v1928, %v1929
        %v1931 = vrot.slane %v1929, 4
        %v1932 = vrot.slane %v1445, 5
        %v1933 = vsel %vm1912, %v1931, %v1932
        %v1934 = vrot.slane %v1849, 5
        %v1935 = vrot.slane %v1934, 4
        %v1936 = vrot.slane %v1418, 5
        %v1937 = vsel %vm1912, %v1935, %v1936
        %v1938 = vrot.slane %v1936, 4
        %v1939 = vrot.slane %v1446, 5
        %v1940 = vsel %vm1912, %v1938, %v1939
        %v1941 = vrot.slane %v1850, 5
        %v1942 = vrot.slane %v1941, 4
        %v1943 = vrot.slane %v1420, 5
        %v1944 = vsel %vm1912, %v1942, %v1943
        %v1945 = vrot.slane %v1943, 4
        %v1946 = vrot.slane %v1447, 5
        %v1947 = vsel %vm1912, %v1945, %v1946
        %v1948 = vrot.slane %v1851, 5
        %v1949 = vrot.slane %v1948, 4
        %v1950 = vrot.slane %v1422, 5
        %v1951 = vsel %vm1912, %v1949, %v1950
        %v1952 = vrot.slane %v1950, 4
        %v1953 = vrot.slane %v1448, 5
        %v1954 = vsel %vm1912, %v1952, %v1953
        %v1955 = vrot.slane %v1852, 5
        %v1956 = vrot.slane %v1955, 4
        %v1957 = vrot.slane %v1424, 5
        %v1958 = vsel %vm1912, %v1956, %v1957
        %v1959 = vrot.slane %v1957, 4
        %v1960 = vrot.slane %v1449, 5
        %v1961 = vsel %vm1912, %v1959, %v1960
        %v1962 = vrot.slane %v1853, 5
        %v1963 = vrot.slane %v1962, 4
        %v1964 = vrot.slane %v1426, 5
        %v1965 = vsel %vm1912, %v1963, %v1964
        %v1966 = vrot.slane %v1964, 4
        %v1967 = vrot.slane %v1450, 5
        %v1968 = vsel %vm1912, %v1966, %v1967
        %v1969 = vrot.slane %v1854, 5
        %v1970 = vrot.slane %v1969, 4
        %v1971 = vrot.slane %v1428, 5
        %v1972 = vsel %vm1912, %v1970, %v1971
        %v1973 = vrot.slane %v1971, 4
        %v1974 = vrot.slane %v1451, 5
        %v1975 = vsel %vm1912, %v1973, %v1974
        %v1976 = vrot.slane %v1855, 5
        %v1977 = vrot.slane %v1976, 4
        %v1978 = vrot.slane %v1430, 5
        %v1979 = vsel %vm1912, %v1977, %v1978
        %v1980 = vrot.slane %v1978, 4
        %v1981 = vrot.slane %v1452, 5
        %v1982 = vsel %vm1912, %v1980, %v1981
        %v1983 = vrot.slane %v1856, 5
        %v1984 = vrot.slane %v1983, 4
        %v1985 = vrot.slane %v1432, 5
        %v1986 = vsel %vm1912, %v1984, %v1985
        %v1987 = vrot.slane %v1985, 4
        %v1988 = vrot.slane %v1453, 5
        %v1989 = vsel %vm1912, %v1987, %v1988
        %v1990 = vrot.slane %v1857, 5
        %v1991 = vrot.slane %v1990, 4
        %v1992 = vrot.slane %v1434, 5
        %v1993 = vsel %vm1912, %v1991, %v1992
        %v1994 = vrot.slane %v1992, 4
        %v1995 = vrot.slane %v1454, 5
        %v1996 = vsel %vm1912, %v1994, %v1995
        %v1997 = vrot.slane %v1858, 5
        %v1998 = vrot.slane %v1997, 4
        %v1999 = vrot.slane %v1436, 5
        %v2000 = vsel %vm1912, %v1998, %v1999
        %v2001 = vrot.slane %v1999, 4
        %v2002 = vrot.slane %v1455, 5
        %v2003 = vsel %vm1912, %v2001, %v2002
        %v2004 = vrot.slane %v1859, 5
        %v2005 = vrot.slane %v2004, 4
        %v2006 = vrot.slane %v1438, 5
        %v2007 = vsel %vm1912, %v2005, %v2006
        %v2008 = vrot.slane %v2006, 4
        %v2009 = vrot.slane %v1456, 5
        %v2010 = vsel %vm1912, %v2008, %v2009
        %v2011 = vrot.slane %v1860, 5
        %v2012 = vrot.slane %v2011, 4
        %v2013 = vrot.slane %v1440, 5
        %v2014 = vsel %vm1912, %v2012, %v2013
        %v2015 = vrot.slane %v2013, 4
        %v2016 = vrot.slane %v1457, 5
        %v2017 = vsel %vm1912, %v2015, %v2016
        %v2018 = vrot.slane %v1861, 5
        %v2019 = vrot.slane %v2018, 4
        %v2020 = vrot.slane %v1442, 5
        %v2021 = vsel %vm1912, %v2019, %v2020
        %v2022 = vrot.slane %v2020, 4
        %v2023 = vrot.slane %v1458, 5
        %v2024 = vsel %vm1912, %v2022, %v2023
        %v2025 = vld [vmem:[%s1293] sm:$0xf]
        %v2026 = vld [vmem:[%s1293 + $0x4] sm:$0xf]
        %v2027 = vld [vmem:[%s1293 + $0xc] sm:$0xf]
        %v2028 = vld [vmem:[%s1293 + $0x10] sm:$0xf]
        %v2029 = vld [vmem:[%s1293 + $0x18] sm:$0xf]
        %v2030 = vld [vmem:[%s1293 + $0x1c] sm:$0xf]
        %v2031 = vld [vmem:[%s1293 + $0x24] sm:$0xf]
        %v2032 = vld [vmem:[%s1293 + $0x28] sm:$0xf]
        %v2033 = vld [vmem:[%s1293 + $0x30] sm:$0xf]
        %v2034 = vld [vmem:[%s1293 + $0x34] sm:$0xf]
        %v2035 = vld [vmem:[%s1293 + $0x3c] sm:$0xf]
        %v2036 = vld [vmem:[%s1293 + $0x40] sm:$0xf]
        %v2037 = vld [vmem:[%s1293 + $0x48] sm:$0xf]
        %v2038 = vld [vmem:[%s1293 + $0x4c] sm:$0xf]
        %v2039 = vld [vmem:[%s1293 + $0x54] sm:$0xf]
        %v2040 = vld [vmem:[%s1293 + $0x58] sm:$0xf]
        %v2041 = vld [vmem:[%s1293 + $0x60] sm:$0xf]
        %v2042 = vld [vmem:[%s1293 + $0x64] sm:$0xf]
        %v2043 = vld [vmem:[%s1293 + $0x6c] sm:$0xf]
        %v2044 = vld [vmem:[%s1293 + $0x70] sm:$0xf]
        %v2045 = vld [vmem:[%s1293 + $0x78] sm:$0xf]
        %v2046 = vld [vmem:[%s1293 + $0x7c] sm:$0xf]
        %v2047 = vld [vmem:[%s1293 + $0x84] sm:$0xf]
        %v2048 = vld [vmem:[%s1293 + $0x88] sm:$0xf]
        %v2049 = vld [vmem:[%s1293 + $0x90] sm:$0xf]
        %v2050 = vld [vmem:[%s1293 + $0x94] sm:$0xf]
        %v2051 = vld [vmem:[%s1293 + $0x9c] sm:$0xf]
        %v2052 = vld [vmem:[%s1293 + $0xa0] sm:$0xf]
        %v2053 = vld [vmem:[%s1293 + $0xa8] sm:$0xf]
        %v2054 = vld [vmem:[%s1293 + $0xac] sm:$0xf]
        %v2055 = vld [vmem:[%s1293 + $0xb4] sm:$0xf]
        %v2056 = vld [vmem:[%s1293 + $0xb8] sm:$0xf]
        %v2057 = vld [vmem:[%s1293 + $0x8] sm:$0x1]
        %v2058 = vld [vmem:[%s1293 + $0x14] sm:$0x1]
        %v2059 = vld [vmem:[%s1293 + $0x20] sm:$0x1]
        %v2060 = vld [vmem:[%s1293 + $0x2c] sm:$0x1]
        %v2061 = vld [vmem:[%s1293 + $0x38] sm:$0x1]
        %v2062 = vld [vmem:[%s1293 + $0x44] sm:$0x1]
        %v2063 = vld [vmem:[%s1293 + $0x50] sm:$0x1]
        %v2064 = vld [vmem:[%s1293 + $0x5c] sm:$0x1]
        %v2065 = vld [vmem:[%s1293 + $0x68] sm:$0x1]
        %v2066 = vld [vmem:[%s1293 + $0x74] sm:$0x1]
        %v2067 = vld [vmem:[%s1293 + $0x80] sm:$0x1]
        %v2068 = vld [vmem:[%s1293 + $0x8c] sm:$0x1]
        %v2069 = vld [vmem:[%s1293 + $0x98] sm:$0x1]
        %v2070 = vld [vmem:[%s1293 + $0xa4] sm:$0x1]
        %v2071 = vld [vmem:[%s1293 + $0xb0] sm:$0x1]
        %v2072 = vld [vmem:[%s1293 + $0xbc] sm:$0x1]
        %v2074 = vshrl.u32 %v2025, 16
        %v2076 = vrot.slane %v2074, 4
        %v2077 = vshll.u32 %v2025, 16
        %v2079 = vrot.slane %v2077, 5
        %v2080 = vor.u32 %v2076, %v2079
        %v2081 = vrot.slane %v2080, 4
        %v2083 = vshll.u32 %v2026, 16
        %v2085 = vrot.slane %v2083, 5
        %v2086 = vsel %vm1461, %v2081, %v2085
        %v2087 = vshrl.u32 %v2026, 16
        %v2089 = vrot.slane %v2087, 4
        %v2090 = vor.u32 %v2089, %v2085
        %v2091 = vrot.slane %v2090, 4
        %v2093 = vshll.u32 %v2057, 16
        %v2095 = vrot.slane %v2093, 5
        %v2096 = vsel %vm1461, %v2091, %v2095
        %v2098 = vshrl.u32 %v2027, 16
        %v2100 = vrot.slane %v2098, 4
        %v2101 = vshll.u32 %v2027, 16
        %v2103 = vrot.slane %v2101, 5
        %v2104 = vor.u32 %v2100, %v2103
        %v2105 = vrot.slane %v2104, 4
        %v2107 = vshll.u32 %v2028, 16
        %v2109 = vrot.slane %v2107, 5
        %v2110 = vsel %vm1461, %v2105, %v2109
        %v2111 = vshrl.u32 %v2028, 16
        %v2113 = vrot.slane %v2111, 4
        %v2114 = vor.u32 %v2113, %v2109
        %v2115 = vrot.slane %v2114, 4
        %v2117 = vshll.u32 %v2058, 16
        %v2119 = vrot.slane %v2117, 5
        %v2120 = vsel %vm1461, %v2115, %v2119
        %v2122 = vshrl.u32 %v2029, 16
        %v2124 = vrot.slane %v2122, 4
        %v2125 = vshll.u32 %v2029, 16
        %v2127 = vrot.slane %v2125, 5
        %v2128 = vor.u32 %v2124, %v2127
        %v2129 = vrot.slane %v2128, 4
        %v2131 = vshll.u32 %v2030, 16
        %v2133 = vrot.slane %v2131, 5
        %v2134 = vsel %vm1461, %v2129, %v2133
        %v2135 = vshrl.u32 %v2030, 16
        %v2137 = vrot.slane %v2135, 4
        %v2138 = vor.u32 %v2137, %v2133
        %v2139 = vrot.slane %v2138, 4
        %v2141 = vshll.u32 %v2059, 16
        %v2143 = vrot.slane %v2141, 5
        %v2144 = vsel %vm1461, %v2139, %v2143
        %v2146 = vshrl.u32 %v2031, 16
        %v2148 = vrot.slane %v2146, 4
        %v2149 = vshll.u32 %v2031, 16
        %v2151 = vrot.slane %v2149, 5
        %v2152 = vor.u32 %v2148, %v2151
        %v2153 = vrot.slane %v2152, 4
        %v2155 = vshll.u32 %v2032, 16
        %v2157 = vrot.slane %v2155, 5
        %v2158 = vsel %vm1461, %v2153, %v2157
        %v2159 = vshrl.u32 %v2032, 16
        %v2161 = vrot.slane %v2159, 4
        %v2162 = vor.u32 %v2161, %v2157
        %v2163 = vrot.slane %v2162, 4
        %v2165 = vshll.u32 %v2060, 16
        %v2167 = vrot.slane %v2165, 5
        %v2168 = vsel %vm1461, %v2163, %v2167
        %v2170 = vshrl.u32 %v2033, 16
        %v2172 = vrot.slane %v2170, 4
        %v2173 = vshll.u32 %v2033, 16
        %v2175 = vrot.slane %v2173, 5
        %v2176 = vor.u32 %v2172, %v2175
        %v2177 = vrot.slane %v2176, 4
        %v2179 = vshll.u32 %v2034, 16
        %v2181 = vrot.slane %v2179, 5
        %v2182 = vsel %vm1461, %v2177, %v2181
        %v2183 = vshrl.u32 %v2034, 16
        %v2185 = vrot.slane %v2183, 4
        %v2186 = vor.u32 %v2185, %v2181
        %v2187 = vrot.slane %v2186, 4
        %v2189 = vshll.u32 %v2061, 16
        %v2191 = vrot.slane %v2189, 5
        %v2192 = vsel %vm1461, %v2187, %v2191
        %v2194 = vshrl.u32 %v2035, 16
        %v2196 = vrot.slane %v2194, 4
        %v2197 = vshll.u32 %v2035, 16
        %v2199 = vrot.slane %v2197, 5
        %v2200 = vor.u32 %v2196, %v2199
        %v2201 = vrot.slane %v2200, 4
        %v2203 = vshll.u32 %v2036, 16
        %v2205 = vrot.slane %v2203, 5
        %v2206 = vsel %vm1461, %v2201, %v2205
        %v2207 = vshrl.u32 %v2036, 16
        %v2209 = vrot.slane %v2207, 4
        %v2210 = vor.u32 %v2209, %v2205
        %v2211 = vrot.slane %v2210, 4
        %v2213 = vshll.u32 %v2062, 16
        %v2215 = vrot.slane %v2213, 5
        %v2216 = vsel %vm1461, %v2211, %v2215
        %v2218 = vshrl.u32 %v2037, 16
        %v2220 = vrot.slane %v2218, 4
        %v2221 = vshll.u32 %v2037, 16
        %v2223 = vrot.slane %v2221, 5
        %v2224 = vor.u32 %v2220, %v2223
        %v2225 = vrot.slane %v2224, 4
        %v2227 = vshll.u32 %v2038, 16
        %v2229 = vrot.slane %v2227, 5
        %v2230 = vsel %vm1461, %v2225, %v2229
        %v2231 = vshrl.u32 %v2038, 16
        %v2233 = vrot.slane %v2231, 4
        %v2234 = vor.u32 %v2233, %v2229
        %v2235 = vrot.slane %v2234, 4
        %v2237 = vshll.u32 %v2063, 16
        %v2239 = vrot.slane %v2237, 5
        %v2240 = vsel %vm1461, %v2235, %v2239
        %v2242 = vshrl.u32 %v2039, 16
        %v2244 = vrot.slane %v2242, 4
        %v2245 = vshll.u32 %v2039, 16
        %v2247 = vrot.slane %v2245, 5
        %v2248 = vor.u32 %v2244, %v2247
        %v2249 = vrot.slane %v2248, 4
        %v2251 = vshll.u32 %v2040, 16
        %v2253 = vrot.slane %v2251, 5
        %v2254 = vsel %vm1461, %v2249, %v2253
        %v2255 = vshrl.u32 %v2040, 16
        %v2257 = vrot.slane %v2255, 4
        %v2258 = vor.u32 %v2257, %v2253
        %v2259 = vrot.slane %v2258, 4
        %v2261 = vshll.u32 %v2064, 16
        %v2263 = vrot.slane %v2261, 5
        %v2264 = vsel %vm1461, %v2259, %v2263
        %v2266 = vshrl.u32 %v2041, 16
        %v2268 = vrot.slane %v2266, 4
        %v2269 = vshll.u32 %v2041, 16
        %v2271 = vrot.slane %v2269, 5
        %v2272 = vor.u32 %v2268, %v2271
        %v2273 = vrot.slane %v2272, 4
        %v2275 = vshll.u32 %v2042, 16
        %v2277 = vrot.slane %v2275, 5
        %v2278 = vsel %vm1461, %v2273, %v2277
        %v2279 = vshrl.u32 %v2042, 16
        %v2281 = vrot.slane %v2279, 4
        %v2282 = vor.u32 %v2281, %v2277
        %v2283 = vrot.slane %v2282, 4
        %v2285 = vshll.u32 %v2065, 16
        %v2287 = vrot.slane %v2285, 5
        %v2288 = vsel %vm1461, %v2283, %v2287
        %v2290 = vshrl.u32 %v2043, 16
        %v2292 = vrot.slane %v2290, 4
        %v2293 = vshll.u32 %v2043, 16
        %v2295 = vrot.slane %v2293, 5
        %v2296 = vor.u32 %v2292, %v2295
        %v2297 = vrot.slane %v2296, 4
        %v2299 = vshll.u32 %v2044, 16
        %v2301 = vrot.slane %v2299, 5
        %v2302 = vsel %vm1461, %v2297, %v2301
        %v2303 = vshrl.u32 %v2044, 16
        %v2305 = vrot.slane %v2303, 4
        %v2306 = vor.u32 %v2305, %v2301
        %v2307 = vrot.slane %v2306, 4
        %v2309 = vshll.u32 %v2066, 16
        %v2311 = vrot.slane %v2309, 5
        %v2312 = vsel %vm1461, %v2307, %v2311
        %v2314 = vshrl.u32 %v2045, 16
        %v2316 = vrot.slane %v2314, 4
        %v2317 = vshll.u32 %v2045, 16
        %v2319 = vrot.slane %v2317, 5
        %v2320 = vor.u32 %v2316, %v2319
        %v2321 = vrot.slane %v2320, 4
        %v2323 = vshll.u32 %v2046, 16
        %v2325 = vrot.slane %v2323, 5
        %v2326 = vsel %vm1461, %v2321, %v2325
        %v2327 = vshrl.u32 %v2046, 16
        %v2329 = vrot.slane %v2327, 4
        %v2330 = vor.u32 %v2329, %v2325
        %v2331 = vrot.slane %v2330, 4
        %v2333 = vshll.u32 %v2067, 16
        %v2335 = vrot.slane %v2333, 5
        %v2336 = vsel %vm1461, %v2331, %v2335
        %v2338 = vshrl.u32 %v2047, 16
        %v2340 = vrot.slane %v2338, 4
        %v2341 = vshll.u32 %v2047, 16
        %v2343 = vrot.slane %v2341, 5
        %v2344 = vor.u32 %v2340, %v2343
        %v2345 = vrot.slane %v2344, 4
        %v2347 = vshll.u32 %v2048, 16
        %v2349 = vrot.slane %v2347, 5
        %v2350 = vsel %vm1461, %v2345, %v2349
        %v2351 = vshrl.u32 %v2048, 16
        %v2353 = vrot.slane %v2351, 4
        %v2354 = vor.u32 %v2353, %v2349
        %v2355 = vrot.slane %v2354, 4
        %v2357 = vshll.u32 %v2068, 16
        %v2359 = vrot.slane %v2357, 5
        %v2360 = vsel %vm1461, %v2355, %v2359
        %v2362 = vshrl.u32 %v2049, 16
        %v2364 = vrot.slane %v2362, 4
        %v2365 = vshll.u32 %v2049, 16
        %v2367 = vrot.slane %v2365, 5
        %v2368 = vor.u32 %v2364, %v2367
        %v2369 = vrot.slane %v2368, 4
        %v2371 = vshll.u32 %v2050, 16
        %v2373 = vrot.slane %v2371, 5
        %v2374 = vsel %vm1461, %v2369, %v2373
        %v2375 = vshrl.u32 %v2050, 16
        %v2377 = vrot.slane %v2375, 4
        %v2378 = vor.u32 %v2377, %v2373
        %v2379 = vrot.slane %v2378, 4
        %v2381 = vshll.u32 %v2069, 16
        %v2383 = vrot.slane %v2381, 5
        %v2384 = vsel %vm1461, %v2379, %v2383
        %v2386 = vshrl.u32 %v2051, 16
        %v2388 = vrot.slane %v2386, 4
        %v2389 = vshll.u32 %v2051, 16
        %v2391 = vrot.slane %v2389, 5
        %v2392 = vor.u32 %v2388, %v2391
        %v2393 = vrot.slane %v2392, 4
        %v2395 = vshll.u32 %v2052, 16
        %v2397 = vrot.slane %v2395, 5
        %v2398 = vsel %vm1461, %v2393, %v2397
        %v2399 = vshrl.u32 %v2052, 16
        %v2401 = vrot.slane %v2399, 4
        %v2402 = vor.u32 %v2401, %v2397
        %v2403 = vrot.slane %v2402, 4
        %v2405 = vshll.u32 %v2070, 16
        %v2407 = vrot.slane %v2405, 5
        %v2408 = vsel %vm1461, %v2403, %v2407
        %v2410 = vshrl.u32 %v2053, 16
        %v2412 = vrot.slane %v2410, 4
        %v2413 = vshll.u32 %v2053, 16
        %v2415 = vrot.slane %v2413, 5
        %v2416 = vor.u32 %v2412, %v2415
        %v2417 = vrot.slane %v2416, 4
        %v2419 = vshll.u32 %v2054, 16
        %v2421 = vrot.slane %v2419, 5
        %v2422 = vsel %vm1461, %v2417, %v2421
        %v2423 = vshrl.u32 %v2054, 16
        %v2425 = vrot.slane %v2423, 4
        %v2426 = vor.u32 %v2425, %v2421
        %v2427 = vrot.slane %v2426, 4
        %v2429 = vshll.u32 %v2071, 16
        %v2431 = vrot.slane %v2429, 5
        %v2432 = vsel %vm1461, %v2427, %v2431
        %v2434 = vshrl.u32 %v2055, 16
        %v2436 = vrot.slane %v2434, 4
        %v2437 = vshll.u32 %v2055, 16
        %v2439 = vrot.slane %v2437, 5
        %v2440 = vor.u32 %v2436, %v2439
        %v2441 = vrot.slane %v2440, 4
        %v2443 = vshll.u32 %v2056, 16
        %v2445 = vrot.slane %v2443, 5
        %v2446 = vsel %vm1461, %v2441, %v2445
        %v2447 = vshrl.u32 %v2056, 16
        %v2449 = vrot.slane %v2447, 4
        %v2450 = vor.u32 %v2449, %v2445
        %v2451 = vrot.slane %v2450, 4
        %v2453 = vshll.u32 %v2072, 16
        %v2455 = vrot.slane %v2453, 5
        %v2456 = vsel %vm1461, %v2451, %v2455
        %v2457 = vld [vmem:[%s1293] sm:$0xe]
        %v2458 = vld [vmem:[%s1293 + $0xc] sm:$0xe]
        %v2459 = vld [vmem:[%s1293 + $0x18] sm:$0xe]
        %v2460 = vld [vmem:[%s1293 + $0x24] sm:$0xe]
        %v2461 = vld [vmem:[%s1293 + $0x30] sm:$0xe]
        %v2462 = vld [vmem:[%s1293 + $0x3c] sm:$0xe]
        %v2463 = vld [vmem:[%s1293 + $0x48] sm:$0xe]
        %v2464 = vld [vmem:[%s1293 + $0x54] sm:$0xe]
        %v2465 = vld [vmem:[%s1293 + $0x60] sm:$0xe]
        %v2466 = vld [vmem:[%s1293 + $0x6c] sm:$0xe]
        %v2467 = vld [vmem:[%s1293 + $0x78] sm:$0xe]
        %v2468 = vld [vmem:[%s1293 + $0x84] sm:$0xe]
        %v2469 = vld [vmem:[%s1293 + $0x90] sm:$0xe]
        %v2470 = vld [vmem:[%s1293 + $0x9c] sm:$0xe]
        %v2471 = vld [vmem:[%s1293 + $0xa8] sm:$0xe]
        %v2472 = vld [vmem:[%s1293 + $0xb4] sm:$0xe]
        %v2521 = vrot.slane %v2457, 5
        %v2522 = vrot.slane %v2521, 4
        %v2523 = vrot.slane %v2026, 5
        %v2524 = vsel %vm1912, %v2522, %v2523
        %v2525 = vrot.slane %v2523, 4
        %v2526 = vrot.slane %v2057, 5
        %v2527 = vsel %vm1912, %v2525, %v2526
        %v2528 = vrot.slane %v2458, 5
        %v2529 = vrot.slane %v2528, 4
        %v2530 = vrot.slane %v2028, 5
        %v2531 = vsel %vm1912, %v2529, %v2530
        %v2532 = vrot.slane %v2530, 4
        %v2533 = vrot.slane %v2058, 5
        %v2534 = vsel %vm1912, %v2532, %v2533
        %v2535 = vrot.slane %v2459, 5
        %v2536 = vrot.slane %v2535, 4
        %v2537 = vrot.slane %v2030, 5
        %v2538 = vsel %vm1912, %v2536, %v2537
        %v2539 = vrot.slane %v2537, 4
        %v2540 = vrot.slane %v2059, 5
        %v2541 = vsel %vm1912, %v2539, %v2540
        %v2542 = vrot.slane %v2460, 5
        %v2543 = vrot.slane %v2542, 4
        %v2544 = vrot.slane %v2032, 5
        %v2545 = vsel %vm1912, %v2543, %v2544
        %v2546 = vrot.slane %v2544, 4
        %v2547 = vrot.slane %v2060, 5
        %v2548 = vsel %vm1912, %v2546, %v2547
        %v2549 = vrot.slane %v2461, 5
        %v2550 = vrot.slane %v2549, 4
        %v2551 = vrot.slane %v2034, 5
        %v2552 = vsel %vm1912, %v2550, %v2551
        %v2553 = vrot.slane %v2551, 4
        %v2554 = vrot.slane %v2061, 5
        %v2555 = vsel %vm1912, %v2553, %v2554
        %v2556 = vrot.slane %v2462, 5
        %v2557 = vrot.slane %v2556, 4
        %v2558 = vrot.slane %v2036, 5
        %v2559 = vsel %vm1912, %v2557, %v2558
        %v2560 = vrot.slane %v2558, 4
        %v2561 = vrot.slane %v2062, 5
        %v2562 = vsel %vm1912, %v2560, %v2561
        %v2563 = vrot.slane %v2463, 5
        %v2564 = vrot.slane %v2563, 4
        %v2565 = vrot.slane %v2038, 5
        %v2566 = vsel %vm1912, %v2564, %v2565
        %v2567 = vrot.slane %v2565, 4
        %v2568 = vrot.slane %v2063, 5
        %v2569 = vsel %vm1912, %v2567, %v2568
        %v2570 = vrot.slane %v2464, 5
        %v2571 = vrot.slane %v2570, 4
        %v2572 = vrot.slane %v2040, 5
        %v2573 = vsel %vm1912, %v2571, %v2572
        %v2574 = vrot.slane %v2572, 4
        %v2575 = vrot.slane %v2064, 5
        %v2576 = vsel %vm1912, %v2574, %v2575
        %v2577 = vrot.slane %v2465, 5
        %v2578 = vrot.slane %v2577, 4
        %v2579 = vrot.slane %v2042, 5
        %v2580 = vsel %vm1912, %v2578, %v2579
        %v2581 = vrot.slane %v2579, 4
        %v2582 = vrot.slane %v2065, 5
        %v2583 = vsel %vm1912, %v2581, %v2582
        %v2584 = vrot.slane %v2466, 5
        %v2585 = vrot.slane %v2584, 4
        %v2586 = vrot.slane %v2044, 5
        %v2587 = vsel %vm1912, %v2585, %v2586
        %v2588 = vrot.slane %v2586, 4
        %v2589 = vrot.slane %v2066, 5
        %v2590 = vsel %vm1912, %v2588, %v2589
        %v2591 = vrot.slane %v2467, 5
        %v2592 = vrot.slane %v2591, 4
        %v2593 = vrot.slane %v2046, 5
        %v2594 = vsel %vm1912, %v2592, %v2593
        %v2595 = vrot.slane %v2593, 4
        %v2596 = vrot.slane %v2067, 5
        %v2597 = vsel %vm1912, %v2595, %v2596
        %v2598 = vrot.slane %v2468, 5
        %v2599 = vrot.slane %v2598, 4
        %v2600 = vrot.slane %v2048, 5
        %v2601 = vsel %vm1912, %v2599, %v2600
        %v2602 = vrot.slane %v2600, 4
        %v2603 = vrot.slane %v2068, 5
        %v2604 = vsel %vm1912, %v2602, %v2603
        %v2605 = vrot.slane %v2469, 5
        %v2606 = vrot.slane %v2605, 4
        %v2607 = vrot.slane %v2050, 5
        %v2608 = vsel %vm1912, %v2606, %v2607
        %v2609 = vrot.slane %v2607, 4
        %v2610 = vrot.slane %v2069, 5
        %v2611 = vsel %vm1912, %v2609, %v2610
        %v2612 = vrot.slane %v2470, 5
        %v2613 = vrot.slane %v2612, 4
        %v2614 = vrot.slane %v2052, 5
        %v2615 = vsel %vm1912, %v2613, %v2614
        %v2616 = vrot.slane %v2614, 4
        %v2617 = vrot.slane %v2070, 5
        %v2618 = vsel %vm1912, %v2616, %v2617
        %v2619 = vrot.slane %v2471, 5
        %v2620 = vrot.slane %v2619, 4
        %v2621 = vrot.slane %v2054, 5
        %v2622 = vsel %vm1912, %v2620, %v2621
        %v2623 = vrot.slane %v2621, 4
        %v2624 = vrot.slane %v2071, 5
        %v2625 = vsel %vm1912, %v2623, %v2624
        %v2626 = vrot.slane %v2472, 5
        %v2627 = vrot.slane %v2626, 4
        %v2628 = vrot.slane %v2056, 5
        %v2629 = vsel %vm1912, %v2627, %v2628
        %v2630 = vrot.slane %v2628, 4
        %v2631 = vrot.slane %v2072, 5
        %v2632 = vsel %vm1912, %v2630, %v2631
        %s2633 = scalar_lea.vmem [#allocation2], 24
        %v2634 = vld [vmem:[%s2633] sm:$0xf]
        %v2635 = vld [vmem:[%s2633 + $0x4] sm:$0xf]
        %v2636 = vld [vmem:[%s2633 + $0xc] sm:$0xf]
        %v2637 = vld [vmem:[%s2633 + $0x10] sm:$0xf]
        %v2638 = vld [vmem:[%s2633 + $0x18] sm:$0xf]
        %v2639 = vld [vmem:[%s2633 + $0x1c] sm:$0xf]
        %v2640 = vld [vmem:[%s2633 + $0x24] sm:$0xf]
        %v2641 = vld [vmem:[%s2633 + $0x28] sm:$0xf]
        %v2642 = vld [vmem:[%s2633 + $0x30] sm:$0xf]
        %v2643 = vld [vmem:[%s2633 + $0x34] sm:$0xf]
        %v2644 = vld [vmem:[%s2633 + $0x3c] sm:$0xf]
        %v2645 = vld [vmem:[%s2633 + $0x40] sm:$0xf]
        %v2646 = vld [vmem:[%s2633 + $0x48] sm:$0xf]
        %v2647 = vld [vmem:[%s2633 + $0x4c] sm:$0xf]
        %v2648 = vld [vmem:[%s2633 + $0x54] sm:$0xf]
        %v2649 = vld [vmem:[%s2633 + $0x58] sm:$0xf]
        %v2650 = vld [vmem:[%s2633 + $0x60] sm:$0xf]
        %v2651 = vld [vmem:[%s2633 + $0x64] sm:$0xf]
        %v2652 = vld [vmem:[%s2633 + $0x6c] sm:$0xf]
        %v2653 = vld [vmem:[%s2633 + $0x70] sm:$0xf]
        %v2654 = vld [vmem:[%s2633 + $0x78] sm:$0xf]
        %v2655 = vld [vmem:[%s2633 + $0x7c] sm:$0xf]
        %v2656 = vld [vmem:[%s2633 + $0x84] sm:$0xf]
        %v2657 = vld [vmem:[%s2633 + $0x88] sm:$0xf]
        %v2658 = vld [vmem:[%s2633 + $0x90] sm:$0xf]
        %v2659 = vld [vmem:[%s2633 + $0x94] sm:$0xf]
        %v2660 = vld [vmem:[%s2633 + $0x9c] sm:$0xf]
        %v2661 = vld [vmem:[%s2633 + $0xa0] sm:$0xf]
        %v2662 = vld [vmem:[%s2633 + $0xa8] sm:$0xf]
        %v2663 = vld [vmem:[%s2633 + $0xac] sm:$0xf]
        %v2664 = vld [vmem:[%s2633 + $0xb4] sm:$0xf]
        %v2665 = vld [vmem:[%s2633 + $0xb8] sm:$0xf]
        %v2666 = vld [vmem:[%s2633 + $0x8] sm:$0x1]
        %v2667 = vld [vmem:[%s2633 + $0x14] sm:$0x1]
        %v2668 = vld [vmem:[%s2633 + $0x20] sm:$0x1]
        %v2669 = vld [vmem:[%s2633 + $0x2c] sm:$0x1]
        %v2670 = vld [vmem:[%s2633 + $0x38] sm:$0x1]
        %v2671 = vld [vmem:[%s2633 + $0x44] sm:$0x1]
        %v2672 = vld [vmem:[%s2633 + $0x50] sm:$0x1]
        %v2673 = vld [vmem:[%s2633 + $0x5c] sm:$0x1]
        %v2674 = vld [vmem:[%s2633 + $0x68] sm:$0x1]
        %v2675 = vld [vmem:[%s2633 + $0x74] sm:$0x1]
        %v2676 = vld [vmem:[%s2633 + $0x80] sm:$0x1]
        %v2677 = vld [vmem:[%s2633 + $0x8c] sm:$0x1]
        %v2678 = vld [vmem:[%s2633 + $0x98] sm:$0x1]
        %v2679 = vld [vmem:[%s2633 + $0xa4] sm:$0x1]
        %v2680 = vld [vmem:[%s2633 + $0xb0] sm:$0x1]
        %v2681 = vld [vmem:[%s2633 + $0xbc] sm:$0x1]
        %v2683 = vshrl.u32 %v2634, 16
        %v2685 = vrot.slane %v2683, 4
        %v2686 = vshll.u32 %v2634, 16
        %v2688 = vrot.slane %v2686, 5
        %v2689 = vor.u32 %v2685, %v2688
        %v2690 = vrot.slane %v2689, 4
        %v2692 = vshll.u32 %v2635, 16
        %v2694 = vrot.slane %v2692, 5
        %v2695 = vsel %vm1461, %v2690, %v2694
        %v2696 = vshrl.u32 %v2635, 16
        %v2698 = vrot.slane %v2696, 4
        %v2699 = vor.u32 %v2698, %v2694
        %v2700 = vrot.slane %v2699, 4
        %v2702 = vshll.u32 %v2666, 16
        %v2704 = vrot.slane %v2702, 5
        %v2705 = vsel %vm1461, %v2700, %v2704
        %v2707 = vshrl.u32 %v2636, 16
        %v2709 = vrot.slane %v2707, 4
        %v2710 = vshll.u32 %v2636, 16
        %v2712 = vrot.slane %v2710, 5
        %v2713 = vor.u32 %v2709, %v2712
        %v2714 = vrot.slane %v2713, 4
        %v2716 = vshll.u32 %v2637, 16
        %v2718 = vrot.slane %v2716, 5
        %v2719 = vsel %vm1461, %v2714, %v2718
        %v2720 = vshrl.u32 %v2637, 16
        %v2722 = vrot.slane %v2720, 4
        %v2723 = vor.u32 %v2722, %v2718
        %v2724 = vrot.slane %v2723, 4
        %v2726 = vshll.u32 %v2667, 16
        %v2728 = vrot.slane %v2726, 5
        %v2729 = vsel %vm1461, %v2724, %v2728
        %v2731 = vshrl.u32 %v2638, 16
        %v2733 = vrot.slane %v2731, 4
        %v2734 = vshll.u32 %v2638, 16
        %v2736 = vrot.slane %v2734, 5
        %v2737 = vor.u32 %v2733, %v2736
        %v2738 = vrot.slane %v2737, 4
        %v2740 = vshll.u32 %v2639, 16
        %v2742 = vrot.slane %v2740, 5
        %v2743 = vsel %vm1461, %v2738, %v2742
        %v2744 = vshrl.u32 %v2639, 16
        %v2746 = vrot.slane %v2744, 4
        %v2747 = vor.u32 %v2746, %v2742
        %v2748 = vrot.slane %v2747, 4
        %v2750 = vshll.u32 %v2668, 16
        %v2752 = vrot.slane %v2750, 5
        %v2753 = vsel %vm1461, %v2748, %v2752
        %v2755 = vshrl.u32 %v2640, 16
        %v2757 = vrot.slane %v2755, 4
        %v2758 = vshll.u32 %v2640, 16
        %v2760 = vrot.slane %v2758, 5
        %v2761 = vor.u32 %v2757, %v2760
        %v2762 = vrot.slane %v2761, 4
        %v2764 = vshll.u32 %v2641, 16
        %v2766 = vrot.slane %v2764, 5
        %v2767 = vsel %vm1461, %v2762, %v2766
        %v2768 = vshrl.u32 %v2641, 16
        %v2770 = vrot.slane %v2768, 4
        %v2771 = vor.u32 %v2770, %v2766
        %v2772 = vrot.slane %v2771, 4
        %v2774 = vshll.u32 %v2669, 16
        %v2776 = vrot.slane %v2774, 5
        %v2777 = vsel %vm1461, %v2772, %v2776
        %v2779 = vshrl.u32 %v2642, 16
        %v2781 = vrot.slane %v2779, 4
        %v2782 = vshll.u32 %v2642, 16
        %v2784 = vrot.slane %v2782, 5
        %v2785 = vor.u32 %v2781, %v2784
        %v2786 = vrot.slane %v2785, 4
        %v2788 = vshll.u32 %v2643, 16
        %v2790 = vrot.slane %v2788, 5
        %v2791 = vsel %vm1461, %v2786, %v2790
        %v2792 = vshrl.u32 %v2643, 16
        %v2794 = vrot.slane %v2792, 4
        %v2795 = vor.u32 %v2794, %v2790
        %v2796 = vrot.slane %v2795, 4
        %v2798 = vshll.u32 %v2670, 16
        %v2800 = vrot.slane %v2798, 5
        %v2801 = vsel %vm1461, %v2796, %v2800
        %v2803 = vshrl.u32 %v2644, 16
        %v2805 = vrot.slane %v2803, 4
        %v2806 = vshll.u32 %v2644, 16
        %v2808 = vrot.slane %v2806, 5
        %v2809 = vor.u32 %v2805, %v2808
        %v2810 = vrot.slane %v2809, 4
        %v2812 = vshll.u32 %v2645, 16
        %v2814 = vrot.slane %v2812, 5
        %v2815 = vsel %vm1461, %v2810, %v2814
        %v2816 = vshrl.u32 %v2645, 16
        %v2818 = vrot.slane %v2816, 4
        %v2819 = vor.u32 %v2818, %v2814
        %v2820 = vrot.slane %v2819, 4
        %v2822 = vshll.u32 %v2671, 16
        %v2824 = vrot.slane %v2822, 5
        %v2825 = vsel %vm1461, %v2820, %v2824
        %v2827 = vshrl.u32 %v2646, 16
        %v2829 = vrot.slane %v2827, 4
        %v2830 = vshll.u32 %v2646, 16
        %v2832 = vrot.slane %v2830, 5
        %v2833 = vor.u32 %v2829, %v2832
        %v2834 = vrot.slane %v2833, 4
        %v2836 = vshll.u32 %v2647, 16
        %v2838 = vrot.slane %v2836, 5
        %v2839 = vsel %vm1461, %v2834, %v2838
        %v2840 = vshrl.u32 %v2647, 16
        %v2842 = vrot.slane %v2840, 4
        %v2843 = vor.u32 %v2842, %v2838
        %v2844 = vrot.slane %v2843, 4
        %v2846 = vshll.u32 %v2672, 16
        %v2848 = vrot.slane %v2846, 5
        %v2849 = vsel %vm1461, %v2844, %v2848
        %v2851 = vshrl.u32 %v2648, 16
        %v2853 = vrot.slane %v2851, 4
        %v2854 = vshll.u32 %v2648, 16
        %v2856 = vrot.slane %v2854, 5
        %v2857 = vor.u32 %v2853, %v2856
        %v2858 = vrot.slane %v2857, 4
        %v2860 = vshll.u32 %v2649, 16
        %v2862 = vrot.slane %v2860, 5
        %v2863 = vsel %vm1461, %v2858, %v2862
        %v2864 = vshrl.u32 %v2649, 16
        %v2866 = vrot.slane %v2864, 4
        %v2867 = vor.u32 %v2866, %v2862
        %v2868 = vrot.slane %v2867, 4
        %v2870 = vshll.u32 %v2673, 16
        %v2872 = vrot.slane %v2870, 5
        %v2873 = vsel %vm1461, %v2868, %v2872
        %v2875 = vshrl.u32 %v2650, 16
        %v2877 = vrot.slane %v2875, 4
        %v2878 = vshll.u32 %v2650, 16
        %v2880 = vrot.slane %v2878, 5
        %v2881 = vor.u32 %v2877, %v2880
        %v2882 = vrot.slane %v2881, 4
        %v2884 = vshll.u32 %v2651, 16
        %v2886 = vrot.slane %v2884, 5
        %v2887 = vsel %vm1461, %v2882, %v2886
        %v2888 = vshrl.u32 %v2651, 16
        %v2890 = vrot.slane %v2888, 4
        %v2891 = vor.u32 %v2890, %v2886
        %v2892 = vrot.slane %v2891, 4
        %v2894 = vshll.u32 %v2674, 16
        %v2896 = vrot.slane %v2894, 5
        %v2897 = vsel %vm1461, %v2892, %v2896
        %v2899 = vshrl.u32 %v2652, 16
        %v2901 = vrot.slane %v2899, 4
        %v2902 = vshll.u32 %v2652, 16
        %v2904 = vrot.slane %v2902, 5
        %v2905 = vor.u32 %v2901, %v2904
        %v2906 = vrot.slane %v2905, 4
        %v2908 = vshll.u32 %v2653, 16
        %v2910 = vrot.slane %v2908, 5
        %v2911 = vsel %vm1461, %v2906, %v2910
        %v2912 = vshrl.u32 %v2653, 16
        %v2914 = vrot.slane %v2912, 4
        %v2915 = vor.u32 %v2914, %v2910
        %v2916 = vrot.slane %v2915, 4
        %v2918 = vshll.u32 %v2675, 16
        %v2920 = vrot.slane %v2918, 5
        %v2921 = vsel %vm1461, %v2916, %v2920
        %v2923 = vshrl.u32 %v2654, 16
        %v2925 = vrot.slane %v2923, 4
        %v2926 = vshll.u32 %v2654, 16
        %v2928 = vrot.slane %v2926, 5
        %v2929 = vor.u32 %v2925, %v2928
        %v2930 = vrot.slane %v2929, 4
        %v2932 = vshll.u32 %v2655, 16
        %v2934 = vrot.slane %v2932, 5
        %v2935 = vsel %vm1461, %v2930, %v2934
        %v2936 = vshrl.u32 %v2655, 16
        %v2938 = vrot.slane %v2936, 4
        %v2939 = vor.u32 %v2938, %v2934
        %v2940 = vrot.slane %v2939, 4
        %v2942 = vshll.u32 %v2676, 16
        %v2944 = vrot.slane %v2942, 5
        %v2945 = vsel %vm1461, %v2940, %v2944
        %v2947 = vshrl.u32 %v2656, 16
        %v2949 = vrot.slane %v2947, 4
        %v2950 = vshll.u32 %v2656, 16
        %v2952 = vrot.slane %v2950, 5
        %v2953 = vor.u32 %v2949, %v2952
        %v2954 = vrot.slane %v2953, 4
        %v2956 = vshll.u32 %v2657, 16
        %v2958 = vrot.slane %v2956, 5
        %v2959 = vsel %vm1461, %v2954, %v2958
        %v2960 = vshrl.u32 %v2657, 16
        %v2962 = vrot.slane %v2960, 4
        %v2963 = vor.u32 %v2962, %v2958
        %v2964 = vrot.slane %v2963, 4
        %v2966 = vshll.u32 %v2677, 16
        %v2968 = vrot.slane %v2966, 5
        %v2969 = vsel %vm1461, %v2964, %v2968
        %v2971 = vshrl.u32 %v2658, 16
        %v2973 = vrot.slane %v2971, 4
        %v2974 = vshll.u32 %v2658, 16
        %v2976 = vrot.slane %v2974, 5
        %v2977 = vor.u32 %v2973, %v2976
        %v2978 = vrot.slane %v2977, 4
        %v2980 = vshll.u32 %v2659, 16
        %v2982 = vrot.slane %v2980, 5
        %v2983 = vsel %vm1461, %v2978, %v2982
        %v2984 = vshrl.u32 %v2659, 16
        %v2986 = vrot.slane %v2984, 4
        %v2987 = vor.u32 %v2986, %v2982
        %v2988 = vrot.slane %v2987, 4
        %v2990 = vshll.u32 %v2678, 16
        %v2992 = vrot.slane %v2990, 5
        %v2993 = vsel %vm1461, %v2988, %v2992
        %v2995 = vshrl.u32 %v2660, 16
        %v2997 = vrot.slane %v2995, 4
        %v2998 = vshll.u32 %v2660, 16
        %v3000 = vrot.slane %v2998, 5
        %v3001 = vor.u32 %v2997, %v3000
        %v3002 = vrot.slane %v3001, 4
        %v3004 = vshll.u32 %v2661, 16
        %v3006 = vrot.slane %v3004, 5
        %v3007 = vsel %vm1461, %v3002, %v3006
        %v3008 = vshrl.u32 %v2661, 16
        %v3010 = vrot.slane %v3008, 4
        %v3011 = vor.u32 %v3010, %v3006
        %v3012 = vrot.slane %v3011, 4
        %v3014 = vshll.u32 %v2679, 16
        %v3016 = vrot.slane %v3014, 5
        %v3017 = vsel %vm1461, %v3012, %v3016
        %v3019 = vshrl.u32 %v2662, 16
        %v3021 = vrot.slane %v3019, 4
        %v3022 = vshll.u32 %v2662, 16
        %v3024 = vrot.slane %v3022, 5
        %v3025 = vor.u32 %v3021, %v3024
        %v3026 = vrot.slane %v3025, 4
        %v3028 = vshll.u32 %v2663, 16
        %v3030 = vrot.slane %v3028, 5
        %v3031 = vsel %vm1461, %v3026, %v3030
        %v3032 = vshrl.u32 %v2663, 16
        %v3034 = vrot.slane %v3032, 4
        %v3035 = vor.u32 %v3034, %v3030
        %v3036 = vrot.slane %v3035, 4
        %v3038 = vshll.u32 %v2680, 16
        %v3040 = vrot.slane %v3038, 5
        %v3041 = vsel %vm1461, %v3036, %v3040
        %v3043 = vshrl.u32 %v2664, 16
        %v3045 = vrot.slane %v3043, 4
        %v3046 = vshll.u32 %v2664, 16
        %v3048 = vrot.slane %v3046, 5
        %v3049 = vor.u32 %v3045, %v3048
        %v3050 = vrot.slane %v3049, 4
        %v3052 = vshll.u32 %v2665, 16
        %v3054 = vrot.slane %v3052, 5
        %v3055 = vsel %vm1461, %v3050, %v3054
        %v3056 = vshrl.u32 %v2665, 16
        %v3058 = vrot.slane %v3056, 4
        %v3059 = vor.u32 %v3058, %v3054
        %v3060 = vrot.slane %v3059, 4
        %v3062 = vshll.u32 %v2681, 16
        %v3064 = vrot.slane %v3062, 5
        %v3065 = vsel %vm1461, %v3060, %v3064
        %v3066 = vld [vmem:[%s2633] sm:$0xe]
        %v3067 = vld [vmem:[%s2633 + $0xc] sm:$0xe]
        %v3068 = vld [vmem:[%s2633 + $0x18] sm:$0xe]
        %v3069 = vld [vmem:[%s2633 + $0x24] sm:$0xe]
        %v3070 = vld [vmem:[%s2633 + $0x30] sm:$0xe]
        %v3071 = vld [vmem:[%s2633 + $0x3c] sm:$0xe]
        %v3072 = vld [vmem:[%s2633 + $0x48] sm:$0xe]
        %v3073 = vld [vmem:[%s2633 + $0x54] sm:$0xe]
        %v3074 = vld [vmem:[%s2633 + $0x60] sm:$0xe]
        %v3075 = vld [vmem:[%s2633 + $0x6c] sm:$0xe]
        %v3076 = vld [vmem:[%s2633 + $0x78] sm:$0xe]
        %v3077 = vld [vmem:[%s2633 + $0x84] sm:$0xe]
        %v3078 = vld [vmem:[%s2633 + $0x90] sm:$0xe]
        %v3079 = vld [vmem:[%s2633 + $0x9c] sm:$0xe]
        %v3080 = vld [vmem:[%s2633 + $0xa8] sm:$0xe]
        %v3081 = vld [vmem:[%s2633 + $0xb4] sm:$0xe]
        %v3130 = vrot.slane %v3066, 5
        %v3131 = vrot.slane %v3130, 4
        %v3132 = vrot.slane %v2635, 5
        %v3133 = vsel %vm1912, %v3131, %v3132
        %v3134 = vrot.slane %v3132, 4
        %v3135 = vrot.slane %v2666, 5
        %v3136 = vsel %vm1912, %v3134, %v3135
        %v3137 = vrot.slane %v3067, 5
        %v3138 = vrot.slane %v3137, 4
        %v3139 = vrot.slane %v2637, 5
        %v3140 = vsel %vm1912, %v3138, %v3139
        %v3141 = vrot.slane %v3139, 4
        %v3142 = vrot.slane %v2667, 5
        %v3143 = vsel %vm1912, %v3141, %v3142
        %v3144 = vrot.slane %v3068, 5
        %v3145 = vrot.slane %v3144, 4
        %v3146 = vrot.slane %v2639, 5
        %v3147 = vsel %vm1912, %v3145, %v3146
        %v3148 = vrot.slane %v3146, 4
        %v3149 = vrot.slane %v2668, 5
        %v3150 = vsel %vm1912, %v3148, %v3149
        %v3151 = vrot.slane %v3069, 5
        %v3152 = vrot.slane %v3151, 4
        %v3153 = vrot.slane %v2641, 5
        %v3154 = vsel %vm1912, %v3152, %v3153
        %v3155 = vrot.slane %v3153, 4
        %v3156 = vrot.slane %v2669, 5
        %v3157 = vsel %vm1912, %v3155, %v3156
        %v3158 = vrot.slane %v3070, 5
        %v3159 = vrot.slane %v3158, 4
        %v3160 = vrot.slane %v2643, 5
        %v3161 = vsel %vm1912, %v3159, %v3160
        %v3162 = vrot.slane %v3160, 4
        %v3163 = vrot.slane %v2670, 5
        %v3164 = vsel %vm1912, %v3162, %v3163
        %v3165 = vrot.slane %v3071, 5
        %v3166 = vrot.slane %v3165, 4
        %v3167 = vrot.slane %v2645, 5
        %v3168 = vsel %vm1912, %v3166, %v3167
        %v3169 = vrot.slane %v3167, 4
        %v3170 = vrot.slane %v2671, 5
        %v3171 = vsel %vm1912, %v3169, %v3170
        %v3172 = vrot.slane %v3072, 5
        %v3173 = vrot.slane %v3172, 4
        %v3174 = vrot.slane %v2647, 5
        %v3175 = vsel %vm1912, %v3173, %v3174
        %v3176 = vrot.slane %v3174, 4
        %v3177 = vrot.slane %v2672, 5
        %v3178 = vsel %vm1912, %v3176, %v3177
        %v3179 = vrot.slane %v3073, 5
        %v3180 = vrot.slane %v3179, 4
        %v3181 = vrot.slane %v2649, 5
        %v3182 = vsel %vm1912, %v3180, %v3181
        %v3183 = vrot.slane %v3181, 4
        %v3184 = vrot.slane %v2673, 5
        %v3185 = vsel %vm1912, %v3183, %v3184
        %v3186 = vrot.slane %v3074, 5
        %v3187 = vrot.slane %v3186, 4
        %v3188 = vrot.slane %v2651, 5
        %v3189 = vsel %vm1912, %v3187, %v3188
        %v3190 = vrot.slane %v3188, 4
        %v3191 = vrot.slane %v2674, 5
        %v3192 = vsel %vm1912, %v3190, %v3191
        %v3193 = vrot.slane %v3075, 5
        %v3194 = vrot.slane %v3193, 4
        %v3195 = vrot.slane %v2653, 5
        %v3196 = vsel %vm1912, %v3194, %v3195
        %v3197 = vrot.slane %v3195, 4
        %v3198 = vrot.slane %v2675, 5
        %v3199 = vsel %vm1912, %v3197, %v3198
        %v3200 = vrot.slane %v3076, 5
        %v3201 = vrot.slane %v3200, 4
        %v3202 = vrot.slane %v2655, 5
        %v3203 = vsel %vm1912, %v3201, %v3202
        %v3204 = vrot.slane %v3202, 4
        %v3205 = vrot.slane %v2676, 5
        %v3206 = vsel %vm1912, %v3204, %v3205
        %v3207 = vrot.slane %v3077, 5
        %v3208 = vrot.slane %v3207, 4
        %v3209 = vrot.slane %v2657, 5
        %v3210 = vsel %vm1912, %v3208, %v3209
        %v3211 = vrot.slane %v3209, 4
        %v3212 = vrot.slane %v2677, 5
        %v3213 = vsel %vm1912, %v3211, %v3212
        %v3214 = vrot.slane %v3078, 5
        %v3215 = vrot.slane %v3214, 4
        %v3216 = vrot.slane %v2659, 5
        %v3217 = vsel %vm1912, %v3215, %v3216
        %v3218 = vrot.slane %v3216, 4
        %v3219 = vrot.slane %v2678, 5
        %v3220 = vsel %vm1912, %v3218, %v3219
        %v3221 = vrot.slane %v3079, 5
        %v3222 = vrot.slane %v3221, 4
        %v3223 = vrot.slane %v2661, 5
        %v3224 = vsel %vm1912, %v3222, %v3223
        %v3225 = vrot.slane %v3223, 4
        %v3226 = vrot.slane %v2679, 5
        %v3227 = vsel %vm1912, %v3225, %v3226
        %v3228 = vrot.slane %v3080, 5
        %v3229 = vrot.slane %v3228, 4
        %v3230 = vrot.slane %v2663, 5
        %v3231 = vsel %vm1912, %v3229, %v3230
        %v3232 = vrot.slane %v3230, 4
        %v3233 = vrot.slane %v2680, 5
        %v3234 = vsel %vm1912, %v3232, %v3233
        %v3235 = vrot.slane %v3081, 5
        %v3236 = vrot.slane %v3235, 4
        %v3237 = vrot.slane %v2665, 5
        %v3238 = vsel %vm1912, %v3236, %v3237
        %v3239 = vrot.slane %v3237, 4
        %v3240 = vrot.slane %v2681, 5
        %v3241 = vsel %vm1912, %v3239, %v3240
        %v3258 = vunpack.c.l.b16 %v1411
        %v3259 = vunpack.c.l.b16 %v1412
        %v3260 = vunpack.c.l.b16 %v1413
        %v3261 = vunpack.c.l.b16 %v1414
        %v3262 = vunpack.c.l.b16 %v1415
        %v3263 = vunpack.c.l.b16 %v1416
        %v3264 = vunpack.c.l.b16 %v1417
        %v3265 = vunpack.c.l.b16 %v1418
        %v3266 = vunpack.c.l.b16 %v1419
        %v3267 = vunpack.c.l.b16 %v1420
        %v3268 = vunpack.c.l.b16 %v1421
        %v3269 = vunpack.c.l.b16 %v1422
        %v3270 = vunpack.c.l.b16 %v1423
        %v3271 = vunpack.c.l.b16 %v1424
        %v3272 = vunpack.c.l.b16 %v1425
        %v3273 = vunpack.c.l.b16 %v1426
        %v3274 = vunpack.c.l.b16 %v1427
        %v3275 = vunpack.c.l.b16 %v1428
        %v3276 = vunpack.c.l.b16 %v1429
        %v3277 = vunpack.c.l.b16 %v1430
        %v3278 = vunpack.c.l.b16 %v1431
        %v3279 = vunpack.c.l.b16 %v1432
        %v3280 = vunpack.c.l.b16 %v1433
        %v3281 = vunpack.c.l.b16 %v1434
        %v3282 = vunpack.c.l.b16 %v1435
        %v3283 = vunpack.c.l.b16 %v1436
        %v3284 = vunpack.c.l.b16 %v1437
        %v3285 = vunpack.c.l.b16 %v1438
        %v3286 = vunpack.c.l.b16 %v1439
        %v3287 = vunpack.c.l.b16 %v1440
        %v3288 = vunpack.c.l.b16 %v1441
        %v3289 = vunpack.c.l.b16 %v1442
        %v3290 = vpack.c.b16 %v3259, %v3258
        %v3291 = vpack.c.b16 %v3261, %v3260
        %v3292 = vpack.c.b16 %v3263, %v3262
        %v3293 = vpack.c.b16 %v3265, %v3264
        %v3294 = vpack.c.b16 %v3267, %v3266
        %v3295 = vpack.c.b16 %v3269, %v3268
        %v3296 = vpack.c.b16 %v3271, %v3270
        %v3297 = vpack.c.b16 %v3273, %v3272
        %v3298 = vpack.c.b16 %v3275, %v3274
        %v3299 = vpack.c.b16 %v3277, %v3276
        %v3300 = vpack.c.b16 %v3279, %v3278
        %v3301 = vpack.c.b16 %v3281, %v3280
        %v3302 = vpack.c.b16 %v3283, %v3282
        %v3303 = vpack.c.b16 %v3285, %v3284
        %v3304 = vpack.c.b16 %v3287, %v3286
        %v3305 = vpack.c.b16 %v3289, %v3288
        %v3306 = vunpack.c.l.b16 %v1475
        %v3307 = vunpack.c.l.b16 %v1485
        %v3308 = vunpack.c.l.b16 %v1499
        %v3309 = vunpack.c.l.b16 %v1509
        %v3310 = vunpack.c.l.b16 %v1523
        %v3311 = vunpack.c.l.b16 %v1533
        %v3312 = vunpack.c.l.b16 %v1547
        %v3313 = vunpack.c.l.b16 %v1557
        %v3314 = vunpack.c.l.b16 %v1571
        %v3315 = vunpack.c.l.b16 %v1581
        %v3316 = vunpack.c.l.b16 %v1595
        %v3317 = vunpack.c.l.b16 %v1605
        %v3318 = vunpack.c.l.b16 %v1619
        %v3319 = vunpack.c.l.b16 %v1629
        %v3320 = vunpack.c.l.b16 %v1643
        %v3321 = vunpack.c.l.b16 %v1653
        %v3322 = vunpack.c.l.b16 %v1667
        %v3323 = vunpack.c.l.b16 %v1677
        %v3324 = vunpack.c.l.b16 %v1691
        %v3325 = vunpack.c.l.b16 %v1701
        %v3326 = vunpack.c.l.b16 %v1715
        %v3327 = vunpack.c.l.b16 %v1725
        %v3328 = vunpack.c.l.b16 %v1739
        %v3329 = vunpack.c.l.b16 %v1749
        %v3330 = vunpack.c.l.b16 %v1763
        %v3331 = vunpack.c.l.b16 %v1773
        %v3332 = vunpack.c.l.b16 %v1787
        %v3333 = vunpack.c.l.b16 %v1797
        %v3334 = vunpack.c.l.b16 %v1811
        %v3335 = vunpack.c.l.b16 %v1821
        %v3336 = vunpack.c.l.b16 %v1835
        %v3337 = vunpack.c.l.b16 %v1845
        %v3338 = vpack.c.b16 %v3307, %v3306
        %v3339 = vpack.c.b16 %v3309, %v3308
        %v3340 = vpack.c.b16 %v3311, %v3310
        %v3341 = vpack.c.b16 %v3313, %v3312
        %v3342 = vpack.c.b16 %v3315, %v3314
        %v3343 = vpack.c.b16 %v3317, %v3316
        %v3344 = vpack.c.b16 %v3319, %v3318
        %v3345 = vpack.c.b16 %v3321, %v3320
        %v3346 = vpack.c.b16 %v3323, %v3322
        %v3347 = vpack.c.b16 %v3325, %v3324
        %v3348 = vpack.c.b16 %v3327, %v3326
        %v3349 = vpack.c.b16 %v3329, %v3328
        %v3350 = vpack.c.b16 %v3331, %v3330
        %v3351 = vpack.c.b16 %v3333, %v3332
        %v3352 = vpack.c.b16 %v3335, %v3334
        %v3353 = vpack.c.b16 %v3337, %v3336
        %3354 = vrot.lane.b32.xlu0 %v3338, 16
        %v3355 = vpop.permute.xlu0 %3354
        %3356 = vrot.lane.b32.xlu0 %v3339, 16
        %v3357 = vpop.permute.xlu0 %3356
        %3358 = vrot.lane.b32.xlu0 %v3340, 16
        %v3359 = vpop.permute.xlu0 %3358
        %3360 = vrot.lane.b32.xlu0 %v3341, 16
        %v3361 = vpop.permute.xlu0 %3360
        %3362 = vrot.lane.b32.xlu0 %v3342, 16
        %v3363 = vpop.permute.xlu0 %3362
        %3364 = vrot.lane.b32.xlu0 %v3343, 16
        %v3365 = vpop.permute.xlu0 %3364
        %3366 = vrot.lane.b32.xlu0 %v3344, 16
        %v3367 = vpop.permute.xlu0 %3366
        %3368 = vrot.lane.b32.xlu0 %v3345, 16
        %v3369 = vpop.permute.xlu0 %3368
        %3370 = vrot.lane.b32.xlu0 %v3346, 16
        %v3371 = vpop.permute.xlu0 %3370
        %3372 = vrot.lane.b32.xlu0 %v3347, 16
        %v3373 = vpop.permute.xlu0 %3372
        %3374 = vrot.lane.b32.xlu0 %v3348, 16
        %v3375 = vpop.permute.xlu0 %3374
        %3376 = vrot.lane.b32.xlu0 %v3349, 16
        %v3377 = vpop.permute.xlu0 %3376
        %3378 = vrot.lane.b32.xlu0 %v3350, 16
        %v3379 = vpop.permute.xlu0 %3378
        %3380 = vrot.lane.b32.xlu0 %v3351, 16
        %v3381 = vpop.permute.xlu0 %3380
        %3382 = vrot.lane.b32.xlu0 %v3352, 16
        %v3383 = vpop.permute.xlu0 %3382
        %3384 = vrot.lane.b32.xlu0 %v3353, 16
        %v3385 = vpop.permute.xlu0 %3384
        %v3386 = vunpack.c.l.b16 %v1916
        %v3387 = vunpack.c.l.b16 %v1919
        %v3388 = vunpack.c.l.b16 %v1923
        %v3389 = vunpack.c.l.b16 %v1926
        %v3390 = vunpack.c.l.b16 %v1930
        %v3391 = vunpack.c.l.b16 %v1933
        %v3392 = vunpack.c.l.b16 %v1937
        %v3393 = vunpack.c.l.b16 %v1940
        %v3394 = vunpack.c.l.b16 %v1944
        %v3395 = vunpack.c.l.b16 %v1947
        %v3396 = vunpack.c.l.b16 %v1951
        %v3397 = vunpack.c.l.b16 %v1954
        %v3398 = vunpack.c.l.b16 %v1958
        %v3399 = vunpack.c.l.b16 %v1961
        %v3400 = vunpack.c.l.b16 %v1965
        %v3401 = vunpack.c.l.b16 %v1968
        %v3402 = vunpack.c.l.b16 %v1972
        %v3403 = vunpack.c.l.b16 %v1975
        %v3404 = vunpack.c.l.b16 %v1979
        %v3405 = vunpack.c.l.b16 %v1982
        %v3406 = vunpack.c.l.b16 %v1986
        %v3407 = vunpack.c.l.b16 %v1989
        %v3408 = vunpack.c.l.b16 %v1993
        %v3409 = vunpack.c.l.b16 %v1996
        %v3410 = vunpack.c.l.b16 %v2000
        %v3411 = vunpack.c.l.b16 %v2003
        %v3412 = vunpack.c.l.b16 %v2007
        %v3413 = vunpack.c.l.b16 %v2010
        %v3414 = vunpack.c.l.b16 %v2014
        %v3415 = vunpack.c.l.b16 %v2017
        %v3416 = vunpack.c.l.b16 %v2021
        %v3417 = vunpack.c.l.b16 %v2024
        %v3418 = vpack.c.b16 %v3387, %v3386
        %v3419 = vpack.c.b16 %v3389, %v3388
        %v3420 = vpack.c.b16 %v3391, %v3390
        %v3421 = vpack.c.b16 %v3393, %v3392
        %v3422 = vpack.c.b16 %v3395, %v3394
        %v3423 = vpack.c.b16 %v3397, %v3396
        %v3424 = vpack.c.b16 %v3399, %v3398
        %v3425 = vpack.c.b16 %v3401, %v3400
        %v3426 = vpack.c.b16 %v3403, %v3402
        %v3427 = vpack.c.b16 %v3405, %v3404
        %v3428 = vpack.c.b16 %v3407, %v3406
        %v3429 = vpack.c.b16 %v3409, %v3408
        %v3430 = vpack.c.b16 %v3411, %v3410
        %v3431 = vpack.c.b16 %v3413, %v3412
        %v3432 = vpack.c.b16 %v3415, %v3414
        %v3433 = vpack.c.b16 %v3417, %v3416
        %3434 = vrot.lane.b32.xlu0 %v3418, 32
        %v3435 = vpop.permute.xlu0 %3434
        %3436 = vrot.lane.b32.xlu0 %v3419, 32
        %v3437 = vpop.permute.xlu0 %3436
        %3438 = vrot.lane.b32.xlu0 %v3420, 32
        %v3439 = vpop.permute.xlu0 %3438
        %3440 = vrot.lane.b32.xlu0 %v3421, 32
        %v3441 = vpop.permute.xlu0 %3440
        %3442 = vrot.lane.b32.xlu0 %v3422, 32
        %v3443 = vpop.permute.xlu0 %3442
        %3444 = vrot.lane.b32.xlu0 %v3423, 32
        %v3445 = vpop.permute.xlu0 %3444
        %3446 = vrot.lane.b32.xlu0 %v3424, 32
        %v3447 = vpop.permute.xlu0 %3446
        %3448 = vrot.lane.b32.xlu0 %v3425, 32
        %v3449 = vpop.permute.xlu0 %3448
        %3450 = vrot.lane.b32.xlu0 %v3426, 32
        %v3451 = vpop.permute.xlu0 %3450
        %3452 = vrot.lane.b32.xlu0 %v3427, 32
        %v3453 = vpop.permute.xlu0 %3452
        %3454 = vrot.lane.b32.xlu0 %v3428, 32
        %v3455 = vpop.permute.xlu0 %3454
        %3456 = vrot.lane.b32.xlu0 %v3429, 32
        %v3457 = vpop.permute.xlu0 %3456
        %3458 = vrot.lane.b32.xlu0 %v3430, 32
        %v3459 = vpop.permute.xlu0 %3458
        %3460 = vrot.lane.b32.xlu0 %v3431, 32
        %v3461 = vpop.permute.xlu0 %3460
        %3462 = vrot.lane.b32.xlu0 %v3432, 32
        %v3463 = vpop.permute.xlu0 %3462
        %3464 = vrot.lane.b32.xlu0 %v3433, 32
        %v3465 = vpop.permute.xlu0 %3464
        %v3482 = vunpack.c.l.b16 %v2025
        %v3483 = vunpack.c.l.b16 %v2026
        %v3484 = vunpack.c.l.b16 %v2027
        %v3485 = vunpack.c.l.b16 %v2028
        %v3486 = vunpack.c.l.b16 %v2029
        %v3487 = vunpack.c.l.b16 %v2030
        %v3488 = vunpack.c.l.b16 %v2031
        %v3489 = vunpack.c.l.b16 %v2032
        %v3490 = vunpack.c.l.b16 %v2033
        %v3491 = vunpack.c.l.b16 %v2034
        %v3492 = vunpack.c.l.b16 %v2035
        %v3493 = vunpack.c.l.b16 %v2036
        %v3494 = vunpack.c.l.b16 %v2037
        %v3495 = vunpack.c.l.b16 %v2038
        %v3496 = vunpack.c.l.b16 %v2039
        %v3497 = vunpack.c.l.b16 %v2040
        %v3498 = vunpack.c.l.b16 %v2041
        %v3499 = vunpack.c.l.b16 %v2042
        %v3500 = vunpack.c.l.b16 %v2043
        %v3501 = vunpack.c.l.b16 %v2044
        %v3502 = vunpack.c.l.b16 %v2045
        %v3503 = vunpack.c.l.b16 %v2046
        %v3504 = vunpack.c.l.b16 %v2047
        %v3505 = vunpack.c.l.b16 %v2048
        %v3506 = vunpack.c.l.b16 %v2049
        %v3507 = vunpack.c.l.b16 %v2050
        %v3508 = vunpack.c.l.b16 %v2051
        %v3509 = vunpack.c.l.b16 %v2052
        %v3510 = vunpack.c.l.b16 %v2053
        %v3511 = vunpack.c.l.b16 %v2054
        %v3512 = vunpack.c.l.b16 %v2055
        %v3513 = vunpack.c.l.b16 %v2056
        %v3514 = vpack.c.b16 %v3483, %v3482
        %v3515 = vpack.c.b16 %v3485, %v3484
        %v3516 = vpack.c.b16 %v3487, %v3486
        %v3517 = vpack.c.b16 %v3489, %v3488
        %v3518 = vpack.c.b16 %v3491, %v3490
        %v3519 = vpack.c.b16 %v3493, %v3492
        %v3520 = vpack.c.b16 %v3495, %v3494
        %v3521 = vpack.c.b16 %v3497, %v3496
        %v3522 = vpack.c.b16 %v3499, %v3498
        %v3523 = vpack.c.b16 %v3501, %v3500
        %v3524 = vpack.c.b16 %v3503, %v3502
        %v3525 = vpack.c.b16 %v3505, %v3504
        %v3526 = vpack.c.b16 %v3507, %v3506
        %v3527 = vpack.c.b16 %v3509, %v3508
        %v3528 = vpack.c.b16 %v3511, %v3510
        %v3529 = vpack.c.b16 %v3513, %v3512
        %3530 = vrot.lane.b32.xlu0 %v3514, 48
        %v3531 = vpop.permute.xlu0 %3530
        %3532 = vrot.lane.b32.xlu0 %v3515, 48
        %v3533 = vpop.permute.xlu0 %3532
        %3534 = vrot.lane.b32.xlu0 %v3516, 48
        %v3535 = vpop.permute.xlu0 %3534
        %3536 = vrot.lane.b32.xlu0 %v3517, 48
        %v3537 = vpop.permute.xlu0 %3536
        %3538 = vrot.lane.b32.xlu0 %v3518, 48
        %v3539 = vpop.permute.xlu0 %3538
        %3540 = vrot.lane.b32.xlu0 %v3519, 48
        %v3541 = vpop.permute.xlu0 %3540
        %3542 = vrot.lane.b32.xlu0 %v3520, 48
        %v3543 = vpop.permute.xlu0 %3542
        %3544 = vrot.lane.b32.xlu0 %v3521, 48
        %v3545 = vpop.permute.xlu0 %3544
        %3546 = vrot.lane.b32.xlu0 %v3522, 48
        %v3547 = vpop.permute.xlu0 %3546
        %3548 = vrot.lane.b32.xlu0 %v3523, 48
        %v3549 = vpop.permute.xlu0 %3548
        %3550 = vrot.lane.b32.xlu0 %v3524, 48
        %v3551 = vpop.permute.xlu0 %3550
        %3552 = vrot.lane.b32.xlu0 %v3525, 48
        %v3553 = vpop.permute.xlu0 %3552
        %3554 = vrot.lane.b32.xlu0 %v3526, 48
        %v3555 = vpop.permute.xlu0 %3554
        %3556 = vrot.lane.b32.xlu0 %v3527, 48
        %v3557 = vpop.permute.xlu0 %3556
        %3558 = vrot.lane.b32.xlu0 %v3528, 48
        %v3559 = vpop.permute.xlu0 %3558
        %3560 = vrot.lane.b32.xlu0 %v3529, 48
        %v3561 = vpop.permute.xlu0 %3560
        %v3562 = vunpack.c.l.b16 %v2086
        %v3563 = vunpack.c.l.b16 %v2096
        %v3564 = vunpack.c.l.b16 %v2110
        %v3565 = vunpack.c.l.b16 %v2120
        %v3566 = vunpack.c.l.b16 %v2134
        %v3567 = vunpack.c.l.b16 %v2144
        %v3568 = vunpack.c.l.b16 %v2158
        %v3569 = vunpack.c.l.b16 %v2168
        %v3570 = vunpack.c.l.b16 %v2182
        %v3571 = vunpack.c.l.b16 %v2192
        %v3572 = vunpack.c.l.b16 %v2206
        %v3573 = vunpack.c.l.b16 %v2216
        %v3574 = vunpack.c.l.b16 %v2230
        %v3575 = vunpack.c.l.b16 %v2240
        %v3576 = vunpack.c.l.b16 %v2254
        %v3577 = vunpack.c.l.b16 %v2264
        %v3578 = vunpack.c.l.b16 %v2278
        %v3579 = vunpack.c.l.b16 %v2288
        %v3580 = vunpack.c.l.b16 %v2302
        %v3581 = vunpack.c.l.b16 %v2312
        %v3582 = vunpack.c.l.b16 %v2326
        %v3583 = vunpack.c.l.b16 %v2336
        %v3584 = vunpack.c.l.b16 %v2350
        %v3585 = vunpack.c.l.b16 %v2360
        %v3586 = vunpack.c.l.b16 %v2374
        %v3587 = vunpack.c.l.b16 %v2384
        %v3588 = vunpack.c.l.b16 %v2398
        %v3589 = vunpack.c.l.b16 %v2408
        %v3590 = vunpack.c.l.b16 %v2422
        %v3591 = vunpack.c.l.b16 %v2432
        %v3592 = vunpack.c.l.b16 %v2446
        %v3593 = vunpack.c.l.b16 %v2456
        %v3594 = vpack.c.b16 %v3563, %v3562
        %v3595 = vpack.c.b16 %v3565, %v3564
        %v3596 = vpack.c.b16 %v3567, %v3566
        %v3597 = vpack.c.b16 %v3569, %v3568
        %v3598 = vpack.c.b16 %v3571, %v3570
        %v3599 = vpack.c.b16 %v3573, %v3572
        %v3600 = vpack.c.b16 %v3575, %v3574
        %v3601 = vpack.c.b16 %v3577, %v3576
        %v3602 = vpack.c.b16 %v3579, %v3578
        %v3603 = vpack.c.b16 %v3581, %v3580
        %v3604 = vpack.c.b16 %v3583, %v3582
        %v3605 = vpack.c.b16 %v3585, %v3584
        %v3606 = vpack.c.b16 %v3587, %v3586
        %v3607 = vpack.c.b16 %v3589, %v3588
        %v3608 = vpack.c.b16 %v3591, %v3590
        %v3609 = vpack.c.b16 %v3593, %v3592
        %3610 = vrot.lane.b32.xlu0 %v3594, 64
        %v3611 = vpop.permute.xlu0 %3610
        %3612 = vrot.lane.b32.xlu0 %v3595, 64
        %v3613 = vpop.permute.xlu0 %3612
        %3614 = vrot.lane.b32.xlu0 %v3596, 64
        %v3615 = vpop.permute.xlu0 %3614
        %3616 = vrot.lane.b32.xlu0 %v3597, 64
        %v3617 = vpop.permute.xlu0 %3616
        %3618 = vrot.lane.b32.xlu0 %v3598, 64
        %v3619 = vpop.permute.xlu0 %3618
        %3620 = vrot.lane.b32.xlu0 %v3599, 64
        %v3621 = vpop.permute.xlu0 %3620
        %3622 = vrot.lane.b32.xlu0 %v3600, 64
        %v3623 = vpop.permute.xlu0 %3622
        %3624 = vrot.lane.b32.xlu0 %v3601, 64
        %v3625 = vpop.permute.xlu0 %3624
        %3626 = vrot.lane.b32.xlu0 %v3602, 64
        %v3627 = vpop.permute.xlu0 %3626
        %3628 = vrot.lane.b32.xlu0 %v3603, 64
        %v3629 = vpop.permute.xlu0 %3628
        %3630 = vrot.lane.b32.xlu0 %v3604, 64
        %v3631 = vpop.permute.xlu0 %3630
        %3632 = vrot.lane.b32.xlu0 %v3605, 64
        %v3633 = vpop.permute.xlu0 %3632
        %3634 = vrot.lane.b32.xlu0 %v3606, 64
        %v3635 = vpop.permute.xlu0 %3634
        %3636 = vrot.lane.b32.xlu0 %v3607, 64
        %v3637 = vpop.permute.xlu0 %3636
        %3638 = vrot.lane.b32.xlu0 %v3608, 64
        %v3639 = vpop.permute.xlu0 %3638
        %3640 = vrot.lane.b32.xlu0 %v3609, 64
        %v3641 = vpop.permute.xlu0 %3640
        %v3642 = vunpack.c.l.b16 %v2524
        %v3643 = vunpack.c.l.b16 %v2527
        %v3644 = vunpack.c.l.b16 %v2531
        %v3645 = vunpack.c.l.b16 %v2534
        %v3646 = vunpack.c.l.b16 %v2538
        %v3647 = vunpack.c.l.b16 %v2541
        %v3648 = vunpack.c.l.b16 %v2545
        %v3649 = vunpack.c.l.b16 %v2548
        %v3650 = vunpack.c.l.b16 %v2552
        %v3651 = vunpack.c.l.b16 %v2555
        %v3652 = vunpack.c.l.b16 %v2559
        %v3653 = vunpack.c.l.b16 %v2562
        %v3654 = vunpack.c.l.b16 %v2566
        %v3655 = vunpack.c.l.b16 %v2569
        %v3656 = vunpack.c.l.b16 %v2573
        %v3657 = vunpack.c.l.b16 %v2576
        %v3658 = vunpack.c.l.b16 %v2580
        %v3659 = vunpack.c.l.b16 %v2583
        %v3660 = vunpack.c.l.b16 %v2587
        %v3661 = vunpack.c.l.b16 %v2590
        %v3662 = vunpack.c.l.b16 %v2594
        %v3663 = vunpack.c.l.b16 %v2597
        %v3664 = vunpack.c.l.b16 %v2601
        %v3665 = vunpack.c.l.b16 %v2604
        %v3666 = vunpack.c.l.b16 %v2608
        %v3667 = vunpack.c.l.b16 %v2611
        %v3668 = vunpack.c.l.b16 %v2615
        %v3669 = vunpack.c.l.b16 %v2618
        %v3670 = vunpack.c.l.b16 %v2622
        %v3671 = vunpack.c.l.b16 %v2625
        %v3672 = vunpack.c.l.b16 %v2629
        %v3673 = vunpack.c.l.b16 %v2632
        %v3674 = vpack.c.b16 %v3643, %v3642
        %v3675 = vpack.c.b16 %v3645, %v3644
        %v3676 = vpack.c.b16 %v3647, %v3646
        %v3677 = vpack.c.b16 %v3649, %v3648
        %v3678 = vpack.c.b16 %v3651, %v3650
        %v3679 = vpack.c.b16 %v3653, %v3652
        %v3680 = vpack.c.b16 %v3655, %v3654
        %v3681 = vpack.c.b16 %v3657, %v3656
        %v3682 = vpack.c.b16 %v3659, %v3658
        %v3683 = vpack.c.b16 %v3661, %v3660
        %v3684 = vpack.c.b16 %v3663, %v3662
        %v3685 = vpack.c.b16 %v3665, %v3664
        %v3686 = vpack.c.b16 %v3667, %v3666
        %v3687 = vpack.c.b16 %v3669, %v3668
        %v3688 = vpack.c.b16 %v3671, %v3670
        %v3689 = vpack.c.b16 %v3673, %v3672
        %3690 = vrot.lane.b32.xlu0 %v3674, 80
        %v3691 = vpop.permute.xlu0 %3690
        %3692 = vrot.lane.b32.xlu0 %v3675, 80
        %v3693 = vpop.permute.xlu0 %3692
        %3694 = vrot.lane.b32.xlu0 %v3676, 80
        %v3695 = vpop.permute.xlu0 %3694
        %3696 = vrot.lane.b32.xlu0 %v3677, 80
        %v3697 = vpop.permute.xlu0 %3696
        %3698 = vrot.lane.b32.xlu0 %v3678, 80
        %v3699 = vpop.permute.xlu0 %3698
        %3700 = vrot.lane.b32.xlu0 %v3679, 80
        %v3701 = vpop.permute.xlu0 %3700
        %3702 = vrot.lane.b32.xlu0 %v3680, 80
        %v3703 = vpop.permute.xlu0 %3702
        %3704 = vrot.lane.b32.xlu0 %v3681, 80
        %v3705 = vpop.permute.xlu0 %3704
        %3706 = vrot.lane.b32.xlu0 %v3682, 80
        %v3707 = vpop.permute.xlu0 %3706
        %3708 = vrot.lane.b32.xlu0 %v3683, 80
        %v3709 = vpop.permute.xlu0 %3708
        %3710 = vrot.lane.b32.xlu0 %v3684, 80
        %v3711 = vpop.permute.xlu0 %3710
        %3712 = vrot.lane.b32.xlu0 %v3685, 80
        %v3713 = vpop.permute.xlu0 %3712
        %3714 = vrot.lane.b32.xlu0 %v3686, 80
        %v3715 = vpop.permute.xlu0 %3714
        %3716 = vrot.lane.b32.xlu0 %v3687, 80
        %v3717 = vpop.permute.xlu0 %3716
        %3718 = vrot.lane.b32.xlu0 %v3688, 80
        %v3719 = vpop.permute.xlu0 %3718
        %3720 = vrot.lane.b32.xlu0 %v3689, 80
        %v3721 = vpop.permute.xlu0 %3720
        %v3738 = vunpack.c.l.b16 %v2634
        %v3739 = vunpack.c.l.b16 %v2635
        %v3740 = vunpack.c.l.b16 %v2636
        %v3741 = vunpack.c.l.b16 %v2637
        %v3742 = vunpack.c.l.b16 %v2638
        %v3743 = vunpack.c.l.b16 %v2639
        %v3744 = vunpack.c.l.b16 %v2640
        %v3745 = vunpack.c.l.b16 %v2641
        %v3746 = vunpack.c.l.b16 %v2642
        %v3747 = vunpack.c.l.b16 %v2643
        %v3748 = vunpack.c.l.b16 %v2644
        %v3749 = vunpack.c.l.b16 %v2645
        %v3750 = vunpack.c.l.b16 %v2646
        %v3751 = vunpack.c.l.b16 %v2647
        %v3752 = vunpack.c.l.b16 %v2648
        %v3753 = vunpack.c.l.b16 %v2649
        %v3754 = vunpack.c.l.b16 %v2650
        %v3755 = vunpack.c.l.b16 %v2651
        %v3756 = vunpack.c.l.b16 %v2652
        %v3757 = vunpack.c.l.b16 %v2653
        %v3758 = vunpack.c.l.b16 %v2654
        %v3759 = vunpack.c.l.b16 %v2655
        %v3760 = vunpack.c.l.b16 %v2656
        %v3761 = vunpack.c.l.b16 %v2657
        %v3762 = vunpack.c.l.b16 %v2658
        %v3763 = vunpack.c.l.b16 %v2659
        %v3764 = vunpack.c.l.b16 %v2660
        %v3765 = vunpack.c.l.b16 %v2661
        %v3766 = vunpack.c.l.b16 %v2662
        %v3767 = vunpack.c.l.b16 %v2663
        %v3768 = vunpack.c.l.b16 %v2664
        %v3769 = vunpack.c.l.b16 %v2665
        %v3770 = vpack.c.b16 %v3739, %v3738
        %v3771 = vpack.c.b16 %v3741, %v3740
        %v3772 = vpack.c.b16 %v3743, %v3742
        %v3773 = vpack.c.b16 %v3745, %v3744
        %v3774 = vpack.c.b16 %v3747, %v3746
        %v3775 = vpack.c.b16 %v3749, %v3748
        %v3776 = vpack.c.b16 %v3751, %v3750
        %v3777 = vpack.c.b16 %v3753, %v3752
        %v3778 = vpack.c.b16 %v3755, %v3754
        %v3779 = vpack.c.b16 %v3757, %v3756
        %v3780 = vpack.c.b16 %v3759, %v3758
        %v3781 = vpack.c.b16 %v3761, %v3760
        %v3782 = vpack.c.b16 %v3763, %v3762
        %v3783 = vpack.c.b16 %v3765, %v3764
        %v3784 = vpack.c.b16 %v3767, %v3766
        %v3785 = vpack.c.b16 %v3769, %v3768
        %3786 = vrot.lane.b32.xlu0 %v3770, 96
        %v3787 = vpop.permute.xlu0 %3786
        %3788 = vrot.lane.b32.xlu0 %v3771, 96
        %v3789 = vpop.permute.xlu0 %3788
        %3790 = vrot.lane.b32.xlu0 %v3772, 96
        %v3791 = vpop.permute.xlu0 %3790
        %3792 = vrot.lane.b32.xlu0 %v3773, 96
        %v3793 = vpop.permute.xlu0 %3792
        %3794 = vrot.lane.b32.xlu0 %v3774, 96
        %v3795 = vpop.permute.xlu0 %3794
        %3796 = vrot.lane.b32.xlu0 %v3775, 96
        %v3797 = vpop.permute.xlu0 %3796
        %3798 = vrot.lane.b32.xlu0 %v3776, 96
        %v3799 = vpop.permute.xlu0 %3798
        %3800 = vrot.lane.b32.xlu0 %v3777, 96
        %v3801 = vpop.permute.xlu0 %3800
        %3802 = vrot.lane.b32.xlu0 %v3778, 96
        %v3803 = vpop.permute.xlu0 %3802
        %3804 = vrot.lane.b32.xlu0 %v3779, 96
        %v3805 = vpop.permute.xlu0 %3804
        %3806 = vrot.lane.b32.xlu0 %v3780, 96
        %v3807 = vpop.permute.xlu0 %3806
        %3808 = vrot.lane.b32.xlu0 %v3781, 96
        %v3809 = vpop.permute.xlu0 %3808
        %3810 = vrot.lane.b32.xlu0 %v3782, 96
        %v3811 = vpop.permute.xlu0 %3810
        %3812 = vrot.lane.b32.xlu0 %v3783, 96
        %v3813 = vpop.permute.xlu0 %3812
        %3814 = vrot.lane.b32.xlu0 %v3784, 96
        %v3815 = vpop.permute.xlu0 %3814
        %3816 = vrot.lane.b32.xlu0 %v3785, 96
        %v3817 = vpop.permute.xlu0 %3816
        %v3818 = vunpack.c.l.b16 %v2695
        %v3819 = vunpack.c.l.b16 %v2705
        %v3820 = vunpack.c.l.b16 %v2719
        %v3821 = vunpack.c.l.b16 %v2729
        %v3822 = vunpack.c.l.b16 %v2743
        %v3823 = vunpack.c.l.b16 %v2753
        %v3824 = vunpack.c.l.b16 %v2767
        %v3825 = vunpack.c.l.b16 %v2777
        %v3826 = vunpack.c.l.b16 %v2791
        %v3827 = vunpack.c.l.b16 %v2801
        %v3828 = vunpack.c.l.b16 %v2815
        %v3829 = vunpack.c.l.b16 %v2825
        %v3830 = vunpack.c.l.b16 %v2839
        %v3831 = vunpack.c.l.b16 %v2849
        %v3832 = vunpack.c.l.b16 %v2863
        %v3833 = vunpack.c.l.b16 %v2873
        %v3834 = vunpack.c.l.b16 %v2887
        %v3835 = vunpack.c.l.b16 %v2897
        %v3836 = vunpack.c.l.b16 %v2911
        %v3837 = vunpack.c.l.b16 %v2921
        %v3838 = vunpack.c.l.b16 %v2935
        %v3839 = vunpack.c.l.b16 %v2945
        %v3840 = vunpack.c.l.b16 %v2959
        %v3841 = vunpack.c.l.b16 %v2969
        %v3842 = vunpack.c.l.b16 %v2983
        %v3843 = vunpack.c.l.b16 %v2993
        %v3844 = vunpack.c.l.b16 %v3007
        %v3845 = vunpack.c.l.b16 %v3017
        %v3846 = vunpack.c.l.b16 %v3031
        %v3847 = vunpack.c.l.b16 %v3041
        %v3848 = vunpack.c.l.b16 %v3055
        %v3849 = vunpack.c.l.b16 %v3065
        %v3850 = vpack.c.b16 %v3819, %v3818
        %v3851 = vpack.c.b16 %v3821, %v3820
        %v3852 = vpack.c.b16 %v3823, %v3822
        %v3853 = vpack.c.b16 %v3825, %v3824
        %v3854 = vpack.c.b16 %v3827, %v3826
        %v3855 = vpack.c.b16 %v3829, %v3828
        %v3856 = vpack.c.b16 %v3831, %v3830
        %v3857 = vpack.c.b16 %v3833, %v3832
        %v3858 = vpack.c.b16 %v3835, %v3834
        %v3859 = vpack.c.b16 %v3837, %v3836
        %v3860 = vpack.c.b16 %v3839, %v3838
        %v3861 = vpack.c.b16 %v3841, %v3840
        %v3862 = vpack.c.b16 %v3843, %v3842
        %v3863 = vpack.c.b16 %v3845, %v3844
        %v3864 = vpack.c.b16 %v3847, %v3846
        %v3865 = vpack.c.b16 %v3849, %v3848
        %3866 = vrot.lane.b32.xlu0 %v3850, 112
        %v3867 = vpop.permute.xlu0 %3866
        %3868 = vrot.lane.b32.xlu0 %v3851, 112
        %v3869 = vpop.permute.xlu0 %3868
        %3870 = vrot.lane.b32.xlu0 %v3852, 112
        %v3871 = vpop.permute.xlu0 %3870
        %3872 = vrot.lane.b32.xlu0 %v3853, 112
        %v3873 = vpop.permute.xlu0 %3872
        %3874 = vrot.lane.b32.xlu0 %v3854, 112
        %v3875 = vpop.permute.xlu0 %3874
        %3876 = vrot.lane.b32.xlu0 %v3855, 112
        %v3877 = vpop.permute.xlu0 %3876
        %3878 = vrot.lane.b32.xlu0 %v3856, 112
        %v3879 = vpop.permute.xlu0 %3878
        %3880 = vrot.lane.b32.xlu0 %v3857, 112
        %v3881 = vpop.permute.xlu0 %3880
        %3882 = vrot.lane.b32.xlu0 %v3858, 112
        %v3883 = vpop.permute.xlu0 %3882
        %3884 = vrot.lane.b32.xlu0 %v3859, 112
        %v3885 = vpop.permute.xlu0 %3884
        %3886 = vrot.lane.b32.xlu0 %v3860, 112
        %v3887 = vpop.permute.xlu0 %3886
        %3888 = vrot.lane.b32.xlu0 %v3861, 112
        %v3889 = vpop.permute.xlu0 %3888
        %3890 = vrot.lane.b32.xlu0 %v3862, 112
        %v3891 = vpop.permute.xlu0 %3890
        %3892 = vrot.lane.b32.xlu0 %v3863, 112
        %v3893 = vpop.permute.xlu0 %3892
        %3894 = vrot.lane.b32.xlu0 %v3864, 112
        %v3895 = vpop.permute.xlu0 %3894
        %3896 = vrot.lane.b32.xlu0 %v3865, 112
        %v3897 = vpop.permute.xlu0 %3896
        %v3898 = vunpack.c.l.b16 %v3133
        %v3899 = vunpack.c.l.b16 %v3136
        %v3900 = vunpack.c.l.b16 %v3140
        %v3901 = vunpack.c.l.b16 %v3143
        %v3902 = vunpack.c.l.b16 %v3147
        %v3903 = vunpack.c.l.b16 %v3150
        %v3904 = vunpack.c.l.b16 %v3154
        %v3905 = vunpack.c.l.b16 %v3157
        %v3906 = vunpack.c.l.b16 %v3161
        %v3907 = vunpack.c.l.b16 %v3164
        %v3908 = vunpack.c.l.b16 %v3168
        %v3909 = vunpack.c.l.b16 %v3171
        %v3910 = vunpack.c.l.b16 %v3175
        %v3911 = vunpack.c.l.b16 %v3178
        %v3912 = vunpack.c.l.b16 %v3182
        %v3913 = vunpack.c.l.b16 %v3185
        %v3914 = vunpack.c.l.b16 %v3189
        %v3915 = vunpack.c.l.b16 %v3192
        %v3916 = vunpack.c.l.b16 %v3196
        %v3917 = vunpack.c.l.b16 %v3199
        %v3918 = vunpack.c.l.b16 %v3203
        %v3919 = vunpack.c.l.b16 %v3206
        %v3920 = vunpack.c.l.b16 %v3210
        %v3921 = vunpack.c.l.b16 %v3213
        %v3922 = vunpack.c.l.b16 %v3217
        %v3923 = vunpack.c.l.b16 %v3220
        %v3924 = vunpack.c.l.b16 %v3224
        %v3925 = vunpack.c.l.b16 %v3227
        %v3926 = vunpack.c.l.b16 %v3231
        %v3927 = vunpack.c.l.b16 %v3234
        %v3928 = vunpack.c.l.b16 %v3238
        %v3929 = vunpack.c.l.b16 %v3241
        %v3930 = vpack.c.b16 %v3899, %v3898
        %v3931 = vpack.c.b16 %v3901, %v3900
        %v3932 = vpack.c.b16 %v3903, %v3902
        %v3933 = vpack.c.b16 %v3905, %v3904
        %v3934 = vpack.c.b16 %v3907, %v3906
        %v3935 = vpack.c.b16 %v3909, %v3908
        %v3936 = vpack.c.b16 %v3911, %v3910
        %v3937 = vpack.c.b16 %v3913, %v3912
        %v3938 = vpack.c.b16 %v3915, %v3914
        %v3939 = vpack.c.b16 %v3917, %v3916
        %v3940 = vpack.c.b16 %v3919, %v3918
        %v3941 = vpack.c.b16 %v3921, %v3920
        %v3942 = vpack.c.b16 %v3923, %v3922
        %v3943 = vpack.c.b16 %v3925, %v3924
        %v3944 = vpack.c.b16 %v3927, %v3926
        %v3945 = vpack.c.b16 %v3929, %v3928
        %vm3946 = vcmask 130048
        %v3949 = vsel %vm3946, %v3290, %v3355
        %v3952 = vsel %vm3946, %v3291, %v3357
        %v3955 = vsel %vm3946, %v3292, %v3359
        %v3958 = vsel %vm3946, %v3293, %v3361
        %v3961 = vsel %vm3946, %v3294, %v3363
        %v3964 = vsel %vm3946, %v3295, %v3365
        %v3967 = vsel %vm3946, %v3296, %v3367
        %v3970 = vsel %vm3946, %v3297, %v3369
        %v3973 = vsel %vm3946, %v3298, %v3371
        %v3976 = vsel %vm3946, %v3299, %v3373
        %v3979 = vsel %vm3946, %v3300, %v3375
        %v3982 = vsel %vm3946, %v3301, %v3377
        %v3985 = vsel %vm3946, %v3302, %v3379
        %v3988 = vsel %vm3946, %v3303, %v3381
        %v3991 = vsel %vm3946, %v3304, %v3383
        %v3994 = vsel %vm3946, %v3305, %v3385
        %vm3995 = vcmask 261120
        %v3997 = vsel %vm3995, %v3949, %v3435
        %v3999 = vsel %vm3995, %v3952, %v3437
        %v4001 = vsel %vm3995, %v3955, %v3439
        %v4003 = vsel %vm3995, %v3958, %v3441
        %v4005 = vsel %vm3995, %v3961, %v3443
        %v4007 = vsel %vm3995, %v3964, %v3445
        %v4009 = vsel %vm3995, %v3967, %v3447
        %v4011 = vsel %vm3995, %v3970, %v3449
        %v4013 = vsel %vm3995, %v3973, %v3451
        %v4015 = vsel %vm3995, %v3976, %v3453
        %v4017 = vsel %vm3995, %v3979, %v3455
        %v4019 = vsel %vm3995, %v3982, %v3457
        %v4021 = vsel %vm3995, %v3985, %v3459
        %v4023 = vsel %vm3995, %v3988, %v3461
        %v4025 = vsel %vm3995, %v3991, %v3463
        %v4027 = vsel %vm3995, %v3994, %v3465
        %vm4028 = vcmask 392192
        %v4030 = vsel %vm4028, %v3997, %v3531
        %v4032 = vsel %vm4028, %v3999, %v3533
        %v4034 = vsel %vm4028, %v4001, %v3535
        %v4036 = vsel %vm4028, %v4003, %v3537
        %v4038 = vsel %vm4028, %v4005, %v3539
        %v4040 = vsel %vm4028, %v4007, %v3541
        %v4042 = vsel %vm4028, %v4009, %v3543
        %v4044 = vsel %vm4028, %v4011, %v3545
        %v4046 = vsel %vm4028, %v4013, %v3547
        %v4048 = vsel %vm4028, %v4015, %v3549
        %v4050 = vsel %vm4028, %v4017, %v3551
        %v4052 = vsel %vm4028, %v4019, %v3553
        %v4054 = vsel %vm4028, %v4021, %v3555
        %v4056 = vsel %vm4028, %v4023, %v3557
        %v4058 = vsel %vm4028, %v4025, %v3559
        %v4060 = vsel %vm4028, %v4027, %v3561
        %vm4061 = vcmask 523264
        %v4063 = vsel %vm4061, %v4030, %v3611
        %v4065 = vsel %vm4061, %v4032, %v3613
        %v4067 = vsel %vm4061, %v4034, %v3615
        %v4069 = vsel %vm4061, %v4036, %v3617
        %v4071 = vsel %vm4061, %v4038, %v3619
        %v4073 = vsel %vm4061, %v4040, %v3621
        %v4075 = vsel %vm4061, %v4042, %v3623
        %v4077 = vsel %vm4061, %v4044, %v3625
        %v4079 = vsel %vm4061, %v4046, %v3627
        %v4081 = vsel %vm4061, %v4048, %v3629
        %v4083 = vsel %vm4061, %v4050, %v3631
        %v4085 = vsel %vm4061, %v4052, %v3633
        %v4087 = vsel %vm4061, %v4054, %v3635
        %v4089 = vsel %vm4061, %v4056, %v3637
        %v4091 = vsel %vm4061, %v4058, %v3639
        %v4093 = vsel %vm4061, %v4060, %v3641
        %vm4094 = vcmask 654336
        %v4096 = vsel %vm4094, %v4063, %v3691
        %v4098 = vsel %vm4094, %v4065, %v3693
        %v4100 = vsel %vm4094, %v4067, %v3695
        %v4102 = vsel %vm4094, %v4069, %v3697
        %v4104 = vsel %vm4094, %v4071, %v3699
        %v4106 = vsel %vm4094, %v4073, %v3701
        %v4108 = vsel %vm4094, %v4075, %v3703
        %v4110 = vsel %vm4094, %v4077, %v3705
        %v4112 = vsel %vm4094, %v4079, %v3707
        %v4114 = vsel %vm4094, %v4081, %v3709
        %v4116 = vsel %vm4094, %v4083, %v3711
        %v4118 = vsel %vm4094, %v4085, %v3713
        %v4120 = vsel %vm4094, %v4087, %v3715
        %v4122 = vsel %vm4094, %v4089, %v3717
        %v4124 = vsel %vm4094, %v4091, %v3719
        %v4126 = vsel %vm4094, %v4093, %v3721
        %vm4127 = vcmask 785408
        %v4129 = vsel %vm4127, %v4096, %v3787
        %v4131 = vsel %vm4127, %v4098, %v3789
        %v4133 = vsel %vm4127, %v4100, %v3791
        %v4135 = vsel %vm4127, %v4102, %v3793
        %v4137 = vsel %vm4127, %v4104, %v3795
        %v4139 = vsel %vm4127, %v4106, %v3797
        %v4141 = vsel %vm4127, %v4108, %v3799
        %v4143 = vsel %vm4127, %v4110, %v3801
        %v4145 = vsel %vm4127, %v4112, %v3803
        %v4147 = vsel %vm4127, %v4114, %v3805
        %v4149 = vsel %vm4127, %v4116, %v3807
        %v4151 = vsel %vm4127, %v4118, %v3809
        %v4153 = vsel %vm4127, %v4120, %v3811
        %v4155 = vsel %vm4127, %v4122, %v3813
        %v4157 = vsel %vm4127, %v4124, %v3815
        %v4159 = vsel %vm4127, %v4126, %v3817
        %vm4160 = vcmask 916480
        %v4162 = vsel %vm4160, %v4129, %v3867
        %v4165 = vsel %vm4160, %v4131, %v3869
        %v4168 = vsel %vm4160, %v4133, %v3871
        %v4171 = vsel %vm4160, %v4135, %v3873
        %v4174 = vsel %vm4160, %v4137, %v3875
        %v4177 = vsel %vm4160, %v4139, %v3877
        %v4180 = vsel %vm4160, %v4141, %v3879
        %v4183 = vsel %vm4160, %v4143, %v3881
        %v4186 = vsel %vm4160, %v4145, %v3883
        %v4189 = vsel %vm4160, %v4147, %v3885
        %v4192 = vsel %vm4160, %v4149, %v3887
        %v4195 = vsel %vm4160, %v4151, %v3889
        %v4198 = vsel %vm4160, %v4153, %v3891
        %v4201 = vsel %vm4160, %v4155, %v3893
        %v4204 = vsel %vm4160, %v4157, %v3895
        %v4207 = vsel %vm4160, %v4159, %v3897
        %v4227 = vunpack.c.l.b16 %v762
        %v4228 = vunpack.c.l.b16 %v763
        %v4229 = vunpack.c.l.b16 %v764
        %v4230 = vunpack.c.l.b16 %v765
        %v4231 = vunpack.c.l.b16 %v766
        %v4232 = vunpack.c.l.b16 %v767
        %v4233 = vunpack.c.l.b16 %v768
        %v4234 = vunpack.c.l.b16 %v769
        %v4235 = vunpack.c.l.b16 %v770
        %v4236 = vunpack.c.l.b16 %v771
        %v4237 = vunpack.c.l.b16 %v772
        %v4238 = vunpack.c.l.b16 %v773
        %v4239 = vunpack.c.l.b16 %v774
        %v4240 = vunpack.c.l.b16 %v775
        %v4241 = vunpack.c.l.b16 %v776
        %v4242 = vunpack.c.l.b16 %v777
        %v4243 = vunpack.c.l.b16 %v778
        %v4244 = vunpack.c.l.b16 %v779
        %v4245 = vpack.c.b16 %v4228, %v4227
        %v4246 = vpack.c.b16 %v4230, %v4229
        %v4247 = vpack.c.b16 %v4232, %v4231
        %v4248 = vpack.c.b16 %v4234, %v4233
        %v4249 = vpack.c.b16 %v4236, %v4235
        %v4250 = vpack.c.b16 %v4238, %v4237
        %v4251 = vpack.c.b16 %v4240, %v4239
        %v4252 = vpack.c.b16 %v4242, %v4241
        %v4253 = vpack.c.b16 %v4244, %v4243
        %v4264 = vsel %vm3946, %v3930, 0
        %v4267 = vsel %vm3946, %v3931, 0
        %v4270 = vsel %vm3946, %v3932, 0
        %v4273 = vsel %vm3946, %v3933, 0
        %v4276 = vsel %vm3946, %v3934, 0
        %v4279 = vsel %vm3946, %v3935, 0
        %v4282 = vsel %vm3946, %v3936, 0
        %v4285 = vsel %vm3946, %v3937, 0
        %v4288 = vsel %vm3946, %v3938, 0
        %v4291 = vsel %vm3946, %v3939, 0
        %v4294 = vsel %vm3946, %v3940, 0
        %v4297 = vsel %vm3946, %v3941, 0
        %v4300 = vsel %vm3946, %v3942, 0
        %v4303 = vsel %vm3946, %v3943, 0
        %v4306 = vsel %vm3946, %v3944, 0
        %v4309 = vsel %vm3946, %v3945, 0
        %4311 = vmatprep.subr.bf16.mxu0 0
        %4312 = vmatpush1.bf16.msra.mxu0 %v4245
        %4313 = vmatprep.subr.bf16.mxu0 0
        %4314 = vmatpush1.bf16.msra.mxu0 %v4246
        %4315 = vmatprep.subr.bf16.mxu0 0
        %4316 = vmatpush1.bf16.msra.mxu0 %v4247
        %4317 = vmatprep.subr.bf16.mxu0 0
        %4318 = vmatpush1.bf16.msra.mxu0 %v4248
        %4319 = vmatprep.subr.bf16.mxu0 0
        %4320 = vmatpush1.bf16.msra.mxu0 %v4249
        %4321 = vmatprep.subr.bf16.mxu0 0
        %4322 = vmatpush1.bf16.msra.mxu0 %v4250
        %4323 = vmatprep.subr.bf16.mxu0 0
        %4324 = vmatpush1.bf16.msra.mxu0 %v4251
        %4325 = vmatprep.subr.bf16.mxu0 0
        %4326 = vmatpush1.bf16.msra.mxu0 %v4252
        %4327 = vmatprep.subr.bf16.mxu0 0
        %4328 = vmatpush1.bf16.msra.mxu0 %v4253
        %4329 = vmatprep.subr.bf16.mxu0 0
        %4330 = vmatpush1.bf16.msra.mxu0 0
        %4331 = vmatprep.subr.bf16.mxu0 0
        %4332 = vmatpush1.bf16.msra.mxu0 0
        %4333 = vmatprep.subr.bf16.mxu0 0
        %4334 = vmatpush1.bf16.msra.mxu0 0
        %4335 = vmatprep.subr.bf16.mxu0 0
        %4336 = vmatpush1.bf16.msra.mxu0 0
        %4337 = vmatprep.subr.bf16.mxu0 0
        %4338 = vmatpush1.bf16.msra.mxu0 0
        %4339 = vmatprep.subr.bf16.mxu0 0
        %4340 = vmatpush1.bf16.msra.mxu0 0
        %4341 = vmatprep.subr.bf16.mxu0 0
        %4342 = vmatpush1.bf16.msra.mxu0 0
        %4343 = vmatprep.mubr.bf16.mxu0 %v4264
        %4344 = vmatmul.mubr.bf16.gmra.mrb[0].mxu0 %v4162
        %v4345 = vpop.f32.mrb[0].mxu0
        %v4346 = vadd.f32 0.0, %v4345
        %v4347 = vpop.f32.mrb[0].mxu0
        %v4348 = vpop.f32.mrb[0].mxu0
        %v4349 = vadd.f32 0.0, %v4348
        %v4350 = vpop.f32.mrb[0].mxu0
        %4351 = vmatprep.mubr.bf16.mxu0 %v4267
        %4352 = vmatmul.mubr.bf16.gmra.mrb[0].mxu0 %v4165
        %v4353 = vpop.f32.mrb[0].mxu0
        %v4354 = vadd.f32 0.0, %v4353
        %v4355 = vpop.f32.mrb[0].mxu0
        %v4356 = vpop.f32.mrb[0].mxu0
        %v4357 = vadd.f32 0.0, %v4356
        %v4358 = vpop.f32.mrb[0].mxu0
        %4359 = vmatprep.mubr.bf16.mxu0 %v4270
        %4360 = vmatmul.mubr.bf16.gmra.mrb[0].mxu0 %v4168
        %v4361 = vpop.f32.mrb[0].mxu0
        %v4362 = vadd.f32 0.0, %v4361
        %v4363 = vpop.f32.mrb[0].mxu0
        %v4364 = vpop.f32.mrb[0].mxu0
        %v4365 = vadd.f32 0.0, %v4364
        %v4366 = vpop.f32.mrb[0].mxu0
        %4367 = vmatprep.mubr.bf16.mxu0 %v4273
        %4368 = vmatmul.mubr.bf16.gmra.mrb[0].mxu0 %v4171
        %v4369 = vpop.f32.mrb[0].mxu0
        %v4370 = vadd.f32 0.0, %v4369
        %v4371 = vpop.f32.mrb[0].mxu0
        %v4372 = vpop.f32.mrb[0].mxu0
        %v4373 = vadd.f32 0.0, %v4372
        %v4374 = vpop.f32.mrb[0].mxu0
        %4375 = vmatprep.mubr.bf16.mxu0 %v4276
        %4376 = vmatmul.mubr.bf16.gmra.mrb[0].mxu0 %v4174
        %v4377 = vpop.f32.mrb[0].mxu0
        %v4378 = vadd.f32 0.0, %v4377
        %v4379 = vpop.f32.mrb[0].mxu0
        %v4380 = vpop.f32.mrb[0].mxu0
        %v4381 = vadd.f32 0.0, %v4380
        %v4382 = vpop.f32.mrb[0].mxu0
        %4383 = vmatprep.mubr.bf16.mxu0 %v4279
        %4384 = vmatmul.mubr.bf16.gmra.mrb[0].mxu0 %v4177
        %v4385 = vpop.f32.mrb[0].mxu0
        %v4386 = vadd.f32 0.0, %v4385
        %v4387 = vpop.f32.mrb[0].mxu0
        %v4388 = vpop.f32.mrb[0].mxu0
        %v4389 = vadd.f32 0.0, %v4388
        %v4390 = vpop.f32.mrb[0].mxu0
        %4391 = vmatprep.mubr.bf16.mxu0 %v4282
        %4392 = vmatmul.mubr.bf16.gmra.mrb[0].mxu0 %v4180
        %v4393 = vpop.f32.mrb[0].mxu0
        %v4394 = vadd.f32 0.0, %v4393
        %v4395 = vpop.f32.mrb[0].mxu0
        %v4396 = vpop.f32.mrb[0].mxu0
        %v4397 = vadd.f32 0.0, %v4396
        %v4398 = vpop.f32.mrb[0].mxu0
        %4399 = vmatprep.mubr.bf16.mxu0 %v4285
        %4400 = vmatmul.mubr.bf16.gmra.mrb[0].mxu0 %v4183
        %v4401 = vpop.f32.mrb[0].mxu0
        %v4402 = vadd.f32 0.0, %v4401
        %v4403 = vpop.f32.mrb[0].mxu0
        %v4404 = vpop.f32.mrb[0].mxu0
        %v4405 = vadd.f32 0.0, %v4404
        %v4406 = vpop.f32.mrb[0].mxu0
        %4407 = vmatprep.mubr.bf16.mxu0 %v4288
        %4408 = vmatmul.mubr.bf16.gmra.mrb[0].mxu0 %v4186
        %v4409 = vpop.f32.mrb[0].mxu0
        %v4410 = vadd.f32 0.0, %v4409
        %v4411 = vpop.f32.mrb[0].mxu0
        %v4412 = vpop.f32.mrb[0].mxu0
        %v4413 = vadd.f32 0.0, %v4412
        %v4414 = vpop.f32.mrb[0].mxu0
        %4415 = vmatprep.mubr.bf16.mxu0 %v4291
        %4416 = vmatmul.mubr.bf16.gmra.mrb[0].mxu0 %v4189
        %v4417 = vpop.f32.mrb[0].mxu0
        %v4418 = vadd.f32 0.0, %v4417
        %v4419 = vpop.f32.mrb[0].mxu0
        %v4420 = vpop.f32.mrb[0].mxu0
        %v4421 = vadd.f32 0.0, %v4420
        %v4422 = vpop.f32.mrb[0].mxu0
        %4423 = vmatprep.mubr.bf16.mxu0 %v4294
        %4424 = vmatmul.mubr.bf16.gmra.mrb[0].mxu0 %v4192
        %v4425 = vpop.f32.mrb[0].mxu0
        %v4426 = vadd.f32 0.0, %v4425
        %v4427 = vpop.f32.mrb[0].mxu0
        %v4428 = vpop.f32.mrb[0].mxu0
        %v4429 = vadd.f32 0.0, %v4428
        %v4430 = vpop.f32.mrb[0].mxu0
        %4431 = vmatprep.mubr.bf16.mxu0 %v4297
        %4432 = vmatmul.mubr.bf16.gmra.mrb[0].mxu0 %v4195
        %v4433 = vpop.f32.mrb[0].mxu0
        %v4434 = vadd.f32 0.0, %v4433
        %v4435 = vpop.f32.mrb[0].mxu0
        %v4436 = vpop.f32.mrb[0].mxu0
        %v4437 = vadd.f32 0.0, %v4436
        %v4438 = vpop.f32.mrb[0].mxu0
        %4439 = vmatprep.mubr.bf16.mxu0 %v4300
        %4440 = vmatmul.mubr.bf16.gmra.mrb[0].mxu0 %v4198
        %v4441 = vpop.f32.mrb[0].mxu0
        %v4442 = vadd.f32 0.0, %v4441
        %v4443 = vpop.f32.mrb[0].mxu0
        %v4444 = vpop.f32.mrb[0].mxu0
        %v4445 = vadd.f32 0.0, %v4444
        %v4446 = vpop.f32.mrb[0].mxu0
        %4447 = vmatprep.mubr.bf16.mxu0 %v4303
        %4448 = vmatmul.mubr.bf16.gmra.mrb[0].mxu0 %v4201
        %v4449 = vpop.f32.mrb[0].mxu0
        %v4450 = vadd.f32 0.0, %v4449
        %v4451 = vpop.f32.mrb[0].mxu0
        %v4452 = vpop.f32.mrb[0].mxu0
        %v4453 = vadd.f32 0.0, %v4452
        %v4454 = vpop.f32.mrb[0].mxu0
        %4455 = vmatprep.mubr.bf16.mxu0 %v4306
        %4456 = vmatmul.mubr.bf16.gmra.mrb[0].mxu0 %v4204
        %v4457 = vpop.f32.mrb[0].mxu0
        %v4458 = vadd.f32 0.0, %v4457
        %v4459 = vpop.f32.mrb[0].mxu0
        %v4460 = vpop.f32.mrb[0].mxu0
        %v4461 = vadd.f32 0.0, %v4460
        %v4462 = vpop.f32.mrb[0].mxu0
        %4463 = vmatprep.mubr.bf16.mxu0 %v4309
        %4464 = vmatmul.mubr.bf16.gmra.mrb[0].mxu0 %v4207
        %v4465 = vpop.f32.mrb[0].mxu0
        %v4466 = vadd.f32 0.0, %v4465
        %v4467 = vpop.f32.mrb[0].mxu0
        %v4468 = vpop.f32.mrb[0].mxu0
        %v4469 = vadd.f32 0.0, %v4468
        %v4470 = vpop.f32.mrb[0].mxu0
        %4471 = vdwg.mxu0
        %v4472 = vlaneseq
        %v4473 = vshrl.u32 %v4472, 7
        %v4474 = vsub.s32 0, %v4473
        %v4475 = vrot.slane %v816, %v4474
        %v4476 = vmul.f32 %v4346, %v4475
        %v4477 = vmul.f32 %v4349, %v4475
        %v4478 = vmul.f32 %v4354, %v4475
        %v4479 = vmul.f32 %v4357, %v4475
        %v4480 = vmul.f32 %v4362, %v4475
        %v4481 = vmul.f32 %v4365, %v4475
        %v4482 = vmul.f32 %v4370, %v4475
        %v4483 = vmul.f32 %v4373, %v4475
        %v4484 = vmul.f32 %v4378, %v4475
        %v4485 = vmul.f32 %v4381, %v4475
        %v4486 = vmul.f32 %v4386, %v4475
        %v4487 = vmul.f32 %v4389, %v4475
        %v4488 = vmul.f32 %v4394, %v4475
        %v4489 = vmul.f32 %v4397, %v4475
        %v4490 = vmul.f32 %v4402, %v4475
        %v4491 = vmul.f32 %v4405, %v4475
        %v4492 = vmul.f32 %v4410, %v4475
        %v4493 = vmul.f32 %v4413, %v4475
        %v4494 = vmul.f32 %v4418, %v4475
        %v4495 = vmul.f32 %v4421, %v4475
        %v4496 = vmul.f32 %v4426, %v4475
        %v4497 = vmul.f32 %v4429, %v4475
        %v4498 = vmul.f32 %v4434, %v4475
        %v4499 = vmul.f32 %v4437, %v4475
        %v4500 = vmul.f32 %v4442, %v4475
        %v4501 = vmul.f32 %v4445, %v4475
        %v4502 = vmul.f32 %v4450, %v4475
        %v4503 = vmul.f32 %v4453, %v4475
        %v4504 = vmul.f32 %v4458, %v4475
        %v4505 = vmul.f32 %v4461, %v4475
        %v4506 = vmul.f32 %v4466, %v4475
        %v4507 = vmul.f32 %v4469, %v4475
        %v4508 = vlaneseq
        %v4509 = vshrl.u32 %v4508, 7
        %v4510 = vsub.s32 0, %v4509
        %v4511 = vrot.slane %v817, %v4510
        %v4512 = vadd.f32 %v4476, %v4511
        %v4513 = vadd.f32 %v4477, %v4511
        %v4514 = vadd.f32 %v4478, %v4511
        %v4515 = vadd.f32 %v4479, %v4511
        %v4516 = vadd.f32 %v4480, %v4511
        %v4517 = vadd.f32 %v4481, %v4511
        %v4518 = vadd.f32 %v4482, %v4511
        %v4519 = vadd.f32 %v4483, %v4511
        %v4520 = vadd.f32 %v4484, %v4511
        %v4521 = vadd.f32 %v4485, %v4511
        %v4522 = vadd.f32 %v4486, %v4511
        %v4523 = vadd.f32 %v4487, %v4511
        %v4524 = vadd.f32 %v4488, %v4511
        %v4525 = vadd.f32 %v4489, %v4511
        %v4526 = vadd.f32 %v4490, %v4511
        %v4527 = vadd.f32 %v4491, %v4511
        %v4528 = vadd.f32 %v4492, %v4511
        %v4529 = vadd.f32 %v4493, %v4511
        %v4530 = vadd.f32 %v4494, %v4511
        %v4531 = vadd.f32 %v4495, %v4511
        %v4532 = vadd.f32 %v4496, %v4511
        %v4533 = vadd.f32 %v4497, %v4511
        %v4534 = vadd.f32 %v4498, %v4511
        %v4535 = vadd.f32 %v4499, %v4511
        %v4536 = vadd.f32 %v4500, %v4511
        %v4537 = vadd.f32 %v4501, %v4511
        %v4538 = vadd.f32 %v4502, %v4511
        %v4539 = vadd.f32 %v4503, %v4511
        %v4540 = vadd.f32 %v4504, %v4511
        %v4541 = vadd.f32 %v4505, %v4511
        %v4542 = vadd.f32 %v4506, %v4511
        %v4543 = vadd.f32 %v4507, %v4511
        %v4544 = vmax.f32 %v4512, 0.0
        %v4545 = vmax.f32 %v4513, 0.0
        %v4546 = vmax.f32 %v4514, 0.0
        %v4547 = vmax.f32 %v4515, 0.0
        %v4548 = vmax.f32 %v4516, 0.0
        %v4549 = vmax.f32 %v4517, 0.0
        %v4550 = vmax.f32 %v4518, 0.0
        %v4551 = vmax.f32 %v4519, 0.0
        %v4552 = vmax.f32 %v4520, 0.0
        %v4553 = vmax.f32 %v4521, 0.0
        %v4554 = vmax.f32 %v4522, 0.0
        %v4555 = vmax.f32 %v4523, 0.0
        %v4556 = vmax.f32 %v4524, 0.0
        %v4557 = vmax.f32 %v4525, 0.0
        %v4558 = vmax.f32 %v4526, 0.0
        %v4559 = vmax.f32 %v4527, 0.0
        %v4560 = vmax.f32 %v4528, 0.0
        %v4561 = vmax.f32 %v4529, 0.0
        %v4562 = vmax.f32 %v4530, 0.0
        %v4563 = vmax.f32 %v4531, 0.0
        %v4564 = vmax.f32 %v4532, 0.0
        %v4565 = vmax.f32 %v4533, 0.0
        %v4566 = vmax.f32 %v4534, 0.0
        %v4567 = vmax.f32 %v4535, 0.0
        %v4568 = vmax.f32 %v4536, 0.0
        %v4569 = vmax.f32 %v4537, 0.0
        %v4570 = vmax.f32 %v4538, 0.0
        %v4571 = vmax.f32 %v4539, 0.0
        %v4572 = vmax.f32 %v4540, 0.0
        %v4573 = vmax.f32 %v4541, 0.0
        %v4574 = vmax.f32 %v4542, 0.0
        %v4575 = vmax.f32 %v4543, 0.0
        %4608 = vrot.lane.b32.xlu0 %v730, 112
        %v4609 = vpop.permute.xlu0 %4608
        %4610 = vrot.lane.b32.xlu0 %v731, 112
        %v4611 = vpop.permute.xlu0 %4610
        %4612 = vrot.lane.b32.xlu0 %v732, 112
        %v4613 = vpop.permute.xlu0 %4612
        %4614 = vrot.lane.b32.xlu0 %v733, 112
        %v4615 = vpop.permute.xlu0 %4614
        %4616 = vrot.lane.b32.xlu0 %v734, 112
        %v4617 = vpop.permute.xlu0 %4616
        %4618 = vrot.lane.b32.xlu0 %v735, 112
        %v4619 = vpop.permute.xlu0 %4618
        %4620 = vrot.lane.b32.xlu0 %v736, 112
        %v4621 = vpop.permute.xlu0 %4620
        %4622 = vrot.lane.b32.xlu0 %v737, 112
        %v4623 = vpop.permute.xlu0 %4622
        %4624 = vrot.lane.b32.xlu0 %v738, 112
        %v4625 = vpop.permute.xlu0 %4624
        %4626 = vrot.lane.b32.xlu0 %v739, 112
        %v4627 = vpop.permute.xlu0 %4626
        %4628 = vrot.lane.b32.xlu0 %v740, 112
        %v4629 = vpop.permute.xlu0 %4628
        %4630 = vrot.lane.b32.xlu0 %v741, 112
        %v4631 = vpop.permute.xlu0 %4630
        %4632 = vrot.lane.b32.xlu0 %v742, 112
        %v4633 = vpop.permute.xlu0 %4632
        %4634 = vrot.lane.b32.xlu0 %v743, 112
        %v4635 = vpop.permute.xlu0 %4634
        %4636 = vrot.lane.b32.xlu0 %v744, 112
        %v4637 = vpop.permute.xlu0 %4636
        %4638 = vrot.lane.b32.xlu0 %v745, 112
        %v4639 = vpop.permute.xlu0 %4638
        %4640 = vrot.lane.b32.xlu0 %v746, 112
        %v4641 = vpop.permute.xlu0 %4640
        %4642 = vrot.lane.b32.xlu0 %v747, 112
        %v4643 = vpop.permute.xlu0 %4642
        %4644 = vrot.lane.b32.xlu0 %v748, 112
        %v4645 = vpop.permute.xlu0 %4644
        %4646 = vrot.lane.b32.xlu0 %v749, 112
        %v4647 = vpop.permute.xlu0 %4646
        %4648 = vrot.lane.b32.xlu0 %v750, 112
        %v4649 = vpop.permute.xlu0 %4648
        %4650 = vrot.lane.b32.xlu0 %v751, 112
        %v4651 = vpop.permute.xlu0 %4650
        %4652 = vrot.lane.b32.xlu0 %v752, 112
        %v4653 = vpop.permute.xlu0 %4652
        %4654 = vrot.lane.b32.xlu0 %v753, 112
        %v4655 = vpop.permute.xlu0 %4654
        %4656 = vrot.lane.b32.xlu0 %v754, 112
        %v4657 = vpop.permute.xlu0 %4656
        %4658 = vrot.lane.b32.xlu0 %v755, 112
        %v4659 = vpop.permute.xlu0 %4658
        %4660 = vrot.lane.b32.xlu0 %v756, 112
        %v4661 = vpop.permute.xlu0 %4660
        %4662 = vrot.lane.b32.xlu0 %v757, 112
        %v4663 = vpop.permute.xlu0 %4662
        %4664 = vrot.lane.b32.xlu0 %v758, 112
        %v4665 = vpop.permute.xlu0 %4664
        %4666 = vrot.lane.b32.xlu0 %v759, 112
        %v4667 = vpop.permute.xlu0 %4666
        %4668 = vrot.lane.b32.xlu0 %v760, 112
        %v4669 = vpop.permute.xlu0 %4668
        %4670 = vrot.lane.b32.xlu0 %v761, 112
        %v4671 = vpop.permute.xlu0 %4670
        %v4704 = vadd.f32 %v4544, %v4609
        %v4705 = vadd.f32 %v4545, %v4611
        %v4706 = vadd.f32 %v4546, %v4613
        %v4707 = vadd.f32 %v4547, %v4615
        %v4708 = vadd.f32 %v4548, %v4617
        %v4709 = vadd.f32 %v4549, %v4619
        %v4710 = vadd.f32 %v4550, %v4621
        %v4711 = vadd.f32 %v4551, %v4623
        %v4712 = vadd.f32 %v4552, %v4625
        %v4713 = vadd.f32 %v4553, %v4627
        %v4714 = vadd.f32 %v4554, %v4629
        %v4715 = vadd.f32 %v4555, %v4631
        %v4716 = vadd.f32 %v4556, %v4633
        %v4717 = vadd.f32 %v4557, %v4635
        %v4718 = vadd.f32 %v4558, %v4637
        %v4719 = vadd.f32 %v4559, %v4639
        %v4720 = vadd.f32 %v4560, %v4641
        %v4721 = vadd.f32 %v4561, %v4643
        %v4722 = vadd.f32 %v4562, %v4645
        %v4723 = vadd.f32 %v4563, %v4647
        %v4724 = vadd.f32 %v4564, %v4649
        %v4725 = vadd.f32 %v4565, %v4651
        %v4726 = vadd.f32 %v4566, %v4653
        %v4727 = vadd.f32 %v4567, %v4655
        %v4728 = vadd.f32 %v4568, %v4657
        %v4729 = vadd.f32 %v4569, %v4659
        %v4730 = vadd.f32 %v4570, %v4661
        %v4731 = vadd.f32 %v4571, %v4663
        %v4732 = vadd.f32 %v4572, %v4665
        %v4733 = vadd.f32 %v4573, %v4667
        %v4734 = vadd.f32 %v4574, %v4669
        %v4735 = vadd.f32 %v4575, %v4671
        %v4736 = vpack.c.bf16 %v4705, %v4704
        %v4737 = vpack.c.bf16 %v4707, %v4706
        %v4738 = vpack.c.bf16 %v4709, %v4708
        %v4739 = vpack.c.bf16 %v4711, %v4710
        %v4740 = vpack.c.bf16 %v4713, %v4712
        %v4741 = vpack.c.bf16 %v4715, %v4714
        %v4742 = vpack.c.bf16 %v4717, %v4716
        %v4743 = vpack.c.bf16 %v4719, %v4718
        %v4744 = vpack.c.bf16 %v4721, %v4720
        %v4745 = vpack.c.bf16 %v4723, %v4722
        %v4746 = vpack.c.bf16 %v4725, %v4724
        %v4747 = vpack.c.bf16 %v4727, %v4726
        %v4748 = vpack.c.bf16 %v4729, %v4728
        %v4749 = vpack.c.bf16 %v4731, %v4730
        %v4750 = vpack.c.bf16 %v4733, %v4732
        %v4751 = vpack.c.bf16 %v4735, %v4734
        %v4768 = vunpack.c.l.b16 %v4736
        %v4769 = vunpack.c.h.b16 %v4736
        %v4770 = vunpack.c.l.b16 %v4737
        %v4771 = vunpack.c.h.b16 %v4737
        %v4772 = vunpack.c.l.b16 %v4738
        %v4773 = vunpack.c.h.b16 %v4738
        %v4774 = vunpack.c.l.b16 %v4739
        %v4775 = vunpack.c.h.b16 %v4739
        %v4776 = vunpack.c.l.b16 %v4740
        %v4777 = vunpack.c.h.b16 %v4740
        %v4778 = vunpack.c.l.b16 %v4741
        %v4779 = vunpack.c.h.b16 %v4741
        %v4780 = vunpack.c.l.b16 %v4742
        %v4781 = vunpack.c.h.b16 %v4742
        %v4782 = vunpack.c.l.b16 %v4743
        %v4783 = vunpack.c.h.b16 %v4743
        %v4784 = vunpack.c.l.b16 %v4744
        %v4785 = vunpack.c.h.b16 %v4744
        %v4786 = vunpack.c.l.b16 %v4745
        %v4787 = vunpack.c.h.b16 %v4745
        %v4788 = vunpack.c.l.b16 %v4746
        %v4789 = vunpack.c.h.b16 %v4746
        %v4790 = vunpack.c.l.b16 %v4747
        %v4791 = vunpack.c.h.b16 %v4747
        %v4792 = vunpack.c.l.b16 %v4748
        %v4793 = vunpack.c.h.b16 %v4748
        %v4794 = vunpack.c.l.b16 %v4749
        %v4795 = vunpack.c.h.b16 %v4749
        %v4796 = vunpack.c.l.b16 %v4750
        %v4797 = vunpack.c.h.b16 %v4750
        %v4798 = vunpack.c.l.b16 %v4751
        %v4799 = vunpack.c.h.b16 %v4751
        %v4800 = vpack.c.b16 %v4768, %v4768
        %v4801 = vpack.c.b16 %v4769, %v4769
        %v4802 = vpack.c.b16 %v4770, %v4770
        %v4803 = vpack.c.b16 %v4771, %v4771
        %v4804 = vpack.c.b16 %v4772, %v4772
        %v4805 = vpack.c.b16 %v4773, %v4773
        %v4806 = vpack.c.b16 %v4774, %v4774
        %v4807 = vpack.c.b16 %v4775, %v4775
        %v4808 = vpack.c.b16 %v4776, %v4776
        %v4809 = vpack.c.b16 %v4777, %v4777
        %v4810 = vpack.c.b16 %v4778, %v4778
        %v4811 = vpack.c.b16 %v4779, %v4779
        %v4812 = vpack.c.b16 %v4780, %v4780
        %v4813 = vpack.c.b16 %v4781, %v4781
        %v4814 = vpack.c.b16 %v4782, %v4782
        %v4815 = vpack.c.b16 %v4783, %v4783
        %v4816 = vpack.c.b16 %v4784, %v4784
        %v4817 = vpack.c.b16 %v4785, %v4785
        %v4818 = vpack.c.b16 %v4786, %v4786
        %v4819 = vpack.c.b16 %v4787, %v4787
        %v4820 = vpack.c.b16 %v4788, %v4788
        %v4821 = vpack.c.b16 %v4789, %v4789
        %v4822 = vpack.c.b16 %v4790, %v4790
        %v4823 = vpack.c.b16 %v4791, %v4791
        %v4824 = vpack.c.b16 %v4792, %v4792
        %v4825 = vpack.c.b16 %v4793, %v4793
        %v4826 = vpack.c.b16 %v4794, %v4794
        %v4827 = vpack.c.b16 %v4795, %v4795
        %v4828 = vpack.c.b16 %v4796, %v4796
        %v4829 = vpack.c.b16 %v4797, %v4797
        %v4830 = vpack.c.b16 %v4798, %v4798
        %v4831 = vpack.c.b16 %v4799, %v4799
        %v4833 = vshrl.u32 %v4800, 16
        %v4835 = vrot.slane %v4833, 7
        %v4836 = vshll.u32 %v4800, 16
        %v4838 = vor.u32 %v4835, %v4836
        %v4839 = vrot.slane %v4835, 4
        %v4841 = vshrl.u32 %v4801, 16
        %v4843 = vrot.slane %v4841, 7
        %v4844 = vshll.u32 %v4801, 16
        %v4846 = vor.u32 %v4843, %v4844
        %v4847 = vsel %vm972, %v4839, %v4846
        %v4848 = vrot.slane %v4843, 4
        %v4850 = vshrl.u32 %v4802, 16
        %v4852 = vrot.slane %v4850, 7
        %v4853 = vshll.u32 %v4802, 16
        %v4855 = vor.u32 %v4852, %v4853
        %v4856 = vrot.slane %v4852, 4
        %v4858 = vshrl.u32 %v4803, 16
        %v4860 = vrot.slane %v4858, 7
        %v4861 = vshll.u32 %v4803, 16
        %v4863 = vor.u32 %v4860, %v4861
        %v4864 = vsel %vm972, %v4856, %v4863
        %v4865 = vrot.slane %v4860, 4
        %v4867 = vshrl.u32 %v4804, 16
        %v4869 = vrot.slane %v4867, 7
        %v4870 = vshll.u32 %v4804, 16
        %v4872 = vor.u32 %v4869, %v4870
        %v4873 = vrot.slane %v4869, 4
        %v4875 = vshrl.u32 %v4805, 16
        %v4877 = vrot.slane %v4875, 7
        %v4878 = vshll.u32 %v4805, 16
        %v4880 = vor.u32 %v4877, %v4878
        %v4881 = vsel %vm972, %v4873, %v4880
        %v4882 = vrot.slane %v4877, 4
        %v4884 = vshrl.u32 %v4806, 16
        %v4886 = vrot.slane %v4884, 7
        %v4887 = vshll.u32 %v4806, 16
        %v4889 = vor.u32 %v4886, %v4887
        %v4890 = vrot.slane %v4886, 4
        %v4892 = vshrl.u32 %v4807, 16
        %v4894 = vrot.slane %v4892, 7
        %v4895 = vshll.u32 %v4807, 16
        %v4897 = vor.u32 %v4894, %v4895
        %v4898 = vsel %vm972, %v4890, %v4897
        %v4899 = vrot.slane %v4894, 4
        %v4901 = vshrl.u32 %v4808, 16
        %v4903 = vrot.slane %v4901, 7
        %v4904 = vshll.u32 %v4808, 16
        %v4906 = vor.u32 %v4903, %v4904
        %v4907 = vrot.slane %v4903, 4
        %v4909 = vshrl.u32 %v4809, 16
        %v4911 = vrot.slane %v4909, 7
        %v4912 = vshll.u32 %v4809, 16
        %v4914 = vor.u32 %v4911, %v4912
        %v4915 = vsel %vm972, %v4907, %v4914
        %v4916 = vrot.slane %v4911, 4
        %v4918 = vshrl.u32 %v4810, 16
        %v4920 = vrot.slane %v4918, 7
        %v4921 = vshll.u32 %v4810, 16
        %v4923 = vor.u32 %v4920, %v4921
        %v4924 = vrot.slane %v4920, 4
        %v4926 = vshrl.u32 %v4811, 16
        %v4928 = vrot.slane %v4926, 7
        %v4929 = vshll.u32 %v4811, 16
        %v4931 = vor.u32 %v4928, %v4929
        %v4932 = vsel %vm972, %v4924, %v4931
        %v4933 = vrot.slane %v4928, 4
        %v4935 = vshrl.u32 %v4812, 16
        %v4937 = vrot.slane %v4935, 7
        %v4938 = vshll.u32 %v4812, 16
        %v4940 = vor.u32 %v4937, %v4938
        %v4941 = vrot.slane %v4937, 4
        %v4943 = vshrl.u32 %v4813, 16
        %v4945 = vrot.slane %v4943, 7
        %v4946 = vshll.u32 %v4813, 16
        %v4948 = vor.u32 %v4945, %v4946
        %v4949 = vsel %vm972, %v4941, %v4948
        %v4950 = vrot.slane %v4945, 4
        %v4952 = vshrl.u32 %v4814, 16
        %v4954 = vrot.slane %v4952, 7
        %v4955 = vshll.u32 %v4814, 16
        %v4957 = vor.u32 %v4954, %v4955
        %v4958 = vrot.slane %v4954, 4
        %v4960 = vshrl.u32 %v4815, 16
        %v4962 = vrot.slane %v4960, 7
        %v4963 = vshll.u32 %v4815, 16
        %v4965 = vor.u32 %v4962, %v4963
        %v4966 = vsel %vm972, %v4958, %v4965
        %v4967 = vrot.slane %v4962, 4
        %v4969 = vshrl.u32 %v4816, 16
        %v4971 = vrot.slane %v4969, 7
        %v4972 = vshll.u32 %v4816, 16
        %v4974 = vor.u32 %v4971, %v4972
        %v4975 = vrot.slane %v4971, 4
        %v4977 = vshrl.u32 %v4817, 16
        %v4979 = vrot.slane %v4977, 7
        %v4980 = vshll.u32 %v4817, 16
        %v4982 = vor.u32 %v4979, %v4980
        %v4983 = vsel %vm972, %v4975, %v4982
        %v4984 = vrot.slane %v4979, 4
        %v4986 = vshrl.u32 %v4818, 16
        %v4988 = vrot.slane %v4986, 7
        %v4989 = vshll.u32 %v4818, 16
        %v4991 = vor.u32 %v4988, %v4989
        %v4992 = vrot.slane %v4988, 4
        %v4994 = vshrl.u32 %v4819, 16
        %v4996 = vrot.slane %v4994, 7
        %v4997 = vshll.u32 %v4819, 16
        %v4999 = vor.u32 %v4996, %v4997
        %v5000 = vsel %vm972, %v4992, %v4999
        %v5001 = vrot.slane %v4996, 4
        %v5003 = vshrl.u32 %v4820, 16
        %v5005 = vrot.slane %v5003, 7
        %v5006 = vshll.u32 %v4820, 16
        %v5008 = vor.u32 %v5005, %v5006
        %v5009 = vrot.slane %v5005, 4
        %v5011 = vshrl.u32 %v4821, 16
        %v5013 = vrot.slane %v5011, 7
        %v5014 = vshll.u32 %v4821, 16
        %v5016 = vor.u32 %v5013, %v5014
        %v5017 = vsel %vm972, %v5009, %v5016
        %v5018 = vrot.slane %v5013, 4
        %v5020 = vshrl.u32 %v4822, 16
        %v5022 = vrot.slane %v5020, 7
        %v5023 = vshll.u32 %v4822, 16
        %v5025 = vor.u32 %v5022, %v5023
        %v5026 = vrot.slane %v5022, 4
        %v5028 = vshrl.u32 %v4823, 16
        %v5030 = vrot.slane %v5028, 7
        %v5031 = vshll.u32 %v4823, 16
        %v5033 = vor.u32 %v5030, %v5031
        %v5034 = vsel %vm972, %v5026, %v5033
        %v5035 = vrot.slane %v5030, 4
        %v5037 = vshrl.u32 %v4824, 16
        %v5039 = vrot.slane %v5037, 7
        %v5040 = vshll.u32 %v4824, 16
        %v5042 = vor.u32 %v5039, %v5040
        %v5043 = vrot.slane %v5039, 4
        %v5045 = vshrl.u32 %v4825, 16
        %v5047 = vrot.slane %v5045, 7
        %v5048 = vshll.u32 %v4825, 16
        %v5050 = vor.u32 %v5047, %v5048
        %v5051 = vsel %vm972, %v5043, %v5050
        %v5052 = vrot.slane %v5047, 4
        %v5054 = vshrl.u32 %v4826, 16
        %v5056 = vrot.slane %v5054, 7
        %v5057 = vshll.u32 %v4826, 16
        %v5059 = vor.u32 %v5056, %v5057
        %v5060 = vrot.slane %v5056, 4
        %v5062 = vshrl.u32 %v4827, 16
        %v5064 = vrot.slane %v5062, 7
        %v5065 = vshll.u32 %v4827, 16
        %v5067 = vor.u32 %v5064, %v5065
        %v5068 = vsel %vm972, %v5060, %v5067
        %v5069 = vrot.slane %v5064, 4
        %v5071 = vshrl.u32 %v4828, 16
        %v5073 = vrot.slane %v5071, 7
        %v5074 = vshll.u32 %v4828, 16
        %v5076 = vor.u32 %v5073, %v5074
        %v5077 = vrot.slane %v5073, 4
        %v5079 = vshrl.u32 %v4829, 16
        %v5081 = vrot.slane %v5079, 7
        %v5082 = vshll.u32 %v4829, 16
        %v5084 = vor.u32 %v5081, %v5082
        %v5085 = vsel %vm972, %v5077, %v5084
        %v5086 = vrot.slane %v5081, 4
        %v5088 = vshrl.u32 %v4830, 16
        %v5090 = vrot.slane %v5088, 7
        %v5091 = vshll.u32 %v4830, 16
        %v5093 = vor.u32 %v5090, %v5091
        %v5094 = vrot.slane %v5090, 4
        %v5096 = vshrl.u32 %v4831, 16
        %v5098 = vrot.slane %v5096, 7
        %v5099 = vshll.u32 %v4831, 16
        %v5101 = vor.u32 %v5098, %v5099
        %v5102 = vsel %vm972, %v5094, %v5101
        %v5103 = vrot.slane %v5098, 4
        %v5152 = vsel %vm1296, %v4838, %v2025
        %5153 = vst [vmem:[%s1293] sm:$0xf] %v5152
        %5154 = vst.msk [vmem:[%s1293 + $0x4] sm:$0xf] %vm818, %v4847
        %v5155 = vld [vmem:[%s1293 + $0x8] sm:$0x1]
        %v5156 = vsel %vm1302, %v4848, %v5155
        %5157 = vst [vmem:[%s1293 + $0x8] sm:$0x1] %v5156
        %v5158 = vld [vmem:[%s1293 + $0xc] sm:$0xf]
        %v5159 = vsel %vm1296, %v4855, %v5158
        %5160 = vst [vmem:[%s1293 + $0xc] sm:$0xf] %v5159
        %5161 = vst.msk [vmem:[%s1293 + $0x10] sm:$0xf] %vm818, %v4864
        %v5162 = vld [vmem:[%s1293 + $0x14] sm:$0x1]
        %v5163 = vsel %vm1302, %v4865, %v5162
        %5164 = vst [vmem:[%s1293 + $0x14] sm:$0x1] %v5163
        %v5165 = vld [vmem:[%s1293 + $0x18] sm:$0xf]
        %v5166 = vsel %vm1296, %v4872, %v5165
        %5167 = vst [vmem:[%s1293 + $0x18] sm:$0xf] %v5166
        %5168 = vst.msk [vmem:[%s1293 + $0x1c] sm:$0xf] %vm818, %v4881
        %v5169 = vld [vmem:[%s1293 + $0x20] sm:$0x1]
        %v5170 = vsel %vm1302, %v4882, %v5169
        %5171 = vst [vmem:[%s1293 + $0x20] sm:$0x1] %v5170
        %v5172 = vld [vmem:[%s1293 + $0x24] sm:$0xf]
        %v5173 = vsel %vm1296, %v4889, %v5172
        %5174 = vst [vmem:[%s1293 + $0x24] sm:$0xf] %v5173
        %5175 = vst.msk [vmem:[%s1293 + $0x28] sm:$0xf] %vm818, %v4898
        %v5176 = vld [vmem:[%s1293 + $0x2c] sm:$0x1]
        %v5177 = vsel %vm1302, %v4899, %v5176
        %5178 = vst [vmem:[%s1293 + $0x2c] sm:$0x1] %v5177
        %v5179 = vld [vmem:[%s1293 + $0x30] sm:$0xf]
        %v5180 = vsel %vm1296, %v4906, %v5179
        %5181 = vst [vmem:[%s1293 + $0x30] sm:$0xf] %v5180
        %5182 = vst.msk [vmem:[%s1293 + $0x34] sm:$0xf] %vm818, %v4915
        %v5183 = vld [vmem:[%s1293 + $0x38] sm:$0x1]
        %v5184 = vsel %vm1302, %v4916, %v5183
        %5185 = vst [vmem:[%s1293 + $0x38] sm:$0x1] %v5184
        %v5186 = vld [vmem:[%s1293 + $0x3c] sm:$0xf]
        %v5187 = vsel %vm1296, %v4923, %v5186
        %5188 = vst [vmem:[%s1293 + $0x3c] sm:$0xf] %v5187
        %5189 = vst.msk [vmem:[%s1293 + $0x40] sm:$0xf] %vm818, %v4932
        %v5190 = vld [vmem:[%s1293 + $0x44] sm:$0x1]
        %v5191 = vsel %vm1302, %v4933, %v5190
        %5192 = vst [vmem:[%s1293 + $0x44] sm:$0x1] %v5191
        %v5193 = vld [vmem:[%s1293 + $0x48] sm:$0xf]
        %v5194 = vsel %vm1296, %v4940, %v5193
        %5195 = vst [vmem:[%s1293 + $0x48] sm:$0xf] %v5194
        %5196 = vst.msk [vmem:[%s1293 + $0x4c] sm:$0xf] %vm818, %v4949
        %v5197 = vld [vmem:[%s1293 + $0x50] sm:$0x1]
        %v5198 = vsel %vm1302, %v4950, %v5197
        %5199 = vst [vmem:[%s1293 + $0x50] sm:$0x1] %v5198
        %v5200 = vld [vmem:[%s1293 + $0x54] sm:$0xf]
        %v5201 = vsel %vm1296, %v4957, %v5200
        %5202 = vst [vmem:[%s1293 + $0x54] sm:$0xf] %v5201
        %5203 = vst.msk [vmem:[%s1293 + $0x58] sm:$0xf] %vm818, %v4966
        %v5204 = vld [vmem:[%s1293 + $0x5c] sm:$0x1]
        %v5205 = vsel %vm1302, %v4967, %v5204
        %5206 = vst [vmem:[%s1293 + $0x5c] sm:$0x1] %v5205
        %v5207 = vld [vmem:[%s1293 + $0x60] sm:$0xf]
        %v5208 = vsel %vm1296, %v4974, %v5207
        %5209 = vst [vmem:[%s1293 + $0x60] sm:$0xf] %v5208
        %5210 = vst.msk [vmem:[%s1293 + $0x64] sm:$0xf] %vm818, %v4983
        %v5211 = vld [vmem:[%s1293 + $0x68] sm:$0x1]
        %v5212 = vsel %vm1302, %v4984, %v5211
        %5213 = vst [vmem:[%s1293 + $0x68] sm:$0x1] %v5212
        %v5214 = vld [vmem:[%s1293 + $0x6c] sm:$0xf]
        %v5215 = vsel %vm1296, %v4991, %v5214
        %5216 = vst [vmem:[%s1293 + $0x6c] sm:$0xf] %v5215
        %5217 = vst.msk [vmem:[%s1293 + $0x70] sm:$0xf] %vm818, %v5000
        %v5218 = vld [vmem:[%s1293 + $0x74] sm:$0x1]
        %v5219 = vsel %vm1302, %v5001, %v5218
        %5220 = vst [vmem:[%s1293 + $0x74] sm:$0x1] %v5219
        %v5221 = vld [vmem:[%s1293 + $0x78] sm:$0xf]
        %v5222 = vsel %vm1296, %v5008, %v5221
        %5223 = vst [vmem:[%s1293 + $0x78] sm:$0xf] %v5222
        %5224 = vst.msk [vmem:[%s1293 + $0x7c] sm:$0xf] %vm818, %v5017
        %v5225 = vld [vmem:[%s1293 + $0x80] sm:$0x1]
        %v5226 = vsel %vm1302, %v5018, %v5225
        %5227 = vst [vmem:[%s1293 + $0x80] sm:$0x1] %v5226
        %v5228 = vld [vmem:[%s1293 + $0x84] sm:$0xf]
        %v5229 = vsel %vm1296, %v5025, %v5228
        %5230 = vst [vmem:[%s1293 + $0x84] sm:$0xf] %v5229
        %5231 = vst.msk [vmem:[%s1293 + $0x88] sm:$0xf] %vm818, %v5034
        %v5232 = vld [vmem:[%s1293 + $0x8c] sm:$0x1]
        %v5233 = vsel %vm1302, %v5035, %v5232
        %5234 = vst [vmem:[%s1293 + $0x8c] sm:$0x1] %v5233
        %v5235 = vld [vmem:[%s1293 + $0x90] sm:$0xf]
        %v5236 = vsel %vm1296, %v5042, %v5235
        %5237 = vst [vmem:[%s1293 + $0x90] sm:$0xf] %v5236
        %5238 = vst.msk [vmem:[%s1293 + $0x94] sm:$0xf] %vm818, %v5051
        %v5239 = vld [vmem:[%s1293 + $0x98] sm:$0x1]
        %v5240 = vsel %vm1302, %v5052, %v5239
        %5241 = vst [vmem:[%s1293 + $0x98] sm:$0x1] %v5240
        %v5242 = vld [vmem:[%s1293 + $0x9c] sm:$0xf]
        %v5243 = vsel %vm1296, %v5059, %v5242
        %5244 = vst [vmem:[%s1293 + $0x9c] sm:$0xf] %v5243
        %5245 = vst.msk [vmem:[%s1293 + $0xa0] sm:$0xf] %vm818, %v5068
        %v5246 = vld [vmem:[%s1293 + $0xa4] sm:$0x1]
        %v5247 = vsel %vm1302, %v5069, %v5246
        %5248 = vst [vmem:[%s1293 + $0xa4] sm:$0x1] %v5247
        %v5249 = vld [vmem:[%s1293 + $0xa8] sm:$0xf]
        %v5250 = vsel %vm1296, %v5076, %v5249
        %5251 = vst [vmem:[%s1293 + $0xa8] sm:$0xf] %v5250
        %5252 = vst.msk [vmem:[%s1293 + $0xac] sm:$0xf] %vm818, %v5085
        %v5253 = vld [vmem:[%s1293 + $0xb0] sm:$0x1]
        %v5254 = vsel %vm1302, %v5086, %v5253
        %5255 = vst [vmem:[%s1293 + $0xb0] sm:$0x1] %v5254
        %v5256 = vld [vmem:[%s1293 + $0xb4] sm:$0xf]
        %v5257 = vsel %vm1296, %v5093, %v5256
        %5258 = vst [vmem:[%s1293 + $0xb4] sm:$0xf] %v5257
        %5259 = vst.msk [vmem:[%s1293 + $0xb8] sm:$0xf] %vm818, %v5102
        %v5260 = vld [vmem:[%s1293 + $0xbc] sm:$0x1]
        %v5261 = vsel %vm1302, %v5103, %v5260
        %5262 = vst [vmem:[%s1293 + $0xbc] sm:$0x1] %v5261
        %v5263 = vld [vmem:[#allocation2] sm:$0xf]
        %v5264 = vld [vmem:[#allocation2 + $0x4] sm:$0xf]
        %v5265 = vld [vmem:[#allocation2 + $0xc] sm:$0xf]
        %v5266 = vld [vmem:[#allocation2 + $0x10] sm:$0xf]
        %v5267 = vld [vmem:[#allocation2 + $0x18] sm:$0xf]
        %v5268 = vld [vmem:[#allocation2 + $0x1c] sm:$0xf]
        %v5269 = vld [vmem:[#allocation2 + $0x24] sm:$0xf]
        %v5270 = vld [vmem:[#allocation2 + $0x28] sm:$0xf]
        %v5271 = vld [vmem:[#allocation2 + $0x30] sm:$0xf]
        %v5272 = vld [vmem:[#allocation2 + $0x34] sm:$0xf]
        %v5273 = vld [vmem:[#allocation2 + $0x3c] sm:$0xf]
        %v5274 = vld [vmem:[#allocation2 + $0x40] sm:$0xf]
        %v5275 = vld [vmem:[#allocation2 + $0x48] sm:$0xf]
        %v5276 = vld [vmem:[#allocation2 + $0x4c] sm:$0xf]
        %v5277 = vld [vmem:[#allocation2 + $0x54] sm:$0xf]
        %v5278 = vld [vmem:[#allocation2 + $0x58] sm:$0xf]
        %v5279 = vld [vmem:[#allocation2 + $0x60] sm:$0xf]
        %v5280 = vld [vmem:[#allocation2 + $0x64] sm:$0xf]
        %v5281 = vld [vmem:[#allocation2 + $0x6c] sm:$0xf]
        %v5282 = vld [vmem:[#allocation2 + $0x70] sm:$0xf]
        %v5283 = vld [vmem:[#allocation2 + $0x78] sm:$0xf]
        %v5284 = vld [vmem:[#allocation2 + $0x7c] sm:$0xf]
        %v5285 = vld [vmem:[#allocation2 + $0x84] sm:$0xf]
        %v5286 = vld [vmem:[#allocation2 + $0x88] sm:$0xf]
        %v5287 = vld [vmem:[#allocation2 + $0x90] sm:$0xf]
        %v5288 = vld [vmem:[#allocation2 + $0x94] sm:$0xf]
        %v5289 = vld [vmem:[#allocation2 + $0x9c] sm:$0xf]
        %v5290 = vld [vmem:[#allocation2 + $0xa0] sm:$0xf]
        %v5291 = vld [vmem:[#allocation2 + $0xa8] sm:$0xf]
        %v5292 = vld [vmem:[#allocation2 + $0xac] sm:$0xf]
        %v5293 = vld [vmem:[#allocation2 + $0xb4] sm:$0xf]
        %v5294 = vld [vmem:[#allocation2 + $0xb8] sm:$0xf]
        %v5295 = vld [vmem:[#allocation2 + $0x8] sm:$0x1]
        %v5296 = vld [vmem:[#allocation2 + $0x14] sm:$0x1]
        %v5297 = vld [vmem:[#allocation2 + $0x20] sm:$0x1]
        %v5298 = vld [vmem:[#allocation2 + $0x2c] sm:$0x1]
        %v5299 = vld [vmem:[#allocation2 + $0x38] sm:$0x1]
        %v5300 = vld [vmem:[#allocation2 + $0x44] sm:$0x1]
        %v5301 = vld [vmem:[#allocation2 + $0x50] sm:$0x1]
        %v5302 = vld [vmem:[#allocation2 + $0x5c] sm:$0x1]
        %v5303 = vld [vmem:[#allocation2 + $0x68] sm:$0x1]
        %v5304 = vld [vmem:[#allocation2 + $0x74] sm:$0x1]
        %v5305 = vld [vmem:[#allocation2 + $0x80] sm:$0x1]
        %v5306 = vld [vmem:[#allocation2 + $0x8c] sm:$0x1]
        %v5307 = vld [vmem:[#allocation2 + $0x98] sm:$0x1]
        %v5308 = vld [vmem:[#allocation2 + $0xa4] sm:$0x1]
        %v5309 = vld [vmem:[#allocation2 + $0xb0] sm:$0x1]
        %v5310 = vld [vmem:[#allocation2 + $0xbc] sm:$0x1]
        %v5312 = vshrl.u32 %v5263, 16
        %v5314 = vrot.slane %v5312, 4
        %v5315 = vshll.u32 %v5263, 16
        %v5317 = vrot.slane %v5315, 5
        %v5318 = vor.u32 %v5314, %v5317
        %v5319 = vrot.slane %v5318, 4
        %v5321 = vshll.u32 %v5264, 16
        %v5323 = vrot.slane %v5321, 5
        %v5324 = vsel %vm1461, %v5319, %v5323
        %v5325 = vshrl.u32 %v5264, 16
        %v5327 = vrot.slane %v5325, 4
        %v5328 = vor.u32 %v5327, %v5323
        %v5329 = vrot.slane %v5328, 4
        %v5331 = vshll.u32 %v5295, 16
        %v5333 = vrot.slane %v5331, 5
        %v5334 = vsel %vm1461, %v5329, %v5333
        %v5336 = vshrl.u32 %v5265, 16
        %v5338 = vrot.slane %v5336, 4
        %v5339 = vshll.u32 %v5265, 16
        %v5341 = vrot.slane %v5339, 5
        %v5342 = vor.u32 %v5338, %v5341
        %v5343 = vrot.slane %v5342, 4
        %v5345 = vshll.u32 %v5266, 16
        %v5347 = vrot.slane %v5345, 5
        %v5348 = vsel %vm1461, %v5343, %v5347
        %v5349 = vshrl.u32 %v5266, 16
        %v5351 = vrot.slane %v5349, 4
        %v5352 = vor.u32 %v5351, %v5347
        %v5353 = vrot.slane %v5352, 4
        %v5355 = vshll.u32 %v5296, 16
        %v5357 = vrot.slane %v5355, 5
        %v5358 = vsel %vm1461, %v5353, %v5357
        %v5360 = vshrl.u32 %v5267, 16
        %v5362 = vrot.slane %v5360, 4
        %v5363 = vshll.u32 %v5267, 16
        %v5365 = vrot.slane %v5363, 5
        %v5366 = vor.u32 %v5362, %v5365
        %v5367 = vrot.slane %v5366, 4
        %v5369 = vshll.u32 %v5268, 16
        %v5371 = vrot.slane %v5369, 5
        %v5372 = vsel %vm1461, %v5367, %v5371
        %v5373 = vshrl.u32 %v5268, 16
        %v5375 = vrot.slane %v5373, 4
        %v5376 = vor.u32 %v5375, %v5371
        %v5377 = vrot.slane %v5376, 4
        %v5379 = vshll.u32 %v5297, 16
        %v5381 = vrot.slane %v5379, 5
        %v5382 = vsel %vm1461, %v5377, %v5381
        %v5384 = vshrl.u32 %v5269, 16
        %v5386 = vrot.slane %v5384, 4
        %v5387 = vshll.u32 %v5269, 16
        %v5389 = vrot.slane %v5387, 5
        %v5390 = vor.u32 %v5386, %v5389
        %v5391 = vrot.slane %v5390, 4
        %v5393 = vshll.u32 %v5270, 16
        %v5395 = vrot.slane %v5393, 5
        %v5396 = vsel %vm1461, %v5391, %v5395
        %v5397 = vshrl.u32 %v5270, 16
        %v5399 = vrot.slane %v5397, 4
        %v5400 = vor.u32 %v5399, %v5395
        %v5401 = vrot.slane %v5400, 4
        %v5403 = vshll.u32 %v5298, 16
        %v5405 = vrot.slane %v5403, 5
        %v5406 = vsel %vm1461, %v5401, %v5405
        %v5408 = vshrl.u32 %v5271, 16
        %v5410 = vrot.slane %v5408, 4
        %v5411 = vshll.u32 %v5271, 16
        %v5413 = vrot.slane %v5411, 5
        %v5414 = vor.u32 %v5410, %v5413
        %v5415 = vrot.slane %v5414, 4
        %v5417 = vshll.u32 %v5272, 16
        %v5419 = vrot.slane %v5417, 5
        %v5420 = vsel %vm1461, %v5415, %v5419
        %v5421 = vshrl.u32 %v5272, 16
        %v5423 = vrot.slane %v5421, 4
        %v5424 = vor.u32 %v5423, %v5419
        %v5425 = vrot.slane %v5424, 4
        %v5427 = vshll.u32 %v5299, 16
        %v5429 = vrot.slane %v5427, 5
        %v5430 = vsel %vm1461, %v5425, %v5429
        %v5432 = vshrl.u32 %v5273, 16
        %v5434 = vrot.slane %v5432, 4
        %v5435 = vshll.u32 %v5273, 16
        %v5437 = vrot.slane %v5435, 5
        %v5438 = vor.u32 %v5434, %v5437
        %v5439 = vrot.slane %v5438, 4
        %v5441 = vshll.u32 %v5274, 16
        %v5443 = vrot.slane %v5441, 5
        %v5444 = vsel %vm1461, %v5439, %v5443
        %v5445 = vshrl.u32 %v5274, 16
        %v5447 = vrot.slane %v5445, 4
        %v5448 = vor.u32 %v5447, %v5443
        %v5449 = vrot.slane %v5448, 4
        %v5451 = vshll.u32 %v5300, 16
        %v5453 = vrot.slane %v5451, 5
        %v5454 = vsel %vm1461, %v5449, %v5453
        %v5456 = vshrl.u32 %v5275, 16
        %v5458 = vrot.slane %v5456, 4
        %v5459 = vshll.u32 %v5275, 16
        %v5461 = vrot.slane %v5459, 5
        %v5462 = vor.u32 %v5458, %v5461
        %v5463 = vrot.slane %v5462, 4
        %v5465 = vshll.u32 %v5276, 16
        %v5467 = vrot.slane %v5465, 5
        %v5468 = vsel %vm1461, %v5463, %v5467
        %v5469 = vshrl.u32 %v5276, 16
        %v5471 = vrot.slane %v5469, 4
        %v5472 = vor.u32 %v5471, %v5467
        %v5473 = vrot.slane %v5472, 4
        %v5475 = vshll.u32 %v5301, 16
        %v5477 = vrot.slane %v5475, 5
        %v5478 = vsel %vm1461, %v5473, %v5477
        %v5480 = vshrl.u32 %v5277, 16
        %v5482 = vrot.slane %v5480, 4
        %v5483 = vshll.u32 %v5277, 16
        %v5485 = vrot.slane %v5483, 5
        %v5486 = vor.u32 %v5482, %v5485
        %v5487 = vrot.slane %v5486, 4
        %v5489 = vshll.u32 %v5278, 16
        %v5491 = vrot.slane %v5489, 5
        %v5492 = vsel %vm1461, %v5487, %v5491
        %v5493 = vshrl.u32 %v5278, 16
        %v5495 = vrot.slane %v5493, 4
        %v5496 = vor.u32 %v5495, %v5491
        %v5497 = vrot.slane %v5496, 4
        %v5499 = vshll.u32 %v5302, 16
        %v5501 = vrot.slane %v5499, 5
        %v5502 = vsel %vm1461, %v5497, %v5501
        %v5504 = vshrl.u32 %v5279, 16
        %v5506 = vrot.slane %v5504, 4
        %v5507 = vshll.u32 %v5279, 16
        %v5509 = vrot.slane %v5507, 5
        %v5510 = vor.u32 %v5506, %v5509
        %v5511 = vrot.slane %v5510, 4
        %v5513 = vshll.u32 %v5280, 16
        %v5515 = vrot.slane %v5513, 5
        %v5516 = vsel %vm1461, %v5511, %v5515
        %v5517 = vshrl.u32 %v5280, 16
        %v5519 = vrot.slane %v5517, 4
        %v5520 = vor.u32 %v5519, %v5515
        %v5521 = vrot.slane %v5520, 4
        %v5523 = vshll.u32 %v5303, 16
        %v5525 = vrot.slane %v5523, 5
        %v5526 = vsel %vm1461, %v5521, %v5525
        %v5528 = vshrl.u32 %v5281, 16
        %v5530 = vrot.slane %v5528, 4
        %v5531 = vshll.u32 %v5281, 16
        %v5533 = vrot.slane %v5531, 5
        %v5534 = vor.u32 %v5530, %v5533
        %v5535 = vrot.slane %v5534, 4
        %v5537 = vshll.u32 %v5282, 16
        %v5539 = vrot.slane %v5537, 5
        %v5540 = vsel %vm1461, %v5535, %v5539
        %v5541 = vshrl.u32 %v5282, 16
        %v5543 = vrot.slane %v5541, 4
        %v5544 = vor.u32 %v5543, %v5539
        %v5545 = vrot.slane %v5544, 4
        %v5547 = vshll.u32 %v5304, 16
        %v5549 = vrot.slane %v5547, 5
        %v5550 = vsel %vm1461, %v5545, %v5549
        %v5552 = vshrl.u32 %v5283, 16
        %v5554 = vrot.slane %v5552, 4
        %v5555 = vshll.u32 %v5283, 16
        %v5557 = vrot.slane %v5555, 5
        %v5558 = vor.u32 %v5554, %v5557
        %v5559 = vrot.slane %v5558, 4
        %v5561 = vshll.u32 %v5284, 16
        %v5563 = vrot.slane %v5561, 5
        %v5564 = vsel %vm1461, %v5559, %v5563
        %v5565 = vshrl.u32 %v5284, 16
        %v5567 = vrot.slane %v5565, 4
        %v5568 = vor.u32 %v5567, %v5563
        %v5569 = vrot.slane %v5568, 4
        %v5571 = vshll.u32 %v5305, 16
        %v5573 = vrot.slane %v5571, 5
        %v5574 = vsel %vm1461, %v5569, %v5573
        %v5576 = vshrl.u32 %v5285, 16
        %v5578 = vrot.slane %v5576, 4
        %v5579 = vshll.u32 %v5285, 16
        %v5581 = vrot.slane %v5579, 5
        %v5582 = vor.u32 %v5578, %v5581
        %v5583 = vrot.slane %v5582, 4
        %v5585 = vshll.u32 %v5286, 16
        %v5587 = vrot.slane %v5585, 5
        %v5588 = vsel %vm1461, %v5583, %v5587
        %v5589 = vshrl.u32 %v5286, 16
        %v5591 = vrot.slane %v5589, 4
        %v5592 = vor.u32 %v5591, %v5587
        %v5593 = vrot.slane %v5592, 4
        %v5595 = vshll.u32 %v5306, 16
        %v5597 = vrot.slane %v5595, 5
        %v5598 = vsel %vm1461, %v5593, %v5597
        %v5600 = vshrl.u32 %v5287, 16
        %v5602 = vrot.slane %v5600, 4
        %v5603 = vshll.u32 %v5287, 16
        %v5605 = vrot.slane %v5603, 5
        %v5606 = vor.u32 %v5602, %v5605
        %v5607 = vrot.slane %v5606, 4
        %v5609 = vshll.u32 %v5288, 16
        %v5611 = vrot.slane %v5609, 5
        %v5612 = vsel %vm1461, %v5607, %v5611
        %v5613 = vshrl.u32 %v5288, 16
        %v5615 = vrot.slane %v5613, 4
        %v5616 = vor.u32 %v5615, %v5611
        %v5617 = vrot.slane %v5616, 4
        %v5619 = vshll.u32 %v5307, 16
        %v5621 = vrot.slane %v5619, 5
        %v5622 = vsel %vm1461, %v5617, %v5621
        %v5624 = vshrl.u32 %v5289, 16
        %v5626 = vrot.slane %v5624, 4
        %v5627 = vshll.u32 %v5289, 16
        %v5629 = vrot.slane %v5627, 5
        %v5630 = vor.u32 %v5626, %v5629
        %v5631 = vrot.slane %v5630, 4
        %v5633 = vshll.u32 %v5290, 16
        %v5635 = vrot.slane %v5633, 5
        %v5636 = vsel %vm1461, %v5631, %v5635
        %v5637 = vshrl.u32 %v5290, 16
        %v5639 = vrot.slane %v5637, 4
        %v5640 = vor.u32 %v5639, %v5635
        %v5641 = vrot.slane %v5640, 4
        %v5643 = vshll.u32 %v5308, 16
        %v5645 = vrot.slane %v5643, 5
        %v5646 = vsel %vm1461, %v5641, %v5645
        %v5648 = vshrl.u32 %v5291, 16
        %v5650 = vrot.slane %v5648, 4
        %v5651 = vshll.u32 %v5291, 16
        %v5653 = vrot.slane %v5651, 5
        %v5654 = vor.u32 %v5650, %v5653
        %v5655 = vrot.slane %v5654, 4
        %v5657 = vshll.u32 %v5292, 16
        %v5659 = vrot.slane %v5657, 5
        %v5660 = vsel %vm1461, %v5655, %v5659
        %v5661 = vshrl.u32 %v5292, 16
        %v5663 = vrot.slane %v5661, 4
        %v5664 = vor.u32 %v5663, %v5659
        %v5665 = vrot.slane %v5664, 4
        %v5667 = vshll.u32 %v5309, 16
        %v5669 = vrot.slane %v5667, 5
        %v5670 = vsel %vm1461, %v5665, %v5669
        %v5672 = vshrl.u32 %v5293, 16
        %v5674 = vrot.slane %v5672, 4
        %v5675 = vshll.u32 %v5293, 16
        %v5677 = vrot.slane %v5675, 5
        %v5678 = vor.u32 %v5674, %v5677
        %v5679 = vrot.slane %v5678, 4
        %v5681 = vshll.u32 %v5294, 16
        %v5683 = vrot.slane %v5681, 5
        %v5684 = vsel %vm1461, %v5679, %v5683
        %v5685 = vshrl.u32 %v5294, 16
        %v5687 = vrot.slane %v5685, 4
        %v5688 = vor.u32 %v5687, %v5683
        %v5689 = vrot.slane %v5688, 4
        %v5691 = vshll.u32 %v5310, 16
        %v5693 = vrot.slane %v5691, 5
        %v5694 = vsel %vm1461, %v5689, %v5693
        %v5695 = vld [vmem:[#allocation2] sm:$0xe]
        %v5696 = vld [vmem:[#allocation2 + $0xc] sm:$0xe]
        %v5697 = vld [vmem:[#allocation2 + $0x18] sm:$0xe]
        %v5698 = vld [vmem:[#allocation2 + $0x24] sm:$0xe]
        %v5699 = vld [vmem:[#allocation2 + $0x30] sm:$0xe]
        %v5700 = vld [vmem:[#allocation2 + $0x3c] sm:$0xe]
        %v5701 = vld [vmem:[#allocation2 + $0x48] sm:$0xe]
        %v5702 = vld [vmem:[#allocation2 + $0x54] sm:$0xe]
        %v5703 = vld [vmem:[#allocation2 + $0x60] sm:$0xe]
        %v5704 = vld [vmem:[#allocation2 + $0x6c] sm:$0xe]
        %v5705 = vld [vmem:[#allocation2 + $0x78] sm:$0xe]
        %v5706 = vld [vmem:[#allocation2 + $0x84] sm:$0xe]
        %v5707 = vld [vmem:[#allocation2 + $0x90] sm:$0xe]
        %v5708 = vld [vmem:[#allocation2 + $0x9c] sm:$0xe]
        %v5709 = vld [vmem:[#allocation2 + $0xa8] sm:$0xe]
        %v5710 = vld [vmem:[#allocation2 + $0xb4] sm:$0xe]
        %v5759 = vrot.slane %v5695, 5
        %v5760 = vrot.slane %v5759, 4
        %v5761 = vrot.slane %v5264, 5
        %v5762 = vsel %vm1912, %v5760, %v5761
        %v5763 = vrot.slane %v5761, 4
        %v5764 = vrot.slane %v5295, 5
        %v5765 = vsel %vm1912, %v5763, %v5764
        %v5766 = vrot.slane %v5696, 5
        %v5767 = vrot.slane %v5766, 4
        %v5768 = vrot.slane %v5266, 5
        %v5769 = vsel %vm1912, %v5767, %v5768
        %v5770 = vrot.slane %v5768, 4
        %v5771 = vrot.slane %v5296, 5
        %v5772 = vsel %vm1912, %v5770, %v5771
        %v5773 = vrot.slane %v5697, 5
        %v5774 = vrot.slane %v5773, 4
        %v5775 = vrot.slane %v5268, 5
        %v5776 = vsel %vm1912, %v5774, %v5775
        %v5777 = vrot.slane %v5775, 4
        %v5778 = vrot.slane %v5297, 5
        %v5779 = vsel %vm1912, %v5777, %v5778
        %v5780 = vrot.slane %v5698, 5
        %v5781 = vrot.slane %v5780, 4
        %v5782 = vrot.slane %v5270, 5
        %v5783 = vsel %vm1912, %v5781, %v5782
        %v5784 = vrot.slane %v5782, 4
        %v5785 = vrot.slane %v5298, 5
        %v5786 = vsel %vm1912, %v5784, %v5785
        %v5787 = vrot.slane %v5699, 5
        %v5788 = vrot.slane %v5787, 4
        %v5789 = vrot.slane %v5272, 5
        %v5790 = vsel %vm1912, %v5788, %v5789
        %v5791 = vrot.slane %v5789, 4
        %v5792 = vrot.slane %v5299, 5
        %v5793 = vsel %vm1912, %v5791, %v5792
        %v5794 = vrot.slane %v5700, 5
        %v5795 = vrot.slane %v5794, 4
        %v5796 = vrot.slane %v5274, 5
        %v5797 = vsel %vm1912, %v5795, %v5796
        %v5798 = vrot.slane %v5796, 4
        %v5799 = vrot.slane %v5300, 5
        %v5800 = vsel %vm1912, %v5798, %v5799
        %v5801 = vrot.slane %v5701, 5
        %v5802 = vrot.slane %v5801, 4
        %v5803 = vrot.slane %v5276, 5
        %v5804 = vsel %vm1912, %v5802, %v5803
        %v5805 = vrot.slane %v5803, 4
        %v5806 = vrot.slane %v5301, 5
        %v5807 = vsel %vm1912, %v5805, %v5806
        %v5808 = vrot.slane %v5702, 5
        %v5809 = vrot.slane %v5808, 4
        %v5810 = vrot.slane %v5278, 5
        %v5811 = vsel %vm1912, %v5809, %v5810
        %v5812 = vrot.slane %v5810, 4
        %v5813 = vrot.slane %v5302, 5
        %v5814 = vsel %vm1912, %v5812, %v5813
        %v5815 = vrot.slane %v5703, 5
        %v5816 = vrot.slane %v5815, 4
        %v5817 = vrot.slane %v5280, 5
        %v5818 = vsel %vm1912, %v5816, %v5817
        %v5819 = vrot.slane %v5817, 4
        %v5820 = vrot.slane %v5303, 5
        %v5821 = vsel %vm1912, %v5819, %v5820
        %v5822 = vrot.slane %v5704, 5
        %v5823 = vrot.slane %v5822, 4
        %v5824 = vrot.slane %v5282, 5
        %v5825 = vsel %vm1912, %v5823, %v5824
        %v5826 = vrot.slane %v5824, 4
        %v5827 = vrot.slane %v5304, 5
        %v5828 = vsel %vm1912, %v5826, %v5827
        %v5829 = vrot.slane %v5705, 5
        %v5830 = vrot.slane %v5829, 4
        %v5831 = vrot.slane %v5284, 5
        %v5832 = vsel %vm1912, %v5830, %v5831
        %v5833 = vrot.slane %v5831, 4
        %v5834 = vrot.slane %v5305, 5
        %v5835 = vsel %vm1912, %v5833, %v5834
        %v5836 = vrot.slane %v5706, 5
        %v5837 = vrot.slane %v5836, 4
        %v5838 = vrot.slane %v5286, 5
        %v5839 = vsel %vm1912, %v5837, %v5838
        %v5840 = vrot.slane %v5838, 4
        %v5841 = vrot.slane %v5306, 5
        %v5842 = vsel %vm1912, %v5840, %v5841
        %v5843 = vrot.slane %v5707, 5
        %v5844 = vrot.slane %v5843, 4
        %v5845 = vrot.slane %v5288, 5
        %v5846 = vsel %vm1912, %v5844, %v5845
        %v5847 = vrot.slane %v5845, 4
        %v5848 = vrot.slane %v5307, 5
        %v5849 = vsel %vm1912, %v5847, %v5848
        %v5850 = vrot.slane %v5708, 5
        %v5851 = vrot.slane %v5850, 4
        %v5852 = vrot.slane %v5290, 5
        %v5853 = vsel %vm1912, %v5851, %v5852
        %v5854 = vrot.slane %v5852, 4
        %v5855 = vrot.slane %v5308, 5
        %v5856 = vsel %vm1912, %v5854, %v5855
        %v5857 = vrot.slane %v5709, 5
        %v5858 = vrot.slane %v5857, 4
        %v5859 = vrot.slane %v5292, 5
        %v5860 = vsel %vm1912, %v5858, %v5859
        %v5861 = vrot.slane %v5859, 4
        %v5862 = vrot.slane %v5309, 5
        %v5863 = vsel %vm1912, %v5861, %v5862
        %v5864 = vrot.slane %v5710, 5
        %v5865 = vrot.slane %v5864, 4
        %v5866 = vrot.slane %v5294, 5
        %v5867 = vsel %vm1912, %v5865, %v5866
        %v5868 = vrot.slane %v5866, 4
        %v5869 = vrot.slane %v5310, 5
        %v5870 = vsel %vm1912, %v5868, %v5869
        %v5871 = vld [vmem:[%s1293] sm:$0xf]
        %v5872 = vld [vmem:[%s1293 + $0x4] sm:$0xf]
        %v5873 = vld [vmem:[%s1293 + $0xc] sm:$0xf]
        %v5874 = vld [vmem:[%s1293 + $0x10] sm:$0xf]
        %v5875 = vld [vmem:[%s1293 + $0x18] sm:$0xf]
        %v5876 = vld [vmem:[%s1293 + $0x1c] sm:$0xf]
        %v5877 = vld [vmem:[%s1293 + $0x24] sm:$0xf]
        %v5878 = vld [vmem:[%s1293 + $0x28] sm:$0xf]
        %v5879 = vld [vmem:[%s1293 + $0x30] sm:$0xf]
        %v5880 = vld [vmem:[%s1293 + $0x34] sm:$0xf]
        %v5881 = vld [vmem:[%s1293 + $0x3c] sm:$0xf]
        %v5882 = vld [vmem:[%s1293 + $0x40] sm:$0xf]
        %v5883 = vld [vmem:[%s1293 + $0x48] sm:$0xf]
        %v5884 = vld [vmem:[%s1293 + $0x4c] sm:$0xf]
        %v5885 = vld [vmem:[%s1293 + $0x54] sm:$0xf]
        %v5886 = vld [vmem:[%s1293 + $0x58] sm:$0xf]
        %v5887 = vld [vmem:[%s1293 + $0x60] sm:$0xf]
        %v5888 = vld [vmem:[%s1293 + $0x64] sm:$0xf]
        %v5889 = vld [vmem:[%s1293 + $0x6c] sm:$0xf]
        %v5890 = vld [vmem:[%s1293 + $0x70] sm:$0xf]
        %v5891 = vld [vmem:[%s1293 + $0x78] sm:$0xf]
        %v5892 = vld [vmem:[%s1293 + $0x7c] sm:$0xf]
        %v5893 = vld [vmem:[%s1293 + $0x84] sm:$0xf]
        %v5894 = vld [vmem:[%s1293 + $0x88] sm:$0xf]
        %v5895 = vld [vmem:[%s1293 + $0x90] sm:$0xf]
        %v5896 = vld [vmem:[%s1293 + $0x94] sm:$0xf]
        %v5897 = vld [vmem:[%s1293 + $0x9c] sm:$0xf]
        %v5898 = vld [vmem:[%s1293 + $0xa0] sm:$0xf]
        %v5899 = vld [vmem:[%s1293 + $0xa8] sm:$0xf]
        %v5900 = vld [vmem:[%s1293 + $0xac] sm:$0xf]
        %v5901 = vld [vmem:[%s1293 + $0xb4] sm:$0xf]
        %v5902 = vld [vmem:[%s1293 + $0xb8] sm:$0xf]
        %v5903 = vld [vmem:[%s1293 + $0x8] sm:$0x1]
        %v5904 = vld [vmem:[%s1293 + $0x14] sm:$0x1]
        %v5905 = vld [vmem:[%s1293 + $0x20] sm:$0x1]
        %v5906 = vld [vmem:[%s1293 + $0x2c] sm:$0x1]
        %v5907 = vld [vmem:[%s1293 + $0x38] sm:$0x1]
        %v5908 = vld [vmem:[%s1293 + $0x44] sm:$0x1]
        %v5909 = vld [vmem:[%s1293 + $0x50] sm:$0x1]
        %v5910 = vld [vmem:[%s1293 + $0x5c] sm:$0x1]
        %v5911 = vld [vmem:[%s1293 + $0x68] sm:$0x1]
        %v5912 = vld [vmem:[%s1293 + $0x74] sm:$0x1]
        %v5913 = vld [vmem:[%s1293 + $0x80] sm:$0x1]
        %v5914 = vld [vmem:[%s1293 + $0x8c] sm:$0x1]
        %v5915 = vld [vmem:[%s1293 + $0x98] sm:$0x1]
        %v5916 = vld [vmem:[%s1293 + $0xa4] sm:$0x1]
        %v5917 = vld [vmem:[%s1293 + $0xb0] sm:$0x1]
        %v5918 = vld [vmem:[%s1293 + $0xbc] sm:$0x1]
        %v5920 = vshrl.u32 %v5871, 16
        %v5922 = vrot.slane %v5920, 4
        %v5923 = vshll.u32 %v5871, 16
        %v5925 = vrot.slane %v5923, 5
        %v5926 = vor.u32 %v5922, %v5925
        %v5927 = vrot.slane %v5926, 4
        %v5929 = vshll.u32 %v5872, 16
        %v5931 = vrot.slane %v5929, 5
        %v5932 = vsel %vm1461, %v5927, %v5931
        %v5933 = vshrl.u32 %v5872, 16
        %v5935 = vrot.slane %v5933, 4
        %v5936 = vor.u32 %v5935, %v5931
        %v5937 = vrot.slane %v5936, 4
        %v5939 = vshll.u32 %v5903, 16
        %v5941 = vrot.slane %v5939, 5
        %v5942 = vsel %vm1461, %v5937, %v5941
        %v5944 = vshrl.u32 %v5873, 16
        %v5946 = vrot.slane %v5944, 4
        %v5947 = vshll.u32 %v5873, 16
        %v5949 = vrot.slane %v5947, 5
        %v5950 = vor.u32 %v5946, %v5949
        %v5951 = vrot.slane %v5950, 4
        %v5953 = vshll.u32 %v5874, 16
        %v5955 = vrot.slane %v5953, 5
        %v5956 = vsel %vm1461, %v5951, %v5955
        %v5957 = vshrl.u32 %v5874, 16
        %v5959 = vrot.slane %v5957, 4
        %v5960 = vor.u32 %v5959, %v5955
        %v5961 = vrot.slane %v5960, 4
        %v5963 = vshll.u32 %v5904, 16
        %v5965 = vrot.slane %v5963, 5
        %v5966 = vsel %vm1461, %v5961, %v5965
        %v5968 = vshrl.u32 %v5875, 16
        %v5970 = vrot.slane %v5968, 4
        %v5971 = vshll.u32 %v5875, 16
        %v5973 = vrot.slane %v5971, 5
        %v5974 = vor.u32 %v5970, %v5973
        %v5975 = vrot.slane %v5974, 4
        %v5977 = vshll.u32 %v5876, 16
        %v5979 = vrot.slane %v5977, 5
        %v5980 = vsel %vm1461, %v5975, %v5979
        %v5981 = vshrl.u32 %v5876, 16
        %v5983 = vrot.slane %v5981, 4
        %v5984 = vor.u32 %v5983, %v5979
        %v5985 = vrot.slane %v5984, 4
        %v5987 = vshll.u32 %v5905, 16
        %v5989 = vrot.slane %v5987, 5
        %v5990 = vsel %vm1461, %v5985, %v5989
        %v5992 = vshrl.u32 %v5877, 16
        %v5994 = vrot.slane %v5992, 4
        %v5995 = vshll.u32 %v5877, 16
        %v5997 = vrot.slane %v5995, 5
        %v5998 = vor.u32 %v5994, %v5997
        %v5999 = vrot.slane %v5998, 4
        %v6001 = vshll.u32 %v5878, 16
        %v6003 = vrot.slane %v6001, 5
        %v6004 = vsel %vm1461, %v5999, %v6003
        %v6005 = vshrl.u32 %v5878, 16
        %v6007 = vrot.slane %v6005, 4
        %v6008 = vor.u32 %v6007, %v6003
        %v6009 = vrot.slane %v6008, 4
        %v6011 = vshll.u32 %v5906, 16
        %v6013 = vrot.slane %v6011, 5
        %v6014 = vsel %vm1461, %v6009, %v6013
        %v6016 = vshrl.u32 %v5879, 16
        %v6018 = vrot.slane %v6016, 4
        %v6019 = vshll.u32 %v5879, 16
        %v6021 = vrot.slane %v6019, 5
        %v6022 = vor.u32 %v6018, %v6021
        %v6023 = vrot.slane %v6022, 4
        %v6025 = vshll.u32 %v5880, 16
        %v6027 = vrot.slane %v6025, 5
        %v6028 = vsel %vm1461, %v6023, %v6027
        %v6029 = vshrl.u32 %v5880, 16
        %v6031 = vrot.slane %v6029, 4
        %v6032 = vor.u32 %v6031, %v6027
        %v6033 = vrot.slane %v6032, 4
        %v6035 = vshll.u32 %v5907, 16
        %v6037 = vrot.slane %v6035, 5
        %v6038 = vsel %vm1461, %v6033, %v6037
        %v6040 = vshrl.u32 %v5881, 16
        %v6042 = vrot.slane %v6040, 4
        %v6043 = vshll.u32 %v5881, 16
        %v6045 = vrot.slane %v6043, 5
        %v6046 = vor.u32 %v6042, %v6045
        %v6047 = vrot.slane %v6046, 4
        %v6049 = vshll.u32 %v5882, 16
        %v6051 = vrot.slane %v6049, 5
        %v6052 = vsel %vm1461, %v6047, %v6051
        %v6053 = vshrl.u32 %v5882, 16
        %v6055 = vrot.slane %v6053, 4
        %v6056 = vor.u32 %v6055, %v6051
        %v6057 = vrot.slane %v6056, 4
        %v6059 = vshll.u32 %v5908, 16
        %v6061 = vrot.slane %v6059, 5
        %v6062 = vsel %vm1461, %v6057, %v6061
        %v6064 = vshrl.u32 %v5883, 16
        %v6066 = vrot.slane %v6064, 4
        %v6067 = vshll.u32 %v5883, 16
        %v6069 = vrot.slane %v6067, 5
        %v6070 = vor.u32 %v6066, %v6069
        %v6071 = vrot.slane %v6070, 4
        %v6073 = vshll.u32 %v5884, 16
        %v6075 = vrot.slane %v6073, 5
        %v6076 = vsel %vm1461, %v6071, %v6075
        %v6077 = vshrl.u32 %v5884, 16
        %v6079 = vrot.slane %v6077, 4
        %v6080 = vor.u32 %v6079, %v6075
        %v6081 = vrot.slane %v6080, 4
        %v6083 = vshll.u32 %v5909, 16
        %v6085 = vrot.slane %v6083, 5
        %v6086 = vsel %vm1461, %v6081, %v6085
        %v6088 = vshrl.u32 %v5885, 16
        %v6090 = vrot.slane %v6088, 4
        %v6091 = vshll.u32 %v5885, 16
        %v6093 = vrot.slane %v6091, 5
        %v6094 = vor.u32 %v6090, %v6093
        %v6095 = vrot.slane %v6094, 4
        %v6097 = vshll.u32 %v5886, 16
        %v6099 = vrot.slane %v6097, 5
        %v6100 = vsel %vm1461, %v6095, %v6099
        %v6101 = vshrl.u32 %v5886, 16
        %v6103 = vrot.slane %v6101, 4
        %v6104 = vor.u32 %v6103, %v6099
        %v6105 = vrot.slane %v6104, 4
        %v6107 = vshll.u32 %v5910, 16
        %v6109 = vrot.slane %v6107, 5
        %v6110 = vsel %vm1461, %v6105, %v6109
        %v6112 = vshrl.u32 %v5887, 16
        %v6114 = vrot.slane %v6112, 4
        %v6115 = vshll.u32 %v5887, 16
        %v6117 = vrot.slane %v6115, 5
        %v6118 = vor.u32 %v6114, %v6117
        %v6119 = vrot.slane %v6118, 4
        %v6121 = vshll.u32 %v5888, 16
        %v6123 = vrot.slane %v6121, 5
        %v6124 = vsel %vm1461, %v6119, %v6123
        %v6125 = vshrl.u32 %v5888, 16
        %v6127 = vrot.slane %v6125, 4
        %v6128 = vor.u32 %v6127, %v6123
        %v6129 = vrot.slane %v6128, 4
        %v6131 = vshll.u32 %v5911, 16
        %v6133 = vrot.slane %v6131, 5
        %v6134 = vsel %vm1461, %v6129, %v6133
        %v6136 = vshrl.u32 %v5889, 16
        %v6138 = vrot.slane %v6136, 4
        %v6139 = vshll.u32 %v5889, 16
        %v6141 = vrot.slane %v6139, 5
        %v6142 = vor.u32 %v6138, %v6141
        %v6143 = vrot.slane %v6142, 4
        %v6145 = vshll.u32 %v5890, 16
        %v6147 = vrot.slane %v6145, 5
        %v6148 = vsel %vm1461, %v6143, %v6147
        %v6149 = vshrl.u32 %v5890, 16
        %v6151 = vrot.slane %v6149, 4
        %v6152 = vor.u32 %v6151, %v6147
        %v6153 = vrot.slane %v6152, 4
        %v6155 = vshll.u32 %v5912, 16
        %v6157 = vrot.slane %v6155, 5
        %v6158 = vsel %vm1461, %v6153, %v6157
        %v6160 = vshrl.u32 %v5891, 16
        %v6162 = vrot.slane %v6160, 4
        %v6163 = vshll.u32 %v5891, 16
        %v6165 = vrot.slane %v6163, 5
        %v6166 = vor.u32 %v6162, %v6165
        %v6167 = vrot.slane %v6166, 4
        %v6169 = vshll.u32 %v5892, 16
        %v6171 = vrot.slane %v6169, 5
        %v6172 = vsel %vm1461, %v6167, %v6171
        %v6173 = vshrl.u32 %v5892, 16
        %v6175 = vrot.slane %v6173, 4
        %v6176 = vor.u32 %v6175, %v6171
        %v6177 = vrot.slane %v6176, 4
        %v6179 = vshll.u32 %v5913, 16
        %v6181 = vrot.slane %v6179, 5
        %v6182 = vsel %vm1461, %v6177, %v6181
        %v6184 = vshrl.u32 %v5893, 16
        %v6186 = vrot.slane %v6184, 4
        %v6187 = vshll.u32 %v5893, 16
        %v6189 = vrot.slane %v6187, 5
        %v6190 = vor.u32 %v6186, %v6189
        %v6191 = vrot.slane %v6190, 4
        %v6193 = vshll.u32 %v5894, 16
        %v6195 = vrot.slane %v6193, 5
        %v6196 = vsel %vm1461, %v6191, %v6195
        %v6197 = vshrl.u32 %v5894, 16
        %v6199 = vrot.slane %v6197, 4
        %v6200 = vor.u32 %v6199, %v6195
        %v6201 = vrot.slane %v6200, 4
        %v6203 = vshll.u32 %v5914, 16
        %v6205 = vrot.slane %v6203, 5
        %v6206 = vsel %vm1461, %v6201, %v6205
        %v6208 = vshrl.u32 %v5895, 16
        %v6210 = vrot.slane %v6208, 4
        %v6211 = vshll.u32 %v5895, 16
        %v6213 = vrot.slane %v6211, 5
        %v6214 = vor.u32 %v6210, %v6213
        %v6215 = vrot.slane %v6214, 4
        %v6217 = vshll.u32 %v5896, 16
        %v6219 = vrot.slane %v6217, 5
        %v6220 = vsel %vm1461, %v6215, %v6219
        %v6221 = vshrl.u32 %v5896, 16
        %v6223 = vrot.slane %v6221, 4
        %v6224 = vor.u32 %v6223, %v6219
        %v6225 = vrot.slane %v6224, 4
        %v6227 = vshll.u32 %v5915, 16
        %v6229 = vrot.slane %v6227, 5
        %v6230 = vsel %vm1461, %v6225, %v6229
        %v6232 = vshrl.u32 %v5897, 16
        %v6234 = vrot.slane %v6232, 4
        %v6235 = vshll.u32 %v5897, 16
        %v6237 = vrot.slane %v6235, 5
        %v6238 = vor.u32 %v6234, %v6237
        %v6239 = vrot.slane %v6238, 4
        %v6241 = vshll.u32 %v5898, 16
        %v6243 = vrot.slane %v6241, 5
        %v6244 = vsel %vm1461, %v6239, %v6243
        %v6245 = vshrl.u32 %v5898, 16
        %v6247 = vrot.slane %v6245, 4
        %v6248 = vor.u32 %v6247, %v6243
        %v6249 = vrot.slane %v6248, 4
        %v6251 = vshll.u32 %v5916, 16
        %v6253 = vrot.slane %v6251, 5
        %v6254 = vsel %vm1461, %v6249, %v6253
        %v6256 = vshrl.u32 %v5899, 16
        %v6258 = vrot.slane %v6256, 4
        %v6259 = vshll.u32 %v5899, 16
        %v6261 = vrot.slane %v6259, 5
        %v6262 = vor.u32 %v6258, %v6261
        %v6263 = vrot.slane %v6262, 4
        %v6265 = vshll.u32 %v5900, 16
        %v6267 = vrot.slane %v6265, 5
        %v6268 = vsel %vm1461, %v6263, %v6267
        %v6269 = vshrl.u32 %v5900, 16
        %v6271 = vrot.slane %v6269, 4
        %v6272 = vor.u32 %v6271, %v6267
        %v6273 = vrot.slane %v6272, 4
        %v6275 = vshll.u32 %v5917, 16
        %v6277 = vrot.slane %v6275, 5
        %v6278 = vsel %vm1461, %v6273, %v6277
        %v6280 = vshrl.u32 %v5901, 16
        %v6282 = vrot.slane %v6280, 4
        %v6283 = vshll.u32 %v5901, 16
        %v6285 = vrot.slane %v6283, 5
        %v6286 = vor.u32 %v6282, %v6285
        %v6287 = vrot.slane %v6286, 4
        %v6289 = vshll.u32 %v5902, 16
        %v6291 = vrot.slane %v6289, 5
        %v6292 = vsel %vm1461, %v6287, %v6291
        %v6293 = vshrl.u32 %v5902, 16
        %v6295 = vrot.slane %v6293, 4
        %v6296 = vor.u32 %v6295, %v6291
        %v6297 = vrot.slane %v6296, 4
        %v6299 = vshll.u32 %v5918, 16
        %v6301 = vrot.slane %v6299, 5
        %v6302 = vsel %vm1461, %v6297, %v6301
        %v6303 = vld [vmem:[%s1293] sm:$0xe]
        %v6304 = vld [vmem:[%s1293 + $0xc] sm:$0xe]
        %v6305 = vld [vmem:[%s1293 + $0x18] sm:$0xe]
        %v6306 = vld [vmem:[%s1293 + $0x24] sm:$0xe]
        %v6307 = vld [vmem:[%s1293 + $0x30] sm:$0xe]
        %v6308 = vld [vmem:[%s1293 + $0x3c] sm:$0xe]
        %v6309 = vld [vmem:[%s1293 + $0x48] sm:$0xe]
        %v6310 = vld [vmem:[%s1293 + $0x54] sm:$0xe]
        %v6311 = vld [vmem:[%s1293 + $0x60] sm:$0xe]
        %v6312 = vld [vmem:[%s1293 + $0x6c] sm:$0xe]
        %v6313 = vld [vmem:[%s1293 + $0x78] sm:$0xe]
        %v6314 = vld [vmem:[%s1293 + $0x84] sm:$0xe]
        %v6315 = vld [vmem:[%s1293 + $0x90] sm:$0xe]
        %v6316 = vld [vmem:[%s1293 + $0x9c] sm:$0xe]
        %v6317 = vld [vmem:[%s1293 + $0xa8] sm:$0xe]
        %v6318 = vld [vmem:[%s1293 + $0xb4] sm:$0xe]
        %v6367 = vrot.slane %v6303, 5
        %v6368 = vrot.slane %v6367, 4
        %v6369 = vrot.slane %v5872, 5
        %v6370 = vsel %vm1912, %v6368, %v6369
        %v6371 = vrot.slane %v6369, 4
        %v6372 = vrot.slane %v5903, 5
        %v6373 = vsel %vm1912, %v6371, %v6372
        %v6374 = vrot.slane %v6304, 5
        %v6375 = vrot.slane %v6374, 4
        %v6376 = vrot.slane %v5874, 5
        %v6377 = vsel %vm1912, %v6375, %v6376
        %v6378 = vrot.slane %v6376, 4
        %v6379 = vrot.slane %v5904, 5
        %v6380 = vsel %vm1912, %v6378, %v6379
        %v6381 = vrot.slane %v6305, 5
        %v6382 = vrot.slane %v6381, 4
        %v6383 = vrot.slane %v5876, 5
        %v6384 = vsel %vm1912, %v6382, %v6383
        %v6385 = vrot.slane %v6383, 4
        %v6386 = vrot.slane %v5905, 5
        %v6387 = vsel %vm1912, %v6385, %v6386
        %v6388 = vrot.slane %v6306, 5
        %v6389 = vrot.slane %v6388, 4
        %v6390 = vrot.slane %v5878, 5
        %v6391 = vsel %vm1912, %v6389, %v6390
        %v6392 = vrot.slane %v6390, 4
        %v6393 = vrot.slane %v5906, 5
        %v6394 = vsel %vm1912, %v6392, %v6393
        %v6395 = vrot.slane %v6307, 5
        %v6396 = vrot.slane %v6395, 4
        %v6397 = vrot.slane %v5880, 5
        %v6398 = vsel %vm1912, %v6396, %v6397
        %v6399 = vrot.slane %v6397, 4
        %v6400 = vrot.slane %v5907, 5
        %v6401 = vsel %vm1912, %v6399, %v6400
        %v6402 = vrot.slane %v6308, 5
        %v6403 = vrot.slane %v6402, 4
        %v6404 = vrot.slane %v5882, 5
        %v6405 = vsel %vm1912, %v6403, %v6404
        %v6406 = vrot.slane %v6404, 4
        %v6407 = vrot.slane %v5908, 5
        %v6408 = vsel %vm1912, %v6406, %v6407
        %v6409 = vrot.slane %v6309, 5
        %v6410 = vrot.slane %v6409, 4
        %v6411 = vrot.slane %v5884, 5
        %v6412 = vsel %vm1912, %v6410, %v6411
        %v6413 = vrot.slane %v6411, 4
        %v6414 = vrot.slane %v5909, 5
        %v6415 = vsel %vm1912, %v6413, %v6414
        %v6416 = vrot.slane %v6310, 5
        %v6417 = vrot.slane %v6416, 4
        %v6418 = vrot.slane %v5886, 5
        %v6419 = vsel %vm1912, %v6417, %v6418
        %v6420 = vrot.slane %v6418, 4
        %v6421 = vrot.slane %v5910, 5
        %v6422 = vsel %vm1912, %v6420, %v6421
        %v6423 = vrot.slane %v6311, 5
        %v6424 = vrot.slane %v6423, 4
        %v6425 = vrot.slane %v5888, 5
        %v6426 = vsel %vm1912, %v6424, %v6425
        %v6427 = vrot.slane %v6425, 4
        %v6428 = vrot.slane %v5911, 5
        %v6429 = vsel %vm1912, %v6427, %v6428
        %v6430 = vrot.slane %v6312, 5
        %v6431 = vrot.slane %v6430, 4
        %v6432 = vrot.slane %v5890, 5
        %v6433 = vsel %vm1912, %v6431, %v6432
        %v6434 = vrot.slane %v6432, 4
        %v6435 = vrot.slane %v5912, 5
        %v6436 = vsel %vm1912, %v6434, %v6435
        %v6437 = vrot.slane %v6313, 5
        %v6438 = vrot.slane %v6437, 4
        %v6439 = vrot.slane %v5892, 5
        %v6440 = vsel %vm1912, %v6438, %v6439
        %v6441 = vrot.slane %v6439, 4
        %v6442 = vrot.slane %v5913, 5
        %v6443 = vsel %vm1912, %v6441, %v6442
        %v6444 = vrot.slane %v6314, 5
        %v6445 = vrot.slane %v6444, 4
        %v6446 = vrot.slane %v5894, 5
        %v6447 = vsel %vm1912, %v6445, %v6446
        %v6448 = vrot.slane %v6446, 4
        %v6449 = vrot.slane %v5914, 5
        %v6450 = vsel %vm1912, %v6448, %v6449
        %v6451 = vrot.slane %v6315, 5
        %v6452 = vrot.slane %v6451, 4
        %v6453 = vrot.slane %v5896, 5
        %v6454 = vsel %vm1912, %v6452, %v6453
        %v6455 = vrot.slane %v6453, 4
        %v6456 = vrot.slane %v5915, 5
        %v6457 = vsel %vm1912, %v6455, %v6456
        %v6458 = vrot.slane %v6316, 5
        %v6459 = vrot.slane %v6458, 4
        %v6460 = vrot.slane %v5898, 5
        %v6461 = vsel %vm1912, %v6459, %v6460
        %v6462 = vrot.slane %v6460, 4
        %v6463 = vrot.slane %v5916, 5
        %v6464 = vsel %vm1912, %v6462, %v6463
        %v6465 = vrot.slane %v6317, 5
        %v6466 = vrot.slane %v6465, 4
        %v6467 = vrot.slane %v5900, 5
        %v6468 = vsel %vm1912, %v6466, %v6467
        %v6469 = vrot.slane %v6467, 4
        %v6470 = vrot.slane %v5917, 5
        %v6471 = vsel %vm1912, %v6469, %v6470
        %v6472 = vrot.slane %v6318, 5
        %v6473 = vrot.slane %v6472, 4
        %v6474 = vrot.slane %v5902, 5
        %v6475 = vsel %vm1912, %v6473, %v6474
        %v6476 = vrot.slane %v6474, 4
        %v6477 = vrot.slane %v5918, 5
        %v6478 = vsel %vm1912, %v6476, %v6477
        %v6479 = vld [vmem:[%s2633] sm:$0xf]
        %v6480 = vld [vmem:[%s2633 + $0x4] sm:$0xf]
        %v6481 = vld [vmem:[%s2633 + $0xc] sm:$0xf]
        %v6482 = vld [vmem:[%s2633 + $0x10] sm:$0xf]
        %v6483 = vld [vmem:[%s2633 + $0x18] sm:$0xf]
        %v6484 = vld [vmem:[%s2633 + $0x1c] sm:$0xf]
        %v6485 = vld [vmem:[%s2633 + $0x24] sm:$0xf]
        %v6486 = vld [vmem:[%s2633 + $0x28] sm:$0xf]
        %v6487 = vld [vmem:[%s2633 + $0x30] sm:$0xf]
        %v6488 = vld [vmem:[%s2633 + $0x34] sm:$0xf]
        %v6489 = vld [vmem:[%s2633 + $0x3c] sm:$0xf]
        %v6490 = vld [vmem:[%s2633 + $0x40] sm:$0xf]
        %v6491 = vld [vmem:[%s2633 + $0x48] sm:$0xf]
        %v6492 = vld [vmem:[%s2633 + $0x4c] sm:$0xf]
        %v6493 = vld [vmem:[%s2633 + $0x54] sm:$0xf]
        %v6494 = vld [vmem:[%s2633 + $0x58] sm:$0xf]
        %v6495 = vld [vmem:[%s2633 + $0x60] sm:$0xf]
        %v6496 = vld [vmem:[%s2633 + $0x64] sm:$0xf]
        %v6497 = vld [vmem:[%s2633 + $0x6c] sm:$0xf]
        %v6498 = vld [vmem:[%s2633 + $0x70] sm:$0xf]
        %v6499 = vld [vmem:[%s2633 + $0x78] sm:$0xf]
        %v6500 = vld [vmem:[%s2633 + $0x7c] sm:$0xf]
        %v6501 = vld [vmem:[%s2633 + $0x84] sm:$0xf]
        %v6502 = vld [vmem:[%s2633 + $0x88] sm:$0xf]
        %v6503 = vld [vmem:[%s2633 + $0x90] sm:$0xf]
        %v6504 = vld [vmem:[%s2633 + $0x94] sm:$0xf]
        %v6505 = vld [vmem:[%s2633 + $0x9c] sm:$0xf]
        %v6506 = vld [vmem:[%s2633 + $0xa0] sm:$0xf]
        %v6507 = vld [vmem:[%s2633 + $0xa8] sm:$0xf]
        %v6508 = vld [vmem:[%s2633 + $0xac] sm:$0xf]
        %v6509 = vld [vmem:[%s2633 + $0xb4] sm:$0xf]
        %v6510 = vld [vmem:[%s2633 + $0xb8] sm:$0xf]
        %v6511 = vld [vmem:[%s2633 + $0x8] sm:$0x1]
        %v6512 = vld [vmem:[%s2633 + $0x14] sm:$0x1]
        %v6513 = vld [vmem:[%s2633 + $0x20] sm:$0x1]
        %v6514 = vld [vmem:[%s2633 + $0x2c] sm:$0x1]
        %v6515 = vld [vmem:[%s2633 + $0x38] sm:$0x1]
        %v6516 = vld [vmem:[%s2633 + $0x44] sm:$0x1]
        %v6517 = vld [vmem:[%s2633 + $0x50] sm:$0x1]
        %v6518 = vld [vmem:[%s2633 + $0x5c] sm:$0x1]
        %v6519 = vld [vmem:[%s2633 + $0x68] sm:$0x1]
        %v6520 = vld [vmem:[%s2633 + $0x74] sm:$0x1]
        %v6521 = vld [vmem:[%s2633 + $0x80] sm:$0x1]
        %v6522 = vld [vmem:[%s2633 + $0x8c] sm:$0x1]
        %v6523 = vld [vmem:[%s2633 + $0x98] sm:$0x1]
        %v6524 = vld [vmem:[%s2633 + $0xa4] sm:$0x1]
        %v6525 = vld [vmem:[%s2633 + $0xb0] sm:$0x1]
        %v6526 = vld [vmem:[%s2633 + $0xbc] sm:$0x1]
        %v6528 = vshrl.u32 %v6479, 16
        %v6530 = vrot.slane %v6528, 4
        %v6531 = vshll.u32 %v6479, 16
        %v6533 = vrot.slane %v6531, 5
        %v6534 = vor.u32 %v6530, %v6533
        %v6535 = vrot.slane %v6534, 4
        %v6537 = vshll.u32 %v6480, 16
        %v6539 = vrot.slane %v6537, 5
        %v6540 = vsel %vm1461, %v6535, %v6539
        %v6541 = vshrl.u32 %v6480, 16
        %v6543 = vrot.slane %v6541, 4
        %v6544 = vor.u32 %v6543, %v6539
        %v6545 = vrot.slane %v6544, 4
        %v6547 = vshll.u32 %v6511, 16
        %v6549 = vrot.slane %v6547, 5
        %v6550 = vsel %vm1461, %v6545, %v6549
        %v6552 = vshrl.u32 %v6481, 16
        %v6554 = vrot.slane %v6552, 4
        %v6555 = vshll.u32 %v6481, 16
        %v6557 = vrot.slane %v6555, 5
        %v6558 = vor.u32 %v6554, %v6557
        %v6559 = vrot.slane %v6558, 4
        %v6561 = vshll.u32 %v6482, 16
        %v6563 = vrot.slane %v6561, 5
        %v6564 = vsel %vm1461, %v6559, %v6563
        %v6565 = vshrl.u32 %v6482, 16
        %v6567 = vrot.slane %v6565, 4
        %v6568 = vor.u32 %v6567, %v6563
        %v6569 = vrot.slane %v6568, 4
        %v6571 = vshll.u32 %v6512, 16
        %v6573 = vrot.slane %v6571, 5
        %v6574 = vsel %vm1461, %v6569, %v6573
        %v6576 = vshrl.u32 %v6483, 16
        %v6578 = vrot.slane %v6576, 4
        %v6579 = vshll.u32 %v6483, 16
        %v6581 = vrot.slane %v6579, 5
        %v6582 = vor.u32 %v6578, %v6581
        %v6583 = vrot.slane %v6582, 4
        %v6585 = vshll.u32 %v6484, 16
        %v6587 = vrot.slane %v6585, 5
        %v6588 = vsel %vm1461, %v6583, %v6587
        %v6589 = vshrl.u32 %v6484, 16
        %v6591 = vrot.slane %v6589, 4
        %v6592 = vor.u32 %v6591, %v6587
        %v6593 = vrot.slane %v6592, 4
        %v6595 = vshll.u32 %v6513, 16
        %v6597 = vrot.slane %v6595, 5
        %v6598 = vsel %vm1461, %v6593, %v6597
        %v6600 = vshrl.u32 %v6485, 16
        %v6602 = vrot.slane %v6600, 4
        %v6603 = vshll.u32 %v6485, 16
        %v6605 = vrot.slane %v6603, 5
        %v6606 = vor.u32 %v6602, %v6605
        %v6607 = vrot.slane %v6606, 4
        %v6609 = vshll.u32 %v6486, 16
        %v6611 = vrot.slane %v6609, 5
        %v6612 = vsel %vm1461, %v6607, %v6611
        %v6613 = vshrl.u32 %v6486, 16
        %v6615 = vrot.slane %v6613, 4
        %v6616 = vor.u32 %v6615, %v6611
        %v6617 = vrot.slane %v6616, 4
        %v6619 = vshll.u32 %v6514, 16
        %v6621 = vrot.slane %v6619, 5
        %v6622 = vsel %vm1461, %v6617, %v6621
        %v6624 = vshrl.u32 %v6487, 16
        %v6626 = vrot.slane %v6624, 4
        %v6627 = vshll.u32 %v6487, 16
        %v6629 = vrot.slane %v6627, 5
        %v6630 = vor.u32 %v6626, %v6629
        %v6631 = vrot.slane %v6630, 4
        %v6633 = vshll.u32 %v6488, 16
        %v6635 = vrot.slane %v6633, 5
        %v6636 = vsel %vm1461, %v6631, %v6635
        %v6637 = vshrl.u32 %v6488, 16
        %v6639 = vrot.slane %v6637, 4
        %v6640 = vor.u32 %v6639, %v6635
        %v6641 = vrot.slane %v6640, 4
        %v6643 = vshll.u32 %v6515, 16
        %v6645 = vrot.slane %v6643, 5
        %v6646 = vsel %vm1461, %v6641, %v6645
        %v6648 = vshrl.u32 %v6489, 16
        %v6650 = vrot.slane %v6648, 4
        %v6651 = vshll.u32 %v6489, 16
        %v6653 = vrot.slane %v6651, 5
        %v6654 = vor.u32 %v6650, %v6653
        %v6655 = vrot.slane %v6654, 4
        %v6657 = vshll.u32 %v6490, 16
        %v6659 = vrot.slane %v6657, 5
        %v6660 = vsel %vm1461, %v6655, %v6659
        %v6661 = vshrl.u32 %v6490, 16
        %v6663 = vrot.slane %v6661, 4
        %v6664 = vor.u32 %v6663, %v6659
        %v6665 = vrot.slane %v6664, 4
        %v6667 = vshll.u32 %v6516, 16
        %v6669 = vrot.slane %v6667, 5
        %v6670 = vsel %vm1461, %v6665, %v6669
        %v6672 = vshrl.u32 %v6491, 16
        %v6674 = vrot.slane %v6672, 4
        %v6675 = vshll.u32 %v6491, 16
        %v6677 = vrot.slane %v6675, 5
        %v6678 = vor.u32 %v6674, %v6677
        %v6679 = vrot.slane %v6678, 4
        %v6681 = vshll.u32 %v6492, 16
        %v6683 = vrot.slane %v6681, 5
        %v6684 = vsel %vm1461, %v6679, %v6683
        %v6685 = vshrl.u32 %v6492, 16
        %v6687 = vrot.slane %v6685, 4
        %v6688 = vor.u32 %v6687, %v6683
        %v6689 = vrot.slane %v6688, 4
        %v6691 = vshll.u32 %v6517, 16
        %v6693 = vrot.slane %v6691, 5
        %v6694 = vsel %vm1461, %v6689, %v6693
        %v6696 = vshrl.u32 %v6493, 16
        %v6698 = vrot.slane %v6696, 4
        %v6699 = vshll.u32 %v6493, 16
        %v6701 = vrot.slane %v6699, 5
        %v6702 = vor.u32 %v6698, %v6701
        %v6703 = vrot.slane %v6702, 4
        %v6705 = vshll.u32 %v6494, 16
        %v6707 = vrot.slane %v6705, 5
        %v6708 = vsel %vm1461, %v6703, %v6707
        %v6709 = vshrl.u32 %v6494, 16
        %v6711 = vrot.slane %v6709, 4
        %v6712 = vor.u32 %v6711, %v6707
        %v6713 = vrot.slane %v6712, 4
        %v6715 = vshll.u32 %v6518, 16
        %v6717 = vrot.slane %v6715, 5
        %v6718 = vsel %vm1461, %v6713, %v6717
        %v6720 = vshrl.u32 %v6495, 16
        %v6722 = vrot.slane %v6720, 4
        %v6723 = vshll.u32 %v6495, 16
        %v6725 = vrot.slane %v6723, 5
        %v6726 = vor.u32 %v6722, %v6725
        %v6727 = vrot.slane %v6726, 4
        %v6729 = vshll.u32 %v6496, 16
        %v6731 = vrot.slane %v6729, 5
        %v6732 = vsel %vm1461, %v6727, %v6731
        %v6733 = vshrl.u32 %v6496, 16
        %v6735 = vrot.slane %v6733, 4
        %v6736 = vor.u32 %v6735, %v6731
        %v6737 = vrot.slane %v6736, 4
        %v6739 = vshll.u32 %v6519, 16
        %v6741 = vrot.slane %v6739, 5
        %v6742 = vsel %vm1461, %v6737, %v6741
        %v6744 = vshrl.u32 %v6497, 16
        %v6746 = vrot.slane %v6744, 4
        %v6747 = vshll.u32 %v6497, 16
        %v6749 = vrot.slane %v6747, 5
        %v6750 = vor.u32 %v6746, %v6749
        %v6751 = vrot.slane %v6750, 4
        %v6753 = vshll.u32 %v6498, 16
        %v6755 = vrot.slane %v6753, 5
        %v6756 = vsel %vm1461, %v6751, %v6755
        %v6757 = vshrl.u32 %v6498, 16
        %v6759 = vrot.slane %v6757, 4
        %v6760 = vor.u32 %v6759, %v6755
        %v6761 = vrot.slane %v6760, 4
        %v6763 = vshll.u32 %v6520, 16
        %v6765 = vrot.slane %v6763, 5
        %v6766 = vsel %vm1461, %v6761, %v6765
        %v6768 = vshrl.u32 %v6499, 16
        %v6770 = vrot.slane %v6768, 4
        %v6771 = vshll.u32 %v6499, 16
        %v6773 = vrot.slane %v6771, 5
        %v6774 = vor.u32 %v6770, %v6773
        %v6775 = vrot.slane %v6774, 4
        %v6777 = vshll.u32 %v6500, 16
        %v6779 = vrot.slane %v6777, 5
        %v6780 = vsel %vm1461, %v6775, %v6779
        %v6781 = vshrl.u32 %v6500, 16
        %v6783 = vrot.slane %v6781, 4
        %v6784 = vor.u32 %v6783, %v6779
        %v6785 = vrot.slane %v6784, 4
        %v6787 = vshll.u32 %v6521, 16
        %v6789 = vrot.slane %v6787, 5
        %v6790 = vsel %vm1461, %v6785, %v6789
        %v6792 = vshrl.u32 %v6501, 16
        %v6794 = vrot.slane %v6792, 4
        %v6795 = vshll.u32 %v6501, 16
        %v6797 = vrot.slane %v6795, 5
        %v6798 = vor.u32 %v6794, %v6797
        %v6799 = vrot.slane %v6798, 4
        %v6801 = vshll.u32 %v6502, 16
        %v6803 = vrot.slane %v6801, 5
        %v6804 = vsel %vm1461, %v6799, %v6803
        %v6805 = vshrl.u32 %v6502, 16
        %v6807 = vrot.slane %v6805, 4
        %v6808 = vor.u32 %v6807, %v6803
        %v6809 = vrot.slane %v6808, 4
        %v6811 = vshll.u32 %v6522, 16
        %v6813 = vrot.slane %v6811, 5
        %v6814 = vsel %vm1461, %v6809, %v6813
        %v6816 = vshrl.u32 %v6503, 16
        %v6818 = vrot.slane %v6816, 4
        %v6819 = vshll.u32 %v6503, 16
        %v6821 = vrot.slane %v6819, 5
        %v6822 = vor.u32 %v6818, %v6821
        %v6823 = vrot.slane %v6822, 4
        %v6825 = vshll.u32 %v6504, 16
        %v6827 = vrot.slane %v6825, 5
        %v6828 = vsel %vm1461, %v6823, %v6827
        %v6829 = vshrl.u32 %v6504, 16
        %v6831 = vrot.slane %v6829, 4
        %v6832 = vor.u32 %v6831, %v6827
        %v6833 = vrot.slane %v6832, 4
        %v6835 = vshll.u32 %v6523, 16
        %v6837 = vrot.slane %v6835, 5
        %v6838 = vsel %vm1461, %v6833, %v6837
        %v6840 = vshrl.u32 %v6505, 16
        %v6842 = vrot.slane %v6840, 4
        %v6843 = vshll.u32 %v6505, 16
        %v6845 = vrot.slane %v6843, 5
        %v6846 = vor.u32 %v6842, %v6845
        %v6847 = vrot.slane %v6846, 4
        %v6849 = vshll.u32 %v6506, 16
        %v6851 = vrot.slane %v6849, 5
        %v6852 = vsel %vm1461, %v6847, %v6851
        %v6853 = vshrl.u32 %v6506, 16
        %v6855 = vrot.slane %v6853, 4
        %v6856 = vor.u32 %v6855, %v6851
        %v6857 = vrot.slane %v6856, 4
        %v6859 = vshll.u32 %v6524, 16
        %v6861 = vrot.slane %v6859, 5
        %v6862 = vsel %vm1461, %v6857, %v6861
        %v6864 = vshrl.u32 %v6507, 16
        %v6866 = vrot.slane %v6864, 4
        %v6867 = vshll.u32 %v6507, 16
        %v6869 = vrot.slane %v6867, 5
        %v6870 = vor.u32 %v6866, %v6869
        %v6871 = vrot.slane %v6870, 4
        %v6873 = vshll.u32 %v6508, 16
        %v6875 = vrot.slane %v6873, 5
        %v6876 = vsel %vm1461, %v6871, %v6875
        %v6877 = vshrl.u32 %v6508, 16
        %v6879 = vrot.slane %v6877, 4
        %v6880 = vor.u32 %v6879, %v6875
        %v6881 = vrot.slane %v6880, 4
        %v6883 = vshll.u32 %v6525, 16
        %v6885 = vrot.slane %v6883, 5
        %v6886 = vsel %vm1461, %v6881, %v6885
        %v6888 = vshrl.u32 %v6509, 16
        %v6890 = vrot.slane %v6888, 4
        %v6891 = vshll.u32 %v6509, 16
        %v6893 = vrot.slane %v6891, 5
        %v6894 = vor.u32 %v6890, %v6893
        %v6895 = vrot.slane %v6894, 4
        %v6897 = vshll.u32 %v6510, 16
        %v6899 = vrot.slane %v6897, 5
        %v6900 = vsel %vm1461, %v6895, %v6899
        %v6901 = vshrl.u32 %v6510, 16
        %v6903 = vrot.slane %v6901, 4
        %v6904 = vor.u32 %v6903, %v6899
        %v6905 = vrot.slane %v6904, 4
        %v6907 = vshll.u32 %v6526, 16
        %v6909 = vrot.slane %v6907, 5
        %v6910 = vsel %vm1461, %v6905, %v6909
        %v6911 = vld [vmem:[%s2633] sm:$0xe]
        %v6912 = vld [vmem:[%s2633 + $0xc] sm:$0xe]
        %v6913 = vld [vmem:[%s2633 + $0x18] sm:$0xe]
        %v6914 = vld [vmem:[%s2633 + $0x24] sm:$0xe]
        %v6915 = vld [vmem:[%s2633 + $0x30] sm:$0xe]
        %v6916 = vld [vmem:[%s2633 + $0x3c] sm:$0xe]
        %v6917 = vld [vmem:[%s2633 + $0x48] sm:$0xe]
        %v6918 = vld [vmem:[%s2633 + $0x54] sm:$0xe]
        %v6919 = vld [vmem:[%s2633 + $0x60] sm:$0xe]
        %v6920 = vld [vmem:[%s2633 + $0x6c] sm:$0xe]
        %v6921 = vld [vmem:[%s2633 + $0x78] sm:$0xe]
        %v6922 = vld [vmem:[%s2633 + $0x84] sm:$0xe]
        %v6923 = vld [vmem:[%s2633 + $0x90] sm:$0xe]
        %v6924 = vld [vmem:[%s2633 + $0x9c] sm:$0xe]
        %v6925 = vld [vmem:[%s2633 + $0xa8] sm:$0xe]
        %v6926 = vld [vmem:[%s2633 + $0xb4] sm:$0xe]
        %v6975 = vrot.slane %v6911, 5
        %v6976 = vrot.slane %v6975, 4
        %v6977 = vrot.slane %v6480, 5
        %v6978 = vsel %vm1912, %v6976, %v6977
        %v6979 = vrot.slane %v6977, 4
        %v6980 = vrot.slane %v6511, 5
        %v6981 = vsel %vm1912, %v6979, %v6980
        %v6982 = vrot.slane %v6912, 5
        %v6983 = vrot.slane %v6982, 4
        %v6984 = vrot.slane %v6482, 5
        %v6985 = vsel %vm1912, %v6983, %v6984
        %v6986 = vrot.slane %v6984, 4
        %v6987 = vrot.slane %v6512, 5
        %v6988 = vsel %vm1912, %v6986, %v6987
        %v6989 = vrot.slane %v6913, 5
        %v6990 = vrot.slane %v6989, 4
        %v6991 = vrot.slane %v6484, 5
        %v6992 = vsel %vm1912, %v6990, %v6991
        %v6993 = vrot.slane %v6991, 4
        %v6994 = vrot.slane %v6513, 5
        %v6995 = vsel %vm1912, %v6993, %v6994
        %v6996 = vrot.slane %v6914, 5
        %v6997 = vrot.slane %v6996, 4
        %v6998 = vrot.slane %v6486, 5
        %v6999 = vsel %vm1912, %v6997, %v6998
        %v7000 = vrot.slane %v6998, 4
        %v7001 = vrot.slane %v6514, 5
        %v7002 = vsel %vm1912, %v7000, %v7001
        %v7003 = vrot.slane %v6915, 5
        %v7004 = vrot.slane %v7003, 4
        %v7005 = vrot.slane %v6488, 5
        %v7006 = vsel %vm1912, %v7004, %v7005
        %v7007 = vrot.slane %v7005, 4
        %v7008 = vrot.slane %v6515, 5
        %v7009 = vsel %vm1912, %v7007, %v7008
        %v7010 = vrot.slane %v6916, 5
        %v7011 = vrot.slane %v7010, 4
        %v7012 = vrot.slane %v6490, 5
        %v7013 = vsel %vm1912, %v7011, %v7012
        %v7014 = vrot.slane %v7012, 4
        %v7015 = vrot.slane %v6516, 5
        %v7016 = vsel %vm1912, %v7014, %v7015
        %v7017 = vrot.slane %v6917, 5
        %v7018 = vrot.slane %v7017, 4
        %v7019 = vrot.slane %v6492, 5
        %v7020 = vsel %vm1912, %v7018, %v7019
        %v7021 = vrot.slane %v7019, 4
        %v7022 = vrot.slane %v6517, 5
        %v7023 = vsel %vm1912, %v7021, %v7022
        %v7024 = vrot.slane %v6918, 5
        %v7025 = vrot.slane %v7024, 4
        %v7026 = vrot.slane %v6494, 5
        %v7027 = vsel %vm1912, %v7025, %v7026
        %v7028 = vrot.slane %v7026, 4
        %v7029 = vrot.slane %v6518, 5
        %v7030 = vsel %vm1912, %v7028, %v7029
        %v7031 = vrot.slane %v6919, 5
        %v7032 = vrot.slane %v7031, 4
        %v7033 = vrot.slane %v6496, 5
        %v7034 = vsel %vm1912, %v7032, %v7033
        %v7035 = vrot.slane %v7033, 4
        %v7036 = vrot.slane %v6519, 5
        %v7037 = vsel %vm1912, %v7035, %v7036
        %v7038 = vrot.slane %v6920, 5
        %v7039 = vrot.slane %v7038, 4
        %v7040 = vrot.slane %v6498, 5
        %v7041 = vsel %vm1912, %v7039, %v7040
        %v7042 = vrot.slane %v7040, 4
        %v7043 = vrot.slane %v6520, 5
        %v7044 = vsel %vm1912, %v7042, %v7043
        %v7045 = vrot.slane %v6921, 5
        %v7046 = vrot.slane %v7045, 4
        %v7047 = vrot.slane %v6500, 5
        %v7048 = vsel %vm1912, %v7046, %v7047
        %v7049 = vrot.slane %v7047, 4
        %v7050 = vrot.slane %v6521, 5
        %v7051 = vsel %vm1912, %v7049, %v7050
        %v7052 = vrot.slane %v6922, 5
        %v7053 = vrot.slane %v7052, 4
        %v7054 = vrot.slane %v6502, 5
        %v7055 = vsel %vm1912, %v7053, %v7054
        %v7056 = vrot.slane %v7054, 4
        %v7057 = vrot.slane %v6522, 5
        %v7058 = vsel %vm1912, %v7056, %v7057
        %v7059 = vrot.slane %v6923, 5
        %v7060 = vrot.slane %v7059, 4
        %v7061 = vrot.slane %v6504, 5
        %v7062 = vsel %vm1912, %v7060, %v7061
        %v7063 = vrot.slane %v7061, 4
        %v7064 = vrot.slane %v6523, 5
        %v7065 = vsel %vm1912, %v7063, %v7064
        %v7066 = vrot.slane %v6924, 5
        %v7067 = vrot.slane %v7066, 4
        %v7068 = vrot.slane %v6506, 5
        %v7069 = vsel %vm1912, %v7067, %v7068
        %v7070 = vrot.slane %v7068, 4
        %v7071 = vrot.slane %v6524, 5
        %v7072 = vsel %vm1912, %v7070, %v7071
        %v7073 = vrot.slane %v6925, 5
        %v7074 = vrot.slane %v7073, 4
        %v7075 = vrot.slane %v6508, 5
        %v7076 = vsel %vm1912, %v7074, %v7075
        %v7077 = vrot.slane %v7075, 4
        %v7078 = vrot.slane %v6525, 5
        %v7079 = vsel %vm1912, %v7077, %v7078
        %v7080 = vrot.slane %v6926, 5
        %v7081 = vrot.slane %v7080, 4
        %v7082 = vrot.slane %v6510, 5
        %v7083 = vsel %vm1912, %v7081, %v7082
        %v7084 = vrot.slane %v7082, 4
        %v7085 = vrot.slane %v6526, 5
        %v7086 = vsel %vm1912, %v7084, %v7085
        %v7103 = vunpack.c.l.b16 %v5263
        %v7104 = vunpack.c.l.b16 %v5264
        %v7105 = vunpack.c.l.b16 %v5265
        %v7106 = vunpack.c.l.b16 %v5266
        %v7107 = vunpack.c.l.b16 %v5267
        %v7108 = vunpack.c.l.b16 %v5268
        %v7109 = vunpack.c.l.b16 %v5269
        %v7110 = vunpack.c.l.b16 %v5270
        %v7111 = vunpack.c.l.b16 %v5271
        %v7112 = vunpack.c.l.b16 %v5272
        %v7113 = vunpack.c.l.b16 %v5273
        %v7114 = vunpack.c.l.b16 %v5274
        %v7115 = vunpack.c.l.b16 %v5275
        %v7116 = vunpack.c.l.b16 %v5276
        %v7117 = vunpack.c.l.b16 %v5277
        %v7118 = vunpack.c.l.b16 %v5278
        %v7119 = vunpack.c.l.b16 %v5279
        %v7120 = vunpack.c.l.b16 %v5280
        %v7121 = vunpack.c.l.b16 %v5281
        %v7122 = vunpack.c.l.b16 %v5282
        %v7123 = vunpack.c.l.b16 %v5283
        %v7124 = vunpack.c.l.b16 %v5284
        %v7125 = vunpack.c.l.b16 %v5285
        %v7126 = vunpack.c.l.b16 %v5286
        %v7127 = vunpack.c.l.b16 %v5287
        %v7128 = vunpack.c.l.b16 %v5288
        %v7129 = vunpack.c.l.b16 %v5289
        %v7130 = vunpack.c.l.b16 %v5290
        %v7131 = vunpack.c.l.b16 %v5291
        %v7132 = vunpack.c.l.b16 %v5292
        %v7133 = vunpack.c.l.b16 %v5293
        %v7134 = vunpack.c.l.b16 %v5294
        %v7135 = vpack.c.b16 %v7104, %v7103
        %v7136 = vpack.c.b16 %v7106, %v7105
        %v7137 = vpack.c.b16 %v7108, %v7107
        %v7138 = vpack.c.b16 %v7110, %v7109
        %v7139 = vpack.c.b16 %v7112, %v7111
        %v7140 = vpack.c.b16 %v7114, %v7113
        %v7141 = vpack.c.b16 %v7116, %v7115
        %v7142 = vpack.c.b16 %v7118, %v7117
        %v7143 = vpack.c.b16 %v7120, %v7119
        %v7144 = vpack.c.b16 %v7122, %v7121
        %v7145 = vpack.c.b16 %v7124, %v7123
        %v7146 = vpack.c.b16 %v7126, %v7125
        %v7147 = vpack.c.b16 %v7128, %v7127
        %v7148 = vpack.c.b16 %v7130, %v7129
        %v7149 = vpack.c.b16 %v7132, %v7131
        %v7150 = vpack.c.b16 %v7134, %v7133
        %v7151 = vunpack.c.l.b16 %v5324
        %v7152 = vunpack.c.l.b16 %v5334
        %v7153 = vunpack.c.l.b16 %v5348
        %v7154 = vunpack.c.l.b16 %v5358
        %v7155 = vunpack.c.l.b16 %v5372
        %v7156 = vunpack.c.l.b16 %v5382
        %v7157 = vunpack.c.l.b16 %v5396
        %v7158 = vunpack.c.l.b16 %v5406
        %v7159 = vunpack.c.l.b16 %v5420
        %v7160 = vunpack.c.l.b16 %v5430
        %v7161 = vunpack.c.l.b16 %v5444
        %v7162 = vunpack.c.l.b16 %v5454
        %v7163 = vunpack.c.l.b16 %v5468
        %v7164 = vunpack.c.l.b16 %v5478
        %v7165 = vunpack.c.l.b16 %v5492
        %v7166 = vunpack.c.l.b16 %v5502
        %v7167 = vunpack.c.l.b16 %v5516
        %v7168 = vunpack.c.l.b16 %v5526
        %v7169 = vunpack.c.l.b16 %v5540
        %v7170 = vunpack.c.l.b16 %v5550
        %v7171 = vunpack.c.l.b16 %v5564
        %v7172 = vunpack.c.l.b16 %v5574
        %v7173 = vunpack.c.l.b16 %v5588
        %v7174 = vunpack.c.l.b16 %v5598
        %v7175 = vunpack.c.l.b16 %v5612
        %v7176 = vunpack.c.l.b16 %v5622
        %v7177 = vunpack.c.l.b16 %v5636
        %v7178 = vunpack.c.l.b16 %v5646
        %v7179 = vunpack.c.l.b16 %v5660
        %v7180 = vunpack.c.l.b16 %v5670
        %v7181 = vunpack.c.l.b16 %v5684
        %v7182 = vunpack.c.l.b16 %v5694
        %v7183 = vpack.c.b16 %v7152, %v7151
        %v7184 = vpack.c.b16 %v7154, %v7153
        %v7185 = vpack.c.b16 %v7156, %v7155
        %v7186 = vpack.c.b16 %v7158, %v7157
        %v7187 = vpack.c.b16 %v7160, %v7159
        %v7188 = vpack.c.b16 %v7162, %v7161
        %v7189 = vpack.c.b16 %v7164, %v7163
        %v7190 = vpack.c.b16 %v7166, %v7165
        %v7191 = vpack.c.b16 %v7168, %v7167
        %v7192 = vpack.c.b16 %v7170, %v7169
        %v7193 = vpack.c.b16 %v7172, %v7171
        %v7194 = vpack.c.b16 %v7174, %v7173
        %v7195 = vpack.c.b16 %v7176, %v7175
        %v7196 = vpack.c.b16 %v7178, %v7177
        %v7197 = vpack.c.b16 %v7180, %v7179
        %v7198 = vpack.c.b16 %v7182, %v7181
        %7199 = vrot.lane.b32.xlu0 %v7183, 16
        %v7200 = vpop.permute.xlu0 %7199
        %7201 = vrot.lane.b32.xlu0 %v7184, 16
        %v7202 = vpop.permute.xlu0 %7201
        %7203 = vrot.lane.b32.xlu0 %v7185, 16
        %v7204 = vpop.permute.xlu0 %7203
        %7205 = vrot.lane.b32.xlu0 %v7186, 16
        %v7206 = vpop.permute.xlu0 %7205
        %7207 = vrot.lane.b32.xlu0 %v7187, 16
        %v7208 = vpop.permute.xlu0 %7207
        %7209 = vrot.lane.b32.xlu0 %v7188, 16
        %v7210 = vpop.permute.xlu0 %7209
        %7211 = vrot.lane.b32.xlu0 %v7189, 16
        %v7212 = vpop.permute.xlu0 %7211
        %7213 = vrot.lane.b32.xlu0 %v7190, 16
        %v7214 = vpop.permute.xlu0 %7213
        %7215 = vrot.lane.b32.xlu0 %v7191, 16
        %v7216 = vpop.permute.xlu0 %7215
        %7217 = vrot.lane.b32.xlu0 %v7192, 16
        %v7218 = vpop.permute.xlu0 %7217
        %7219 = vrot.lane.b32.xlu0 %v7193, 16
        %v7220 = vpop.permute.xlu0 %7219
        %7221 = vrot.lane.b32.xlu0 %v7194, 16
        %v7222 = vpop.permute.xlu0 %7221
        %7223 = vrot.lane.b32.xlu0 %v7195, 16
        %v7224 = vpop.permute.xlu0 %7223
        %7225 = vrot.lane.b32.xlu0 %v7196, 16
        %v7226 = vpop.permute.xlu0 %7225
        %7227 = vrot.lane.b32.xlu0 %v7197, 16
        %v7228 = vpop.permute.xlu0 %7227
        %7229 = vrot.lane.b32.xlu0 %v7198, 16
        %v7230 = vpop.permute.xlu0 %7229
        %v7231 = vunpack.c.l.b16 %v5762
        %v7232 = vunpack.c.l.b16 %v5765
        %v7233 = vunpack.c.l.b16 %v5769
        %v7234 = vunpack.c.l.b16 %v5772
        %v7235 = vunpack.c.l.b16 %v5776
        %v7236 = vunpack.c.l.b16 %v5779
        %v7237 = vunpack.c.l.b16 %v5783
        %v7238 = vunpack.c.l.b16 %v5786
        %v7239 = vunpack.c.l.b16 %v5790
        %v7240 = vunpack.c.l.b16 %v5793
        %v7241 = vunpack.c.l.b16 %v5797
        %v7242 = vunpack.c.l.b16 %v5800
        %v7243 = vunpack.c.l.b16 %v5804
        %v7244 = vunpack.c.l.b16 %v5807
        %v7245 = vunpack.c.l.b16 %v5811
        %v7246 = vunpack.c.l.b16 %v5814
        %v7247 = vunpack.c.l.b16 %v5818
        %v7248 = vunpack.c.l.b16 %v5821
        %v7249 = vunpack.c.l.b16 %v5825
        %v7250 = vunpack.c.l.b16 %v5828
        %v7251 = vunpack.c.l.b16 %v5832
        %v7252 = vunpack.c.l.b16 %v5835
        %v7253 = vunpack.c.l.b16 %v5839
        %v7254 = vunpack.c.l.b16 %v5842
        %v7255 = vunpack.c.l.b16 %v5846
        %v7256 = vunpack.c.l.b16 %v5849
        %v7257 = vunpack.c.l.b16 %v5853
        %v7258 = vunpack.c.l.b16 %v5856
        %v7259 = vunpack.c.l.b16 %v5860
        %v7260 = vunpack.c.l.b16 %v5863
        %v7261 = vunpack.c.l.b16 %v5867
        %v7262 = vunpack.c.l.b16 %v5870
        %v7263 = vpack.c.b16 %v7232, %v7231
        %v7264 = vpack.c.b16 %v7234, %v7233
        %v7265 = vpack.c.b16 %v7236, %v7235
        %v7266 = vpack.c.b16 %v7238, %v7237
        %v7267 = vpack.c.b16 %v7240, %v7239
        %v7268 = vpack.c.b16 %v7242, %v7241
        %v7269 = vpack.c.b16 %v7244, %v7243
        %v7270 = vpack.c.b16 %v7246, %v7245
        %v7271 = vpack.c.b16 %v7248, %v7247
        %v7272 = vpack.c.b16 %v7250, %v7249
        %v7273 = vpack.c.b16 %v7252, %v7251
        %v7274 = vpack.c.b16 %v7254, %v7253
        %v7275 = vpack.c.b16 %v7256, %v7255
        %v7276 = vpack.c.b16 %v7258, %v7257
        %v7277 = vpack.c.b16 %v7260, %v7259
        %v7278 = vpack.c.b16 %v7262, %v7261
        %7279 = vrot.lane.b32.xlu0 %v7263, 32
        %v7280 = vpop.permute.xlu0 %7279
        %7281 = vrot.lane.b32.xlu0 %v7264, 32
        %v7282 = vpop.permute.xlu0 %7281
        %7283 = vrot.lane.b32.xlu0 %v7265, 32
        %v7284 = vpop.permute.xlu0 %7283
        %7285 = vrot.lane.b32.xlu0 %v7266, 32
        %v7286 = vpop.permute.xlu0 %7285
        %7287 = vrot.lane.b32.xlu0 %v7267, 32
        %v7288 = vpop.permute.xlu0 %7287
        %7289 = vrot.lane.b32.xlu0 %v7268, 32
        %v7290 = vpop.permute.xlu0 %7289
        %7291 = vrot.lane.b32.xlu0 %v7269, 32
        %v7292 = vpop.permute.xlu0 %7291
        %7293 = vrot.lane.b32.xlu0 %v7270, 32
        %v7294 = vpop.permute.xlu0 %7293
        %7295 = vrot.lane.b32.xlu0 %v7271, 32
        %v7296 = vpop.permute.xlu0 %7295
        %7297 = vrot.lane.b32.xlu0 %v7272, 32
        %v7298 = vpop.permute.xlu0 %7297
        %7299 = vrot.lane.b32.xlu0 %v7273, 32
        %v7300 = vpop.permute.xlu0 %7299
        %7301 = vrot.lane.b32.xlu0 %v7274, 32
        %v7302 = vpop.permute.xlu0 %7301
        %7303 = vrot.lane.b32.xlu0 %v7275, 32
        %v7304 = vpop.permute.xlu0 %7303
        %7305 = vrot.lane.b32.xlu0 %v7276, 32
        %v7306 = vpop.permute.xlu0 %7305
        %7307 = vrot.lane.b32.xlu0 %v7277, 32
        %v7308 = vpop.permute.xlu0 %7307
        %7309 = vrot.lane.b32.xlu0 %v7278, 32
        %v7310 = vpop.permute.xlu0 %7309
        %v7327 = vunpack.c.l.b16 %v5871
        %v7328 = vunpack.c.l.b16 %v5872
        %v7329 = vunpack.c.l.b16 %v5873
        %v7330 = vunpack.c.l.b16 %v5874
        %v7331 = vunpack.c.l.b16 %v5875
        %v7332 = vunpack.c.l.b16 %v5876
        %v7333 = vunpack.c.l.b16 %v5877
        %v7334 = vunpack.c.l.b16 %v5878
        %v7335 = vunpack.c.l.b16 %v5879
        %v7336 = vunpack.c.l.b16 %v5880
        %v7337 = vunpack.c.l.b16 %v5881
        %v7338 = vunpack.c.l.b16 %v5882
        %v7339 = vunpack.c.l.b16 %v5883
        %v7340 = vunpack.c.l.b16 %v5884
        %v7341 = vunpack.c.l.b16 %v5885
        %v7342 = vunpack.c.l.b16 %v5886
        %v7343 = vunpack.c.l.b16 %v5887
        %v7344 = vunpack.c.l.b16 %v5888
        %v7345 = vunpack.c.l.b16 %v5889
        %v7346 = vunpack.c.l.b16 %v5890
        %v7347 = vunpack.c.l.b16 %v5891
        %v7348 = vunpack.c.l.b16 %v5892
        %v7349 = vunpack.c.l.b16 %v5893
        %v7350 = vunpack.c.l.b16 %v5894
        %v7351 = vunpack.c.l.b16 %v5895
        %v7352 = vunpack.c.l.b16 %v5896
        %v7353 = vunpack.c.l.b16 %v5897
        %v7354 = vunpack.c.l.b16 %v5898
        %v7355 = vunpack.c.l.b16 %v5899
        %v7356 = vunpack.c.l.b16 %v5900
        %v7357 = vunpack.c.l.b16 %v5901
        %v7358 = vunpack.c.l.b16 %v5902
        %v7359 = vpack.c.b16 %v7328, %v7327
        %v7360 = vpack.c.b16 %v7330, %v7329
        %v7361 = vpack.c.b16 %v7332, %v7331
        %v7362 = vpack.c.b16 %v7334, %v7333
        %v7363 = vpack.c.b16 %v7336, %v7335
        %v7364 = vpack.c.b16 %v7338, %v7337
        %v7365 = vpack.c.b16 %v7340, %v7339
        %v7366 = vpack.c.b16 %v7342, %v7341
        %v7367 = vpack.c.b16 %v7344, %v7343
        %v7368 = vpack.c.b16 %v7346, %v7345
        %v7369 = vpack.c.b16 %v7348, %v7347
        %v7370 = vpack.c.b16 %v7350, %v7349
        %v7371 = vpack.c.b16 %v7352, %v7351
        %v7372 = vpack.c.b16 %v7354, %v7353
        %v7373 = vpack.c.b16 %v7356, %v7355
        %v7374 = vpack.c.b16 %v7358, %v7357
        %7375 = vrot.lane.b32.xlu0 %v7359, 48
        %v7376 = vpop.permute.xlu0 %7375
        %7377 = vrot.lane.b32.xlu0 %v7360, 48
        %v7378 = vpop.permute.xlu0 %7377
        %7379 = vrot.lane.b32.xlu0 %v7361, 48
        %v7380 = vpop.permute.xlu0 %7379
        %7381 = vrot.lane.b32.xlu0 %v7362, 48
        %v7382 = vpop.permute.xlu0 %7381
        %7383 = vrot.lane.b32.xlu0 %v7363, 48
        %v7384 = vpop.permute.xlu0 %7383
        %7385 = vrot.lane.b32.xlu0 %v7364, 48
        %v7386 = vpop.permute.xlu0 %7385
        %7387 = vrot.lane.b32.xlu0 %v7365, 48
        %v7388 = vpop.permute.xlu0 %7387
        %7389 = vrot.lane.b32.xlu0 %v7366, 48
        %v7390 = vpop.permute.xlu0 %7389
        %7391 = vrot.lane.b32.xlu0 %v7367, 48
        %v7392 = vpop.permute.xlu0 %7391
        %7393 = vrot.lane.b32.xlu0 %v7368, 48
        %v7394 = vpop.permute.xlu0 %7393
        %7395 = vrot.lane.b32.xlu0 %v7369, 48
        %v7396 = vpop.permute.xlu0 %7395
        %7397 = vrot.lane.b32.xlu0 %v7370, 48
        %v7398 = vpop.permute.xlu0 %7397
        %7399 = vrot.lane.b32.xlu0 %v7371, 48
        %v7400 = vpop.permute.xlu0 %7399
        %7401 = vrot.lane.b32.xlu0 %v7372, 48
        %v7402 = vpop.permute.xlu0 %7401
        %7403 = vrot.lane.b32.xlu0 %v7373, 48
        %v7404 = vpop.permute.xlu0 %7403
        %7405 = vrot.lane.b32.xlu0 %v7374, 48
        %v7406 = vpop.permute.xlu0 %7405
        %v7407 = vunpack.c.l.b16 %v5932
        %v7408 = vunpack.c.l.b16 %v5942
        %v7409 = vunpack.c.l.b16 %v5956
        %v7410 = vunpack.c.l.b16 %v5966
        %v7411 = vunpack.c.l.b16 %v5980
        %v7412 = vunpack.c.l.b16 %v5990
        %v7413 = vunpack.c.l.b16 %v6004
        %v7414 = vunpack.c.l.b16 %v6014
        %v7415 = vunpack.c.l.b16 %v6028
        %v7416 = vunpack.c.l.b16 %v6038
        %v7417 = vunpack.c.l.b16 %v6052
        %v7418 = vunpack.c.l.b16 %v6062
        %v7419 = vunpack.c.l.b16 %v6076
        %v7420 = vunpack.c.l.b16 %v6086
        %v7421 = vunpack.c.l.b16 %v6100
        %v7422 = vunpack.c.l.b16 %v6110
        %v7423 = vunpack.c.l.b16 %v6124
        %v7424 = vunpack.c.l.b16 %v6134
        %v7425 = vunpack.c.l.b16 %v6148
        %v7426 = vunpack.c.l.b16 %v6158
        %v7427 = vunpack.c.l.b16 %v6172
        %v7428 = vunpack.c.l.b16 %v6182
        %v7429 = vunpack.c.l.b16 %v6196
        %v7430 = vunpack.c.l.b16 %v6206
        %v7431 = vunpack.c.l.b16 %v6220
        %v7432 = vunpack.c.l.b16 %v6230
        %v7433 = vunpack.c.l.b16 %v6244
        %v7434 = vunpack.c.l.b16 %v6254
        %v7435 = vunpack.c.l.b16 %v6268
        %v7436 = vunpack.c.l.b16 %v6278
        %v7437 = vunpack.c.l.b16 %v6292
        %v7438 = vunpack.c.l.b16 %v6302
        %v7439 = vpack.c.b16 %v7408, %v7407
        %v7440 = vpack.c.b16 %v7410, %v7409
        %v7441 = vpack.c.b16 %v7412, %v7411
        %v7442 = vpack.c.b16 %v7414, %v7413
        %v7443 = vpack.c.b16 %v7416, %v7415
        %v7444 = vpack.c.b16 %v7418, %v7417
        %v7445 = vpack.c.b16 %v7420, %v7419
        %v7446 = vpack.c.b16 %v7422, %v7421
        %v7447 = vpack.c.b16 %v7424, %v7423
        %v7448 = vpack.c.b16 %v7426, %v7425
        %v7449 = vpack.c.b16 %v7428, %v7427
        %v7450 = vpack.c.b16 %v7430, %v7429
        %v7451 = vpack.c.b16 %v7432, %v7431
        %v7452 = vpack.c.b16 %v7434, %v7433
        %v7453 = vpack.c.b16 %v7436, %v7435
        %v7454 = vpack.c.b16 %v7438, %v7437
        %7455 = vrot.lane.b32.xlu0 %v7439, 64
        %v7456 = vpop.permute.xlu0 %7455
        %7457 = vrot.lane.b32.xlu0 %v7440, 64
        %v7458 = vpop.permute.xlu0 %7457
        %7459 = vrot.lane.b32.xlu0 %v7441, 64
        %v7460 = vpop.permute.xlu0 %7459
        %7461 = vrot.lane.b32.xlu0 %v7442, 64
        %v7462 = vpop.permute.xlu0 %7461
        %7463 = vrot.lane.b32.xlu0 %v7443, 64
        %v7464 = vpop.permute.xlu0 %7463
        %7465 = vrot.lane.b32.xlu0 %v7444, 64
        %v7466 = vpop.permute.xlu0 %7465
        %7467 = vrot.lane.b32.xlu0 %v7445, 64
        %v7468 = vpop.permute.xlu0 %7467
        %7469 = vrot.lane.b32.xlu0 %v7446, 64
        %v7470 = vpop.permute.xlu0 %7469
        %7471 = vrot.lane.b32.xlu0 %v7447, 64
        %v7472 = vpop.permute.xlu0 %7471
        %7473 = vrot.lane.b32.xlu0 %v7448, 64
        %v7474 = vpop.permute.xlu0 %7473
        %7475 = vrot.lane.b32.xlu0 %v7449, 64
        %v7476 = vpop.permute.xlu0 %7475
        %7477 = vrot.lane.b32.xlu0 %v7450, 64
        %v7478 = vpop.permute.xlu0 %7477
        %7479 = vrot.lane.b32.xlu0 %v7451, 64
        %v7480 = vpop.permute.xlu0 %7479
        %7481 = vrot.lane.b32.xlu0 %v7452, 64
        %v7482 = vpop.permute.xlu0 %7481
        %7483 = vrot.lane.b32.xlu0 %v7453, 64
        %v7484 = vpop.permute.xlu0 %7483
        %7485 = vrot.lane.b32.xlu0 %v7454, 64
        %v7486 = vpop.permute.xlu0 %7485
        %v7487 = vunpack.c.l.b16 %v6370
        %v7488 = vunpack.c.l.b16 %v6373
        %v7489 = vunpack.c.l.b16 %v6377
        %v7490 = vunpack.c.l.b16 %v6380
        %v7491 = vunpack.c.l.b16 %v6384
        %v7492 = vunpack.c.l.b16 %v6387
        %v7493 = vunpack.c.l.b16 %v6391
        %v7494 = vunpack.c.l.b16 %v6394
        %v7495 = vunpack.c.l.b16 %v6398
        %v7496 = vunpack.c.l.b16 %v6401
        %v7497 = vunpack.c.l.b16 %v6405
        %v7498 = vunpack.c.l.b16 %v6408
        %v7499 = vunpack.c.l.b16 %v6412
        %v7500 = vunpack.c.l.b16 %v6415
        %v7501 = vunpack.c.l.b16 %v6419
        %v7502 = vunpack.c.l.b16 %v6422
        %v7503 = vunpack.c.l.b16 %v6426
        %v7504 = vunpack.c.l.b16 %v6429
        %v7505 = vunpack.c.l.b16 %v6433
        %v7506 = vunpack.c.l.b16 %v6436
        %v7507 = vunpack.c.l.b16 %v6440
        %v7508 = vunpack.c.l.b16 %v6443
        %v7509 = vunpack.c.l.b16 %v6447
        %v7510 = vunpack.c.l.b16 %v6450
        %v7511 = vunpack.c.l.b16 %v6454
        %v7512 = vunpack.c.l.b16 %v6457
        %v7513 = vunpack.c.l.b16 %v6461
        %v7514 = vunpack.c.l.b16 %v6464
        %v7515 = vunpack.c.l.b16 %v6468
        %v7516 = vunpack.c.l.b16 %v6471
        %v7517 = vunpack.c.l.b16 %v6475
        %v7518 = vunpack.c.l.b16 %v6478
        %v7519 = vpack.c.b16 %v7488, %v7487
        %v7520 = vpack.c.b16 %v7490, %v7489
        %v7521 = vpack.c.b16 %v7492, %v7491
        %v7522 = vpack.c.b16 %v7494, %v7493
        %v7523 = vpack.c.b16 %v7496, %v7495
        %v7524 = vpack.c.b16 %v7498, %v7497
        %v7525 = vpack.c.b16 %v7500, %v7499
        %v7526 = vpack.c.b16 %v7502, %v7501
        %v7527 = vpack.c.b16 %v7504, %v7503
        %v7528 = vpack.c.b16 %v7506, %v7505
        %v7529 = vpack.c.b16 %v7508, %v7507
        %v7530 = vpack.c.b16 %v7510, %v7509
        %v7531 = vpack.c.b16 %v7512, %v7511
        %v7532 = vpack.c.b16 %v7514, %v7513
        %v7533 = vpack.c.b16 %v7516, %v7515
        %v7534 = vpack.c.b16 %v7518, %v7517
        %7535 = vrot.lane.b32.xlu0 %v7519, 80
        %v7536 = vpop.permute.xlu0 %7535
        %7537 = vrot.lane.b32.xlu0 %v7520, 80
        %v7538 = vpop.permute.xlu0 %7537
        %7539 = vrot.lane.b32.xlu0 %v7521, 80
        %v7540 = vpop.permute.xlu0 %7539
        %7541 = vrot.lane.b32.xlu0 %v7522, 80
        %v7542 = vpop.permute.xlu0 %7541
        %7543 = vrot.lane.b32.xlu0 %v7523, 80
        %v7544 = vpop.permute.xlu0 %7543
        %7545 = vrot.lane.b32.xlu0 %v7524, 80
        %v7546 = vpop.permute.xlu0 %7545
        %7547 = vrot.lane.b32.xlu0 %v7525, 80
        %v7548 = vpop.permute.xlu0 %7547
        %7549 = vrot.lane.b32.xlu0 %v7526, 80
        %v7550 = vpop.permute.xlu0 %7549
        %7551 = vrot.lane.b32.xlu0 %v7527, 80
        %v7552 = vpop.permute.xlu0 %7551
        %7553 = vrot.lane.b32.xlu0 %v7528, 80
        %v7554 = vpop.permute.xlu0 %7553
        %7555 = vrot.lane.b32.xlu0 %v7529, 80
        %v7556 = vpop.permute.xlu0 %7555
        %7557 = vrot.lane.b32.xlu0 %v7530, 80
        %v7558 = vpop.permute.xlu0 %7557
        %7559 = vrot.lane.b32.xlu0 %v7531, 80
        %v7560 = vpop.permute.xlu0 %7559
        %7561 = vrot.lane.b32.xlu0 %v7532, 80
        %v7562 = vpop.permute.xlu0 %7561
        %7563 = vrot.lane.b32.xlu0 %v7533, 80
        %v7564 = vpop.permute.xlu0 %7563
        %7565 = vrot.lane.b32.xlu0 %v7534, 80
        %v7566 = vpop.permute.xlu0 %7565
        %v7583 = vunpack.c.l.b16 %v6479
        %v7584 = vunpack.c.l.b16 %v6480
        %v7585 = vunpack.c.l.b16 %v6481
        %v7586 = vunpack.c.l.b16 %v6482
        %v7587 = vunpack.c.l.b16 %v6483
        %v7588 = vunpack.c.l.b16 %v6484
        %v7589 = vunpack.c.l.b16 %v6485
        %v7590 = vunpack.c.l.b16 %v6486
        %v7591 = vunpack.c.l.b16 %v6487
        %v7592 = vunpack.c.l.b16 %v6488
        %v7593 = vunpack.c.l.b16 %v6489
        %v7594 = vunpack.c.l.b16 %v6490
        %v7595 = vunpack.c.l.b16 %v6491
        %v7596 = vunpack.c.l.b16 %v6492
        %v7597 = vunpack.c.l.b16 %v6493
        %v7598 = vunpack.c.l.b16 %v6494
        %v7599 = vunpack.c.l.b16 %v6495
        %v7600 = vunpack.c.l.b16 %v6496
        %v7601 = vunpack.c.l.b16 %v6497
        %v7602 = vunpack.c.l.b16 %v6498
        %v7603 = vunpack.c.l.b16 %v6499
        %v7604 = vunpack.c.l.b16 %v6500
        %v7605 = vunpack.c.l.b16 %v6501
        %v7606 = vunpack.c.l.b16 %v6502
        %v7607 = vunpack.c.l.b16 %v6503
        %v7608 = vunpack.c.l.b16 %v6504
        %v7609 = vunpack.c.l.b16 %v6505
        %v7610 = vunpack.c.l.b16 %v6506
        %v7611 = vunpack.c.l.b16 %v6507
        %v7612 = vunpack.c.l.b16 %v6508
        %v7613 = vunpack.c.l.b16 %v6509
        %v7614 = vunpack.c.l.b16 %v6510
        %v7615 = vpack.c.b16 %v7584, %v7583
        %v7616 = vpack.c.b16 %v7586, %v7585
        %v7617 = vpack.c.b16 %v7588, %v7587
        %v7618 = vpack.c.b16 %v7590, %v7589
        %v7619 = vpack.c.b16 %v7592, %v7591
        %v7620 = vpack.c.b16 %v7594, %v7593
        %v7621 = vpack.c.b16 %v7596, %v7595
        %v7622 = vpack.c.b16 %v7598, %v7597
        %v7623 = vpack.c.b16 %v7600, %v7599
        %v7624 = vpack.c.b16 %v7602, %v7601
        %v7625 = vpack.c.b16 %v7604, %v7603
        %v7626 = vpack.c.b16 %v7606, %v7605
        %v7627 = vpack.c.b16 %v7608, %v7607
        %v7628 = vpack.c.b16 %v7610, %v7609
        %v7629 = vpack.c.b16 %v7612, %v7611
        %v7630 = vpack.c.b16 %v7614, %v7613
        %7631 = vrot.lane.b32.xlu0 %v7615, 96
        %v7632 = vpop.permute.xlu0 %7631
        %7633 = vrot.lane.b32.xlu0 %v7616, 96
        %v7634 = vpop.permute.xlu0 %7633
        %7635 = vrot.lane.b32.xlu0 %v7617, 96
        %v7636 = vpop.permute.xlu0 %7635
        %7637 = vrot.lane.b32.xlu0 %v7618, 96
        %v7638 = vpop.permute.xlu0 %7637
        %7639 = vrot.lane.b32.xlu0 %v7619, 96
        %v7640 = vpop.permute.xlu0 %7639
        %7641 = vrot.lane.b32.xlu0 %v7620, 96
        %v7642 = vpop.permute.xlu0 %7641
        %7643 = vrot.lane.b32.xlu0 %v7621, 96
        %v7644 = vpop.permute.xlu0 %7643
        %7645 = vrot.lane.b32.xlu0 %v7622, 96
        %v7646 = vpop.permute.xlu0 %7645
        %7647 = vrot.lane.b32.xlu0 %v7623, 96
        %v7648 = vpop.permute.xlu0 %7647
        %7649 = vrot.lane.b32.xlu0 %v7624, 96
        %v7650 = vpop.permute.xlu0 %7649
        %7651 = vrot.lane.b32.xlu0 %v7625, 96
        %v7652 = vpop.permute.xlu0 %7651
        %7653 = vrot.lane.b32.xlu0 %v7626, 96
        %v7654 = vpop.permute.xlu0 %7653
        %7655 = vrot.lane.b32.xlu0 %v7627, 96
        %v7656 = vpop.permute.xlu0 %7655
        %7657 = vrot.lane.b32.xlu0 %v7628, 96
        %v7658 = vpop.permute.xlu0 %7657
        %7659 = vrot.lane.b32.xlu0 %v7629, 96
        %v7660 = vpop.permute.xlu0 %7659
        %7661 = vrot.lane.b32.xlu0 %v7630, 96
        %v7662 = vpop.permute.xlu0 %7661
        %v7663 = vunpack.c.l.b16 %v6540
        %v7664 = vunpack.c.l.b16 %v6550
        %v7665 = vunpack.c.l.b16 %v6564
        %v7666 = vunpack.c.l.b16 %v6574
        %v7667 = vunpack.c.l.b16 %v6588
        %v7668 = vunpack.c.l.b16 %v6598
        %v7669 = vunpack.c.l.b16 %v6612
        %v7670 = vunpack.c.l.b16 %v6622
        %v7671 = vunpack.c.l.b16 %v6636
        %v7672 = vunpack.c.l.b16 %v6646
        %v7673 = vunpack.c.l.b16 %v6660
        %v7674 = vunpack.c.l.b16 %v6670
        %v7675 = vunpack.c.l.b16 %v6684
        %v7676 = vunpack.c.l.b16 %v6694
        %v7677 = vunpack.c.l.b16 %v6708
        %v7678 = vunpack.c.l.b16 %v6718
        %v7679 = vunpack.c.l.b16 %v6732
        %v7680 = vunpack.c.l.b16 %v6742
        %v7681 = vunpack.c.l.b16 %v6756
        %v7682 = vunpack.c.l.b16 %v6766
        %v7683 = vunpack.c.l.b16 %v6780
        %v7684 = vunpack.c.l.b16 %v6790
        %v7685 = vunpack.c.l.b16 %v6804
        %v7686 = vunpack.c.l.b16 %v6814
        %v7687 = vunpack.c.l.b16 %v6828
        %v7688 = vunpack.c.l.b16 %v6838
        %v7689 = vunpack.c.l.b16 %v6852
        %v7690 = vunpack.c.l.b16 %v6862
        %v7691 = vunpack.c.l.b16 %v6876
        %v7692 = vunpack.c.l.b16 %v6886
        %v7693 = vunpack.c.l.b16 %v6900
        %v7694 = vunpack.c.l.b16 %v6910
        %v7695 = vpack.c.b16 %v7664, %v7663
        %v7696 = vpack.c.b16 %v7666, %v7665
        %v7697 = vpack.c.b16 %v7668, %v7667
        %v7698 = vpack.c.b16 %v7670, %v7669
        %v7699 = vpack.c.b16 %v7672, %v7671
        %v7700 = vpack.c.b16 %v7674, %v7673
        %v7701 = vpack.c.b16 %v7676, %v7675
        %v7702 = vpack.c.b16 %v7678, %v7677
        %v7703 = vpack.c.b16 %v7680, %v7679
        %v7704 = vpack.c.b16 %v7682, %v7681
        %v7705 = vpack.c.b16 %v7684, %v7683
        %v7706 = vpack.c.b16 %v7686, %v7685
        %v7707 = vpack.c.b16 %v7688, %v7687
        %v7708 = vpack.c.b16 %v7690, %v7689
        %v7709 = vpack.c.b16 %v7692, %v7691
        %v7710 = vpack.c.b16 %v7694, %v7693
        %7711 = vrot.lane.b32.xlu0 %v7695, 112
        %v7712 = vpop.permute.xlu0 %7711
        %7713 = vrot.lane.b32.xlu0 %v7696, 112
        %v7714 = vpop.permute.xlu0 %7713
        %7715 = vrot.lane.b32.xlu0 %v7697, 112
        %v7716 = vpop.permute.xlu0 %7715
        %7717 = vrot.lane.b32.xlu0 %v7698, 112
        %v7718 = vpop.permute.xlu0 %7717
        %7719 = vrot.lane.b32.xlu0 %v7699, 112
        %v7720 = vpop.permute.xlu0 %7719
        %7721 = vrot.lane.b32.xlu0 %v7700, 112
        %v7722 = vpop.permute.xlu0 %7721
        %7723 = vrot.lane.b32.xlu0 %v7701, 112
        %v7724 = vpop.permute.xlu0 %7723
        %7725 = vrot.lane.b32.xlu0 %v7702, 112
        %v7726 = vpop.permute.xlu0 %7725
        %7727 = vrot.lane.b32.xlu0 %v7703, 112
        %v7728 = vpop.permute.xlu0 %7727
        %7729 = vrot.lane.b32.xlu0 %v7704, 112
        %v7730 = vpop.permute.xlu0 %7729
        %7731 = vrot.lane.b32.xlu0 %v7705, 112
        %v7732 = vpop.permute.xlu0 %7731
        %7733 = vrot.lane.b32.xlu0 %v7706, 112
        %v7734 = vpop.permute.xlu0 %7733
        %7735 = vrot.lane.b32.xlu0 %v7707, 112
        %v7736 = vpop.permute.xlu0 %7735
        %7737 = vrot.lane.b32.xlu0 %v7708, 112
        %v7738 = vpop.permute.xlu0 %7737
        %7739 = vrot.lane.b32.xlu0 %v7709, 112
        %v7740 = vpop.permute.xlu0 %7739
        %7741 = vrot.lane.b32.xlu0 %v7710, 112
        %v7742 = vpop.permute.xlu0 %7741
        %v7743 = vunpack.c.l.b16 %v6978
        %v7744 = vunpack.c.l.b16 %v6981
        %v7745 = vunpack.c.l.b16 %v6985
        %v7746 = vunpack.c.l.b16 %v6988
        %v7747 = vunpack.c.l.b16 %v6992
        %v7748 = vunpack.c.l.b16 %v6995
        %v7749 = vunpack.c.l.b16 %v6999
        %v7750 = vunpack.c.l.b16 %v7002
        %v7751 = vunpack.c.l.b16 %v7006
        %v7752 = vunpack.c.l.b16 %v7009
        %v7753 = vunpack.c.l.b16 %v7013
        %v7754 = vunpack.c.l.b16 %v7016
        %v7755 = vunpack.c.l.b16 %v7020
        %v7756 = vunpack.c.l.b16 %v7023
        %v7757 = vunpack.c.l.b16 %v7027
        %v7758 = vunpack.c.l.b16 %v7030
        %v7759 = vunpack.c.l.b16 %v7034
        %v7760 = vunpack.c.l.b16 %v7037
        %v7761 = vunpack.c.l.b16 %v7041
        %v7762 = vunpack.c.l.b16 %v7044
        %v7763 = vunpack.c.l.b16 %v7048
        %v7764 = vunpack.c.l.b16 %v7051
        %v7765 = vunpack.c.l.b16 %v7055
        %v7766 = vunpack.c.l.b16 %v7058
        %v7767 = vunpack.c.l.b16 %v7062
        %v7768 = vunpack.c.l.b16 %v7065
        %v7769 = vunpack.c.l.b16 %v7069
        %v7770 = vunpack.c.l.b16 %v7072
        %v7771 = vunpack.c.l.b16 %v7076
        %v7772 = vunpack.c.l.b16 %v7079
        %v7773 = vunpack.c.l.b16 %v7083
        %v7774 = vunpack.c.l.b16 %v7086
        %v7775 = vpack.c.b16 %v7744, %v7743
        %v7776 = vpack.c.b16 %v7746, %v7745
        %v7777 = vpack.c.b16 %v7748, %v7747
        %v7778 = vpack.c.b16 %v7750, %v7749
        %v7779 = vpack.c.b16 %v7752, %v7751
        %v7780 = vpack.c.b16 %v7754, %v7753
        %v7781 = vpack.c.b16 %v7756, %v7755
        %v7782 = vpack.c.b16 %v7758, %v7757
        %v7783 = vpack.c.b16 %v7760, %v7759
        %v7784 = vpack.c.b16 %v7762, %v7761
        %v7785 = vpack.c.b16 %v7764, %v7763
        %v7786 = vpack.c.b16 %v7766, %v7765
        %v7787 = vpack.c.b16 %v7768, %v7767
        %v7788 = vpack.c.b16 %v7770, %v7769
        %v7789 = vpack.c.b16 %v7772, %v7771
        %v7790 = vpack.c.b16 %v7774, %v7773
        %v7793 = vsel %vm3946, %v7135, %v7200
        %v7796 = vsel %vm3946, %v7136, %v7202
        %v7799 = vsel %vm3946, %v7137, %v7204
        %v7802 = vsel %vm3946, %v7138, %v7206
        %v7805 = vsel %vm3946, %v7139, %v7208
        %v7808 = vsel %vm3946, %v7140, %v7210
        %v7811 = vsel %vm3946, %v7141, %v7212
        %v7814 = vsel %vm3946, %v7142, %v7214
        %v7817 = vsel %vm3946, %v7143, %v7216
        %v7820 = vsel %vm3946, %v7144, %v7218
        %v7823 = vsel %vm3946, %v7145, %v7220
        %v7826 = vsel %vm3946, %v7146, %v7222
        %v7829 = vsel %vm3946, %v7147, %v7224
        %v7832 = vsel %vm3946, %v7148, %v7226
        %v7835 = vsel %vm3946, %v7149, %v7228
        %v7838 = vsel %vm3946, %v7150, %v7230
        %v7840 = vsel %vm3995, %v7793, %v7280
        %v7842 = vsel %vm3995, %v7796, %v7282
        %v7844 = vsel %vm3995, %v7799, %v7284
        %v7846 = vsel %vm3995, %v7802, %v7286
        %v7848 = vsel %vm3995, %v7805, %v7288
        %v7850 = vsel %vm3995, %v7808, %v7290
        %v7852 = vsel %vm3995, %v7811, %v7292
        %v7854 = vsel %vm3995, %v7814, %v7294
        %v7856 = vsel %vm3995, %v7817, %v7296
        %v7858 = vsel %vm3995, %v7820, %v7298
        %v7860 = vsel %vm3995, %v7823, %v7300
        %v7862 = vsel %vm3995, %v7826, %v7302
        %v7864 = vsel %vm3995, %v7829, %v7304
        %v7866 = vsel %vm3995, %v7832, %v7306
        %v7868 = vsel %vm3995, %v7835, %v7308
        %v7870 = vsel %vm3995, %v7838, %v7310
        %v7872 = vsel %vm4028, %v7840, %v7376
        %v7874 = vsel %vm4028, %v7842, %v7378
        %v7876 = vsel %vm4028, %v7844, %v7380
        %v7878 = vsel %vm4028, %v7846, %v7382
        %v7880 = vsel %vm4028, %v7848, %v7384
        %v7882 = vsel %vm4028, %v7850, %v7386
        %v7884 = vsel %vm4028, %v7852, %v7388
        %v7886 = vsel %vm4028, %v7854, %v7390
        %v7888 = vsel %vm4028, %v7856, %v7392
        %v7890 = vsel %vm4028, %v7858, %v7394
        %v7892 = vsel %vm4028, %v7860, %v7396
        %v7894 = vsel %vm4028, %v7862, %v7398
        %v7896 = vsel %vm4028, %v7864, %v7400
        %v7898 = vsel %vm4028, %v7866, %v7402
        %v7900 = vsel %vm4028, %v7868, %v7404
        %v7902 = vsel %vm4028, %v7870, %v7406
        %v7904 = vsel %vm4061, %v7872, %v7456
        %v7906 = vsel %vm4061, %v7874, %v7458
        %v7908 = vsel %vm4061, %v7876, %v7460
        %v7910 = vsel %vm4061, %v7878, %v7462
        %v7912 = vsel %vm4061, %v7880, %v7464
        %v7914 = vsel %vm4061, %v7882, %v7466
        %v7916 = vsel %vm4061, %v7884, %v7468
        %v7918 = vsel %vm4061, %v7886, %v7470
        %v7920 = vsel %vm4061, %v7888, %v7472
        %v7922 = vsel %vm4061, %v7890, %v7474
        %v7924 = vsel %vm4061, %v7892, %v7476
        %v7926 = vsel %vm4061, %v7894, %v7478
        %v7928 = vsel %vm4061, %v7896, %v7480
        %v7930 = vsel %vm4061, %v7898, %v7482
        %v7932 = vsel %vm4061, %v7900, %v7484
        %v7934 = vsel %vm4061, %v7902, %v7486
        %v7936 = vsel %vm4094, %v7904, %v7536
        %v7938 = vsel %vm4094, %v7906, %v7538
        %v7940 = vsel %vm4094, %v7908, %v7540
        %v7942 = vsel %vm4094, %v7910, %v7542
        %v7944 = vsel %vm4094, %v7912, %v7544
        %v7946 = vsel %vm4094, %v7914, %v7546
        %v7948 = vsel %vm4094, %v7916, %v7548
        %v7950 = vsel %vm4094, %v7918, %v7550
        %v7952 = vsel %vm4094, %v7920, %v7552
        %v7954 = vsel %vm4094, %v7922, %v7554
        %v7956 = vsel %vm4094, %v7924, %v7556
        %v7958 = vsel %vm4094, %v7926, %v7558
        %v7960 = vsel %vm4094, %v7928, %v7560
        %v7962 = vsel %vm4094, %v7930, %v7562
        %v7964 = vsel %vm4094, %v7932, %v7564
        %v7966 = vsel %vm4094, %v7934, %v7566
        %v7968 = vsel %vm4127, %v7936, %v7632
        %v7970 = vsel %vm4127, %v7938, %v7634
        %v7972 = vsel %vm4127, %v7940, %v7636
        %v7974 = vsel %vm4127, %v7942, %v7638
        %v7976 = vsel %vm4127, %v7944, %v7640
        %v7978 = vsel %vm4127, %v7946, %v7642
        %v7980 = vsel %vm4127, %v7948, %v7644
        %v7982 = vsel %vm4127, %v7950, %v7646
        %v7984 = vsel %vm4127, %v7952, %v7648
        %v7986 = vsel %vm4127, %v7954, %v7650
        %v7988 = vsel %vm4127, %v7956, %v7652
        %v7990 = vsel %vm4127, %v7958, %v7654
        %v7992 = vsel %vm4127, %v7960, %v7656
        %v7994 = vsel %vm4127, %v7962, %v7658
        %v7996 = vsel %vm4127, %v7964, %v7660
        %v7998 = vsel %vm4127, %v7966, %v7662
        %v8000 = vsel %vm4160, %v7968, %v7712
        %v8003 = vsel %vm4160, %v7970, %v7714
        %v8006 = vsel %vm4160, %v7972, %v7716
        %v8009 = vsel %vm4160, %v7974, %v7718
        %v8012 = vsel %vm4160, %v7976, %v7720
        %v8015 = vsel %vm4160, %v7978, %v7722
        %v8018 = vsel %vm4160, %v7980, %v7724
        %v8021 = vsel %vm4160, %v7982, %v7726
        %v8024 = vsel %vm4160, %v7984, %v7728
        %v8027 = vsel %vm4160, %v7986, %v7730
        %v8030 = vsel %vm4160, %v7988, %v7732
        %v8033 = vsel %vm4160, %v7990, %v7734
        %v8036 = vsel %vm4160, %v7992, %v7736
        %v8039 = vsel %vm4160, %v7994, %v7738
        %v8042 = vsel %vm4160, %v7996, %v7740
        %v8045 = vsel %vm4160, %v7998, %v7742
        %v8065 = vunpack.c.l.b16 %v780
        %v8066 = vunpack.c.l.b16 %v781
        %v8067 = vunpack.c.l.b16 %v782
        %v8068 = vunpack.c.l.b16 %v783
        %v8069 = vunpack.c.l.b16 %v784
        %v8070 = vunpack.c.l.b16 %v785
        %v8071 = vunpack.c.l.b16 %v786
        %v8072 = vunpack.c.l.b16 %v787
        %v8073 = vunpack.c.l.b16 %v788
        %v8074 = vunpack.c.l.b16 %v789
        %v8075 = vunpack.c.l.b16 %v790
        %v8076 = vunpack.c.l.b16 %v791
        %v8077 = vunpack.c.l.b16 %v792
        %v8078 = vunpack.c.l.b16 %v793
        %v8079 = vunpack.c.l.b16 %v794
        %v8080 = vunpack.c.l.b16 %v795
        %v8081 = vunpack.c.l.b16 %v796
        %v8082 = vunpack.c.l.b16 %v797
        %v8083 = vpack.c.b16 %v8066, %v8065
        %v8084 = vpack.c.b16 %v8068, %v8067
        %v8085 = vpack.c.b16 %v8070, %v8069
        %v8086 = vpack.c.b16 %v8072, %v8071
        %v8087 = vpack.c.b16 %v8074, %v8073
        %v8088 = vpack.c.b16 %v8076, %v8075
        %v8089 = vpack.c.b16 %v8078, %v8077
        %v8090 = vpack.c.b16 %v8080, %v8079
        %v8091 = vpack.c.b16 %v8082, %v8081
        %v8102 = vsel %vm3946, %v7775, 0
        %v8105 = vsel %vm3946, %v7776, 0
        %v8108 = vsel %vm3946, %v7777, 0
        %v8111 = vsel %vm3946, %v7778, 0
        %v8114 = vsel %vm3946, %v7779, 0
        %v8117 = vsel %vm3946, %v7780, 0
        %v8120 = vsel %vm3946, %v7781, 0
        %v8123 = vsel %vm3946, %v7782, 0
        %v8126 = vsel %vm3946, %v7783, 0
        %v8129 = vsel %vm3946, %v7784, 0
        %v8132 = vsel %vm3946, %v7785, 0
        %v8135 = vsel %vm3946, %v7786, 0
        %v8138 = vsel %vm3946, %v7787, 0
        %v8141 = vsel %vm3946, %v7788, 0
        %v8144 = vsel %vm3946, %v7789, 0
        %v8147 = vsel %vm3946, %v7790, 0
        %8149 = vmatprep.subr.bf16.mxu0 0
        %8150 = vmatpush1.bf16.msra.mxu0 %v8083
        %8151 = vmatprep.subr.bf16.mxu0 0
        %8152 = vmatpush1.bf16.msra.mxu0 %v8084
        %8153 = vmatprep.subr.bf16.mxu0 0
        %8154 = vmatpush1.bf16.msra.mxu0 %v8085
        %8155 = vmatprep.subr.bf16.mxu0 0
        %8156 = vmatpush1.bf16.msra.mxu0 %v8086
        %8157 = vmatprep.subr.bf16.mxu0 0
        %8158 = vmatpush1.bf16.msra.mxu0 %v8087
        %8159 = vmatprep.subr.bf16.mxu0 0
        %8160 = vmatpush1.bf16.msra.mxu0 %v8088
        %8161 = vmatprep.subr.bf16.mxu0 0
        %8162 = vmatpush1.bf16.msra.mxu0 %v8089
        %8163 = vmatprep.subr.bf16.mxu0 0
        %8164 = vmatpush1.bf16.msra.mxu0 %v8090
        %8165 = vmatprep.subr.bf16.mxu0 0
        %8166 = vmatpush1.bf16.msra.mxu0 %v8091
        %8167 = vmatprep.subr.bf16.mxu0 0
        %8168 = vmatpush1.bf16.msra.mxu0 0
        %8169 = vmatprep.subr.bf16.mxu0 0
        %8170 = vmatpush1.bf16.msra.mxu0 0
        %8171 = vmatprep.subr.bf16.mxu0 0
        %8172 = vmatpush1.bf16.msra.mxu0 0
        %8173 = vmatprep.subr.bf16.mxu0 0
        %8174 = vmatpush1.bf16.msra.mxu0 0
        %8175 = vmatprep.subr.bf16.mxu0 0
        %8176 = vmatpush1.bf16.msra.mxu0 0
        %8177 = vmatprep.subr.bf16.mxu0 0
        %8178 = vmatpush1.bf16.msra.mxu0 0
        %8179 = vmatprep.subr.bf16.mxu0 0
        %8180 = vmatpush1.bf16.msra.mxu0 0
        %8181 = vmatprep.mubr.bf16.mxu0 %v8102
        %8182 = vmatmul.mubr.bf16.gmra.mrb[0].mxu0 %v8000
        %v8183 = vpop.f32.mrb[0].mxu0
        %v8184 = vadd.f32 0.0, %v8183
        %v8185 = vpop.f32.mrb[0].mxu0
        %v8186 = vpop.f32.mrb[0].mxu0
        %v8187 = vadd.f32 0.0, %v8186
        %v8188 = vpop.f32.mrb[0].mxu0
        %8189 = vmatprep.mubr.bf16.mxu0 %v8105
        %8190 = vmatmul.mubr.bf16.gmra.mrb[0].mxu0 %v8003
        %v8191 = vpop.f32.mrb[0].mxu0
        %v8192 = vadd.f32 0.0, %v8191
        %v8193 = vpop.f32.mrb[0].mxu0
        %v8194 = vpop.f32.mrb[0].mxu0
        %v8195 = vadd.f32 0.0, %v8194
        %v8196 = vpop.f32.mrb[0].mxu0
        %8197 = vmatprep.mubr.bf16.mxu0 %v8108
        %8198 = vmatmul.mubr.bf16.gmra.mrb[0].mxu0 %v8006
        %v8199 = vpop.f32.mrb[0].mxu0
        %v8200 = vadd.f32 0.0, %v8199
        %v8201 = vpop.f32.mrb[0].mxu0
        %v8202 = vpop.f32.mrb[0].mxu0
        %v8203 = vadd.f32 0.0, %v8202
        %v8204 = vpop.f32.mrb[0].mxu0
        %8205 = vmatprep.mubr.bf16.mxu0 %v8111
        %8206 = vmatmul.mubr.bf16.gmra.mrb[0].mxu0 %v8009
        %v8207 = vpop.f32.mrb[0].mxu0
        %v8208 = vadd.f32 0.0, %v8207
        %v8209 = vpop.f32.mrb[0].mxu0
        %v8210 = vpop.f32.mrb[0].mxu0
        %v8211 = vadd.f32 0.0, %v8210
        %v8212 = vpop.f32.mrb[0].mxu0
        %8213 = vmatprep.mubr.bf16.mxu0 %v8114
        %8214 = vmatmul.mubr.bf16.gmra.mrb[0].mxu0 %v8012
        %v8215 = vpop.f32.mrb[0].mxu0
        %v8216 = vadd.f32 0.0, %v8215
        %v8217 = vpop.f32.mrb[0].mxu0
        %v8218 = vpop.f32.mrb[0].mxu0
        %v8219 = vadd.f32 0.0, %v8218
        %v8220 = vpop.f32.mrb[0].mxu0
        %8221 = vmatprep.mubr.bf16.mxu0 %v8117
        %8222 = vmatmul.mubr.bf16.gmra.mrb[0].mxu0 %v8015
        %v8223 = vpop.f32.mrb[0].mxu0
        %v8224 = vadd.f32 0.0, %v8223
        %v8225 = vpop.f32.mrb[0].mxu0
        %v8226 = vpop.f32.mrb[0].mxu0
        %v8227 = vadd.f32 0.0, %v8226
        %v8228 = vpop.f32.mrb[0].mxu0
        %8229 = vmatprep.mubr.bf16.mxu0 %v8120
        %8230 = vmatmul.mubr.bf16.gmra.mrb[0].mxu0 %v8018
        %v8231 = vpop.f32.mrb[0].mxu0
        %v8232 = vadd.f32 0.0, %v8231
        %v8233 = vpop.f32.mrb[0].mxu0
        %v8234 = vpop.f32.mrb[0].mxu0
        %v8235 = vadd.f32 0.0, %v8234
        %v8236 = vpop.f32.mrb[0].mxu0
        %8237 = vmatprep.mubr.bf16.mxu0 %v8123
        %8238 = vmatmul.mubr.bf16.gmra.mrb[0].mxu0 %v8021
        %v8239 = vpop.f32.mrb[0].mxu0
        %v8240 = vadd.f32 0.0, %v8239
        %v8241 = vpop.f32.mrb[0].mxu0
        %v8242 = vpop.f32.mrb[0].mxu0
        %v8243 = vadd.f32 0.0, %v8242
        %v8244 = vpop.f32.mrb[0].mxu0
        %8245 = vmatprep.mubr.bf16.mxu0 %v8126
        %8246 = vmatmul.mubr.bf16.gmra.mrb[0].mxu0 %v8024
        %v8247 = vpop.f32.mrb[0].mxu0
        %v8248 = vadd.f32 0.0, %v8247
        %v8249 = vpop.f32.mrb[0].mxu0
        %v8250 = vpop.f32.mrb[0].mxu0
        %v8251 = vadd.f32 0.0, %v8250
        %v8252 = vpop.f32.mrb[0].mxu0
        %8253 = vmatprep.mubr.bf16.mxu0 %v8129
        %8254 = vmatmul.mubr.bf16.gmra.mrb[0].mxu0 %v8027
        %v8255 = vpop.f32.mrb[0].mxu0
        %v8256 = vadd.f32 0.0, %v8255
        %v8257 = vpop.f32.mrb[0].mxu0
        %v8258 = vpop.f32.mrb[0].mxu0
        %v8259 = vadd.f32 0.0, %v8258
        %v8260 = vpop.f32.mrb[0].mxu0
        %8261 = vmatprep.mubr.bf16.mxu0 %v8132
        %8262 = vmatmul.mubr.bf16.gmra.mrb[0].mxu0 %v8030
        %v8263 = vpop.f32.mrb[0].mxu0
        %v8264 = vadd.f32 0.0, %v8263
        %v8265 = vpop.f32.mrb[0].mxu0
        %v8266 = vpop.f32.mrb[0].mxu0
        %v8267 = vadd.f32 0.0, %v8266
        %v8268 = vpop.f32.mrb[0].mxu0
        %8269 = vmatprep.mubr.bf16.mxu0 %v8135
        %8270 = vmatmul.mubr.bf16.gmra.mrb[0].mxu0 %v8033
        %v8271 = vpop.f32.mrb[0].mxu0
        %v8272 = vadd.f32 0.0, %v8271
        %v8273 = vpop.f32.mrb[0].mxu0
        %v8274 = vpop.f32.mrb[0].mxu0
        %v8275 = vadd.f32 0.0, %v8274
        %v8276 = vpop.f32.mrb[0].mxu0
        %8277 = vmatprep.mubr.bf16.mxu0 %v8138
        %8278 = vmatmul.mubr.bf16.gmra.mrb[0].mxu0 %v8036
        %v8279 = vpop.f32.mrb[0].mxu0
        %v8280 = vadd.f32 0.0, %v8279
        %v8281 = vpop.f32.mrb[0].mxu0
        %v8282 = vpop.f32.mrb[0].mxu0
        %v8283 = vadd.f32 0.0, %v8282
        %v8284 = vpop.f32.mrb[0].mxu0
        %8285 = vmatprep.mubr.bf16.mxu0 %v8141
        %8286 = vmatmul.mubr.bf16.gmra.mrb[0].mxu0 %v8039
        %v8287 = vpop.f32.mrb[0].mxu0
        %v8288 = vadd.f32 0.0, %v8287
        %v8289 = vpop.f32.mrb[0].mxu0
        %v8290 = vpop.f32.mrb[0].mxu0
        %v8291 = vadd.f32 0.0, %v8290
        %v8292 = vpop.f32.mrb[0].mxu0
        %8293 = vmatprep.mubr.bf16.mxu0 %v8144
        %8294 = vmatmul.mubr.bf16.gmra.mrb[0].mxu0 %v8042
        %v8295 = vpop.f32.mrb[0].mxu0
        %v8296 = vadd.f32 0.0, %v8295
        %v8297 = vpop.f32.mrb[0].mxu0
        %v8298 = vpop.f32.mrb[0].mxu0
        %v8299 = vadd.f32 0.0, %v8298
        %v8300 = vpop.f32.mrb[0].mxu0
        %8301 = vmatprep.mubr.bf16.mxu0 %v8147
        %8302 = vmatmul.mubr.bf16.gmra.mrb[0].mxu0 %v8045
        %v8303 = vpop.f32.mrb[0].mxu0
        %v8304 = vadd.f32 0.0, %v8303
        %v8305 = vpop.f32.mrb[0].mxu0
        %v8306 = vpop.f32.mrb[0].mxu0
        %v8307 = vadd.f32 0.0, %v8306
        %v8308 = vpop.f32.mrb[0].mxu0
        %8309 = vdwg.mxu0
        %v8310 = vlaneseq
        %v8311 = vshrl.u32 %v8310, 7
        %v8312 = vsub.s32 1, %v8311
        %v8313 = vrot.slane %v816, %v8312
        %v8314 = vmul.f32 %v8184, %v8313
        %v8315 = vmul.f32 %v8187, %v8313
        %v8316 = vmul.f32 %v8192, %v8313
        %v8317 = vmul.f32 %v8195, %v8313
        %v8318 = vmul.f32 %v8200, %v8313
        %v8319 = vmul.f32 %v8203, %v8313
        %v8320 = vmul.f32 %v8208, %v8313
        %v8321 = vmul.f32 %v8211, %v8313
        %v8322 = vmul.f32 %v8216, %v8313
        %v8323 = vmul.f32 %v8219, %v8313
        %v8324 = vmul.f32 %v8224, %v8313
        %v8325 = vmul.f32 %v8227, %v8313
        %v8326 = vmul.f32 %v8232, %v8313
        %v8327 = vmul.f32 %v8235, %v8313
        %v8328 = vmul.f32 %v8240, %v8313
        %v8329 = vmul.f32 %v8243, %v8313
        %v8330 = vmul.f32 %v8248, %v8313
        %v8331 = vmul.f32 %v8251, %v8313
        %v8332 = vmul.f32 %v8256, %v8313
        %v8333 = vmul.f32 %v8259, %v8313
        %v8334 = vmul.f32 %v8264, %v8313
        %v8335 = vmul.f32 %v8267, %v8313
        %v8336 = vmul.f32 %v8272, %v8313
        %v8337 = vmul.f32 %v8275, %v8313
        %v8338 = vmul.f32 %v8280, %v8313
        %v8339 = vmul.f32 %v8283, %v8313
        %v8340 = vmul.f32 %v8288, %v8313
        %v8341 = vmul.f32 %v8291, %v8313
        %v8342 = vmul.f32 %v8296, %v8313
        %v8343 = vmul.f32 %v8299, %v8313
        %v8344 = vmul.f32 %v8304, %v8313
        %v8345 = vmul.f32 %v8307, %v8313
        %v8346 = vlaneseq
        %v8347 = vshrl.u32 %v8346, 7
        %v8348 = vsub.s32 1, %v8347
        %v8349 = vrot.slane %v817, %v8348
        %v8350 = vadd.f32 %v8314, %v8349
        %v8351 = vadd.f32 %v8315, %v8349
        %v8352 = vadd.f32 %v8316, %v8349
        %v8353 = vadd.f32 %v8317, %v8349
        %v8354 = vadd.f32 %v8318, %v8349
        %v8355 = vadd.f32 %v8319, %v8349
        %v8356 = vadd.f32 %v8320, %v8349
        %v8357 = vadd.f32 %v8321, %v8349
        %v8358 = vadd.f32 %v8322, %v8349
        %v8359 = vadd.f32 %v8323, %v8349
        %v8360 = vadd.f32 %v8324, %v8349
        %v8361 = vadd.f32 %v8325, %v8349
        %v8362 = vadd.f32 %v8326, %v8349
        %v8363 = vadd.f32 %v8327, %v8349
        %v8364 = vadd.f32 %v8328, %v8349
        %v8365 = vadd.f32 %v8329, %v8349
        %v8366 = vadd.f32 %v8330, %v8349
        %v8367 = vadd.f32 %v8331, %v8349
        %v8368 = vadd.f32 %v8332, %v8349
        %v8369 = vadd.f32 %v8333, %v8349
        %v8370 = vadd.f32 %v8334, %v8349
        %v8371 = vadd.f32 %v8335, %v8349
        %v8372 = vadd.f32 %v8336, %v8349
        %v8373 = vadd.f32 %v8337, %v8349
        %v8374 = vadd.f32 %v8338, %v8349
        %v8375 = vadd.f32 %v8339, %v8349
        %v8376 = vadd.f32 %v8340, %v8349
        %v8377 = vadd.f32 %v8341, %v8349
        %v8378 = vadd.f32 %v8342, %v8349
        %v8379 = vadd.f32 %v8343, %v8349
        %v8380 = vadd.f32 %v8344, %v8349
        %v8381 = vadd.f32 %v8345, %v8349
        %v8382 = vmax.f32 %v8350, 0.0
        %v8383 = vmax.f32 %v8351, 0.0
        %v8384 = vmax.f32 %v8352, 0.0
        %v8385 = vmax.f32 %v8353, 0.0
        %v8386 = vmax.f32 %v8354, 0.0
        %v8387 = vmax.f32 %v8355, 0.0
        %v8388 = vmax.f32 %v8356, 0.0
        %v8389 = vmax.f32 %v8357, 0.0
        %v8390 = vmax.f32 %v8358, 0.0
        %v8391 = vmax.f32 %v8359, 0.0
        %v8392 = vmax.f32 %v8360, 0.0
        %v8393 = vmax.f32 %v8361, 0.0
        %v8394 = vmax.f32 %v8362, 0.0
        %v8395 = vmax.f32 %v8363, 0.0
        %v8396 = vmax.f32 %v8364, 0.0
        %v8397 = vmax.f32 %v8365, 0.0
        %v8398 = vmax.f32 %v8366, 0.0
        %v8399 = vmax.f32 %v8367, 0.0
        %v8400 = vmax.f32 %v8368, 0.0
        %v8401 = vmax.f32 %v8369, 0.0
        %v8402 = vmax.f32 %v8370, 0.0
        %v8403 = vmax.f32 %v8371, 0.0
        %v8404 = vmax.f32 %v8372, 0.0
        %v8405 = vmax.f32 %v8373, 0.0
        %v8406 = vmax.f32 %v8374, 0.0
        %v8407 = vmax.f32 %v8375, 0.0
        %v8408 = vmax.f32 %v8376, 0.0
        %v8409 = vmax.f32 %v8377, 0.0
        %v8410 = vmax.f32 %v8378, 0.0
        %v8411 = vmax.f32 %v8379, 0.0
        %v8412 = vmax.f32 %v8380, 0.0
        %v8413 = vmax.f32 %v8381, 0.0
        %8414 = vrot.lane.b32.xlu0 %v730, 96
        %v8415 = vpop.permute.xlu0 %8414
        %8416 = vrot.lane.b32.xlu0 %v731, 96
        %v8417 = vpop.permute.xlu0 %8416
        %8418 = vrot.lane.b32.xlu0 %v732, 96
        %v8419 = vpop.permute.xlu0 %8418
        %8420 = vrot.lane.b32.xlu0 %v733, 96
        %v8421 = vpop.permute.xlu0 %8420
        %8422 = vrot.lane.b32.xlu0 %v734, 96
        %v8423 = vpop.permute.xlu0 %8422
        %8424 = vrot.lane.b32.xlu0 %v735, 96
        %v8425 = vpop.permute.xlu0 %8424
        %8426 = vrot.lane.b32.xlu0 %v736, 96
        %v8427 = vpop.permute.xlu0 %8426
        %8428 = vrot.lane.b32.xlu0 %v737, 96
        %v8429 = vpop.permute.xlu0 %8428
        %8430 = vrot.lane.b32.xlu0 %v738, 96
        %v8431 = vpop.permute.xlu0 %8430
        %8432 = vrot.lane.b32.xlu0 %v739, 96
        %v8433 = vpop.permute.xlu0 %8432
        %8434 = vrot.lane.b32.xlu0 %v740, 96
        %v8435 = vpop.permute.xlu0 %8434
        %8436 = vrot.lane.b32.xlu0 %v741, 96
        %v8437 = vpop.permute.xlu0 %8436
        %8438 = vrot.lane.b32.xlu0 %v742, 96
        %v8439 = vpop.permute.xlu0 %8438
        %8440 = vrot.lane.b32.xlu0 %v743, 96
        %v8441 = vpop.permute.xlu0 %8440
        %8442 = vrot.lane.b32.xlu0 %v744, 96
        %v8443 = vpop.permute.xlu0 %8442
        %8444 = vrot.lane.b32.xlu0 %v745, 96
        %v8445 = vpop.permute.xlu0 %8444
        %8446 = vrot.lane.b32.xlu0 %v746, 96
        %v8447 = vpop.permute.xlu0 %8446
        %8448 = vrot.lane.b32.xlu0 %v747, 96
        %v8449 = vpop.permute.xlu0 %8448
        %8450 = vrot.lane.b32.xlu0 %v748, 96
        %v8451 = vpop.permute.xlu0 %8450
        %8452 = vrot.lane.b32.xlu0 %v749, 96
        %v8453 = vpop.permute.xlu0 %8452
        %8454 = vrot.lane.b32.xlu0 %v750, 96
        %v8455 = vpop.permute.xlu0 %8454
        %8456 = vrot.lane.b32.xlu0 %v751, 96
        %v8457 = vpop.permute.xlu0 %8456
        %8458 = vrot.lane.b32.xlu0 %v752, 96
        %v8459 = vpop.permute.xlu0 %8458
        %8460 = vrot.lane.b32.xlu0 %v753, 96
        %v8461 = vpop.permute.xlu0 %8460
        %8462 = vrot.lane.b32.xlu0 %v754, 96
        %v8463 = vpop.permute.xlu0 %8462
        %8464 = vrot.lane.b32.xlu0 %v755, 96
        %v8465 = vpop.permute.xlu0 %8464
        %8466 = vrot.lane.b32.xlu0 %v756, 96
        %v8467 = vpop.permute.xlu0 %8466
        %8468 = vrot.lane.b32.xlu0 %v757, 96
        %v8469 = vpop.permute.xlu0 %8468
        %8470 = vrot.lane.b32.xlu0 %v758, 96
        %v8471 = vpop.permute.xlu0 %8470
        %8472 = vrot.lane.b32.xlu0 %v759, 96
        %v8473 = vpop.permute.xlu0 %8472
        %8474 = vrot.lane.b32.xlu0 %v760, 96
        %v8475 = vpop.permute.xlu0 %8474
        %8476 = vrot.lane.b32.xlu0 %v761, 96
        %v8477 = vpop.permute.xlu0 %8476
        %v8510 = vadd.f32 %v8382, %v8415
        %v8511 = vadd.f32 %v8383, %v8417
        %v8512 = vadd.f32 %v8384, %v8419
        %v8513 = vadd.f32 %v8385, %v8421
        %v8514 = vadd.f32 %v8386, %v8423
        %v8515 = vadd.f32 %v8387, %v8425
        %v8516 = vadd.f32 %v8388, %v8427
        %v8517 = vadd.f32 %v8389, %v8429
        %v8518 = vadd.f32 %v8390, %v8431
        %v8519 = vadd.f32 %v8391, %v8433
        %v8520 = vadd.f32 %v8392, %v8435
        %v8521 = vadd.f32 %v8393, %v8437
        %v8522 = vadd.f32 %v8394, %v8439
        %v8523 = vadd.f32 %v8395, %v8441
        %v8524 = vadd.f32 %v8396, %v8443
        %v8525 = vadd.f32 %v8397, %v8445
        %v8526 = vadd.f32 %v8398, %v8447
        %v8527 = vadd.f32 %v8399, %v8449
        %v8528 = vadd.f32 %v8400, %v8451
        %v8529 = vadd.f32 %v8401, %v8453
        %v8530 = vadd.f32 %v8402, %v8455
        %v8531 = vadd.f32 %v8403, %v8457
        %v8532 = vadd.f32 %v8404, %v8459
        %v8533 = vadd.f32 %v8405, %v8461
        %v8534 = vadd.f32 %v8406, %v8463
        %v8535 = vadd.f32 %v8407, %v8465
        %v8536 = vadd.f32 %v8408, %v8467
        %v8537 = vadd.f32 %v8409, %v8469
        %v8538 = vadd.f32 %v8410, %v8471
        %v8539 = vadd.f32 %v8411, %v8473
        %v8540 = vadd.f32 %v8412, %v8475
        %v8541 = vadd.f32 %v8413, %v8477
        %v8542 = vpack.c.bf16 %v8511, %v8510
        %v8543 = vpack.c.bf16 %v8513, %v8512
        %v8544 = vpack.c.bf16 %v8515, %v8514
        %v8545 = vpack.c.bf16 %v8517, %v8516
        %v8546 = vpack.c.bf16 %v8519, %v8518
        %v8547 = vpack.c.bf16 %v8521, %v8520
        %v8548 = vpack.c.bf16 %v8523, %v8522
        %v8549 = vpack.c.bf16 %v8525, %v8524
        %v8550 = vpack.c.bf16 %v8527, %v8526
        %v8551 = vpack.c.bf16 %v8529, %v8528
        %v8552 = vpack.c.bf16 %v8531, %v8530
        %v8553 = vpack.c.bf16 %v8533, %v8532
        %v8554 = vpack.c.bf16 %v8535, %v8534
        %v8555 = vpack.c.bf16 %v8537, %v8536
        %v8556 = vpack.c.bf16 %v8539, %v8538
        %v8557 = vpack.c.bf16 %v8541, %v8540
        %v8574 = vunpack.c.l.b16 %v8542
        %v8575 = vunpack.c.h.b16 %v8542
        %v8576 = vunpack.c.l.b16 %v8543
        %v8577 = vunpack.c.h.b16 %v8543
        %v8578 = vunpack.c.l.b16 %v8544
        %v8579 = vunpack.c.h.b16 %v8544
        %v8580 = vunpack.c.l.b16 %v8545
        %v8581 = vunpack.c.h.b16 %v8545
        %v8582 = vunpack.c.l.b16 %v8546
        %v8583 = vunpack.c.h.b16 %v8546
        %v8584 = vunpack.c.l.b16 %v8547
        %v8585 = vunpack.c.h.b16 %v8547
        %v8586 = vunpack.c.l.b16 %v8548
        %v8587 = vunpack.c.h.b16 %v8548
        %v8588 = vunpack.c.l.b16 %v8549
        %v8589 = vunpack.c.h.b16 %v8549
        %v8590 = vunpack.c.l.b16 %v8550
        %v8591 = vunpack.c.h.b16 %v8550
        %v8592 = vunpack.c.l.b16 %v8551
        %v8593 = vunpack.c.h.b16 %v8551
        %v8594 = vunpack.c.l.b16 %v8552
        %v8595 = vunpack.c.h.b16 %v8552
        %v8596 = vunpack.c.l.b16 %v8553
        %v8597 = vunpack.c.h.b16 %v8553
        %v8598 = vunpack.c.l.b16 %v8554
        %v8599 = vunpack.c.h.b16 %v8554
        %v8600 = vunpack.c.l.b16 %v8555
        %v8601 = vunpack.c.h.b16 %v8555
        %v8602 = vunpack.c.l.b16 %v8556
        %v8603 = vunpack.c.h.b16 %v8556
        %v8604 = vunpack.c.l.b16 %v8557
        %v8605 = vunpack.c.h.b16 %v8557
        %v8606 = vpack.c.b16 %v8574, %v8574
        %v8607 = vpack.c.b16 %v8575, %v8575
        %v8608 = vpack.c.b16 %v8576, %v8576
        %v8609 = vpack.c.b16 %v8577, %v8577
        %v8610 = vpack.c.b16 %v8578, %v8578
        %v8611 = vpack.c.b16 %v8579, %v8579
        %v8612 = vpack.c.b16 %v8580, %v8580
        %v8613 = vpack.c.b16 %v8581, %v8581
        %v8614 = vpack.c.b16 %v8582, %v8582
        %v8615 = vpack.c.b16 %v8583, %v8583
        %v8616 = vpack.c.b16 %v8584, %v8584
        %v8617 = vpack.c.b16 %v8585, %v8585
        %v8618 = vpack.c.b16 %v8586, %v8586
        %v8619 = vpack.c.b16 %v8587, %v8587
        %v8620 = vpack.c.b16 %v8588, %v8588
        %v8621 = vpack.c.b16 %v8589, %v8589
        %v8622 = vpack.c.b16 %v8590, %v8590
        %v8623 = vpack.c.b16 %v8591, %v8591
        %v8624 = vpack.c.b16 %v8592, %v8592
        %v8625 = vpack.c.b16 %v8593, %v8593
        %v8626 = vpack.c.b16 %v8594, %v8594
        %v8627 = vpack.c.b16 %v8595, %v8595
        %v8628 = vpack.c.b16 %v8596, %v8596
        %v8629 = vpack.c.b16 %v8597, %v8597
        %v8630 = vpack.c.b16 %v8598, %v8598
        %v8631 = vpack.c.b16 %v8599, %v8599
        %v8632 = vpack.c.b16 %v8600, %v8600
        %v8633 = vpack.c.b16 %v8601, %v8601
        %v8634 = vpack.c.b16 %v8602, %v8602
        %v8635 = vpack.c.b16 %v8603, %v8603
        %v8636 = vpack.c.b16 %v8604, %v8604
        %v8637 = vpack.c.b16 %v8605, %v8605
        %v8639 = vshrl.u32 %v8606, 16
        %v8641 = vrot.slane %v8639, 7
        %v8642 = vshll.u32 %v8606, 16
        %v8644 = vor.u32 %v8641, %v8642
        %v8645 = vrot.slane %v8641, 4
        %v8647 = vshrl.u32 %v8607, 16
        %v8649 = vrot.slane %v8647, 7
        %v8650 = vshll.u32 %v8607, 16
        %v8652 = vor.u32 %v8649, %v8650
        %v8653 = vsel %vm972, %v8645, %v8652
        %v8654 = vrot.slane %v8649, 4
        %v8656 = vshrl.u32 %v8608, 16
        %v8658 = vrot.slane %v8656, 7
        %v8659 = vshll.u32 %v8608, 16
        %v8661 = vor.u32 %v8658, %v8659
        %v8662 = vrot.slane %v8658, 4
        %v8664 = vshrl.u32 %v8609, 16
        %v8666 = vrot.slane %v8664, 7
        %v8667 = vshll.u32 %v8609, 16
        %v8669 = vor.u32 %v8666, %v8667
        %v8670 = vsel %vm972, %v8662, %v8669
        %v8671 = vrot.slane %v8666, 4
        %v8673 = vshrl.u32 %v8610, 16
        %v8675 = vrot.slane %v8673, 7
        %v8676 = vshll.u32 %v8610, 16
        %v8678 = vor.u32 %v8675, %v8676
        %v8679 = vrot.slane %v8675, 4
        %v8681 = vshrl.u32 %v8611, 16
        %v8683 = vrot.slane %v8681, 7
        %v8684 = vshll.u32 %v8611, 16
        %v8686 = vor.u32 %v8683, %v8684
        %v8687 = vsel %vm972, %v8679, %v8686
        %v8688 = vrot.slane %v8683, 4
        %v8690 = vshrl.u32 %v8612, 16
        %v8692 = vrot.slane %v8690, 7
        %v8693 = vshll.u32 %v8612, 16
        %v8695 = vor.u32 %v8692, %v8693
        %v8696 = vrot.slane %v8692, 4
        %v8698 = vshrl.u32 %v8613, 16
        %v8700 = vrot.slane %v8698, 7
        %v8701 = vshll.u32 %v8613, 16
        %v8703 = vor.u32 %v8700, %v8701
        %v8704 = vsel %vm972, %v8696, %v8703
        %v8705 = vrot.slane %v8700, 4
        %v8707 = vshrl.u32 %v8614, 16
        %v8709 = vrot.slane %v8707, 7
        %v8710 = vshll.u32 %v8614, 16
        %v8712 = vor.u32 %v8709, %v8710
        %v8713 = vrot.slane %v8709, 4
        %v8715 = vshrl.u32 %v8615, 16
        %v8717 = vrot.slane %v8715, 7
        %v8718 = vshll.u32 %v8615, 16
        %v8720 = vor.u32 %v8717, %v8718
        %v8721 = vsel %vm972, %v8713, %v8720
        %v8722 = vrot.slane %v8717, 4
        %v8724 = vshrl.u32 %v8616, 16
        %v8726 = vrot.slane %v8724, 7
        %v8727 = vshll.u32 %v8616, 16
        %v8729 = vor.u32 %v8726, %v8727
        %v8730 = vrot.slane %v8726, 4
        %v8732 = vshrl.u32 %v8617, 16
        %v8734 = vrot.slane %v8732, 7
        %v8735 = vshll.u32 %v8617, 16
        %v8737 = vor.u32 %v8734, %v8735
        %v8738 = vsel %vm972, %v8730, %v8737
        %v8739 = vrot.slane %v8734, 4
        %v8741 = vshrl.u32 %v8618, 16
        %v8743 = vrot.slane %v8741, 7
        %v8744 = vshll.u32 %v8618, 16
        %v8746 = vor.u32 %v8743, %v8744
        %v8747 = vrot.slane %v8743, 4
        %v8749 = vshrl.u32 %v8619, 16
        %v8751 = vrot.slane %v8749, 7
        %v8752 = vshll.u32 %v8619, 16
        %v8754 = vor.u32 %v8751, %v8752
        %v8755 = vsel %vm972, %v8747, %v8754
        %v8756 = vrot.slane %v8751, 4
        %v8758 = vshrl.u32 %v8620, 16
        %v8760 = vrot.slane %v8758, 7
        %v8761 = vshll.u32 %v8620, 16
        %v8763 = vor.u32 %v8760, %v8761
        %v8764 = vrot.slane %v8760, 4
        %v8766 = vshrl.u32 %v8621, 16
        %v8768 = vrot.slane %v8766, 7
        %v8769 = vshll.u32 %v8621, 16
        %v8771 = vor.u32 %v8768, %v8769
        %v8772 = vsel %vm972, %v8764, %v8771
        %v8773 = vrot.slane %v8768, 4
        %v8775 = vshrl.u32 %v8622, 16
        %v8777 = vrot.slane %v8775, 7
        %v8778 = vshll.u32 %v8622, 16
        %v8780 = vor.u32 %v8777, %v8778
        %v8781 = vrot.slane %v8777, 4
        %v8783 = vshrl.u32 %v8623, 16
        %v8785 = vrot.slane %v8783, 7
        %v8786 = vshll.u32 %v8623, 16
        %v8788 = vor.u32 %v8785, %v8786
        %v8789 = vsel %vm972, %v8781, %v8788
        %v8790 = vrot.slane %v8785, 4
        %v8792 = vshrl.u32 %v8624, 16
        %v8794 = vrot.slane %v8792, 7
        %v8795 = vshll.u32 %v8624, 16
        %v8797 = vor.u32 %v8794, %v8795
        %v8798 = vrot.slane %v8794, 4
        %v8800 = vshrl.u32 %v8625, 16
        %v8802 = vrot.slane %v8800, 7
        %v8803 = vshll.u32 %v8625, 16
        %v8805 = vor.u32 %v8802, %v8803
        %v8806 = vsel %vm972, %v8798, %v8805
        %v8807 = vrot.slane %v8802, 4
        %v8809 = vshrl.u32 %v8626, 16
        %v8811 = vrot.slane %v8809, 7
        %v8812 = vshll.u32 %v8626, 16
        %v8814 = vor.u32 %v8811, %v8812
        %v8815 = vrot.slane %v8811, 4
        %v8817 = vshrl.u32 %v8627, 16
        %v8819 = vrot.slane %v8817, 7
        %v8820 = vshll.u32 %v8627, 16
        %v8822 = vor.u32 %v8819, %v8820
        %v8823 = vsel %vm972, %v8815, %v8822
        %v8824 = vrot.slane %v8819, 4
        %v8826 = vshrl.u32 %v8628, 16
        %v8828 = vrot.slane %v8826, 7
        %v8829 = vshll.u32 %v8628, 16
        %v8831 = vor.u32 %v8828, %v8829
        %v8832 = vrot.slane %v8828, 4
        %v8834 = vshrl.u32 %v8629, 16
        %v8836 = vrot.slane %v8834, 7
        %v8837 = vshll.u32 %v8629, 16
        %v8839 = vor.u32 %v8836, %v8837
        %v8840 = vsel %vm972, %v8832, %v8839
        %v8841 = vrot.slane %v8836, 4
        %v8843 = vshrl.u32 %v8630, 16
        %v8845 = vrot.slane %v8843, 7
        %v8846 = vshll.u32 %v8630, 16
        %v8848 = vor.u32 %v8845, %v8846
        %v8849 = vrot.slane %v8845, 4
        %v8851 = vshrl.u32 %v8631, 16
        %v8853 = vrot.slane %v8851, 7
        %v8854 = vshll.u32 %v8631, 16
        %v8856 = vor.u32 %v8853, %v8854
        %v8857 = vsel %vm972, %v8849, %v8856
        %v8858 = vrot.slane %v8853, 4
        %v8860 = vshrl.u32 %v8632, 16
        %v8862 = vrot.slane %v8860, 7
        %v8863 = vshll.u32 %v8632, 16
        %v8865 = vor.u32 %v8862, %v8863
        %v8866 = vrot.slane %v8862, 4
        %v8868 = vshrl.u32 %v8633, 16
        %v8870 = vrot.slane %v8868, 7
        %v8871 = vshll.u32 %v8633, 16
        %v8873 = vor.u32 %v8870, %v8871
        %v8874 = vsel %vm972, %v8866, %v8873
        %v8875 = vrot.slane %v8870, 4
        %v8877 = vshrl.u32 %v8634, 16
        %v8879 = vrot.slane %v8877, 7
        %v8880 = vshll.u32 %v8634, 16
        %v8882 = vor.u32 %v8879, %v8880
        %v8883 = vrot.slane %v8879, 4
        %v8885 = vshrl.u32 %v8635, 16
        %v8887 = vrot.slane %v8885, 7
        %v8888 = vshll.u32 %v8635, 16
        %v8890 = vor.u32 %v8887, %v8888
        %v8891 = vsel %vm972, %v8883, %v8890
        %v8892 = vrot.slane %v8887, 4
        %v8894 = vshrl.u32 %v8636, 16
        %v8896 = vrot.slane %v8894, 7
        %v8897 = vshll.u32 %v8636, 16
        %v8899 = vor.u32 %v8896, %v8897
        %v8900 = vrot.slane %v8896, 4
        %v8902 = vshrl.u32 %v8637, 16
        %v8904 = vrot.slane %v8902, 7
        %v8905 = vshll.u32 %v8637, 16
        %v8907 = vor.u32 %v8904, %v8905
        %v8908 = vsel %vm972, %v8900, %v8907
        %v8909 = vrot.slane %v8904, 4
        %v8958 = vsel %vm1296, %v8644, %v5871
        %8959 = vst [vmem:[%s1293] sm:$0xf] %v8958
        %8960 = vst.msk [vmem:[%s1293 + $0x4] sm:$0xf] %vm818, %v8653
        %v8961 = vld [vmem:[%s1293 + $0x8] sm:$0x1]
        %v8962 = vsel %vm1302, %v8654, %v8961
        %8963 = vst [vmem:[%s1293 + $0x8] sm:$0x1] %v8962
        %v8964 = vld [vmem:[%s1293 + $0xc] sm:$0xf]
        %v8965 = vsel %vm1296, %v8661, %v8964
        %8966 = vst [vmem:[%s1293 + $0xc] sm:$0xf] %v8965
        %8967 = vst.msk [vmem:[%s1293 + $0x10] sm:$0xf] %vm818, %v8670
        %v8968 = vld [vmem:[%s1293 + $0x14] sm:$0x1]
        %v8969 = vsel %vm1302, %v8671, %v8968
        %8970 = vst [vmem:[%s1293 + $0x14] sm:$0x1] %v8969
        %v8971 = vld [vmem:[%s1293 + $0x18] sm:$0xf]
        %v8972 = vsel %vm1296, %v8678, %v8971
        %8973 = vst [vmem:[%s1293 + $0x18] sm:$0xf] %v8972
        %8974 = vst.msk [vmem:[%s1293 + $0x1c] sm:$0xf] %vm818, %v8687
        %v8975 = vld [vmem:[%s1293 + $0x20] sm:$0x1]
        %v8976 = vsel %vm1302, %v8688, %v8975
        %8977 = vst [vmem:[%s1293 + $0x20] sm:$0x1] %v8976
        %v8978 = vld [vmem:[%s1293 + $0x24] sm:$0xf]
        %v8979 = vsel %vm1296, %v8695, %v8978
        %8980 = vst [vmem:[%s1293 + $0x24] sm:$0xf] %v8979
        %8981 = vst.msk [vmem:[%s1293 + $0x28] sm:$0xf] %vm818, %v8704
        %v8982 = vld [vmem:[%s1293 + $0x2c] sm:$0x1]
        %v8983 = vsel %vm1302, %v8705, %v8982
        %8984 = vst [vmem:[%s1293 + $0x2c] sm:$0x1] %v8983
        %v8985 = vld [vmem:[%s1293 + $0x30] sm:$0xf]
        %v8986 = vsel %vm1296, %v8712, %v8985
        %8987 = vst [vmem:[%s1293 + $0x30] sm:$0xf] %v8986
        %8988 = vst.msk [vmem:[%s1293 + $0x34] sm:$0xf] %vm818, %v8721
        %v8989 = vld [vmem:[%s1293 + $0x38] sm:$0x1]
        %v8990 = vsel %vm1302, %v8722, %v8989
        %8991 = vst [vmem:[%s1293 + $0x38] sm:$0x1] %v8990
        %v8992 = vld [vmem:[%s1293 + $0x3c] sm:$0xf]
        %v8993 = vsel %vm1296, %v8729, %v8992
        %8994 = vst [vmem:[%s1293 + $0x3c] sm:$0xf] %v8993
        %8995 = vst.msk [vmem:[%s1293 + $0x40] sm:$0xf] %vm818, %v8738
        %v8996 = vld [vmem:[%s1293 + $0x44] sm:$0x1]
        %v8997 = vsel %vm1302, %v8739, %v8996
        %8998 = vst [vmem:[%s1293 + $0x44] sm:$0x1] %v8997
        %v8999 = vld [vmem:[%s1293 + $0x48] sm:$0xf]
        %v9000 = vsel %vm1296, %v8746, %v8999
        %9001 = vst [vmem:[%s1293 + $0x48] sm:$0xf] %v9000
        %9002 = vst.msk [vmem:[%s1293 + $0x4c] sm:$0xf] %vm818, %v8755
        %v9003 = vld [vmem:[%s1293 + $0x50] sm:$0x1]
        %v9004 = vsel %vm1302, %v8756, %v9003
        %9005 = vst [vmem:[%s1293 + $0x50] sm:$0x1] %v9004
        %v9006 = vld [vmem:[%s1293 + $0x54] sm:$0xf]
        %v9007 = vsel %vm1296, %v8763, %v9006
        %9008 = vst [vmem:[%s1293 + $0x54] sm:$0xf] %v9007
        %9009 = vst.msk [vmem:[%s1293 + $0x58] sm:$0xf] %vm818, %v8772
        %v9010 = vld [vmem:[%s1293 + $0x5c] sm:$0x1]
        %v9011 = vsel %vm1302, %v8773, %v9010
        %9012 = vst [vmem:[%s1293 + $0x5c] sm:$0x1] %v9011
        %v9013 = vld [vmem:[%s1293 + $0x60] sm:$0xf]
        %v9014 = vsel %vm1296, %v8780, %v9013
        %9015 = vst [vmem:[%s1293 + $0x60] sm:$0xf] %v9014
        %9016 = vst.msk [vmem:[%s1293 + $0x64] sm:$0xf] %vm818, %v8789
        %v9017 = vld [vmem:[%s1293 + $0x68] sm:$0x1]
        %v9018 = vsel %vm1302, %v8790, %v9017
        %9019 = vst [vmem:[%s1293 + $0x68] sm:$0x1] %v9018
        %v9020 = vld [vmem:[%s1293 + $0x6c] sm:$0xf]
        %v9021 = vsel %vm1296, %v8797, %v9020
        %9022 = vst [vmem:[%s1293 + $0x6c] sm:$0xf] %v9021
        %9023 = vst.msk [vmem:[%s1293 + $0x70] sm:$0xf] %vm818, %v8806
        %v9024 = vld [vmem:[%s1293 + $0x74] sm:$0x1]
        %v9025 = vsel %vm1302, %v8807, %v9024
        %9026 = vst [vmem:[%s1293 + $0x74] sm:$0x1] %v9025
        %v9027 = vld [vmem:[%s1293 + $0x78] sm:$0xf]
        %v9028 = vsel %vm1296, %v8814, %v9027
        %9029 = vst [vmem:[%s1293 + $0x78] sm:$0xf] %v9028
        %9030 = vst.msk [vmem:[%s1293 + $0x7c] sm:$0xf] %vm818, %v8823
        %v9031 = vld [vmem:[%s1293 + $0x80] sm:$0x1]
        %v9032 = vsel %vm1302, %v8824, %v9031
        %9033 = vst [vmem:[%s1293 + $0x80] sm:$0x1] %v9032
        %v9034 = vld [vmem:[%s1293 + $0x84] sm:$0xf]
        %v9035 = vsel %vm1296, %v8831, %v9034
        %9036 = vst [vmem:[%s1293 + $0x84] sm:$0xf] %v9035
        %9037 = vst.msk [vmem:[%s1293 + $0x88] sm:$0xf] %vm818, %v8840
        %v9038 = vld [vmem:[%s1293 + $0x8c] sm:$0x1]
        %v9039 = vsel %vm1302, %v8841, %v9038
        %9040 = vst [vmem:[%s1293 + $0x8c] sm:$0x1] %v9039
        %v9041 = vld [vmem:[%s1293 + $0x90] sm:$0xf]
        %v9042 = vsel %vm1296, %v8848, %v9041
        %9043 = vst [vmem:[%s1293 + $0x90] sm:$0xf] %v9042
        %9044 = vst.msk [vmem:[%s1293 + $0x94] sm:$0xf] %vm818, %v8857
        %v9045 = vld [vmem:[%s1293 + $0x98] sm:$0x1]
        %v9046 = vsel %vm1302, %v8858, %v9045
        %9047 = vst [vmem:[%s1293 + $0x98] sm:$0x1] %v9046
        %v9048 = vld [vmem:[%s1293 + $0x9c] sm:$0xf]
        %v9049 = vsel %vm1296, %v8865, %v9048
        %9050 = vst [vmem:[%s1293 + $0x9c] sm:$0xf] %v9049
        %9051 = vst.msk [vmem:[%s1293 + $0xa0] sm:$0xf] %vm818, %v8874
        %v9052 = vld [vmem:[%s1293 + $0xa4] sm:$0x1]
        %v9053 = vsel %vm1302, %v8875, %v9052
        %9054 = vst [vmem:[%s1293 + $0xa4] sm:$0x1] %v9053
        %v9055 = vld [vmem:[%s1293 + $0xa8] sm:$0xf]
        %v9056 = vsel %vm1296, %v8882, %v9055
        %9057 = vst [vmem:[%s1293 + $0xa8] sm:$0xf] %v9056
        %9058 = vst.msk [vmem:[%s1293 + $0xac] sm:$0xf] %vm818, %v8891
        %v9059 = vld [vmem:[%s1293 + $0xb0] sm:$0x1]
        %v9060 = vsel %vm1302, %v8892, %v9059
        %9061 = vst [vmem:[%s1293 + $0xb0] sm:$0x1] %v9060
        %v9062 = vld [vmem:[%s1293 + $0xb4] sm:$0xf]
        %v9063 = vsel %vm1296, %v8899, %v9062
        %9064 = vst [vmem:[%s1293 + $0xb4] sm:$0xf] %v9063
        %9065 = vst.msk [vmem:[%s1293 + $0xb8] sm:$0xf] %vm818, %v8908
        %v9066 = vld [vmem:[%s1293 + $0xbc] sm:$0x1]
        %v9067 = vsel %vm1302, %v8909, %v9066
        %9068 = vst [vmem:[%s1293 + $0xbc] sm:$0x1] %v9067
        %v9069 = vld [vmem:[#allocation2] sm:$0xf]
        %v9070 = vld [vmem:[#allocation2 + $0x4] sm:$0xf]
        %v9071 = vld [vmem:[#allocation2 + $0xc] sm:$0xf]
        %v9072 = vld [vmem:[#allocation2 + $0x10] sm:$0xf]
        %v9073 = vld [vmem:[#allocation2 + $0x18] sm:$0xf]
        %v9074 = vld [vmem:[#allocation2 + $0x1c] sm:$0xf]
        %v9075 = vld [vmem:[#allocation2 + $0x24] sm:$0xf]
        %v9076 = vld [vmem:[#allocation2 + $0x28] sm:$0xf]
        %v9077 = vld [vmem:[#allocation2 + $0x30] sm:$0xf]
        %v9078 = vld [vmem:[#allocation2 + $0x34] sm:$0xf]
        %v9079 = vld [vmem:[#allocation2 + $0x3c] sm:$0xf]
        %v9080 = vld [vmem:[#allocation2 + $0x40] sm:$0xf]
        %v9081 = vld [vmem:[#allocation2 + $0x48] sm:$0xf]
        %v9082 = vld [vmem:[#allocation2 + $0x4c] sm:$0xf]
        %v9083 = vld [vmem:[#allocation2 + $0x54] sm:$0xf]
        %v9084 = vld [vmem:[#allocation2 + $0x58] sm:$0xf]
        %v9085 = vld [vmem:[#allocation2 + $0x60] sm:$0xf]
        %v9086 = vld [vmem:[#allocation2 + $0x64] sm:$0xf]
        %v9087 = vld [vmem:[#allocation2 + $0x6c] sm:$0xf]
        %v9088 = vld [vmem:[#allocation2 + $0x70] sm:$0xf]
        %v9089 = vld [vmem:[#allocation2 + $0x78] sm:$0xf]
        %v9090 = vld [vmem:[#allocation2 + $0x7c] sm:$0xf]
        %v9091 = vld [vmem:[#allocation2 + $0x84] sm:$0xf]
        %v9092 = vld [vmem:[#allocation2 + $0x88] sm:$0xf]
        %v9093 = vld [vmem:[#allocation2 + $0x90] sm:$0xf]
        %v9094 = vld [vmem:[#allocation2 + $0x94] sm:$0xf]
        %v9095 = vld [vmem:[#allocation2 + $0x9c] sm:$0xf]
        %v9096 = vld [vmem:[#allocation2 + $0xa0] sm:$0xf]
        %v9097 = vld [vmem:[#allocation2 + $0xa8] sm:$0xf]
        %v9098 = vld [vmem:[#allocation2 + $0xac] sm:$0xf]
        %v9099 = vld [vmem:[#allocation2 + $0xb4] sm:$0xf]
        %v9100 = vld [vmem:[#allocation2 + $0xb8] sm:$0xf]
        %v9101 = vld [vmem:[#allocation2 + $0x8] sm:$0x1]
        %v9102 = vld [vmem:[#allocation2 + $0x14] sm:$0x1]
        %v9103 = vld [vmem:[#allocation2 + $0x20] sm:$0x1]
        %v9104 = vld [vmem:[#allocation2 + $0x2c] sm:$0x1]
        %v9105 = vld [vmem:[#allocation2 + $0x38] sm:$0x1]
        %v9106 = vld [vmem:[#allocation2 + $0x44] sm:$0x1]
        %v9107 = vld [vmem:[#allocation2 + $0x50] sm:$0x1]
        %v9108 = vld [vmem:[#allocation2 + $0x5c] sm:$0x1]
        %v9109 = vld [vmem:[#allocation2 + $0x68] sm:$0x1]
        %v9110 = vld [vmem:[#allocation2 + $0x74] sm:$0x1]
        %v9111 = vld [vmem:[#allocation2 + $0x80] sm:$0x1]
        %v9112 = vld [vmem:[#allocation2 + $0x8c] sm:$0x1]
        %v9113 = vld [vmem:[#allocation2 + $0x98] sm:$0x1]
        %v9114 = vld [vmem:[#allocation2 + $0xa4] sm:$0x1]
        %v9115 = vld [vmem:[#allocation2 + $0xb0] sm:$0x1]
        %v9116 = vld [vmem:[#allocation2 + $0xbc] sm:$0x1]
        %v9118 = vshrl.u32 %v9069, 16
        %v9120 = vrot.slane %v9118, 4
        %v9121 = vshll.u32 %v9069, 16
        %v9123 = vrot.slane %v9121, 5
        %v9124 = vor.u32 %v9120, %v9123
        %v9125 = vrot.slane %v9124, 4
        %v9127 = vshll.u32 %v9070, 16
        %v9129 = vrot.slane %v9127, 5
        %v9130 = vsel %vm1461, %v9125, %v9129
        %v9131 = vshrl.u32 %v9070, 16
        %v9133 = vrot.slane %v9131, 4
        %v9134 = vor.u32 %v9133, %v9129
        %v9135 = vrot.slane %v9134, 4
        %v9137 = vshll.u32 %v9101, 16
        %v9139 = vrot.slane %v9137, 5
        %v9140 = vsel %vm1461, %v9135, %v9139
        %v9142 = vshrl.u32 %v9071, 16
        %v9144 = vrot.slane %v9142, 4
        %v9145 = vshll.u32 %v9071, 16
        %v9147 = vrot.slane %v9145, 5
        %v9148 = vor.u32 %v9144, %v9147
        %v9149 = vrot.slane %v9148, 4
        %v9151 = vshll.u32 %v9072, 16
        %v9153 = vrot.slane %v9151, 5
        %v9154 = vsel %vm1461, %v9149, %v9153
        %v9155 = vshrl.u32 %v9072, 16
        %v9157 = vrot.slane %v9155, 4
        %v9158 = vor.u32 %v9157, %v9153
        %v9159 = vrot.slane %v9158, 4
        %v9161 = vshll.u32 %v9102, 16
        %v9163 = vrot.slane %v9161, 5
        %v9164 = vsel %vm1461, %v9159, %v9163
        %v9166 = vshrl.u32 %v9073, 16
        %v9168 = vrot.slane %v9166, 4
        %v9169 = vshll.u32 %v9073, 16
        %v9171 = vrot.slane %v9169, 5
        %v9172 = vor.u32 %v9168, %v9171
        %v9173 = vrot.slane %v9172, 4
        %v9175 = vshll.u32 %v9074, 16
        %v9177 = vrot.slane %v9175, 5
        %v9178 = vsel %vm1461, %v9173, %v9177
        %v9179 = vshrl.u32 %v9074, 16
        %v9181 = vrot.slane %v9179, 4
        %v9182 = vor.u32 %v9181, %v9177
        %v9183 = vrot.slane %v9182, 4
        %v9185 = vshll.u32 %v9103, 16
        %v9187 = vrot.slane %v9185, 5
        %v9188 = vsel %vm1461, %v9183, %v9187
        %v9190 = vshrl.u32 %v9075, 16
        %v9192 = vrot.slane %v9190, 4
        %v9193 = vshll.u32 %v9075, 16
        %v9195 = vrot.slane %v9193, 5
        %v9196 = vor.u32 %v9192, %v9195
        %v9197 = vrot.slane %v9196, 4
        %v9199 = vshll.u32 %v9076, 16
        %v9201 = vrot.slane %v9199, 5
        %v9202 = vsel %vm1461, %v9197, %v9201
        %v9203 = vshrl.u32 %v9076, 16
        %v9205 = vrot.slane %v9203, 4
        %v9206 = vor.u32 %v9205, %v9201
        %v9207 = vrot.slane %v9206, 4
        %v9209 = vshll.u32 %v9104, 16
        %v9211 = vrot.slane %v9209, 5
        %v9212 = vsel %vm1461, %v9207, %v9211
        %v9214 = vshrl.u32 %v9077, 16
        %v9216 = vrot.slane %v9214, 4
        %v9217 = vshll.u32 %v9077, 16
        %v9219 = vrot.slane %v9217, 5
        %v9220 = vor.u32 %v9216, %v9219
        %v9221 = vrot.slane %v9220, 4
        %v9223 = vshll.u32 %v9078, 16
        %v9225 = vrot.slane %v9223, 5
        %v9226 = vsel %vm1461, %v9221, %v9225
        %v9227 = vshrl.u32 %v9078, 16
        %v9229 = vrot.slane %v9227, 4
        %v9230 = vor.u32 %v9229, %v9225
        %v9231 = vrot.slane %v9230, 4
        %v9233 = vshll.u32 %v9105, 16
        %v9235 = vrot.slane %v9233, 5
        %v9236 = vsel %vm1461, %v9231, %v9235
        %v9238 = vshrl.u32 %v9079, 16
        %v9240 = vrot.slane %v9238, 4
        %v9241 = vshll.u32 %v9079, 16
        %v9243 = vrot.slane %v9241, 5
        %v9244 = vor.u32 %v9240, %v9243
        %v9245 = vrot.slane %v9244, 4
        %v9247 = vshll.u32 %v9080, 16
        %v9249 = vrot.slane %v9247, 5
        %v9250 = vsel %vm1461, %v9245, %v9249
        %v9251 = vshrl.u32 %v9080, 16
        %v9253 = vrot.slane %v9251, 4
        %v9254 = vor.u32 %v9253, %v9249
        %v9255 = vrot.slane %v9254, 4
        %v9257 = vshll.u32 %v9106, 16
        %v9259 = vrot.slane %v9257, 5
        %v9260 = vsel %vm1461, %v9255, %v9259
        %v9262 = vshrl.u32 %v9081, 16
        %v9264 = vrot.slane %v9262, 4
        %v9265 = vshll.u32 %v9081, 16
        %v9267 = vrot.slane %v9265, 5
        %v9268 = vor.u32 %v9264, %v9267
        %v9269 = vrot.slane %v9268, 4
        %v9271 = vshll.u32 %v9082, 16
        %v9273 = vrot.slane %v9271, 5
        %v9274 = vsel %vm1461, %v9269, %v9273
        %v9275 = vshrl.u32 %v9082, 16
        %v9277 = vrot.slane %v9275, 4
        %v9278 = vor.u32 %v9277, %v9273
        %v9279 = vrot.slane %v9278, 4
        %v9281 = vshll.u32 %v9107, 16
        %v9283 = vrot.slane %v9281, 5
        %v9284 = vsel %vm1461, %v9279, %v9283
        %v9286 = vshrl.u32 %v9083, 16
        %v9288 = vrot.slane %v9286, 4
        %v9289 = vshll.u32 %v9083, 16
        %v9291 = vrot.slane %v9289, 5
        %v9292 = vor.u32 %v9288, %v9291
        %v9293 = vrot.slane %v9292, 4
        %v9295 = vshll.u32 %v9084, 16
        %v9297 = vrot.slane %v9295, 5
        %v9298 = vsel %vm1461, %v9293, %v9297
        %v9299 = vshrl.u32 %v9084, 16
        %v9301 = vrot.slane %v9299, 4
        %v9302 = vor.u32 %v9301, %v9297
        %v9303 = vrot.slane %v9302, 4
        %v9305 = vshll.u32 %v9108, 16
        %v9307 = vrot.slane %v9305, 5
        %v9308 = vsel %vm1461, %v9303, %v9307
        %v9310 = vshrl.u32 %v9085, 16
        %v9312 = vrot.slane %v9310, 4
        %v9313 = vshll.u32 %v9085, 16
        %v9315 = vrot.slane %v9313, 5
        %v9316 = vor.u32 %v9312, %v9315
        %v9317 = vrot.slane %v9316, 4
        %v9319 = vshll.u32 %v9086, 16
        %v9321 = vrot.slane %v9319, 5
        %v9322 = vsel %vm1461, %v9317, %v9321
        %v9323 = vshrl.u32 %v9086, 16
        %v9325 = vrot.slane %v9323, 4
        %v9326 = vor.u32 %v9325, %v9321
        %v9327 = vrot.slane %v9326, 4
        %v9329 = vshll.u32 %v9109, 16
        %v9331 = vrot.slane %v9329, 5
        %v9332 = vsel %vm1461, %v9327, %v9331
        %v9334 = vshrl.u32 %v9087, 16
        %v9336 = vrot.slane %v9334, 4
        %v9337 = vshll.u32 %v9087, 16
        %v9339 = vrot.slane %v9337, 5
        %v9340 = vor.u32 %v9336, %v9339
        %v9341 = vrot.slane %v9340, 4
        %v9343 = vshll.u32 %v9088, 16
        %v9345 = vrot.slane %v9343, 5
        %v9346 = vsel %vm1461, %v9341, %v9345
        %v9347 = vshrl.u32 %v9088, 16
        %v9349 = vrot.slane %v9347, 4
        %v9350 = vor.u32 %v9349, %v9345
        %v9351 = vrot.slane %v9350, 4
        %v9353 = vshll.u32 %v9110, 16
        %v9355 = vrot.slane %v9353, 5
        %v9356 = vsel %vm1461, %v9351, %v9355
        %v9358 = vshrl.u32 %v9089, 16
        %v9360 = vrot.slane %v9358, 4
        %v9361 = vshll.u32 %v9089, 16
        %v9363 = vrot.slane %v9361, 5
        %v9364 = vor.u32 %v9360, %v9363
        %v9365 = vrot.slane %v9364, 4
        %v9367 = vshll.u32 %v9090, 16
        %v9369 = vrot.slane %v9367, 5
        %v9370 = vsel %vm1461, %v9365, %v9369
        %v9371 = vshrl.u32 %v9090, 16
        %v9373 = vrot.slane %v9371, 4
        %v9374 = vor.u32 %v9373, %v9369
        %v9375 = vrot.slane %v9374, 4
        %v9377 = vshll.u32 %v9111, 16
        %v9379 = vrot.slane %v9377, 5
        %v9380 = vsel %vm1461, %v9375, %v9379
        %v9382 = vshrl.u32 %v9091, 16
        %v9384 = vrot.slane %v9382, 4
        %v9385 = vshll.u32 %v9091, 16
        %v9387 = vrot.slane %v9385, 5
        %v9388 = vor.u32 %v9384, %v9387
        %v9389 = vrot.slane %v9388, 4
        %v9391 = vshll.u32 %v9092, 16
        %v9393 = vrot.slane %v9391, 5
        %v9394 = vsel %vm1461, %v9389, %v9393
        %v9395 = vshrl.u32 %v9092, 16
        %v9397 = vrot.slane %v9395, 4
        %v9398 = vor.u32 %v9397, %v9393
        %v9399 = vrot.slane %v9398, 4
        %v9401 = vshll.u32 %v9112, 16
        %v9403 = vrot.slane %v9401, 5
        %v9404 = vsel %vm1461, %v9399, %v9403
        %v9406 = vshrl.u32 %v9093, 16
        %v9408 = vrot.slane %v9406, 4
        %v9409 = vshll.u32 %v9093, 16
        %v9411 = vrot.slane %v9409, 5
        %v9412 = vor.u32 %v9408, %v9411
        %v9413 = vrot.slane %v9412, 4
        %v9415 = vshll.u32 %v9094, 16
        %v9417 = vrot.slane %v9415, 5
        %v9418 = vsel %vm1461, %v9413, %v9417
        %v9419 = vshrl.u32 %v9094, 16
        %v9421 = vrot.slane %v9419, 4
        %v9422 = vor.u32 %v9421, %v9417
        %v9423 = vrot.slane %v9422, 4
        %v9425 = vshll.u32 %v9113, 16
        %v9427 = vrot.slane %v9425, 5
        %v9428 = vsel %vm1461, %v9423, %v9427
        %v9430 = vshrl.u32 %v9095, 16
        %v9432 = vrot.slane %v9430, 4
        %v9433 = vshll.u32 %v9095, 16
        %v9435 = vrot.slane %v9433, 5
        %v9436 = vor.u32 %v9432, %v9435
        %v9437 = vrot.slane %v9436, 4
        %v9439 = vshll.u32 %v9096, 16
        %v9441 = vrot.slane %v9439, 5
        %v9442 = vsel %vm1461, %v9437, %v9441
        %v9443 = vshrl.u32 %v9096, 16
        %v9445 = vrot.slane %v9443, 4
        %v9446 = vor.u32 %v9445, %v9441
        %v9447 = vrot.slane %v9446, 4
        %v9449 = vshll.u32 %v9114, 16
        %v9451 = vrot.slane %v9449, 5
        %v9452 = vsel %vm1461, %v9447, %v9451
        %v9454 = vshrl.u32 %v9097, 16
        %v9456 = vrot.slane %v9454, 4
        %v9457 = vshll.u32 %v9097, 16
        %v9459 = vrot.slane %v9457, 5
        %v9460 = vor.u32 %v9456, %v9459
        %v9461 = vrot.slane %v9460, 4
        %v9463 = vshll.u32 %v9098, 16
        %v9465 = vrot.slane %v9463, 5
        %v9466 = vsel %vm1461, %v9461, %v9465
        %v9467 = vshrl.u32 %v9098, 16
        %v9469 = vrot.slane %v9467, 4
        %v9470 = vor.u32 %v9469, %v9465
        %v9471 = vrot.slane %v9470, 4
        %v9473 = vshll.u32 %v9115, 16
        %v9475 = vrot.slane %v9473, 5
        %v9476 = vsel %vm1461, %v9471, %v9475
        %v9478 = vshrl.u32 %v9099, 16
        %v9480 = vrot.slane %v9478, 4
        %v9481 = vshll.u32 %v9099, 16
        %v9483 = vrot.slane %v9481, 5
        %v9484 = vor.u32 %v9480, %v9483
        %v9485 = vrot.slane %v9484, 4
        %v9487 = vshll.u32 %v9100, 16
        %v9489 = vrot.slane %v9487, 5
        %v9490 = vsel %vm1461, %v9485, %v9489
        %v9491 = vshrl.u32 %v9100, 16
        %v9493 = vrot.slane %v9491, 4
        %v9494 = vor.u32 %v9493, %v9489
        %v9495 = vrot.slane %v9494, 4
        %v9497 = vshll.u32 %v9116, 16
        %v9499 = vrot.slane %v9497, 5
        %v9500 = vsel %vm1461, %v9495, %v9499
        %v9501 = vld [vmem:[#allocation2] sm:$0xe]
        %v9502 = vld [vmem:[#allocation2 + $0xc] sm:$0xe]
        %v9503 = vld [vmem:[#allocation2 + $0x18] sm:$0xe]
        %v9504 = vld [vmem:[#allocation2 + $0x24] sm:$0xe]
        %v9505 = vld [vmem:[#allocation2 + $0x30] sm:$0xe]
        %v9506 = vld [vmem:[#allocation2 + $0x3c] sm:$0xe]
        %v9507 = vld [vmem:[#allocation2 + $0x48] sm:$0xe]
        %v9508 = vld [vmem:[#allocation2 + $0x54] sm:$0xe]
        %v9509 = vld [vmem:[#allocation2 + $0x60] sm:$0xe]
        %v9510 = vld [vmem:[#allocation2 + $0x6c] sm:$0xe]
        %v9511 = vld [vmem:[#allocation2 + $0x78] sm:$0xe]
        %v9512 = vld [vmem:[#allocation2 + $0x84] sm:$0xe]
        %v9513 = vld [vmem:[#allocation2 + $0x90] sm:$0xe]
        %v9514 = vld [vmem:[#allocation2 + $0x9c] sm:$0xe]
        %v9515 = vld [vmem:[#allocation2 + $0xa8] sm:$0xe]
        %v9516 = vld [vmem:[#allocation2 + $0xb4] sm:$0xe]
        %v9565 = vrot.slane %v9501, 5
        %v9566 = vrot.slane %v9565, 4
        %v9567 = vrot.slane %v9070, 5
        %v9568 = vsel %vm1912, %v9566, %v9567
        %v9569 = vrot.slane %v9567, 4
        %v9570 = vrot.slane %v9101, 5
        %v9571 = vsel %vm1912, %v9569, %v9570
        %v9572 = vrot.slane %v9502, 5
        %v9573 = vrot.slane %v9572, 4
        %v9574 = vrot.slane %v9072, 5
        %v9575 = vsel %vm1912, %v9573, %v9574
        %v9576 = vrot.slane %v9574, 4
        %v9577 = vrot.slane %v9102, 5
        %v9578 = vsel %vm1912, %v9576, %v9577
        %v9579 = vrot.slane %v9503, 5
        %v9580 = vrot.slane %v9579, 4
        %v9581 = vrot.slane %v9074, 5
        %v9582 = vsel %vm1912, %v9580, %v9581
        %v9583 = vrot.slane %v9581, 4
        %v9584 = vrot.slane %v9103, 5
        %v9585 = vsel %vm1912, %v9583, %v9584
        %v9586 = vrot.slane %v9504, 5
        %v9587 = vrot.slane %v9586, 4
        %v9588 = vrot.slane %v9076, 5
        %v9589 = vsel %vm1912, %v9587, %v9588
        %v9590 = vrot.slane %v9588, 4
        %v9591 = vrot.slane %v9104, 5
        %v9592 = vsel %vm1912, %v9590, %v9591
        %v9593 = vrot.slane %v9505, 5
        %v9594 = vrot.slane %v9593, 4
        %v9595 = vrot.slane %v9078, 5
        %v9596 = vsel %vm1912, %v9594, %v9595
        %v9597 = vrot.slane %v9595, 4
        %v9598 = vrot.slane %v9105, 5
        %v9599 = vsel %vm1912, %v9597, %v9598
        %v9600 = vrot.slane %v9506, 5
        %v9601 = vrot.slane %v9600, 4
        %v9602 = vrot.slane %v9080, 5
        %v9603 = vsel %vm1912, %v9601, %v9602
        %v9604 = vrot.slane %v9602, 4
        %v9605 = vrot.slane %v9106, 5
        %v9606 = vsel %vm1912, %v9604, %v9605
        %v9607 = vrot.slane %v9507, 5
        %v9608 = vrot.slane %v9607, 4
        %v9609 = vrot.slane %v9082, 5
        %v9610 = vsel %vm1912, %v9608, %v9609
        %v9611 = vrot.slane %v9609, 4
        %v9612 = vrot.slane %v9107, 5
        %v9613 = vsel %vm1912, %v9611, %v9612
        %v9614 = vrot.slane %v9508, 5
        %v9615 = vrot.slane %v9614, 4
        %v9616 = vrot.slane %v9084, 5
        %v9617 = vsel %vm1912, %v9615, %v9616
        %v9618 = vrot.slane %v9616, 4
        %v9619 = vrot.slane %v9108, 5
        %v9620 = vsel %vm1912, %v9618, %v9619
        %v9621 = vrot.slane %v9509, 5
        %v9622 = vrot.slane %v9621, 4
        %v9623 = vrot.slane %v9086, 5
        %v9624 = vsel %vm1912, %v9622, %v9623
        %v9625 = vrot.slane %v9623, 4
        %v9626 = vrot.slane %v9109, 5
        %v9627 = vsel %vm1912, %v9625, %v9626
        %v9628 = vrot.slane %v9510, 5
        %v9629 = vrot.slane %v9628, 4
        %v9630 = vrot.slane %v9088, 5
        %v9631 = vsel %vm1912, %v9629, %v9630
        %v9632 = vrot.slane %v9630, 4
        %v9633 = vrot.slane %v9110, 5
        %v9634 = vsel %vm1912, %v9632, %v9633
        %v9635 = vrot.slane %v9511, 5
        %v9636 = vrot.slane %v9635, 4
        %v9637 = vrot.slane %v9090, 5
        %v9638 = vsel %vm1912, %v9636, %v9637
        %v9639 = vrot.slane %v9637, 4
        %v9640 = vrot.slane %v9111, 5
        %v9641 = vsel %vm1912, %v9639, %v9640
        %v9642 = vrot.slane %v9512, 5
        %v9643 = vrot.slane %v9642, 4
        %v9644 = vrot.slane %v9092, 5
        %v9645 = vsel %vm1912, %v9643, %v9644
        %v9646 = vrot.slane %v9644, 4
        %v9647 = vrot.slane %v9112, 5
        %v9648 = vsel %vm1912, %v9646, %v9647
        %v9649 = vrot.slane %v9513, 5
        %v9650 = vrot.slane %v9649, 4
        %v9651 = vrot.slane %v9094, 5
        %v9652 = vsel %vm1912, %v9650, %v9651
        %v9653 = vrot.slane %v9651, 4
        %v9654 = vrot.slane %v9113, 5
        %v9655 = vsel %vm1912, %v9653, %v9654
        %v9656 = vrot.slane %v9514, 5
        %v9657 = vrot.slane %v9656, 4
        %v9658 = vrot.slane %v9096, 5
        %v9659 = vsel %vm1912, %v9657, %v9658
        %v9660 = vrot.slane %v9658, 4
        %v9661 = vrot.slane %v9114, 5
        %v9662 = vsel %vm1912, %v9660, %v9661
        %v9663 = vrot.slane %v9515, 5
        %v9664 = vrot.slane %v9663, 4
        %v9665 = vrot.slane %v9098, 5
        %v9666 = vsel %vm1912, %v9664, %v9665
        %v9667 = vrot.slane %v9665, 4
        %v9668 = vrot.slane %v9115, 5
        %v9669 = vsel %vm1912, %v9667, %v9668
        %v9670 = vrot.slane %v9516, 5
        %v9671 = vrot.slane %v9670, 4
        %v9672 = vrot.slane %v9100, 5
        %v9673 = vsel %vm1912, %v9671, %v9672
        %v9674 = vrot.slane %v9672, 4
        %v9675 = vrot.slane %v9116, 5
        %v9676 = vsel %vm1912, %v9674, %v9675
        %v9677 = vld [vmem:[%s1293] sm:$0xf]
        %v9678 = vld [vmem:[%s1293 + $0x4] sm:$0xf]
        %v9679 = vld [vmem:[%s1293 + $0xc] sm:$0xf]
        %v9680 = vld [vmem:[%s1293 + $0x10] sm:$0xf]
        %v9681 = vld [vmem:[%s1293 + $0x18] sm:$0xf]
        %v9682 = vld [vmem:[%s1293 + $0x1c] sm:$0xf]
        %v9683 = vld [vmem:[%s1293 + $0x24] sm:$0xf]
        %v9684 = vld [vmem:[%s1293 + $0x28] sm:$0xf]
        %v9685 = vld [vmem:[%s1293 + $0x30] sm:$0xf]
        %v9686 = vld [vmem:[%s1293 + $0x34] sm:$0xf]
        %v9687 = vld [vmem:[%s1293 + $0x3c] sm:$0xf]
        %v9688 = vld [vmem:[%s1293 + $0x40] sm:$0xf]
        %v9689 = vld [vmem:[%s1293 + $0x48] sm:$0xf]
        %v9690 = vld [vmem:[%s1293 + $0x4c] sm:$0xf]
        %v9691 = vld [vmem:[%s1293 + $0x54] sm:$0xf]
        %v9692 = vld [vmem:[%s1293 + $0x58] sm:$0xf]
        %v9693 = vld [vmem:[%s1293 + $0x60] sm:$0xf]
        %v9694 = vld [vmem:[%s1293 + $0x64] sm:$0xf]
        %v9695 = vld [vmem:[%s1293 + $0x6c] sm:$0xf]
        %v9696 = vld [vmem:[%s1293 + $0x70] sm:$0xf]
        %v9697 = vld [vmem:[%s1293 + $0x78] sm:$0xf]
        %v9698 = vld [vmem:[%s1293 + $0x7c] sm:$0xf]
        %v9699 = vld [vmem:[%s1293 + $0x84] sm:$0xf]
        %v9700 = vld [vmem:[%s1293 + $0x88] sm:$0xf]
        %v9701 = vld [vmem:[%s1293 + $0x90] sm:$0xf]
        %v9702 = vld [vmem:[%s1293 + $0x94] sm:$0xf]
        %v9703 = vld [vmem:[%s1293 + $0x9c] sm:$0xf]
        %v9704 = vld [vmem:[%s1293 + $0xa0] sm:$0xf]
        %v9705 = vld [vmem:[%s1293 + $0xa8] sm:$0xf]
        %v9706 = vld [vmem:[%s1293 + $0xac] sm:$0xf]
        %v9707 = vld [vmem:[%s1293 + $0xb4] sm:$0xf]
        %v9708 = vld [vmem:[%s1293 + $0xb8] sm:$0xf]
        %v9709 = vld [vmem:[%s1293 + $0x8] sm:$0x1]
        %v9710 = vld [vmem:[%s1293 + $0x14] sm:$0x1]
        %v9711 = vld [vmem:[%s1293 + $0x20] sm:$0x1]
        %v9712 = vld [vmem:[%s1293 + $0x2c] sm:$0x1]
        %v9713 = vld [vmem:[%s1293 + $0x38] sm:$0x1]
        %v9714 = vld [vmem:[%s1293 + $0x44] sm:$0x1]
        %v9715 = vld [vmem:[%s1293 + $0x50] sm:$0x1]
        %v9716 = vld [vmem:[%s1293 + $0x5c] sm:$0x1]
        %v9717 = vld [vmem:[%s1293 + $0x68] sm:$0x1]
        %v9718 = vld [vmem:[%s1293 + $0x74] sm:$0x1]
        %v9719 = vld [vmem:[%s1293 + $0x80] sm:$0x1]
        %v9720 = vld [vmem:[%s1293 + $0x8c] sm:$0x1]
        %v9721 = vld [vmem:[%s1293 + $0x98] sm:$0x1]
        %v9722 = vld [vmem:[%s1293 + $0xa4] sm:$0x1]
        %v9723 = vld [vmem:[%s1293 + $0xb0] sm:$0x1]
        %v9724 = vld [vmem:[%s1293 + $0xbc] sm:$0x1]
        %v9726 = vshrl.u32 %v9677, 16
        %v9728 = vrot.slane %v9726, 4
        %v9729 = vshll.u32 %v9677, 16
        %v9731 = vrot.slane %v9729, 5
        %v9732 = vor.u32 %v9728, %v9731
        %v9733 = vrot.slane %v9732, 4
        %v9735 = vshll.u32 %v9678, 16
        %v9737 = vrot.slane %v9735, 5
        %v9738 = vsel %vm1461, %v9733, %v9737
        %v9739 = vshrl.u32 %v9678, 16
        %v9741 = vrot.slane %v9739, 4
        %v9742 = vor.u32 %v9741, %v9737
        %v9743 = vrot.slane %v9742, 4
        %v9745 = vshll.u32 %v9709, 16
        %v9747 = vrot.slane %v9745, 5
        %v9748 = vsel %vm1461, %v9743, %v9747
        %v9750 = vshrl.u32 %v9679, 16
        %v9752 = vrot.slane %v9750, 4
        %v9753 = vshll.u32 %v9679, 16
        %v9755 = vrot.slane %v9753, 5
        %v9756 = vor.u32 %v9752, %v9755
        %v9757 = vrot.slane %v9756, 4
        %v9759 = vshll.u32 %v9680, 16
        %v9761 = vrot.slane %v9759, 5
        %v9762 = vsel %vm1461, %v9757, %v9761
        %v9763 = vshrl.u32 %v9680, 16
        %v9765 = vrot.slane %v9763, 4
        %v9766 = vor.u32 %v9765, %v9761
        %v9767 = vrot.slane %v9766, 4
        %v9769 = vshll.u32 %v9710, 16
        %v9771 = vrot.slane %v9769, 5
        %v9772 = vsel %vm1461, %v9767, %v9771
        %v9774 = vshrl.u32 %v9681, 16
        %v9776 = vrot.slane %v9774, 4
        %v9777 = vshll.u32 %v9681, 16
        %v9779 = vrot.slane %v9777, 5
        %v9780 = vor.u32 %v9776, %v9779
        %v9781 = vrot.slane %v9780, 4
        %v9783 = vshll.u32 %v9682, 16
        %v9785 = vrot.slane %v9783, 5
        %v9786 = vsel %vm1461, %v9781, %v9785
        %v9787 = vshrl.u32 %v9682, 16
        %v9789 = vrot.slane %v9787, 4
        %v9790 = vor.u32 %v9789, %v9785
        %v9791 = vrot.slane %v9790, 4
        %v9793 = vshll.u32 %v9711, 16
        %v9795 = vrot.slane %v9793, 5
        %v9796 = vsel %vm1461, %v9791, %v9795
        %v9798 = vshrl.u32 %v9683, 16
        %v9800 = vrot.slane %v9798, 4
        %v9801 = vshll.u32 %v9683, 16
        %v9803 = vrot.slane %v9801, 5
        %v9804 = vor.u32 %v9800, %v9803
        %v9805 = vrot.slane %v9804, 4
        %v9807 = vshll.u32 %v9684, 16
        %v9809 = vrot.slane %v9807, 5
        %v9810 = vsel %vm1461, %v9805, %v9809
        %v9811 = vshrl.u32 %v9684, 16
        %v9813 = vrot.slane %v9811, 4
        %v9814 = vor.u32 %v9813, %v9809
        %v9815 = vrot.slane %v9814, 4
        %v9817 = vshll.u32 %v9712, 16
        %v9819 = vrot.slane %v9817, 5
        %v9820 = vsel %vm1461, %v9815, %v9819
        %v9822 = vshrl.u32 %v9685, 16
        %v9824 = vrot.slane %v9822, 4
        %v9825 = vshll.u32 %v9685, 16
        %v9827 = vrot.slane %v9825, 5
        %v9828 = vor.u32 %v9824, %v9827
        %v9829 = vrot.slane %v9828, 4
        %v9831 = vshll.u32 %v9686, 16
        %v9833 = vrot.slane %v9831, 5
        %v9834 = vsel %vm1461, %v9829, %v9833
        %v9835 = vshrl.u32 %v9686, 16
        %v9837 = vrot.slane %v9835, 4
        %v9838 = vor.u32 %v9837, %v9833
        %v9839 = vrot.slane %v9838, 4
        %v9841 = vshll.u32 %v9713, 16
        %v9843 = vrot.slane %v9841, 5
        %v9844 = vsel %vm1461, %v9839, %v9843
        %v9846 = vshrl.u32 %v9687, 16
        %v9848 = vrot.slane %v9846, 4
        %v9849 = vshll.u32 %v9687, 16
        %v9851 = vrot.slane %v9849, 5
        %v9852 = vor.u32 %v9848, %v9851
        %v9853 = vrot.slane %v9852, 4
        %v9855 = vshll.u32 %v9688, 16
        %v9857 = vrot.slane %v9855, 5
        %v9858 = vsel %vm1461, %v9853, %v9857
        %v9859 = vshrl.u32 %v9688, 16
        %v9861 = vrot.slane %v9859, 4
        %v9862 = vor.u32 %v9861, %v9857
        %v9863 = vrot.slane %v9862, 4
        %v9865 = vshll.u32 %v9714, 16
        %v9867 = vrot.slane %v9865, 5
        %v9868 = vsel %vm1461, %v9863, %v9867
        %v9870 = vshrl.u32 %v9689, 16
        %v9872 = vrot.slane %v9870, 4
        %v9873 = vshll.u32 %v9689, 16
        %v9875 = vrot.slane %v9873, 5
        %v9876 = vor.u32 %v9872, %v9875
        %v9877 = vrot.slane %v9876, 4
        %v9879 = vshll.u32 %v9690, 16
        %v9881 = vrot.slane %v9879, 5
        %v9882 = vsel %vm1461, %v9877, %v9881
        %v9883 = vshrl.u32 %v9690, 16
        %v9885 = vrot.slane %v9883, 4
        %v9886 = vor.u32 %v9885, %v9881
        %v9887 = vrot.slane %v9886, 4
        %v9889 = vshll.u32 %v9715, 16
        %v9891 = vrot.slane %v9889, 5
        %v9892 = vsel %vm1461, %v9887, %v9891
        %v9894 = vshrl.u32 %v9691, 16
        %v9896 = vrot.slane %v9894, 4
        %v9897 = vshll.u32 %v9691, 16
        %v9899 = vrot.slane %v9897, 5
        %v9900 = vor.u32 %v9896, %v9899
        %v9901 = vrot.slane %v9900, 4
        %v9903 = vshll.u32 %v9692, 16
        %v9905 = vrot.slane %v9903, 5
        %v9906 = vsel %vm1461, %v9901, %v9905
        %v9907 = vshrl.u32 %v9692, 16
        %v9909 = vrot.slane %v9907, 4
        %v9910 = vor.u32 %v9909, %v9905
        %v9911 = vrot.slane %v9910, 4
        %v9913 = vshll.u32 %v9716, 16
        %v9915 = vrot.slane %v9913, 5
        %v9916 = vsel %vm1461, %v9911, %v9915
        %v9918 = vshrl.u32 %v9693, 16
        %v9920 = vrot.slane %v9918, 4
        %v9921 = vshll.u32 %v9693, 16
        %v9923 = vrot.slane %v9921, 5
        %v9924 = vor.u32 %v9920, %v9923
        %v9925 = vrot.slane %v9924, 4
        %v9927 = vshll.u32 %v9694, 16
        %v9929 = vrot.slane %v9927, 5
        %v9930 = vsel %vm1461, %v9925, %v9929
        %v9931 = vshrl.u32 %v9694, 16
        %v9933 = vrot.slane %v9931, 4
        %v9934 = vor.u32 %v9933, %v9929
        %v9935 = vrot.slane %v9934, 4
        %v9937 = vshll.u32 %v9717, 16
        %v9939 = vrot.slane %v9937, 5
        %v9940 = vsel %vm1461, %v9935, %v9939
        %v9942 = vshrl.u32 %v9695, 16
        %v9944 = vrot.slane %v9942, 4
        %v9945 = vshll.u32 %v9695, 16
        %v9947 = vrot.slane %v9945, 5
        %v9948 = vor.u32 %v9944, %v9947
        %v9949 = vrot.slane %v9948, 4
        %v9951 = vshll.u32 %v9696, 16
        %v9953 = vrot.slane %v9951, 5
        %v9954 = vsel %vm1461, %v9949, %v9953
        %v9955 = vshrl.u32 %v9696, 16
        %v9957 = vrot.slane %v9955, 4
        %v9958 = vor.u32 %v9957, %v9953
        %v9959 = vrot.slane %v9958, 4
        %v9961 = vshll.u32 %v9718, 16
        %v9963 = vrot.slane %v9961, 5
        %v9964 = vsel %vm1461, %v9959, %v9963
        %v9966 = vshrl.u32 %v9697, 16
        %v9968 = vrot.slane %v9966, 4
        %v9969 = vshll.u32 %v9697, 16
        %v9971 = vrot.slane %v9969, 5
        %v9972 = vor.u32 %v9968, %v9971
        %v9973 = vrot.slane %v9972, 4
        %v9975 = vshll.u32 %v9698, 16
        %v9977 = vrot.slane %v9975, 5
        %v9978 = vsel %vm1461, %v9973, %v9977
        %v9979 = vshrl.u32 %v9698, 16
        %v9981 = vrot.slane %v9979, 4
        %v9982 = vor.u32 %v9981, %v9977
        %v9983 = vrot.slane %v9982, 4
        %v9985 = vshll.u32 %v9719, 16
        %v9987 = vrot.slane %v9985, 5
        %v9988 = vsel %vm1461, %v9983, %v9987
        %v9990 = vshrl.u32 %v9699, 16
        %v9992 = vrot.slane %v9990, 4
        %v9993 = vshll.u32 %v9699, 16
        %v9995 = vrot.slane %v9993, 5
        %v9996 = vor.u32 %v9992, %v9995
        %v9997 = vrot.slane %v9996, 4
        %v9999 = vshll.u32 %v9700, 16
        %v10001 = vrot.slane %v9999, 5
        %v10002 = vsel %vm1461, %v9997, %v10001
        %v10003 = vshrl.u32 %v9700, 16
        %v10005 = vrot.slane %v10003, 4
        %v10006 = vor.u32 %v10005, %v10001
        %v10007 = vrot.slane %v10006, 4
        %v10009 = vshll.u32 %v9720, 16
        %v10011 = vrot.slane %v10009, 5
        %v10012 = vsel %vm1461, %v10007, %v10011
        %v10014 = vshrl.u32 %v9701, 16
        %v10016 = vrot.slane %v10014, 4
        %v10017 = vshll.u32 %v9701, 16
        %v10019 = vrot.slane %v10017, 5
        %v10020 = vor.u32 %v10016, %v10019
        %v10021 = vrot.slane %v10020, 4
        %v10023 = vshll.u32 %v9702, 16
        %v10025 = vrot.slane %v10023, 5
        %v10026 = vsel %vm1461, %v10021, %v10025
        %v10027 = vshrl.u32 %v9702, 16
        %v10029 = vrot.slane %v10027, 4
        %v10030 = vor.u32 %v10029, %v10025
        %v10031 = vrot.slane %v10030, 4
        %v10033 = vshll.u32 %v9721, 16
        %v10035 = vrot.slane %v10033, 5
        %v10036 = vsel %vm1461, %v10031, %v10035
        %v10038 = vshrl.u32 %v9703, 16
        %v10040 = vrot.slane %v10038, 4
        %v10041 = vshll.u32 %v9703, 16
        %v10043 = vrot.slane %v10041, 5
        %v10044 = vor.u32 %v10040, %v10043
        %v10045 = vrot.slane %v10044, 4
        %v10047 = vshll.u32 %v9704, 16
        %v10049 = vrot.slane %v10047, 5
        %v10050 = vsel %vm1461, %v10045, %v10049
        %v10051 = vshrl.u32 %v9704, 16
        %v10053 = vrot.slane %v10051, 4
        %v10054 = vor.u32 %v10053, %v10049
        %v10055 = vrot.slane %v10054, 4
        %v10057 = vshll.u32 %v9722, 16
        %v10059 = vrot.slane %v10057, 5
        %v10060 = vsel %vm1461, %v10055, %v10059
        %v10062 = vshrl.u32 %v9705, 16
        %v10064 = vrot.slane %v10062, 4
        %v10065 = vshll.u32 %v9705, 16
        %v10067 = vrot.slane %v10065, 5
        %v10068 = vor.u32 %v10064, %v10067
        %v10069 = vrot.slane %v10068, 4
        %v10071 = vshll.u32 %v9706, 16
        %v10073 = vrot.slane %v10071, 5
        %v10074 = vsel %vm1461, %v10069, %v10073
        %v10075 = vshrl.u32 %v9706, 16
        %v10077 = vrot.slane %v10075, 4
        %v10078 = vor.u32 %v10077, %v10073
        %v10079 = vrot.slane %v10078, 4
        %v10081 = vshll.u32 %v9723, 16
        %v10083 = vrot.slane %v10081, 5
        %v10084 = vsel %vm1461, %v10079, %v10083
        %v10086 = vshrl.u32 %v9707, 16
        %v10088 = vrot.slane %v10086, 4
        %v10089 = vshll.u32 %v9707, 16
        %v10091 = vrot.slane %v10089, 5
        %v10092 = vor.u32 %v10088, %v10091
        %v10093 = vrot.slane %v10092, 4
        %v10095 = vshll.u32 %v9708, 16
        %v10097 = vrot.slane %v10095, 5
        %v10098 = vsel %vm1461, %v10093, %v10097
        %v10099 = vshrl.u32 %v9708, 16
        %v10101 = vrot.slane %v10099, 4
        %v10102 = vor.u32 %v10101, %v10097
        %v10103 = vrot.slane %v10102, 4
        %v10105 = vshll.u32 %v9724, 16
        %v10107 = vrot.slane %v10105, 5
        %v10108 = vsel %vm1461, %v10103, %v10107
        %v10109 = vld [vmem:[%s1293] sm:$0xe]
        %v10110 = vld [vmem:[%s1293 + $0xc] sm:$0xe]
        %v10111 = vld [vmem:[%s1293 + $0x18] sm:$0xe]
        %v10112 = vld [vmem:[%s1293 + $0x24] sm:$0xe]
        %v10113 = vld [vmem:[%s1293 + $0x30] sm:$0xe]
        %v10114 = vld [vmem:[%s1293 + $0x3c] sm:$0xe]
        %v10115 = vld [vmem:[%s1293 + $0x48] sm:$0xe]
        %v10116 = vld [vmem:[%s1293 + $0x54] sm:$0xe]
        %v10117 = vld [vmem:[%s1293 + $0x60] sm:$0xe]
        %v10118 = vld [vmem:[%s1293 + $0x6c] sm:$0xe]
        %v10119 = vld [vmem:[%s1293 + $0x78] sm:$0xe]
        %v10120 = vld [vmem:[%s1293 + $0x84] sm:$0xe]
        %v10121 = vld [vmem:[%s1293 + $0x90] sm:$0xe]
        %v10122 = vld [vmem:[%s1293 + $0x9c] sm:$0xe]
        %v10123 = vld [vmem:[%s1293 + $0xa8] sm:$0xe]
        %v10124 = vld [vmem:[%s1293 + $0xb4] sm:$0xe]
        %v10173 = vrot.slane %v10109, 5
        %v10174 = vrot.slane %v10173, 4
        %v10175 = vrot.slane %v9678, 5
        %v10176 = vsel %vm1912, %v10174, %v10175
        %v10177 = vrot.slane %v10175, 4
        %v10178 = vrot.slane %v9709, 5
        %v10179 = vsel %vm1912, %v10177, %v10178
        %v10180 = vrot.slane %v10110, 5
        %v10181 = vrot.slane %v10180, 4
        %v10182 = vrot.slane %v9680, 5
        %v10183 = vsel %vm1912, %v10181, %v10182
        %v10184 = vrot.slane %v10182, 4
        %v10185 = vrot.slane %v9710, 5
        %v10186 = vsel %vm1912, %v10184, %v10185
        %v10187 = vrot.slane %v10111, 5
        %v10188 = vrot.slane %v10187, 4
        %v10189 = vrot.slane %v9682, 5
        %v10190 = vsel %vm1912, %v10188, %v10189
        %v10191 = vrot.slane %v10189, 4
        %v10192 = vrot.slane %v9711, 5
        %v10193 = vsel %vm1912, %v10191, %v10192
        %v10194 = vrot.slane %v10112, 5
        %v10195 = vrot.slane %v10194, 4
        %v10196 = vrot.slane %v9684, 5
        %v10197 = vsel %vm1912, %v10195, %v10196
        %v10198 = vrot.slane %v10196, 4
        %v10199 = vrot.slane %v9712, 5
        %v10200 = vsel %vm1912, %v10198, %v10199
        %v10201 = vrot.slane %v10113, 5
        %v10202 = vrot.slane %v10201, 4
        %v10203 = vrot.slane %v9686, 5
        %v10204 = vsel %vm1912, %v10202, %v10203
        %v10205 = vrot.slane %v10203, 4
        %v10206 = vrot.slane %v9713, 5
        %v10207 = vsel %vm1912, %v10205, %v10206
        %v10208 = vrot.slane %v10114, 5
        %v10209 = vrot.slane %v10208, 4
        %v10210 = vrot.slane %v9688, 5
        %v10211 = vsel %vm1912, %v10209, %v10210
        %v10212 = vrot.slane %v10210, 4
        %v10213 = vrot.slane %v9714, 5
        %v10214 = vsel %vm1912, %v10212, %v10213
        %v10215 = vrot.slane %v10115, 5
        %v10216 = vrot.slane %v10215, 4
        %v10217 = vrot.slane %v9690, 5
        %v10218 = vsel %vm1912, %v10216, %v10217
        %v10219 = vrot.slane %v10217, 4
        %v10220 = vrot.slane %v9715, 5
        %v10221 = vsel %vm1912, %v10219, %v10220
        %v10222 = vrot.slane %v10116, 5
        %v10223 = vrot.slane %v10222, 4
        %v10224 = vrot.slane %v9692, 5
        %v10225 = vsel %vm1912, %v10223, %v10224
        %v10226 = vrot.slane %v10224, 4
        %v10227 = vrot.slane %v9716, 5
        %v10228 = vsel %vm1912, %v10226, %v10227
        %v10229 = vrot.slane %v10117, 5
        %v10230 = vrot.slane %v10229, 4
        %v10231 = vrot.slane %v9694, 5
        %v10232 = vsel %vm1912, %v10230, %v10231
        %v10233 = vrot.slane %v10231, 4
        %v10234 = vrot.slane %v9717, 5
        %v10235 = vsel %vm1912, %v10233, %v10234
        %v10236 = vrot.slane %v10118, 5
        %v10237 = vrot.slane %v10236, 4
        %v10238 = vrot.slane %v9696, 5
        %v10239 = vsel %vm1912, %v10237, %v10238
        %v10240 = vrot.slane %v10238, 4
        %v10241 = vrot.slane %v9718, 5
        %v10242 = vsel %vm1912, %v10240, %v10241
        %v10243 = vrot.slane %v10119, 5
        %v10244 = vrot.slane %v10243, 4
        %v10245 = vrot.slane %v9698, 5
        %v10246 = vsel %vm1912, %v10244, %v10245
        %v10247 = vrot.slane %v10245, 4
        %v10248 = vrot.slane %v9719, 5
        %v10249 = vsel %vm1912, %v10247, %v10248
        %v10250 = vrot.slane %v10120, 5
        %v10251 = vrot.slane %v10250, 4
        %v10252 = vrot.slane %v9700, 5
        %v10253 = vsel %vm1912, %v10251, %v10252
        %v10254 = vrot.slane %v10252, 4
        %v10255 = vrot.slane %v9720, 5
        %v10256 = vsel %vm1912, %v10254, %v10255
        %v10257 = vrot.slane %v10121, 5
        %v10258 = vrot.slane %v10257, 4
        %v10259 = vrot.slane %v9702, 5
        %v10260 = vsel %vm1912, %v10258, %v10259
        %v10261 = vrot.slane %v10259, 4
        %v10262 = vrot.slane %v9721, 5
        %v10263 = vsel %vm1912, %v10261, %v10262
        %v10264 = vrot.slane %v10122, 5
        %v10265 = vrot.slane %v10264, 4
        %v10266 = vrot.slane %v9704, 5
        %v10267 = vsel %vm1912, %v10265, %v10266
        %v10268 = vrot.slane %v10266, 4
        %v10269 = vrot.slane %v9722, 5
        %v10270 = vsel %vm1912, %v10268, %v10269
        %v10271 = vrot.slane %v10123, 5
        %v10272 = vrot.slane %v10271, 4
        %v10273 = vrot.slane %v9706, 5
        %v10274 = vsel %vm1912, %v10272, %v10273
        %v10275 = vrot.slane %v10273, 4
        %v10276 = vrot.slane %v9723, 5
        %v10277 = vsel %vm1912, %v10275, %v10276
        %v10278 = vrot.slane %v10124, 5
        %v10279 = vrot.slane %v10278, 4
        %v10280 = vrot.slane %v9708, 5
        %v10281 = vsel %vm1912, %v10279, %v10280
        %v10282 = vrot.slane %v10280, 4
        %v10283 = vrot.slane %v9724, 5
        %v10284 = vsel %vm1912, %v10282, %v10283
        %v10285 = vld [vmem:[%s2633] sm:$0xf]
        %v10286 = vld [vmem:[%s2633 + $0x4] sm:$0xf]
        %v10287 = vld [vmem:[%s2633 + $0xc] sm:$0xf]
        %v10288 = vld [vmem:[%s2633 + $0x10] sm:$0xf]
        %v10289 = vld [vmem:[%s2633 + $0x18] sm:$0xf]
        %v10290 = vld [vmem:[%s2633 + $0x1c] sm:$0xf]
        %v10291 = vld [vmem:[%s2633 + $0x24] sm:$0xf]
        %v10292 = vld [vmem:[%s2633 + $0x28] sm:$0xf]
        %v10293 = vld [vmem:[%s2633 + $0x30] sm:$0xf]
        %v10294 = vld [vmem:[%s2633 + $0x34] sm:$0xf]
        %v10295 = vld [vmem:[%s2633 + $0x3c] sm:$0xf]
        %v10296 = vld [vmem:[%s2633 + $0x40] sm:$0xf]
        %v10297 = vld [vmem:[%s2633 + $0x48] sm:$0xf]
        %v10298 = vld [vmem:[%s2633 + $0x4c] sm:$0xf]
        %v10299 = vld [vmem:[%s2633 + $0x54] sm:$0xf]
        %v10300 = vld [vmem:[%s2633 + $0x58] sm:$0xf]
        %v10301 = vld [vmem:[%s2633 + $0x60] sm:$0xf]
        %v10302 = vld [vmem:[%s2633 + $0x64] sm:$0xf]
        %v10303 = vld [vmem:[%s2633 + $0x6c] sm:$0xf]
        %v10304 = vld [vmem:[%s2633 + $0x70] sm:$0xf]
        %v10305 = vld [vmem:[%s2633 + $0x78] sm:$0xf]
        %v10306 = vld [vmem:[%s2633 + $0x7c] sm:$0xf]
        %v10307 = vld [vmem:[%s2633 + $0x84] sm:$0xf]
        %v10308 = vld [vmem:[%s2633 + $0x88] sm:$0xf]
        %v10309 = vld [vmem:[%s2633 + $0x90] sm:$0xf]
        %v10310 = vld [vmem:[%s2633 + $0x94] sm:$0xf]
        %v10311 = vld [vmem:[%s2633 + $0x9c] sm:$0xf]
        %v10312 = vld [vmem:[%s2633 + $0xa0] sm:$0xf]
        %v10313 = vld [vmem:[%s2633 + $0xa8] sm:$0xf]
        %v10314 = vld [vmem:[%s2633 + $0xac] sm:$0xf]
        %v10315 = vld [vmem:[%s2633 + $0xb4] sm:$0xf]
        %v10316 = vld [vmem:[%s2633 + $0xb8] sm:$0xf]
        %v10317 = vld [vmem:[%s2633 + $0x8] sm:$0x1]
        %v10318 = vld [vmem:[%s2633 + $0x14] sm:$0x1]
        %v10319 = vld [vmem:[%s2633 + $0x20] sm:$0x1]
        %v10320 = vld [vmem:[%s2633 + $0x2c] sm:$0x1]
        %v10321 = vld [vmem:[%s2633 + $0x38] sm:$0x1]
        %v10322 = vld [vmem:[%s2633 + $0x44] sm:$0x1]
        %v10323 = vld [vmem:[%s2633 + $0x50] sm:$0x1]
        %v10324 = vld [vmem:[%s2633 + $0x5c] sm:$0x1]
        %v10325 = vld [vmem:[%s2633 + $0x68] sm:$0x1]
        %v10326 = vld [vmem:[%s2633 + $0x74] sm:$0x1]
        %v10327 = vld [vmem:[%s2633 + $0x80] sm:$0x1]
        %v10328 = vld [vmem:[%s2633 + $0x8c] sm:$0x1]
        %v10329 = vld [vmem:[%s2633 + $0x98] sm:$0x1]
        %v10330 = vld [vmem:[%s2633 + $0xa4] sm:$0x1]
        %v10331 = vld [vmem:[%s2633 + $0xb0] sm:$0x1]
        %v10332 = vld [vmem:[%s2633 + $0xbc] sm:$0x1]
        %v10334 = vshrl.u32 %v10285, 16
        %v10336 = vrot.slane %v10334, 4
        %v10337 = vshll.u32 %v10285, 16
        %v10339 = vrot.slane %v10337, 5
        %v10340 = vor.u32 %v10336, %v10339
        %v10341 = vrot.slane %v10340, 4
        %v10343 = vshll.u32 %v10286, 16
        %v10345 = vrot.slane %v10343, 5
        %v10346 = vsel %vm1461, %v10341, %v10345
        %v10347 = vshrl.u32 %v10286, 16
        %v10349 = vrot.slane %v10347, 4
        %v10350 = vor.u32 %v10349, %v10345
        %v10351 = vrot.slane %v10350, 4
        %v10353 = vshll.u32 %v10317, 16
        %v10355 = vrot.slane %v10353, 5
        %v10356 = vsel %vm1461, %v10351, %v10355
        %v10358 = vshrl.u32 %v10287, 16
        %v10360 = vrot.slane %v10358, 4
        %v10361 = vshll.u32 %v10287, 16
        %v10363 = vrot.slane %v10361, 5
        %v10364 = vor.u32 %v10360, %v10363
        %v10365 = vrot.slane %v10364, 4
        %v10367 = vshll.u32 %v10288, 16
        %v10369 = vrot.slane %v10367, 5
        %v10370 = vsel %vm1461, %v10365, %v10369
        %v10371 = vshrl.u32 %v10288, 16
        %v10373 = vrot.slane %v10371, 4
        %v10374 = vor.u32 %v10373, %v10369
        %v10375 = vrot.slane %v10374, 4
        %v10377 = vshll.u32 %v10318, 16
        %v10379 = vrot.slane %v10377, 5
        %v10380 = vsel %vm1461, %v10375, %v10379
        %v10382 = vshrl.u32 %v10289, 16
        %v10384 = vrot.slane %v10382, 4
        %v10385 = vshll.u32 %v10289, 16
        %v10387 = vrot.slane %v10385, 5
        %v10388 = vor.u32 %v10384, %v10387
        %v10389 = vrot.slane %v10388, 4
        %v10391 = vshll.u32 %v10290, 16
        %v10393 = vrot.slane %v10391, 5
        %v10394 = vsel %vm1461, %v10389, %v10393
        %v10395 = vshrl.u32 %v10290, 16
        %v10397 = vrot.slane %v10395, 4
        %v10398 = vor.u32 %v10397, %v10393
        %v10399 = vrot.slane %v10398, 4
        %v10401 = vshll.u32 %v10319, 16
        %v10403 = vrot.slane %v10401, 5
        %v10404 = vsel %vm1461, %v10399, %v10403
        %v10406 = vshrl.u32 %v10291, 16
        %v10408 = vrot.slane %v10406, 4
        %v10409 = vshll.u32 %v10291, 16
        %v10411 = vrot.slane %v10409, 5
        %v10412 = vor.u32 %v10408, %v10411
        %v10413 = vrot.slane %v10412, 4
        %v10415 = vshll.u32 %v10292, 16
        %v10417 = vrot.slane %v10415, 5
        %v10418 = vsel %vm1461, %v10413, %v10417
        %v10419 = vshrl.u32 %v10292, 16
        %v10421 = vrot.slane %v10419, 4
        %v10422 = vor.u32 %v10421, %v10417
        %v10423 = vrot.slane %v10422, 4
        %v10425 = vshll.u32 %v10320, 16
        %v10427 = vrot.slane %v10425, 5
        %v10428 = vsel %vm1461, %v10423, %v10427
        %v10430 = vshrl.u32 %v10293, 16
        %v10432 = vrot.slane %v10430, 4
        %v10433 = vshll.u32 %v10293, 16
        %v10435 = vrot.slane %v10433, 5
        %v10436 = vor.u32 %v10432, %v10435
        %v10437 = vrot.slane %v10436, 4
        %v10439 = vshll.u32 %v10294, 16
        %v10441 = vrot.slane %v10439, 5
        %v10442 = vsel %vm1461, %v10437, %v10441
        %v10443 = vshrl.u32 %v10294, 16
        %v10445 = vrot.slane %v10443, 4
        %v10446 = vor.u32 %v10445, %v10441
        %v10447 = vrot.slane %v10446, 4
        %v10449 = vshll.u32 %v10321, 16
        %v10451 = vrot.slane %v10449, 5
        %v10452 = vsel %vm1461, %v10447, %v10451
        %v10454 = vshrl.u32 %v10295, 16
        %v10456 = vrot.slane %v10454, 4
        %v10457 = vshll.u32 %v10295, 16
        %v10459 = vrot.slane %v10457, 5
        %v10460 = vor.u32 %v10456, %v10459
        %v10461 = vrot.slane %v10460, 4
        %v10463 = vshll.u32 %v10296, 16
        %v10465 = vrot.slane %v10463, 5
        %v10466 = vsel %vm1461, %v10461, %v10465
        %v10467 = vshrl.u32 %v10296, 16
        %v10469 = vrot.slane %v10467, 4
        %v10470 = vor.u32 %v10469, %v10465
        %v10471 = vrot.slane %v10470, 4
        %v10473 = vshll.u32 %v10322, 16
        %v10475 = vrot.slane %v10473, 5
        %v10476 = vsel %vm1461, %v10471, %v10475
        %v10478 = vshrl.u32 %v10297, 16
        %v10480 = vrot.slane %v10478, 4
        %v10481 = vshll.u32 %v10297, 16
        %v10483 = vrot.slane %v10481, 5
        %v10484 = vor.u32 %v10480, %v10483
        %v10485 = vrot.slane %v10484, 4
        %v10487 = vshll.u32 %v10298, 16
        %v10489 = vrot.slane %v10487, 5
        %v10490 = vsel %vm1461, %v10485, %v10489
        %v10491 = vshrl.u32 %v10298, 16
        %v10493 = vrot.slane %v10491, 4
        %v10494 = vor.u32 %v10493, %v10489
        %v10495 = vrot.slane %v10494, 4
        %v10497 = vshll.u32 %v10323, 16
        %v10499 = vrot.slane %v10497, 5
        %v10500 = vsel %vm1461, %v10495, %v10499
        %v10502 = vshrl.u32 %v10299, 16
        %v10504 = vrot.slane %v10502, 4
        %v10505 = vshll.u32 %v10299, 16
        %v10507 = vrot.slane %v10505, 5
        %v10508 = vor.u32 %v10504, %v10507
        %v10509 = vrot.slane %v10508, 4
        %v10511 = vshll.u32 %v10300, 16
        %v10513 = vrot.slane %v10511, 5
        %v10514 = vsel %vm1461, %v10509, %v10513
        %v10515 = vshrl.u32 %v10300, 16
        %v10517 = vrot.slane %v10515, 4
        %v10518 = vor.u32 %v10517, %v10513
        %v10519 = vrot.slane %v10518, 4
        %v10521 = vshll.u32 %v10324, 16
        %v10523 = vrot.slane %v10521, 5
        %v10524 = vsel %vm1461, %v10519, %v10523
        %v10526 = vshrl.u32 %v10301, 16
        %v10528 = vrot.slane %v10526, 4
        %v10529 = vshll.u32 %v10301, 16
        %v10531 = vrot.slane %v10529, 5
        %v10532 = vor.u32 %v10528, %v10531
        %v10533 = vrot.slane %v10532, 4
        %v10535 = vshll.u32 %v10302, 16
        %v10537 = vrot.slane %v10535, 5
        %v10538 = vsel %vm1461, %v10533, %v10537
        %v10539 = vshrl.u32 %v10302, 16
        %v10541 = vrot.slane %v10539, 4
        %v10542 = vor.u32 %v10541, %v10537
        %v10543 = vrot.slane %v10542, 4
        %v10545 = vshll.u32 %v10325, 16
        %v10547 = vrot.slane %v10545, 5
        %v10548 = vsel %vm1461, %v10543, %v10547
        %v10550 = vshrl.u32 %v10303, 16
        %v10552 = vrot.slane %v10550, 4
        %v10553 = vshll.u32 %v10303, 16
        %v10555 = vrot.slane %v10553, 5
        %v10556 = vor.u32 %v10552, %v10555
        %v10557 = vrot.slane %v10556, 4
        %v10559 = vshll.u32 %v10304, 16
        %v10561 = vrot.slane %v10559, 5
        %v10562 = vsel %vm1461, %v10557, %v10561
        %v10563 = vshrl.u32 %v10304, 16
        %v10565 = vrot.slane %v10563, 4
        %v10566 = vor.u32 %v10565, %v10561
        %v10567 = vrot.slane %v10566, 4
        %v10569 = vshll.u32 %v10326, 16
        %v10571 = vrot.slane %v10569, 5
        %v10572 = vsel %vm1461, %v10567, %v10571
        %v10574 = vshrl.u32 %v10305, 16
        %v10576 = vrot.slane %v10574, 4
        %v10577 = vshll.u32 %v10305, 16
        %v10579 = vrot.slane %v10577, 5
        %v10580 = vor.u32 %v10576, %v10579
        %v10581 = vrot.slane %v10580, 4
        %v10583 = vshll.u32 %v10306, 16
        %v10585 = vrot.slane %v10583, 5
        %v10586 = vsel %vm1461, %v10581, %v10585
        %v10587 = vshrl.u32 %v10306, 16
        %v10589 = vrot.slane %v10587, 4
        %v10590 = vor.u32 %v10589, %v10585
        %v10591 = vrot.slane %v10590, 4
        %v10593 = vshll.u32 %v10327, 16
        %v10595 = vrot.slane %v10593, 5
        %v10596 = vsel %vm1461, %v10591, %v10595
        %v10598 = vshrl.u32 %v10307, 16
        %v10600 = vrot.slane %v10598, 4
        %v10601 = vshll.u32 %v10307, 16
        %v10603 = vrot.slane %v10601, 5
        %v10604 = vor.u32 %v10600, %v10603
        %v10605 = vrot.slane %v10604, 4
        %v10607 = vshll.u32 %v10308, 16
        %v10609 = vrot.slane %v10607, 5
        %v10610 = vsel %vm1461, %v10605, %v10609
        %v10611 = vshrl.u32 %v10308, 16
        %v10613 = vrot.slane %v10611, 4
        %v10614 = vor.u32 %v10613, %v10609
        %v10615 = vrot.slane %v10614, 4
        %v10617 = vshll.u32 %v10328, 16
        %v10619 = vrot.slane %v10617, 5
        %v10620 = vsel %vm1461, %v10615, %v10619
        %v10622 = vshrl.u32 %v10309, 16
        %v10624 = vrot.slane %v10622, 4
        %v10625 = vshll.u32 %v10309, 16
        %v10627 = vrot.slane %v10625, 5
        %v10628 = vor.u32 %v10624, %v10627
        %v10629 = vrot.slane %v10628, 4
        %v10631 = vshll.u32 %v10310, 16
        %v10633 = vrot.slane %v10631, 5
        %v10634 = vsel %vm1461, %v10629, %v10633
        %v10635 = vshrl.u32 %v10310, 16
        %v10637 = vrot.slane %v10635, 4
        %v10638 = vor.u32 %v10637, %v10633
        %v10639 = vrot.slane %v10638, 4
        %v10641 = vshll.u32 %v10329, 16
        %v10643 = vrot.slane %v10641, 5
        %v10644 = vsel %vm1461, %v10639, %v10643
        %v10646 = vshrl.u32 %v10311, 16
        %v10648 = vrot.slane %v10646, 4
        %v10649 = vshll.u32 %v10311, 16
        %v10651 = vrot.slane %v10649, 5
        %v10652 = vor.u32 %v10648, %v10651
        %v10653 = vrot.slane %v10652, 4
        %v10655 = vshll.u32 %v10312, 16
        %v10657 = vrot.slane %v10655, 5
        %v10658 = vsel %vm1461, %v10653, %v10657
        %v10659 = vshrl.u32 %v10312, 16
        %v10661 = vrot.slane %v10659, 4
        %v10662 = vor.u32 %v10661, %v10657
        %v10663 = vrot.slane %v10662, 4
        %v10665 = vshll.u32 %v10330, 16
        %v10667 = vrot.slane %v10665, 5
        %v10668 = vsel %vm1461, %v10663, %v10667
        %v10670 = vshrl.u32 %v10313, 16
        %v10672 = vrot.slane %v10670, 4
        %v10673 = vshll.u32 %v10313, 16
        %v10675 = vrot.slane %v10673, 5
        %v10676 = vor.u32 %v10672, %v10675
        %v10677 = vrot.slane %v10676, 4
        %v10679 = vshll.u32 %v10314, 16
        %v10681 = vrot.slane %v10679, 5
        %v10682 = vsel %vm1461, %v10677, %v10681
        %v10683 = vshrl.u32 %v10314, 16
        %v10685 = vrot.slane %v10683, 4
        %v10686 = vor.u32 %v10685, %v10681
        %v10687 = vrot.slane %v10686, 4
        %v10689 = vshll.u32 %v10331, 16
        %v10691 = vrot.slane %v10689, 5
        %v10692 = vsel %vm1461, %v10687, %v10691
        %v10694 = vshrl.u32 %v10315, 16
        %v10696 = vrot.slane %v10694, 4
        %v10697 = vshll.u32 %v10315, 16
        %v10699 = vrot.slane %v10697, 5
        %v10700 = vor.u32 %v10696, %v10699
        %v10701 = vrot.slane %v10700, 4
        %v10703 = vshll.u32 %v10316, 16
        %v10705 = vrot.slane %v10703, 5
        %v10706 = vsel %vm1461, %v10701, %v10705
        %v10707 = vshrl.u32 %v10316, 16
        %v10709 = vrot.slane %v10707, 4
        %v10710 = vor.u32 %v10709, %v10705
        %v10711 = vrot.slane %v10710, 4
        %v10713 = vshll.u32 %v10332, 16
        %v10715 = vrot.slane %v10713, 5
        %v10716 = vsel %vm1461, %v10711, %v10715
        %v10717 = vld [vmem:[%s2633] sm:$0xe]
        %v10718 = vld [vmem:[%s2633 + $0xc] sm:$0xe]
        %v10719 = vld [vmem:[%s2633 + $0x18] sm:$0xe]
        %v10720 = vld [vmem:[%s2633 + $0x24] sm:$0xe]
        %v10721 = vld [vmem:[%s2633 + $0x30] sm:$0xe]
        %v10722 = vld [vmem:[%s2633 + $0x3c] sm:$0xe]
        %v10723 = vld [vmem:[%s2633 + $0x48] sm:$0xe]
        %v10724 = vld [vmem:[%s2633 + $0x54] sm:$0xe]
        %v10725 = vld [vmem:[%s2633 + $0x60] sm:$0xe]
        %v10726 = vld [vmem:[%s2633 + $0x6c] sm:$0xe]
        %v10727 = vld [vmem:[%s2633 + $0x78] sm:$0xe]
        %v10728 = vld [vmem:[%s2633 + $0x84] sm:$0xe]
        %v10729 = vld [vmem:[%s2633 + $0x90] sm:$0xe]
        %v10730 = vld [vmem:[%s2633 + $0x9c] sm:$0xe]
        %v10731 = vld [vmem:[%s2633 + $0xa8] sm:$0xe]
        %v10732 = vld [vmem:[%s2633 + $0xb4] sm:$0xe]
        %v10781 = vrot.slane %v10717, 5
        %v10782 = vrot.slane %v10781, 4
        %v10783 = vrot.slane %v10286, 5
        %v10784 = vsel %vm1912, %v10782, %v10783
        %v10785 = vrot.slane %v10783, 4
        %v10786 = vrot.slane %v10317, 5
        %v10787 = vsel %vm1912, %v10785, %v10786
        %v10788 = vrot.slane %v10718, 5
        %v10789 = vrot.slane %v10788, 4
        %v10790 = vrot.slane %v10288, 5
        %v10791 = vsel %vm1912, %v10789, %v10790
        %v10792 = vrot.slane %v10790, 4
        %v10793 = vrot.slane %v10318, 5
        %v10794 = vsel %vm1912, %v10792, %v10793
        %v10795 = vrot.slane %v10719, 5
        %v10796 = vrot.slane %v10795, 4
        %v10797 = vrot.slane %v10290, 5
        %v10798 = vsel %vm1912, %v10796, %v10797
        %v10799 = vrot.slane %v10797, 4
        %v10800 = vrot.slane %v10319, 5
        %v10801 = vsel %vm1912, %v10799, %v10800
        %v10802 = vrot.slane %v10720, 5
        %v10803 = vrot.slane %v10802, 4
        %v10804 = vrot.slane %v10292, 5
        %v10805 = vsel %vm1912, %v10803, %v10804
        %v10806 = vrot.slane %v10804, 4
        %v10807 = vrot.slane %v10320, 5
        %v10808 = vsel %vm1912, %v10806, %v10807
        %v10809 = vrot.slane %v10721, 5
        %v10810 = vrot.slane %v10809, 4
        %v10811 = vrot.slane %v10294, 5
        %v10812 = vsel %vm1912, %v10810, %v10811
        %v10813 = vrot.slane %v10811, 4
        %v10814 = vrot.slane %v10321, 5
        %v10815 = vsel %vm1912, %v10813, %v10814
        %v10816 = vrot.slane %v10722, 5
        %v10817 = vrot.slane %v10816, 4
        %v10818 = vrot.slane %v10296, 5
        %v10819 = vsel %vm1912, %v10817, %v10818
        %v10820 = vrot.slane %v10818, 4
        %v10821 = vrot.slane %v10322, 5
        %v10822 = vsel %vm1912, %v10820, %v10821
        %v10823 = vrot.slane %v10723, 5
        %v10824 = vrot.slane %v10823, 4
        %v10825 = vrot.slane %v10298, 5
        %v10826 = vsel %vm1912, %v10824, %v10825
        %v10827 = vrot.slane %v10825, 4
        %v10828 = vrot.slane %v10323, 5
        %v10829 = vsel %vm1912, %v10827, %v10828
        %v10830 = vrot.slane %v10724, 5
        %v10831 = vrot.slane %v10830, 4
        %v10832 = vrot.slane %v10300, 5
        %v10833 = vsel %vm1912, %v10831, %v10832
        %v10834 = vrot.slane %v10832, 4
        %v10835 = vrot.slane %v10324, 5
        %v10836 = vsel %vm1912, %v10834, %v10835
        %v10837 = vrot.slane %v10725, 5
        %v10838 = vrot.slane %v10837, 4
        %v10839 = vrot.slane %v10302, 5
        %v10840 = vsel %vm1912, %v10838, %v10839
        %v10841 = vrot.slane %v10839, 4
        %v10842 = vrot.slane %v10325, 5
        %v10843 = vsel %vm1912, %v10841, %v10842
        %v10844 = vrot.slane %v10726, 5
        %v10845 = vrot.slane %v10844, 4
        %v10846 = vrot.slane %v10304, 5
        %v10847 = vsel %vm1912, %v10845, %v10846
        %v10848 = vrot.slane %v10846, 4
        %v10849 = vrot.slane %v10326, 5
        %v10850 = vsel %vm1912, %v10848, %v10849
        %v10851 = vrot.slane %v10727, 5
        %v10852 = vrot.slane %v10851, 4
        %v10853 = vrot.slane %v10306, 5
        %v10854 = vsel %vm1912, %v10852, %v10853
        %v10855 = vrot.slane %v10853, 4
        %v10856 = vrot.slane %v10327, 5
        %v10857 = vsel %vm1912, %v10855, %v10856
        %v10858 = vrot.slane %v10728, 5
        %v10859 = vrot.slane %v10858, 4
        %v10860 = vrot.slane %v10308, 5
        %v10861 = vsel %vm1912, %v10859, %v10860
        %v10862 = vrot.slane %v10860, 4
        %v10863 = vrot.slane %v10328, 5
        %v10864 = vsel %vm1912, %v10862, %v10863
        %v10865 = vrot.slane %v10729, 5
        %v10866 = vrot.slane %v10865, 4
        %v10867 = vrot.slane %v10310, 5
        %v10868 = vsel %vm1912, %v10866, %v10867
        %v10869 = vrot.slane %v10867, 4
        %v10870 = vrot.slane %v10329, 5
        %v10871 = vsel %vm1912, %v10869, %v10870
        %v10872 = vrot.slane %v10730, 5
        %v10873 = vrot.slane %v10872, 4
        %v10874 = vrot.slane %v10312, 5
        %v10875 = vsel %vm1912, %v10873, %v10874
        %v10876 = vrot.slane %v10874, 4
        %v10877 = vrot.slane %v10330, 5
        %v10878 = vsel %vm1912, %v10876, %v10877
        %v10879 = vrot.slane %v10731, 5
        %v10880 = vrot.slane %v10879, 4
        %v10881 = vrot.slane %v10314, 5
        %v10882 = vsel %vm1912, %v10880, %v10881
        %v10883 = vrot.slane %v10881, 4
        %v10884 = vrot.slane %v10331, 5
        %v10885 = vsel %vm1912, %v10883, %v10884
        %v10886 = vrot.slane %v10732, 5
        %v10887 = vrot.slane %v10886, 4
        %v10888 = vrot.slane %v10316, 5
        %v10889 = vsel %vm1912, %v10887, %v10888
        %v10890 = vrot.slane %v10888, 4
        %v10891 = vrot.slane %v10332, 5
        %v10892 = vsel %vm1912, %v10890, %v10891
        %v10909 = vunpack.c.l.b16 %v9069
        %v10910 = vunpack.c.l.b16 %v9070
        %v10911 = vunpack.c.l.b16 %v9071
        %v10912 = vunpack.c.l.b16 %v9072
        %v10913 = vunpack.c.l.b16 %v9073
        %v10914 = vunpack.c.l.b16 %v9074
        %v10915 = vunpack.c.l.b16 %v9075
        %v10916 = vunpack.c.l.b16 %v9076
        %v10917 = vunpack.c.l.b16 %v9077
        %v10918 = vunpack.c.l.b16 %v9078
        %v10919 = vunpack.c.l.b16 %v9079
        %v10920 = vunpack.c.l.b16 %v9080
        %v10921 = vunpack.c.l.b16 %v9081
        %v10922 = vunpack.c.l.b16 %v9082
        %v10923 = vunpack.c.l.b16 %v9083
        %v10924 = vunpack.c.l.b16 %v9084
        %v10925 = vunpack.c.l.b16 %v9085
        %v10926 = vunpack.c.l.b16 %v9086
        %v10927 = vunpack.c.l.b16 %v9087
        %v10928 = vunpack.c.l.b16 %v9088
        %v10929 = vunpack.c.l.b16 %v9089
        %v10930 = vunpack.c.l.b16 %v9090
        %v10931 = vunpack.c.l.b16 %v9091
        %v10932 = vunpack.c.l.b16 %v9092
        %v10933 = vunpack.c.l.b16 %v9093
        %v10934 = vunpack.c.l.b16 %v9094
        %v10935 = vunpack.c.l.b16 %v9095
        %v10936 = vunpack.c.l.b16 %v9096
        %v10937 = vunpack.c.l.b16 %v9097
        %v10938 = vunpack.c.l.b16 %v9098
        %v10939 = vunpack.c.l.b16 %v9099
        %v10940 = vunpack.c.l.b16 %v9100
        %v10941 = vpack.c.b16 %v10910, %v10909
        %v10942 = vpack.c.b16 %v10912, %v10911
        %v10943 = vpack.c.b16 %v10914, %v10913
        %v10944 = vpack.c.b16 %v10916, %v10915
        %v10945 = vpack.c.b16 %v10918, %v10917
        %v10946 = vpack.c.b16 %v10920, %v10919
        %v10947 = vpack.c.b16 %v10922, %v10921
        %v10948 = vpack.c.b16 %v10924, %v10923
        %v10949 = vpack.c.b16 %v10926, %v10925
        %v10950 = vpack.c.b16 %v10928, %v10927
        %v10951 = vpack.c.b16 %v10930, %v10929
        %v10952 = vpack.c.b16 %v10932, %v10931
        %v10953 = vpack.c.b16 %v10934, %v10933
        %v10954 = vpack.c.b16 %v10936, %v10935
        %v10955 = vpack.c.b16 %v10938, %v10937
        %v10956 = vpack.c.b16 %v10940, %v10939
        %v10957 = vunpack.c.l.b16 %v9130
        %v10958 = vunpack.c.l.b16 %v9140
        %v10959 = vunpack.c.l.b16 %v9154
        %v10960 = vunpack.c.l.b16 %v9164
        %v10961 = vunpack.c.l.b16 %v9178
        %v10962 = vunpack.c.l.b16 %v9188
        %v10963 = vunpack.c.l.b16 %v9202
        %v10964 = vunpack.c.l.b16 %v9212
        %v10965 = vunpack.c.l.b16 %v9226
        %v10966 = vunpack.c.l.b16 %v9236
        %v10967 = vunpack.c.l.b16 %v9250
        %v10968 = vunpack.c.l.b16 %v9260
        %v10969 = vunpack.c.l.b16 %v9274
        %v10970 = vunpack.c.l.b16 %v9284
        %v10971 = vunpack.c.l.b16 %v9298
        %v10972 = vunpack.c.l.b16 %v9308
        %v10973 = vunpack.c.l.b16 %v9322
        %v10974 = vunpack.c.l.b16 %v9332
        %v10975 = vunpack.c.l.b16 %v9346
        %v10976 = vunpack.c.l.b16 %v9356
        %v10977 = vunpack.c.l.b16 %v9370
        %v10978 = vunpack.c.l.b16 %v9380
        %v10979 = vunpack.c.l.b16 %v9394
        %v10980 = vunpack.c.l.b16 %v9404
        %v10981 = vunpack.c.l.b16 %v9418
        %v10982 = vunpack.c.l.b16 %v9428
        %v10983 = vunpack.c.l.b16 %v9442
        %v10984 = vunpack.c.l.b16 %v9452
        %v10985 = vunpack.c.l.b16 %v9466
        %v10986 = vunpack.c.l.b16 %v9476
        %v10987 = vunpack.c.l.b16 %v9490
        %v10988 = vunpack.c.l.b16 %v9500
        %v10989 = vpack.c.b16 %v10958, %v10957
        %v10990 = vpack.c.b16 %v10960, %v10959
        %v10991 = vpack.c.b16 %v10962, %v10961
        %v10992 = vpack.c.b16 %v10964, %v10963
        %v10993 = vpack.c.b16 %v10966, %v10965
        %v10994 = vpack.c.b16 %v10968, %v10967
        %v10995 = vpack.c.b16 %v10970, %v10969
        %v10996 = vpack.c.b16 %v10972, %v10971
        %v10997 = vpack.c.b16 %v10974, %v10973
        %v10998 = vpack.c.b16 %v10976, %v10975
        %v10999 = vpack.c.b16 %v10978, %v10977
        %v11000 = vpack.c.b16 %v10980, %v10979
        %v11001 = vpack.c.b16 %v10982, %v10981
        %v11002 = vpack.c.b16 %v10984, %v10983
        %v11003 = vpack.c.b16 %v10986, %v10985
        %v11004 = vpack.c.b16 %v10988, %v10987
        %11005 = vrot.lane.b32.xlu0 %v10989, 16
        %v11006 = vpop.permute.xlu0 %11005
        %11007 = vrot.lane.b32.xlu0 %v10990, 16
        %v11008 = vpop.permute.xlu0 %11007
        %11009 = vrot.lane.b32.xlu0 %v10991, 16
        %v11010 = vpop.permute.xlu0 %11009
        %11011 = vrot.lane.b32.xlu0 %v10992, 16
        %v11012 = vpop.permute.xlu0 %11011
        %11013 = vrot.lane.b32.xlu0 %v10993, 16
        %v11014 = vpop.permute.xlu0 %11013
        %11015 = vrot.lane.b32.xlu0 %v10994, 16
        %v11016 = vpop.permute.xlu0 %11015
        %11017 = vrot.lane.b32.xlu0 %v10995, 16
        %v11018 = vpop.permute.xlu0 %11017
        %11019 = vrot.lane.b32.xlu0 %v10996, 16
        %v11020 = vpop.permute.xlu0 %11019
        %11021 = vrot.lane.b32.xlu0 %v10997, 16
        %v11022 = vpop.permute.xlu0 %11021
        %11023 = vrot.lane.b32.xlu0 %v10998, 16
        %v11024 = vpop.permute.xlu0 %11023
        %11025 = vrot.lane.b32.xlu0 %v10999, 16
        %v11026 = vpop.permute.xlu0 %11025
        %11027 = vrot.lane.b32.xlu0 %v11000, 16
        %v11028 = vpop.permute.xlu0 %11027
        %11029 = vrot.lane.b32.xlu0 %v11001, 16
        %v11030 = vpop.permute.xlu0 %11029
        %11031 = vrot.lane.b32.xlu0 %v11002, 16
        %v11032 = vpop.permute.xlu0 %11031
        %11033 = vrot.lane.b32.xlu0 %v11003, 16
        %v11034 = vpop.permute.xlu0 %11033
        %11035 = vrot.lane.b32.xlu0 %v11004, 16
        %v11036 = vpop.permute.xlu0 %11035
        %v11037 = vunpack.c.l.b16 %v9568
        %v11038 = vunpack.c.l.b16 %v9571
        %v11039 = vunpack.c.l.b16 %v9575
        %v11040 = vunpack.c.l.b16 %v9578
        %v11041 = vunpack.c.l.b16 %v9582
        %v11042 = vunpack.c.l.b16 %v9585
        %v11043 = vunpack.c.l.b16 %v9589
        %v11044 = vunpack.c.l.b16 %v9592
        %v11045 = vunpack.c.l.b16 %v9596
        %v11046 = vunpack.c.l.b16 %v9599
        %v11047 = vunpack.c.l.b16 %v9603
        %v11048 = vunpack.c.l.b16 %v9606
        %v11049 = vunpack.c.l.b16 %v9610
        %v11050 = vunpack.c.l.b16 %v9613
        %v11051 = vunpack.c.l.b16 %v9617
        %v11052 = vunpack.c.l.b16 %v9620
        %v11053 = vunpack.c.l.b16 %v9624
        %v11054 = vunpack.c.l.b16 %v9627
        %v11055 = vunpack.c.l.b16 %v9631
        %v11056 = vunpack.c.l.b16 %v9634
        %v11057 = vunpack.c.l.b16 %v9638
        %v11058 = vunpack.c.l.b16 %v9641
        %v11059 = vunpack.c.l.b16 %v9645
        %v11060 = vunpack.c.l.b16 %v9648
        %v11061 = vunpack.c.l.b16 %v9652
        %v11062 = vunpack.c.l.b16 %v9655
        %v11063 = vunpack.c.l.b16 %v9659
        %v11064 = vunpack.c.l.b16 %v9662
        %v11065 = vunpack.c.l.b16 %v9666
        %v11066 = vunpack.c.l.b16 %v9669
        %v11067 = vunpack.c.l.b16 %v9673
        %v11068 = vunpack.c.l.b16 %v9676
        %v11069 = vpack.c.b16 %v11038, %v11037
        %v11070 = vpack.c.b16 %v11040, %v11039
        %v11071 = vpack.c.b16 %v11042, %v11041
        %v11072 = vpack.c.b16 %v11044, %v11043
        %v11073 = vpack.c.b16 %v11046, %v11045
        %v11074 = vpack.c.b16 %v11048, %v11047
        %v11075 = vpack.c.b16 %v11050, %v11049
        %v11076 = vpack.c.b16 %v11052, %v11051
        %v11077 = vpack.c.b16 %v11054, %v11053
        %v11078 = vpack.c.b16 %v11056, %v11055
        %v11079 = vpack.c.b16 %v11058, %v11057
        %v11080 = vpack.c.b16 %v11060, %v11059
        %v11081 = vpack.c.b16 %v11062, %v11061
        %v11082 = vpack.c.b16 %v11064, %v11063
        %v11083 = vpack.c.b16 %v11066, %v11065
        %v11084 = vpack.c.b16 %v11068, %v11067
        %11085 = vrot.lane.b32.xlu0 %v11069, 32
        %v11086 = vpop.permute.xlu0 %11085
        %11087 = vrot.lane.b32.xlu0 %v11070, 32
        %v11088 = vpop.permute.xlu0 %11087
        %11089 = vrot.lane.b32.xlu0 %v11071, 32
        %v11090 = vpop.permute.xlu0 %11089
        %11091 = vrot.lane.b32.xlu0 %v11072, 32
        %v11092 = vpop.permute.xlu0 %11091
        %11093 = vrot.lane.b32.xlu0 %v11073, 32
        %v11094 = vpop.permute.xlu0 %11093
        %11095 = vrot.lane.b32.xlu0 %v11074, 32
        %v11096 = vpop.permute.xlu0 %11095
        %11097 = vrot.lane.b32.xlu0 %v11075, 32
        %v11098 = vpop.permute.xlu0 %11097
        %11099 = vrot.lane.b32.xlu0 %v11076, 32
        %v11100 = vpop.permute.xlu0 %11099
        %11101 = vrot.lane.b32.xlu0 %v11077, 32
        %v11102 = vpop.permute.xlu0 %11101
        %11103 = vrot.lane.b32.xlu0 %v11078, 32
        %v11104 = vpop.permute.xlu0 %11103
        %11105 = vrot.lane.b32.xlu0 %v11079, 32
        %v11106 = vpop.permute.xlu0 %11105
        %11107 = vrot.lane.b32.xlu0 %v11080, 32
        %v11108 = vpop.permute.xlu0 %11107
        %11109 = vrot.lane.b32.xlu0 %v11081, 32
        %v11110 = vpop.permute.xlu0 %11109
        %11111 = vrot.lane.b32.xlu0 %v11082, 32
        %v11112 = vpop.permute.xlu0 %11111
        %11113 = vrot.lane.b32.xlu0 %v11083, 32
        %v11114 = vpop.permute.xlu0 %11113
        %11115 = vrot.lane.b32.xlu0 %v11084, 32
        %v11116 = vpop.permute.xlu0 %11115
        %v11133 = vunpack.c.l.b16 %v9677
        %v11134 = vunpack.c.l.b16 %v9678
        %v11135 = vunpack.c.l.b16 %v9679
        %v11136 = vunpack.c.l.b16 %v9680
        %v11137 = vunpack.c.l.b16 %v9681
        %v11138 = vunpack.c.l.b16 %v9682
        %v11139 = vunpack.c.l.b16 %v9683
        %v11140 = vunpack.c.l.b16 %v9684
        %v11141 = vunpack.c.l.b16 %v9685
        %v11142 = vunpack.c.l.b16 %v9686
        %v11143 = vunpack.c.l.b16 %v9687
        %v11144 = vunpack.c.l.b16 %v9688
        %v11145 = vunpack.c.l.b16 %v9689
        %v11146 = vunpack.c.l.b16 %v9690
        %v11147 = vunpack.c.l.b16 %v9691
        %v11148 = vunpack.c.l.b16 %v9692
        %v11149 = vunpack.c.l.b16 %v9693
        %v11150 = vunpack.c.l.b16 %v9694
        %v11151 = vunpack.c.l.b16 %v9695
        %v11152 = vunpack.c.l.b16 %v9696
        %v11153 = vunpack.c.l.b16 %v9697
        %v11154 = vunpack.c.l.b16 %v9698
        %v11155 = vunpack.c.l.b16 %v9699
        %v11156 = vunpack.c.l.b16 %v9700
        %v11157 = vunpack.c.l.b16 %v9701
        %v11158 = vunpack.c.l.b16 %v9702
        %v11159 = vunpack.c.l.b16 %v9703
        %v11160 = vunpack.c.l.b16 %v9704
        %v11161 = vunpack.c.l.b16 %v9705
        %v11162 = vunpack.c.l.b16 %v9706
        %v11163 = vunpack.c.l.b16 %v9707
        %v11164 = vunpack.c.l.b16 %v9708
        %v11165 = vpack.c.b16 %v11134, %v11133
        %v11166 = vpack.c.b16 %v11136, %v11135
        %v11167 = vpack.c.b16 %v11138, %v11137
        %v11168 = vpack.c.b16 %v11140, %v11139
        %v11169 = vpack.c.b16 %v11142, %v11141
        %v11170 = vpack.c.b16 %v11144, %v11143
        %v11171 = vpack.c.b16 %v11146, %v11145
        %v11172 = vpack.c.b16 %v11148, %v11147
        %v11173 = vpack.c.b16 %v11150, %v11149
        %v11174 = vpack.c.b16 %v11152, %v11151
        %v11175 = vpack.c.b16 %v11154, %v11153
        %v11176 = vpack.c.b16 %v11156, %v11155
        %v11177 = vpack.c.b16 %v11158, %v11157
        %v11178 = vpack.c.b16 %v11160, %v11159
        %v11179 = vpack.c.b16 %v11162, %v11161
        %v11180 = vpack.c.b16 %v11164, %v11163
        %11181 = vrot.lane.b32.xlu0 %v11165, 48
        %v11182 = vpop.permute.xlu0 %11181
        %11183 = vrot.lane.b32.xlu0 %v11166, 48
        %v11184 = vpop.permute.xlu0 %11183
        %11185 = vrot.lane.b32.xlu0 %v11167, 48
        %v11186 = vpop.permute.xlu0 %11185
        %11187 = vrot.lane.b32.xlu0 %v11168, 48
        %v11188 = vpop.permute.xlu0 %11187
        %11189 = vrot.lane.b32.xlu0 %v11169, 48
        %v11190 = vpop.permute.xlu0 %11189
        %11191 = vrot.lane.b32.xlu0 %v11170, 48
        %v11192 = vpop.permute.xlu0 %11191
        %11193 = vrot.lane.b32.xlu0 %v11171, 48
        %v11194 = vpop.permute.xlu0 %11193
        %11195 = vrot.lane.b32.xlu0 %v11172, 48
        %v11196 = vpop.permute.xlu0 %11195
        %11197 = vrot.lane.b32.xlu0 %v11173, 48
        %v11198 = vpop.permute.xlu0 %11197
        %11199 = vrot.lane.b32.xlu0 %v11174, 48
        %v11200 = vpop.permute.xlu0 %11199
        %11201 = vrot.lane.b32.xlu0 %v11175, 48
        %v11202 = vpop.permute.xlu0 %11201
        %11203 = vrot.lane.b32.xlu0 %v11176, 48
        %v11204 = vpop.permute.xlu0 %11203
        %11205 = vrot.lane.b32.xlu0 %v11177, 48
        %v11206 = vpop.permute.xlu0 %11205
        %11207 = vrot.lane.b32.xlu0 %v11178, 48
        %v11208 = vpop.permute.xlu0 %11207
        %11209 = vrot.lane.b32.xlu0 %v11179, 48
        %v11210 = vpop.permute.xlu0 %11209
        %11211 = vrot.lane.b32.xlu0 %v11180, 48
        %v11212 = vpop.permute.xlu0 %11211
        %v11213 = vunpack.c.l.b16 %v9738
        %v11214 = vunpack.c.l.b16 %v9748
        %v11215 = vunpack.c.l.b16 %v9762
        %v11216 = vunpack.c.l.b16 %v9772
        %v11217 = vunpack.c.l.b16 %v9786
        %v11218 = vunpack.c.l.b16 %v9796
        %v11219 = vunpack.c.l.b16 %v9810
        %v11220 = vunpack.c.l.b16 %v9820
        %v11221 = vunpack.c.l.b16 %v9834
        %v11222 = vunpack.c.l.b16 %v9844
        %v11223 = vunpack.c.l.b16 %v9858
        %v11224 = vunpack.c.l.b16 %v9868
        %v11225 = vunpack.c.l.b16 %v9882
        %v11226 = vunpack.c.l.b16 %v9892
        %v11227 = vunpack.c.l.b16 %v9906
        %v11228 = vunpack.c.l.b16 %v9916
        %v11229 = vunpack.c.l.b16 %v9930
        %v11230 = vunpack.c.l.b16 %v9940
        %v11231 = vunpack.c.l.b16 %v9954
        %v11232 = vunpack.c.l.b16 %v9964
        %v11233 = vunpack.c.l.b16 %v9978
        %v11234 = vunpack.c.l.b16 %v9988
        %v11235 = vunpack.c.l.b16 %v10002
        %v11236 = vunpack.c.l.b16 %v10012
        %v11237 = vunpack.c.l.b16 %v10026
        %v11238 = vunpack.c.l.b16 %v10036
        %v11239 = vunpack.c.l.b16 %v10050
        %v11240 = vunpack.c.l.b16 %v10060
        %v11241 = vunpack.c.l.b16 %v10074
        %v11242 = vunpack.c.l.b16 %v10084
        %v11243 = vunpack.c.l.b16 %v10098
        %v11244 = vunpack.c.l.b16 %v10108
        %v11245 = vpack.c.b16 %v11214, %v11213
        %v11246 = vpack.c.b16 %v11216, %v11215
        %v11247 = vpack.c.b16 %v11218, %v11217
        %v11248 = vpack.c.b16 %v11220, %v11219
        %v11249 = vpack.c.b16 %v11222, %v11221
        %v11250 = vpack.c.b16 %v11224, %v11223
        %v11251 = vpack.c.b16 %v11226, %v11225
        %v11252 = vpack.c.b16 %v11228, %v11227
        %v11253 = vpack.c.b16 %v11230, %v11229
        %v11254 = vpack.c.b16 %v11232, %v11231
        %v11255 = vpack.c.b16 %v11234, %v11233
        %v11256 = vpack.c.b16 %v11236, %v11235
        %v11257 = vpack.c.b16 %v11238, %v11237
        %v11258 = vpack.c.b16 %v11240, %v11239
        %v11259 = vpack.c.b16 %v11242, %v11241
        %v11260 = vpack.c.b16 %v11244, %v11243
        %11261 = vrot.lane.b32.xlu0 %v11245, 64
        %v11262 = vpop.permute.xlu0 %11261
        %11263 = vrot.lane.b32.xlu0 %v11246, 64
        %v11264 = vpop.permute.xlu0 %11263
        %11265 = vrot.lane.b32.xlu0 %v11247, 64
        %v11266 = vpop.permute.xlu0 %11265
        %11267 = vrot.lane.b32.xlu0 %v11248, 64
        %v11268 = vpop.permute.xlu0 %11267
        %11269 = vrot.lane.b32.xlu0 %v11249, 64
        %v11270 = vpop.permute.xlu0 %11269
        %11271 = vrot.lane.b32.xlu0 %v11250, 64
        %v11272 = vpop.permute.xlu0 %11271
        %11273 = vrot.lane.b32.xlu0 %v11251, 64
        %v11274 = vpop.permute.xlu0 %11273
        %11275 = vrot.lane.b32.xlu0 %v11252, 64
        %v11276 = vpop.permute.xlu0 %11275
        %11277 = vrot.lane.b32.xlu0 %v11253, 64
        %v11278 = vpop.permute.xlu0 %11277
        %11279 = vrot.lane.b32.xlu0 %v11254, 64
        %v11280 = vpop.permute.xlu0 %11279
        %11281 = vrot.lane.b32.xlu0 %v11255, 64
        %v11282 = vpop.permute.xlu0 %11281
        %11283 = vrot.lane.b32.xlu0 %v11256, 64
        %v11284 = vpop.permute.xlu0 %11283
        %11285 = vrot.lane.b32.xlu0 %v11257, 64
        %v11286 = vpop.permute.xlu0 %11285
        %11287 = vrot.lane.b32.xlu0 %v11258, 64
        %v11288 = vpop.permute.xlu0 %11287
        %11289 = vrot.lane.b32.xlu0 %v11259, 64
        %v11290 = vpop.permute.xlu0 %11289
        %11291 = vrot.lane.b32.xlu0 %v11260, 64
        %v11292 = vpop.permute.xlu0 %11291
        %v11293 = vunpack.c.l.b16 %v10176
        %v11294 = vunpack.c.l.b16 %v10179
        %v11295 = vunpack.c.l.b16 %v10183
        %v11296 = vunpack.c.l.b16 %v10186
        %v11297 = vunpack.c.l.b16 %v10190
        %v11298 = vunpack.c.l.b16 %v10193
        %v11299 = vunpack.c.l.b16 %v10197
        %v11300 = vunpack.c.l.b16 %v10200
        %v11301 = vunpack.c.l.b16 %v10204
        %v11302 = vunpack.c.l.b16 %v10207
        %v11303 = vunpack.c.l.b16 %v10211
        %v11304 = vunpack.c.l.b16 %v10214
        %v11305 = vunpack.c.l.b16 %v10218
        %v11306 = vunpack.c.l.b16 %v10221
        %v11307 = vunpack.c.l.b16 %v10225
        %v11308 = vunpack.c.l.b16 %v10228
        %v11309 = vunpack.c.l.b16 %v10232
        %v11310 = vunpack.c.l.b16 %v10235
        %v11311 = vunpack.c.l.b16 %v10239
        %v11312 = vunpack.c.l.b16 %v10242
        %v11313 = vunpack.c.l.b16 %v10246
        %v11314 = vunpack.c.l.b16 %v10249
        %v11315 = vunpack.c.l.b16 %v10253
        %v11316 = vunpack.c.l.b16 %v10256
        %v11317 = vunpack.c.l.b16 %v10260
        %v11318 = vunpack.c.l.b16 %v10263
        %v11319 = vunpack.c.l.b16 %v10267
        %v11320 = vunpack.c.l.b16 %v10270
        %v11321 = vunpack.c.l.b16 %v10274
        %v11322 = vunpack.c.l.b16 %v10277
        %v11323 = vunpack.c.l.b16 %v10281
        %v11324 = vunpack.c.l.b16 %v10284
        %v11325 = vpack.c.b16 %v11294, %v11293
        %v11326 = vpack.c.b16 %v11296, %v11295
        %v11327 = vpack.c.b16 %v11298, %v11297
        %v11328 = vpack.c.b16 %v11300, %v11299
        %v11329 = vpack.c.b16 %v11302, %v11301
        %v11330 = vpack.c.b16 %v11304, %v11303
        %v11331 = vpack.c.b16 %v11306, %v11305
        %v11332 = vpack.c.b16 %v11308, %v11307
        %v11333 = vpack.c.b16 %v11310, %v11309
        %v11334 = vpack.c.b16 %v11312, %v11311
        %v11335 = vpack.c.b16 %v11314, %v11313
        %v11336 = vpack.c.b16 %v11316, %v11315
        %v11337 = vpack.c.b16 %v11318, %v11317
        %v11338 = vpack.c.b16 %v11320, %v11319
        %v11339 = vpack.c.b16 %v11322, %v11321
        %v11340 = vpack.c.b16 %v11324, %v11323
        %11341 = vrot.lane.b32.xlu0 %v11325, 80
        %v11342 = vpop.permute.xlu0 %11341
        %11343 = vrot.lane.b32.xlu0 %v11326, 80
        %v11344 = vpop.permute.xlu0 %11343
        %11345 = vrot.lane.b32.xlu0 %v11327, 80
        %v11346 = vpop.permute.xlu0 %11345
        %11347 = vrot.lane.b32.xlu0 %v11328, 80
        %v11348 = vpop.permute.xlu0 %11347
        %11349 = vrot.lane.b32.xlu0 %v11329, 80
        %v11350 = vpop.permute.xlu0 %11349
        %11351 = vrot.lane.b32.xlu0 %v11330, 80
        %v11352 = vpop.permute.xlu0 %11351
        %11353 = vrot.lane.b32.xlu0 %v11331, 80
        %v11354 = vpop.permute.xlu0 %11353
        %11355 = vrot.lane.b32.xlu0 %v11332, 80
        %v11356 = vpop.permute.xlu0 %11355
        %11357 = vrot.lane.b32.xlu0 %v11333, 80
        %v11358 = vpop.permute.xlu0 %11357
        %11359 = vrot.lane.b32.xlu0 %v11334, 80
        %v11360 = vpop.permute.xlu0 %11359
        %11361 = vrot.lane.b32.xlu0 %v11335, 80
        %v11362 = vpop.permute.xlu0 %11361
        %11363 = vrot.lane.b32.xlu0 %v11336, 80
        %v11364 = vpop.permute.xlu0 %11363
        %11365 = vrot.lane.b32.xlu0 %v11337, 80
        %v11366 = vpop.permute.xlu0 %11365
        %11367 = vrot.lane.b32.xlu0 %v11338, 80
        %v11368 = vpop.permute.xlu0 %11367
        %11369 = vrot.lane.b32.xlu0 %v11339, 80
        %v11370 = vpop.permute.xlu0 %11369
        %11371 = vrot.lane.b32.xlu0 %v11340, 80
        %v11372 = vpop.permute.xlu0 %11371
        %v11389 = vunpack.c.l.b16 %v10285
        %v11390 = vunpack.c.l.b16 %v10286
        %v11391 = vunpack.c.l.b16 %v10287
        %v11392 = vunpack.c.l.b16 %v10288
        %v11393 = vunpack.c.l.b16 %v10289
        %v11394 = vunpack.c.l.b16 %v10290
        %v11395 = vunpack.c.l.b16 %v10291
        %v11396 = vunpack.c.l.b16 %v10292
        %v11397 = vunpack.c.l.b16 %v10293
        %v11398 = vunpack.c.l.b16 %v10294
        %v11399 = vunpack.c.l.b16 %v10295
        %v11400 = vunpack.c.l.b16 %v10296
        %v11401 = vunpack.c.l.b16 %v10297
        %v11402 = vunpack.c.l.b16 %v10298
        %v11403 = vunpack.c.l.b16 %v10299
        %v11404 = vunpack.c.l.b16 %v10300
        %v11405 = vunpack.c.l.b16 %v10301
        %v11406 = vunpack.c.l.b16 %v10302
        %v11407 = vunpack.c.l.b16 %v10303
        %v11408 = vunpack.c.l.b16 %v10304
        %v11409 = vunpack.c.l.b16 %v10305
        %v11410 = vunpack.c.l.b16 %v10306
        %v11411 = vunpack.c.l.b16 %v10307
        %v11412 = vunpack.c.l.b16 %v10308
        %v11413 = vunpack.c.l.b16 %v10309
        %v11414 = vunpack.c.l.b16 %v10310
        %v11415 = vunpack.c.l.b16 %v10311
        %v11416 = vunpack.c.l.b16 %v10312
        %v11417 = vunpack.c.l.b16 %v10313
        %v11418 = vunpack.c.l.b16 %v10314
        %v11419 = vunpack.c.l.b16 %v10315
        %v11420 = vunpack.c.l.b16 %v10316
        %v11421 = vpack.c.b16 %v11390, %v11389
        %v11422 = vpack.c.b16 %v11392, %v11391
        %v11423 = vpack.c.b16 %v11394, %v11393
        %v11424 = vpack.c.b16 %v11396, %v11395
        %v11425 = vpack.c.b16 %v11398, %v11397
        %v11426 = vpack.c.b16 %v11400, %v11399
        %v11427 = vpack.c.b16 %v11402, %v11401
        %v11428 = vpack.c.b16 %v11404, %v11403
        %v11429 = vpack.c.b16 %v11406, %v11405
        %v11430 = vpack.c.b16 %v11408, %v11407
        %v11431 = vpack.c.b16 %v11410, %v11409
        %v11432 = vpack.c.b16 %v11412, %v11411
        %v11433 = vpack.c.b16 %v11414, %v11413
        %v11434 = vpack.c.b16 %v11416, %v11415
        %v11435 = vpack.c.b16 %v11418, %v11417
        %v11436 = vpack.c.b16 %v11420, %v11419
        %11437 = vrot.lane.b32.xlu0 %v11421, 96
        %v11438 = vpop.permute.xlu0 %11437
        %11439 = vrot.lane.b32.xlu0 %v11422, 96
        %v11440 = vpop.permute.xlu0 %11439
        %11441 = vrot.lane.b32.xlu0 %v11423, 96
        %v11442 = vpop.permute.xlu0 %11441
        %11443 = vrot.lane.b32.xlu0 %v11424, 96
        %v11444 = vpop.permute.xlu0 %11443
        %11445 = vrot.lane.b32.xlu0 %v11425, 96
        %v11446 = vpop.permute.xlu0 %11445
        %11447 = vrot.lane.b32.xlu0 %v11426, 96
        %v11448 = vpop.permute.xlu0 %11447
        %11449 = vrot.lane.b32.xlu0 %v11427, 96
        %v11450 = vpop.permute.xlu0 %11449
        %11451 = vrot.lane.b32.xlu0 %v11428, 96
        %v11452 = vpop.permute.xlu0 %11451
        %11453 = vrot.lane.b32.xlu0 %v11429, 96
        %v11454 = vpop.permute.xlu0 %11453
        %11455 = vrot.lane.b32.xlu0 %v11430, 96
        %v11456 = vpop.permute.xlu0 %11455
        %11457 = vrot.lane.b32.xlu0 %v11431, 96
        %v11458 = vpop.permute.xlu0 %11457
        %11459 = vrot.lane.b32.xlu0 %v11432, 96
        %v11460 = vpop.permute.xlu0 %11459
        %11461 = vrot.lane.b32.xlu0 %v11433, 96
        %v11462 = vpop.permute.xlu0 %11461
        %11463 = vrot.lane.b32.xlu0 %v11434, 96
        %v11464 = vpop.permute.xlu0 %11463
        %11465 = vrot.lane.b32.xlu0 %v11435, 96
        %v11466 = vpop.permute.xlu0 %11465
        %11467 = vrot.lane.b32.xlu0 %v11436, 96
        %v11468 = vpop.permute.xlu0 %11467
        %v11469 = vunpack.c.l.b16 %v10346
        %v11470 = vunpack.c.l.b16 %v10356
        %v11471 = vunpack.c.l.b16 %v10370
        %v11472 = vunpack.c.l.b16 %v10380
        %v11473 = vunpack.c.l.b16 %v10394
        %v11474 = vunpack.c.l.b16 %v10404
        %v11475 = vunpack.c.l.b16 %v10418
        %v11476 = vunpack.c.l.b16 %v10428
        %v11477 = vunpack.c.l.b16 %v10442
        %v11478 = vunpack.c.l.b16 %v10452
        %v11479 = vunpack.c.l.b16 %v10466
        %v11480 = vunpack.c.l.b16 %v10476
        %v11481 = vunpack.c.l.b16 %v10490
        %v11482 = vunpack.c.l.b16 %v10500
        %v11483 = vunpack.c.l.b16 %v10514
        %v11484 = vunpack.c.l.b16 %v10524
        %v11485 = vunpack.c.l.b16 %v10538
        %v11486 = vunpack.c.l.b16 %v10548
        %v11487 = vunpack.c.l.b16 %v10562
        %v11488 = vunpack.c.l.b16 %v10572
        %v11489 = vunpack.c.l.b16 %v10586
        %v11490 = vunpack.c.l.b16 %v10596
        %v11491 = vunpack.c.l.b16 %v10610
        %v11492 = vunpack.c.l.b16 %v10620
        %v11493 = vunpack.c.l.b16 %v10634
        %v11494 = vunpack.c.l.b16 %v10644
        %v11495 = vunpack.c.l.b16 %v10658
        %v11496 = vunpack.c.l.b16 %v10668
        %v11497 = vunpack.c.l.b16 %v10682
        %v11498 = vunpack.c.l.b16 %v10692
        %v11499 = vunpack.c.l.b16 %v10706
        %v11500 = vunpack.c.l.b16 %v10716
        %v11501 = vpack.c.b16 %v11470, %v11469
        %v11502 = vpack.c.b16 %v11472, %v11471
        %v11503 = vpack.c.b16 %v11474, %v11473
        %v11504 = vpack.c.b16 %v11476, %v11475
        %v11505 = vpack.c.b16 %v11478, %v11477
        %v11506 = vpack.c.b16 %v11480, %v11479
        %v11507 = vpack.c.b16 %v11482, %v11481
        %v11508 = vpack.c.b16 %v11484, %v11483
        %v11509 = vpack.c.b16 %v11486, %v11485
        %v11510 = vpack.c.b16 %v11488, %v11487
        %v11511 = vpack.c.b16 %v11490, %v11489
        %v11512 = vpack.c.b16 %v11492, %v11491
        %v11513 = vpack.c.b16 %v11494, %v11493
        %v11514 = vpack.c.b16 %v11496, %v11495
        %v11515 = vpack.c.b16 %v11498, %v11497
        %v11516 = vpack.c.b16 %v11500, %v11499
        %11517 = vrot.lane.b32.xlu0 %v11501, 112
        %v11518 = vpop.permute.xlu0 %11517
        %11519 = vrot.lane.b32.xlu0 %v11502, 112
        %v11520 = vpop.permute.xlu0 %11519
        %11521 = vrot.lane.b32.xlu0 %v11503, 112
        %v11522 = vpop.permute.xlu0 %11521
        %11523 = vrot.lane.b32.xlu0 %v11504, 112
        %v11524 = vpop.permute.xlu0 %11523
        %11525 = vrot.lane.b32.xlu0 %v11505, 112
        %v11526 = vpop.permute.xlu0 %11525
        %11527 = vrot.lane.b32.xlu0 %v11506, 112
        %v11528 = vpop.permute.xlu0 %11527
        %11529 = vrot.lane.b32.xlu0 %v11507, 112
        %v11530 = vpop.permute.xlu0 %11529
        %11531 = vrot.lane.b32.xlu0 %v11508, 112
        %v11532 = vpop.permute.xlu0 %11531
        %11533 = vrot.lane.b32.xlu0 %v11509, 112
        %v11534 = vpop.permute.xlu0 %11533
        %11535 = vrot.lane.b32.xlu0 %v11510, 112
        %v11536 = vpop.permute.xlu0 %11535
        %11537 = vrot.lane.b32.xlu0 %v11511, 112
        %v11538 = vpop.permute.xlu0 %11537
        %11539 = vrot.lane.b32.xlu0 %v11512, 112
        %v11540 = vpop.permute.xlu0 %11539
        %11541 = vrot.lane.b32.xlu0 %v11513, 112
        %v11542 = vpop.permute.xlu0 %11541
        %11543 = vrot.lane.b32.xlu0 %v11514, 112
        %v11544 = vpop.permute.xlu0 %11543
        %11545 = vrot.lane.b32.xlu0 %v11515, 112
        %v11546 = vpop.permute.xlu0 %11545
        %11547 = vrot.lane.b32.xlu0 %v11516, 112
        %v11548 = vpop.permute.xlu0 %11547
        %v11549 = vunpack.c.l.b16 %v10784
        %v11550 = vunpack.c.l.b16 %v10787
        %v11551 = vunpack.c.l.b16 %v10791
        %v11552 = vunpack.c.l.b16 %v10794
        %v11553 = vunpack.c.l.b16 %v10798
        %v11554 = vunpack.c.l.b16 %v10801
        %v11555 = vunpack.c.l.b16 %v10805
        %v11556 = vunpack.c.l.b16 %v10808
        %v11557 = vunpack.c.l.b16 %v10812
        %v11558 = vunpack.c.l.b16 %v10815
        %v11559 = vunpack.c.l.b16 %v10819
        %v11560 = vunpack.c.l.b16 %v10822
        %v11561 = vunpack.c.l.b16 %v10826
        %v11562 = vunpack.c.l.b16 %v10829
        %v11563 = vunpack.c.l.b16 %v10833
        %v11564 = vunpack.c.l.b16 %v10836
        %v11565 = vunpack.c.l.b16 %v10840
        %v11566 = vunpack.c.l.b16 %v10843
        %v11567 = vunpack.c.l.b16 %v10847
        %v11568 = vunpack.c.l.b16 %v10850
        %v11569 = vunpack.c.l.b16 %v10854
        %v11570 = vunpack.c.l.b16 %v10857
        %v11571 = vunpack.c.l.b16 %v10861
        %v11572 = vunpack.c.l.b16 %v10864
        %v11573 = vunpack.c.l.b16 %v10868
        %v11574 = vunpack.c.l.b16 %v10871
        %v11575 = vunpack.c.l.b16 %v10875
        %v11576 = vunpack.c.l.b16 %v10878
        %v11577 = vunpack.c.l.b16 %v10882
        %v11578 = vunpack.c.l.b16 %v10885
        %v11579 = vunpack.c.l.b16 %v10889
        %v11580 = vunpack.c.l.b16 %v10892
        %v11581 = vpack.c.b16 %v11550, %v11549
        %v11582 = vpack.c.b16 %v11552, %v11551
        %v11583 = vpack.c.b16 %v11554, %v11553
        %v11584 = vpack.c.b16 %v11556, %v11555
        %v11585 = vpack.c.b16 %v11558, %v11557
        %v11586 = vpack.c.b16 %v11560, %v11559
        %v11587 = vpack.c.b16 %v11562, %v11561
        %v11588 = vpack.c.b16 %v11564, %v11563
        %v11589 = vpack.c.b16 %v11566, %v11565
        %v11590 = vpack.c.b16 %v11568, %v11567
        %v11591 = vpack.c.b16 %v11570, %v11569
        %v11592 = vpack.c.b16 %v11572, %v11571
        %v11593 = vpack.c.b16 %v11574, %v11573
        %v11594 = vpack.c.b16 %v11576, %v11575
        %v11595 = vpack.c.b16 %v11578, %v11577
        %v11596 = vpack.c.b16 %v11580, %v11579
        %v11599 = vsel %vm3946, %v10941, %v11006
        %v11602 = vsel %vm3946, %v10942, %v11008
        %v11605 = vsel %vm3946, %v10943, %v11010
        %v11608 = vsel %vm3946, %v10944, %v11012
        %v11611 = vsel %vm3946, %v10945, %v11014
        %v11614 = vsel %vm3946, %v10946, %v11016
        %v11617 = vsel %vm3946, %v10947, %v11018
        %v11620 = vsel %vm3946, %v10948, %v11020
        %v11623 = vsel %vm3946, %v10949, %v11022
        %v11626 = vsel %vm3946, %v10950, %v11024
        %v11629 = vsel %vm3946, %v10951, %v11026
        %v11632 = vsel %vm3946, %v10952, %v11028
        %v11635 = vsel %vm3946, %v10953, %v11030
        %v11638 = vsel %vm3946, %v10954, %v11032
        %v11641 = vsel %vm3946, %v10955, %v11034
        %v11644 = vsel %vm3946, %v10956, %v11036
        %v11646 = vsel %vm3995, %v11599, %v11086
        %v11648 = vsel %vm3995, %v11602, %v11088
        %v11650 = vsel %vm3995, %v11605, %v11090
        %v11652 = vsel %vm3995, %v11608, %v11092
        %v11654 = vsel %vm3995, %v11611, %v11094
        %v11656 = vsel %vm3995, %v11614, %v11096
        %v11658 = vsel %vm3995, %v11617, %v11098
        %v11660 = vsel %vm3995, %v11620, %v11100
        %v11662 = vsel %vm3995, %v11623, %v11102
        %v11664 = vsel %vm3995, %v11626, %v11104
        %v11666 = vsel %vm3995, %v11629, %v11106
        %v11668 = vsel %vm3995, %v11632, %v11108
        %v11670 = vsel %vm3995, %v11635, %v11110
        %v11672 = vsel %vm3995, %v11638, %v11112
        %v11674 = vsel %vm3995, %v11641, %v11114
        %v11676 = vsel %vm3995, %v11644, %v11116
        %v11678 = vsel %vm4028, %v11646, %v11182
        %v11680 = vsel %vm4028, %v11648, %v11184
        %v11682 = vsel %vm4028, %v11650, %v11186
        %v11684 = vsel %vm4028, %v11652, %v11188
        %v11686 = vsel %vm4028, %v11654, %v11190
        %v11688 = vsel %vm4028, %v11656, %v11192
        %v11690 = vsel %vm4028, %v11658, %v11194
        %v11692 = vsel %vm4028, %v11660, %v11196
        %v11694 = vsel %vm4028, %v11662, %v11198
        %v11696 = vsel %vm4028, %v11664, %v11200
        %v11698 = vsel %vm4028, %v11666, %v11202
        %v11700 = vsel %vm4028, %v11668, %v11204
        %v11702 = vsel %vm4028, %v11670, %v11206
        %v11704 = vsel %vm4028, %v11672, %v11208
        %v11706 = vsel %vm4028, %v11674, %v11210
        %v11708 = vsel %vm4028, %v11676, %v11212
        %v11710 = vsel %vm4061, %v11678, %v11262
        %v11712 = vsel %vm4061, %v11680, %v11264
        %v11714 = vsel %vm4061, %v11682, %v11266
        %v11716 = vsel %vm4061, %v11684, %v11268
        %v11718 = vsel %vm4061, %v11686, %v11270
        %v11720 = vsel %vm4061, %v11688, %v11272
        %v11722 = vsel %vm4061, %v11690, %v11274
        %v11724 = vsel %vm4061, %v11692, %v11276
        %v11726 = vsel %vm4061, %v11694, %v11278
        %v11728 = vsel %vm4061, %v11696, %v11280
        %v11730 = vsel %vm4061, %v11698, %v11282
        %v11732 = vsel %vm4061, %v11700, %v11284
        %v11734 = vsel %vm4061, %v11702, %v11286
        %v11736 = vsel %vm4061, %v11704, %v11288
        %v11738 = vsel %vm4061, %v11706, %v11290
        %v11740 = vsel %vm4061, %v11708, %v11292
        %v11742 = vsel %vm4094, %v11710, %v11342
        %v11744 = vsel %vm4094, %v11712, %v11344
        %v11746 = vsel %vm4094, %v11714, %v11346
        %v11748 = vsel %vm4094, %v11716, %v11348
        %v11750 = vsel %vm4094, %v11718, %v11350
        %v11752 = vsel %vm4094, %v11720, %v11352
        %v11754 = vsel %vm4094, %v11722, %v11354
        %v11756 = vsel %vm4094, %v11724, %v11356
        %v11758 = vsel %vm4094, %v11726, %v11358
        %v11760 = vsel %vm4094, %v11728, %v11360
        %v11762 = vsel %vm4094, %v11730, %v11362
        %v11764 = vsel %vm4094, %v11732, %v11364
        %v11766 = vsel %vm4094, %v11734, %v11366
        %v11768 = vsel %vm4094, %v11736, %v11368
        %v11770 = vsel %vm4094, %v11738, %v11370
        %v11772 = vsel %vm4094, %v11740, %v11372
        %v11774 = vsel %vm4127, %v11742, %v11438
        %v11776 = vsel %vm4127, %v11744, %v11440
        %v11778 = vsel %vm4127, %v11746, %v11442
        %v11780 = vsel %vm4127, %v11748, %v11444
        %v11782 = vsel %vm4127, %v11750, %v11446
        %v11784 = vsel %vm4127, %v11752, %v11448
        %v11786 = vsel %vm4127, %v11754, %v11450
        %v11788 = vsel %vm4127, %v11756, %v11452
        %v11790 = vsel %vm4127, %v11758, %v11454
        %v11792 = vsel %vm4127, %v11760, %v11456
        %v11794 = vsel %vm4127, %v11762, %v11458
        %v11796 = vsel %vm4127, %v11764, %v11460
        %v11798 = vsel %vm4127, %v11766, %v11462
        %v11800 = vsel %vm4127, %v11768, %v11464
        %v11802 = vsel %vm4127, %v11770, %v11466
        %v11804 = vsel %vm4127, %v11772, %v11468
        %v11806 = vsel %vm4160, %v11774, %v11518
        %v11809 = vsel %vm4160, %v11776, %v11520
        %v11812 = vsel %vm4160, %v11778, %v11522
        %v11815 = vsel %vm4160, %v11780, %v11524
        %v11818 = vsel %vm4160, %v11782, %v11526
        %v11821 = vsel %vm4160, %v11784, %v11528
        %v11824 = vsel %vm4160, %v11786, %v11530
        %v11827 = vsel %vm4160, %v11788, %v11532
        %v11830 = vsel %vm4160, %v11790, %v11534
        %v11833 = vsel %vm4160, %v11792, %v11536
        %v11836 = vsel %vm4160, %v11794, %v11538
        %v11839 = vsel %vm4160, %v11796, %v11540
        %v11842 = vsel %vm4160, %v11798, %v11542
        %v11845 = vsel %vm4160, %v11800, %v11544
        %v11848 = vsel %vm4160, %v11802, %v11546
        %v11851 = vsel %vm4160, %v11804, %v11548
        %v11871 = vunpack.c.l.b16 %v798
        %v11872 = vunpack.c.l.b16 %v799
        %v11873 = vunpack.c.l.b16 %v800
        %v11874 = vunpack.c.l.b16 %v801
        %v11875 = vunpack.c.l.b16 %v802
        %v11876 = vunpack.c.l.b16 %v803
        %v11877 = vunpack.c.l.b16 %v804
        %v11878 = vunpack.c.l.b16 %v805
        %v11879 = vunpack.c.l.b16 %v806
        %v11880 = vunpack.c.l.b16 %v807
        %v11881 = vunpack.c.l.b16 %v808
        %v11882 = vunpack.c.l.b16 %v809
        %v11883 = vunpack.c.l.b16 %v810
        %v11884 = vunpack.c.l.b16 %v811
        %v11885 = vunpack.c.l.b16 %v812
        %v11886 = vunpack.c.l.b16 %v813
        %v11887 = vunpack.c.l.b16 %v814
        %v11888 = vunpack.c.l.b16 %v815
        %v11889 = vpack.c.b16 %v11872, %v11871
        %v11890 = vpack.c.b16 %v11874, %v11873
        %v11891 = vpack.c.b16 %v11876, %v11875
        %v11892 = vpack.c.b16 %v11878, %v11877
        %v11893 = vpack.c.b16 %v11880, %v11879
        %v11894 = vpack.c.b16 %v11882, %v11881
        %v11895 = vpack.c.b16 %v11884, %v11883
        %v11896 = vpack.c.b16 %v11886, %v11885
        %v11897 = vpack.c.b16 %v11888, %v11887
        %v11908 = vsel %vm3946, %v11581, 0
        %v11911 = vsel %vm3946, %v11582, 0
        %v11914 = vsel %vm3946, %v11583, 0
        %v11917 = vsel %vm3946, %v11584, 0
        %v11920 = vsel %vm3946, %v11585, 0
        %v11923 = vsel %vm3946, %v11586, 0
        %v11926 = vsel %vm3946, %v11587, 0
        %v11929 = vsel %vm3946, %v11588, 0
        %v11932 = vsel %vm3946, %v11589, 0
        %v11935 = vsel %vm3946, %v11590, 0
        %v11938 = vsel %vm3946, %v11591, 0
        %v11941 = vsel %vm3946, %v11592, 0
        %v11944 = vsel %vm3946, %v11593, 0
        %v11947 = vsel %vm3946, %v11594, 0
        %v11950 = vsel %vm3946, %v11595, 0
        %v11953 = vsel %vm3946, %v11596, 0
        %11955 = vmatprep.subr.bf16.mxu0 0
        %11956 = vmatpush1.bf16.msra.mxu0 %v11889
        %11957 = vmatprep.subr.bf16.mxu0 0
        %11958 = vmatpush1.bf16.msra.mxu0 %v11890
        %11959 = vmatprep.subr.bf16.mxu0 0
        %11960 = vmatpush1.bf16.msra.mxu0 %v11891
        %11961 = vmatprep.subr.bf16.mxu0 0
        %11962 = vmatpush1.bf16.msra.mxu0 %v11892
        %11963 = vmatprep.subr.bf16.mxu0 0
        %11964 = vmatpush1.bf16.msra.mxu0 %v11893
        %11965 = vmatprep.subr.bf16.mxu0 0
        %11966 = vmatpush1.bf16.msra.mxu0 %v11894
        %11967 = vmatprep.subr.bf16.mxu0 0
        %11968 = vmatpush1.bf16.msra.mxu0 %v11895
        %11969 = vmatprep.subr.bf16.mxu0 0
        %11970 = vmatpush1.bf16.msra.mxu0 %v11896
        %11971 = vmatprep.subr.bf16.mxu0 0
        %11972 = vmatpush1.bf16.msra.mxu0 %v11897
        %11973 = vmatprep.subr.bf16.mxu0 0
        %11974 = vmatpush1.bf16.msra.mxu0 0
        %11975 = vmatprep.subr.bf16.mxu0 0
        %11976 = vmatpush1.bf16.msra.mxu0 0
        %11977 = vmatprep.subr.bf16.mxu0 0
        %11978 = vmatpush1.bf16.msra.mxu0 0
        %11979 = vmatprep.subr.bf16.mxu0 0
        %11980 = vmatpush1.bf16.msra.mxu0 0
        %11981 = vmatprep.subr.bf16.mxu0 0
        %11982 = vmatpush1.bf16.msra.mxu0 0
        %11983 = vmatprep.subr.bf16.mxu0 0
        %11984 = vmatpush1.bf16.msra.mxu0 0
        %11985 = vmatprep.subr.bf16.mxu0 0
        %11986 = vmatpush1.bf16.msra.mxu0 0
        %11987 = vmatprep.mubr.bf16.mxu0 %v11908
        %11988 = vmatmul.mubr.bf16.gmra.mrb[0].mxu0 %v11806
        %v11989 = vpop.f32.mrb[0].mxu0
        %v11990 = vadd.f32 0.0, %v11989
        %v11991 = vpop.f32.mrb[0].mxu0
        %v11992 = vpop.f32.mrb[0].mxu0
        %v11993 = vadd.f32 0.0, %v11992
        %v11994 = vpop.f32.mrb[0].mxu0
        %11995 = vmatprep.mubr.bf16.mxu0 %v11911
        %11996 = vmatmul.mubr.bf16.gmra.mrb[0].mxu0 %v11809
        %v11997 = vpop.f32.mrb[0].mxu0
        %v11998 = vadd.f32 0.0, %v11997
        %v11999 = vpop.f32.mrb[0].mxu0
        %v12000 = vpop.f32.mrb[0].mxu0
        %v12001 = vadd.f32 0.0, %v12000
        %v12002 = vpop.f32.mrb[0].mxu0
        %12003 = vmatprep.mubr.bf16.mxu0 %v11914
        %12004 = vmatmul.mubr.bf16.gmra.mrb[0].mxu0 %v11812
        %v12005 = vpop.f32.mrb[0].mxu0
        %v12006 = vadd.f32 0.0, %v12005
        %v12007 = vpop.f32.mrb[0].mxu0
        %v12008 = vpop.f32.mrb[0].mxu0
        %v12009 = vadd.f32 0.0, %v12008
        %v12010 = vpop.f32.mrb[0].mxu0
        %12011 = vmatprep.mubr.bf16.mxu0 %v11917
        %12012 = vmatmul.mubr.bf16.gmra.mrb[0].mxu0 %v11815
        %v12013 = vpop.f32.mrb[0].mxu0
        %v12014 = vadd.f32 0.0, %v12013
        %v12015 = vpop.f32.mrb[0].mxu0
        %v12016 = vpop.f32.mrb[0].mxu0
        %v12017 = vadd.f32 0.0, %v12016
        %v12018 = vpop.f32.mrb[0].mxu0
        %12019 = vmatprep.mubr.bf16.mxu0 %v11920
        %12020 = vmatmul.mubr.bf16.gmra.mrb[0].mxu0 %v11818
        %v12021 = vpop.f32.mrb[0].mxu0
        %v12022 = vadd.f32 0.0, %v12021
        %v12023 = vpop.f32.mrb[0].mxu0
        %v12024 = vpop.f32.mrb[0].mxu0
        %v12025 = vadd.f32 0.0, %v12024
        %v12026 = vpop.f32.mrb[0].mxu0
        %12027 = vmatprep.mubr.bf16.mxu0 %v11923
        %12028 = vmatmul.mubr.bf16.gmra.mrb[0].mxu0 %v11821
        %v12029 = vpop.f32.mrb[0].mxu0
        %v12030 = vadd.f32 0.0, %v12029
        %v12031 = vpop.f32.mrb[0].mxu0
        %v12032 = vpop.f32.mrb[0].mxu0
        %v12033 = vadd.f32 0.0, %v12032
        %v12034 = vpop.f32.mrb[0].mxu0
        %12035 = vmatprep.mubr.bf16.mxu0 %v11926
        %12036 = vmatmul.mubr.bf16.gmra.mrb[0].mxu0 %v11824
        %v12037 = vpop.f32.mrb[0].mxu0
        %v12038 = vadd.f32 0.0, %v12037
        %v12039 = vpop.f32.mrb[0].mxu0
        %v12040 = vpop.f32.mrb[0].mxu0
        %v12041 = vadd.f32 0.0, %v12040
        %v12042 = vpop.f32.mrb[0].mxu0
        %12043 = vmatprep.mubr.bf16.mxu0 %v11929
        %12044 = vmatmul.mubr.bf16.gmra.mrb[0].mxu0 %v11827
        %v12045 = vpop.f32.mrb[0].mxu0
        %v12046 = vadd.f32 0.0, %v12045
        %v12047 = vpop.f32.mrb[0].mxu0
        %v12048 = vpop.f32.mrb[0].mxu0
        %v12049 = vadd.f32 0.0, %v12048
        %v12050 = vpop.f32.mrb[0].mxu0
        %12051 = vmatprep.mubr.bf16.mxu0 %v11932
        %12052 = vmatmul.mubr.bf16.gmra.mrb[0].mxu0 %v11830
        %v12053 = vpop.f32.mrb[0].mxu0
        %v12054 = vadd.f32 0.0, %v12053
        %v12055 = vpop.f32.mrb[0].mxu0
        %v12056 = vpop.f32.mrb[0].mxu0
        %v12057 = vadd.f32 0.0, %v12056
        %v12058 = vpop.f32.mrb[0].mxu0
        %12059 = vmatprep.mubr.bf16.mxu0 %v11935
        %12060 = vmatmul.mubr.bf16.gmra.mrb[0].mxu0 %v11833
        %v12061 = vpop.f32.mrb[0].mxu0
        %v12062 = vadd.f32 0.0, %v12061
        %v12063 = vpop.f32.mrb[0].mxu0
        %v12064 = vpop.f32.mrb[0].mxu0
        %v12065 = vadd.f32 0.0, %v12064
        %v12066 = vpop.f32.mrb[0].mxu0
        %12067 = vmatprep.mubr.bf16.mxu0 %v11938
        %12068 = vmatmul.mubr.bf16.gmra.mrb[0].mxu0 %v11836
        %v12069 = vpop.f32.mrb[0].mxu0
        %v12070 = vadd.f32 0.0, %v12069
        %v12071 = vpop.f32.mrb[0].mxu0
        %v12072 = vpop.f32.mrb[0].mxu0
        %v12073 = vadd.f32 0.0, %v12072
        %v12074 = vpop.f32.mrb[0].mxu0
        %12075 = vmatprep.mubr.bf16.mxu0 %v11941
        %12076 = vmatmul.mubr.bf16.gmra.mrb[0].mxu0 %v11839
        %v12077 = vpop.f32.mrb[0].mxu0
        %v12078 = vadd.f32 0.0, %v12077
        %v12079 = vpop.f32.mrb[0].mxu0
        %v12080 = vpop.f32.mrb[0].mxu0
        %v12081 = vadd.f32 0.0, %v12080
        %v12082 = vpop.f32.mrb[0].mxu0
        %12083 = vmatprep.mubr.bf16.mxu0 %v11944
        %12084 = vmatmul.mubr.bf16.gmra.mrb[0].mxu0 %v11842
        %v12085 = vpop.f32.mrb[0].mxu0
        %v12086 = vadd.f32 0.0, %v12085
        %v12087 = vpop.f32.mrb[0].mxu0
        %v12088 = vpop.f32.mrb[0].mxu0
        %v12089 = vadd.f32 0.0, %v12088
        %v12090 = vpop.f32.mrb[0].mxu0
        %12091 = vmatprep.mubr.bf16.mxu0 %v11947
        %12092 = vmatmul.mubr.bf16.gmra.mrb[0].mxu0 %v11845
        %v12093 = vpop.f32.mrb[0].mxu0
        %v12094 = vadd.f32 0.0, %v12093
        %v12095 = vpop.f32.mrb[0].mxu0
        %v12096 = vpop.f32.mrb[0].mxu0
        %v12097 = vadd.f32 0.0, %v12096
        %v12098 = vpop.f32.mrb[0].mxu0
        %12099 = vmatprep.mubr.bf16.mxu0 %v11950
        %12100 = vmatmul.mubr.bf16.gmra.mrb[0].mxu0 %v11848
        %v12101 = vpop.f32.mrb[0].mxu0
        %v12102 = vadd.f32 0.0, %v12101
        %v12103 = vpop.f32.mrb[0].mxu0
        %v12104 = vpop.f32.mrb[0].mxu0
        %v12105 = vadd.f32 0.0, %v12104
        %v12106 = vpop.f32.mrb[0].mxu0
        %12107 = vmatprep.mubr.bf16.mxu0 %v11953
        %12108 = vmatmul.mubr.bf16.gmra.mrb[0].mxu0 %v11851
        %v12109 = vpop.f32.mrb[0].mxu0
        %v12110 = vadd.f32 0.0, %v12109
        %v12111 = vpop.f32.mrb[0].mxu0
        %v12112 = vpop.f32.mrb[0].mxu0
        %v12113 = vadd.f32 0.0, %v12112
        %v12114 = vpop.f32.mrb[0].mxu0
        %12115 = vdwg.mxu0
        %v12116 = vlaneseq
        %v12117 = vshrl.u32 %v12116, 7
        %v12118 = vsub.s32 2, %v12117
        %v12119 = vrot.slane %v816, %v12118
        %v12120 = vmul.f32 %v11990, %v12119
        %v12121 = vmul.f32 %v11993, %v12119
        %v12122 = vmul.f32 %v11998, %v12119
        %v12123 = vmul.f32 %v12001, %v12119
        %v12124 = vmul.f32 %v12006, %v12119
        %v12125 = vmul.f32 %v12009, %v12119
        %v12126 = vmul.f32 %v12014, %v12119
        %v12127 = vmul.f32 %v12017, %v12119
        %v12128 = vmul.f32 %v12022, %v12119
        %v12129 = vmul.f32 %v12025, %v12119
        %v12130 = vmul.f32 %v12030, %v12119
        %v12131 = vmul.f32 %v12033, %v12119
        %v12132 = vmul.f32 %v12038, %v12119
        %v12133 = vmul.f32 %v12041, %v12119
        %v12134 = vmul.f32 %v12046, %v12119
        %v12135 = vmul.f32 %v12049, %v12119
        %v12136 = vmul.f32 %v12054, %v12119
        %v12137 = vmul.f32 %v12057, %v12119
        %v12138 = vmul.f32 %v12062, %v12119
        %v12139 = vmul.f32 %v12065, %v12119
        %v12140 = vmul.f32 %v12070, %v12119
        %v12141 = vmul.f32 %v12073, %v12119
        %v12142 = vmul.f32 %v12078, %v12119
        %v12143 = vmul.f32 %v12081, %v12119
        %v12144 = vmul.f32 %v12086, %v12119
        %v12145 = vmul.f32 %v12089, %v12119
        %v12146 = vmul.f32 %v12094, %v12119
        %v12147 = vmul.f32 %v12097, %v12119
        %v12148 = vmul.f32 %v12102, %v12119
        %v12149 = vmul.f32 %v12105, %v12119
        %v12150 = vmul.f32 %v12110, %v12119
        %v12151 = vmul.f32 %v12113, %v12119
        %v12152 = vlaneseq
        %v12153 = vshrl.u32 %v12152, 7
        %v12154 = vsub.s32 2, %v12153
        %v12155 = vrot.slane %v817, %v12154
        %v12156 = vadd.f32 %v12120, %v12155
        %v12157 = vadd.f32 %v12121, %v12155
        %v12158 = vadd.f32 %v12122, %v12155
        %v12159 = vadd.f32 %v12123, %v12155
        %v12160 = vadd.f32 %v12124, %v12155
        %v12161 = vadd.f32 %v12125, %v12155
        %v12162 = vadd.f32 %v12126, %v12155
        %v12163 = vadd.f32 %v12127, %v12155
        %v12164 = vadd.f32 %v12128, %v12155
        %v12165 = vadd.f32 %v12129, %v12155
        %v12166 = vadd.f32 %v12130, %v12155
        %v12167 = vadd.f32 %v12131, %v12155
        %v12168 = vadd.f32 %v12132, %v12155
        %v12169 = vadd.f32 %v12133, %v12155
        %v12170 = vadd.f32 %v12134, %v12155
        %v12171 = vadd.f32 %v12135, %v12155
        %v12172 = vadd.f32 %v12136, %v12155
        %v12173 = vadd.f32 %v12137, %v12155
        %v12174 = vadd.f32 %v12138, %v12155
        %v12175 = vadd.f32 %v12139, %v12155
        %v12176 = vadd.f32 %v12140, %v12155
        %v12177 = vadd.f32 %v12141, %v12155
        %v12178 = vadd.f32 %v12142, %v12155
        %v12179 = vadd.f32 %v12143, %v12155
        %v12180 = vadd.f32 %v12144, %v12155
        %v12181 = vadd.f32 %v12145, %v12155
        %v12182 = vadd.f32 %v12146, %v12155
        %v12183 = vadd.f32 %v12147, %v12155
        %v12184 = vadd.f32 %v12148, %v12155
        %v12185 = vadd.f32 %v12149, %v12155
        %v12186 = vadd.f32 %v12150, %v12155
        %v12187 = vadd.f32 %v12151, %v12155
        %v12188 = vmax.f32 %v12156, 0.0
        %v12189 = vmax.f32 %v12157, 0.0
        %v12190 = vmax.f32 %v12158, 0.0
        %v12191 = vmax.f32 %v12159, 0.0
        %v12192 = vmax.f32 %v12160, 0.0
        %v12193 = vmax.f32 %v12161, 0.0
        %v12194 = vmax.f32 %v12162, 0.0
        %v12195 = vmax.f32 %v12163, 0.0
        %v12196 = vmax.f32 %v12164, 0.0
        %v12197 = vmax.f32 %v12165, 0.0
        %v12198 = vmax.f32 %v12166, 0.0
        %v12199 = vmax.f32 %v12167, 0.0
        %v12200 = vmax.f32 %v12168, 0.0
        %v12201 = vmax.f32 %v12169, 0.0
        %v12202 = vmax.f32 %v12170, 0.0
        %v12203 = vmax.f32 %v12171, 0.0
        %v12204 = vmax.f32 %v12172, 0.0
        %v12205 = vmax.f32 %v12173, 0.0
        %v12206 = vmax.f32 %v12174, 0.0
        %v12207 = vmax.f32 %v12175, 0.0
        %v12208 = vmax.f32 %v12176, 0.0
        %v12209 = vmax.f32 %v12177, 0.0
        %v12210 = vmax.f32 %v12178, 0.0
        %v12211 = vmax.f32 %v12179, 0.0
        %v12212 = vmax.f32 %v12180, 0.0
        %v12213 = vmax.f32 %v12181, 0.0
        %v12214 = vmax.f32 %v12182, 0.0
        %v12215 = vmax.f32 %v12183, 0.0
        %v12216 = vmax.f32 %v12184, 0.0
        %v12217 = vmax.f32 %v12185, 0.0
        %v12218 = vmax.f32 %v12186, 0.0
        %v12219 = vmax.f32 %v12187, 0.0
        %12252 = vrot.lane.b32.xlu0 %v8382, 16
        %v12253 = vpop.permute.xlu0 %12252
        %12254 = vrot.lane.b32.xlu0 %v8383, 16
        %v12255 = vpop.permute.xlu0 %12254
        %12256 = vrot.lane.b32.xlu0 %v8384, 16
        %v12257 = vpop.permute.xlu0 %12256
        %12258 = vrot.lane.b32.xlu0 %v8385, 16
        %v12259 = vpop.permute.xlu0 %12258
        %12260 = vrot.lane.b32.xlu0 %v8386, 16
        %v12261 = vpop.permute.xlu0 %12260
        %12262 = vrot.lane.b32.xlu0 %v8387, 16
        %v12263 = vpop.permute.xlu0 %12262
        %12264 = vrot.lane.b32.xlu0 %v8388, 16
        %v12265 = vpop.permute.xlu0 %12264
        %12266 = vrot.lane.b32.xlu0 %v8389, 16
        %v12267 = vpop.permute.xlu0 %12266
        %12268 = vrot.lane.b32.xlu0 %v8390, 16
        %v12269 = vpop.permute.xlu0 %12268
        %12270 = vrot.lane.b32.xlu0 %v8391, 16
        %v12271 = vpop.permute.xlu0 %12270
        %12272 = vrot.lane.b32.xlu0 %v8392, 16
        %v12273 = vpop.permute.xlu0 %12272
        %12274 = vrot.lane.b32.xlu0 %v8393, 16
        %v12275 = vpop.permute.xlu0 %12274
        %12276 = vrot.lane.b32.xlu0 %v8394, 16
        %v12277 = vpop.permute.xlu0 %12276
        %12278 = vrot.lane.b32.xlu0 %v8395, 16
        %v12279 = vpop.permute.xlu0 %12278
        %12280 = vrot.lane.b32.xlu0 %v8396, 16
        %v12281 = vpop.permute.xlu0 %12280
        %12282 = vrot.lane.b32.xlu0 %v8397, 16
        %v12283 = vpop.permute.xlu0 %12282
        %12284 = vrot.lane.b32.xlu0 %v8398, 16
        %v12285 = vpop.permute.xlu0 %12284
        %12286 = vrot.lane.b32.xlu0 %v8399, 16
        %v12287 = vpop.permute.xlu0 %12286
        %12288 = vrot.lane.b32.xlu0 %v8400, 16
        %v12289 = vpop.permute.xlu0 %12288
        %12290 = vrot.lane.b32.xlu0 %v8401, 16
        %v12291 = vpop.permute.xlu0 %12290
        %12292 = vrot.lane.b32.xlu0 %v8402, 16
        %v12293 = vpop.permute.xlu0 %12292
        %12294 = vrot.lane.b32.xlu0 %v8403, 16
        %v12295 = vpop.permute.xlu0 %12294
        %12296 = vrot.lane.b32.xlu0 %v8404, 16
        %v12297 = vpop.permute.xlu0 %12296
        %12298 = vrot.lane.b32.xlu0 %v8405, 16
        %v12299 = vpop.permute.xlu0 %12298
        %12300 = vrot.lane.b32.xlu0 %v8406, 16
        %v12301 = vpop.permute.xlu0 %12300
        %12302 = vrot.lane.b32.xlu0 %v8407, 16
        %v12303 = vpop.permute.xlu0 %12302
        %12304 = vrot.lane.b32.xlu0 %v8408, 16
        %v12305 = vpop.permute.xlu0 %12304
        %12306 = vrot.lane.b32.xlu0 %v8409, 16
        %v12307 = vpop.permute.xlu0 %12306
        %12308 = vrot.lane.b32.xlu0 %v8410, 16
        %v12309 = vpop.permute.xlu0 %12308
        %12310 = vrot.lane.b32.xlu0 %v8411, 16
        %v12311 = vpop.permute.xlu0 %12310
        %12312 = vrot.lane.b32.xlu0 %v8412, 16
        %v12313 = vpop.permute.xlu0 %12312
        %12314 = vrot.lane.b32.xlu0 %v8413, 16
        %v12315 = vpop.permute.xlu0 %12314
        %12380 = vrot.lane.b32.xlu0 %v12188, 32
        %v12381 = vpop.permute.xlu0 %12380
        %12382 = vrot.lane.b32.xlu0 %v12189, 32
        %v12383 = vpop.permute.xlu0 %12382
        %12384 = vrot.lane.b32.xlu0 %v12190, 32
        %v12385 = vpop.permute.xlu0 %12384
        %12386 = vrot.lane.b32.xlu0 %v12191, 32
        %v12387 = vpop.permute.xlu0 %12386
        %12388 = vrot.lane.b32.xlu0 %v12192, 32
        %v12389 = vpop.permute.xlu0 %12388
        %12390 = vrot.lane.b32.xlu0 %v12193, 32
        %v12391 = vpop.permute.xlu0 %12390
        %12392 = vrot.lane.b32.xlu0 %v12194, 32
        %v12393 = vpop.permute.xlu0 %12392
        %12394 = vrot.lane.b32.xlu0 %v12195, 32
        %v12395 = vpop.permute.xlu0 %12394
        %12396 = vrot.lane.b32.xlu0 %v12196, 32
        %v12397 = vpop.permute.xlu0 %12396
        %12398 = vrot.lane.b32.xlu0 %v12197, 32
        %v12399 = vpop.permute.xlu0 %12398
        %12400 = vrot.lane.b32.xlu0 %v12198, 32
        %v12401 = vpop.permute.xlu0 %12400
        %12402 = vrot.lane.b32.xlu0 %v12199, 32
        %v12403 = vpop.permute.xlu0 %12402
        %12404 = vrot.lane.b32.xlu0 %v12200, 32
        %v12405 = vpop.permute.xlu0 %12404
        %12406 = vrot.lane.b32.xlu0 %v12201, 32
        %v12407 = vpop.permute.xlu0 %12406
        %12408 = vrot.lane.b32.xlu0 %v12202, 32
        %v12409 = vpop.permute.xlu0 %12408
        %12410 = vrot.lane.b32.xlu0 %v12203, 32
        %v12411 = vpop.permute.xlu0 %12410
        %12412 = vrot.lane.b32.xlu0 %v12204, 32
        %v12413 = vpop.permute.xlu0 %12412
        %12414 = vrot.lane.b32.xlu0 %v12205, 32
        %v12415 = vpop.permute.xlu0 %12414
        %12416 = vrot.lane.b32.xlu0 %v12206, 32
        %v12417 = vpop.permute.xlu0 %12416
        %12418 = vrot.lane.b32.xlu0 %v12207, 32
        %v12419 = vpop.permute.xlu0 %12418
        %12420 = vrot.lane.b32.xlu0 %v12208, 32
        %v12421 = vpop.permute.xlu0 %12420
        %12422 = vrot.lane.b32.xlu0 %v12209, 32
        %v12423 = vpop.permute.xlu0 %12422
        %12424 = vrot.lane.b32.xlu0 %v12210, 32
        %v12425 = vpop.permute.xlu0 %12424
        %12426 = vrot.lane.b32.xlu0 %v12211, 32
        %v12427 = vpop.permute.xlu0 %12426
        %12428 = vrot.lane.b32.xlu0 %v12212, 32
        %v12429 = vpop.permute.xlu0 %12428
        %12430 = vrot.lane.b32.xlu0 %v12213, 32
        %v12431 = vpop.permute.xlu0 %12430
        %12432 = vrot.lane.b32.xlu0 %v12214, 32
        %v12433 = vpop.permute.xlu0 %12432
        %12434 = vrot.lane.b32.xlu0 %v12215, 32
        %v12435 = vpop.permute.xlu0 %12434
        %12436 = vrot.lane.b32.xlu0 %v12216, 32
        %v12437 = vpop.permute.xlu0 %12436
        %12438 = vrot.lane.b32.xlu0 %v12217, 32
        %v12439 = vpop.permute.xlu0 %12438
        %12440 = vrot.lane.b32.xlu0 %v12218, 32
        %v12441 = vpop.permute.xlu0 %12440
        %12442 = vrot.lane.b32.xlu0 %v12219, 32
        %v12443 = vpop.permute.xlu0 %12442
        %v12476 = vsel %vm3946, %v4544, %v12253
        %v12477 = vsel %vm3946, %v4545, %v12255
        %v12478 = vsel %vm3946, %v4546, %v12257
        %v12479 = vsel %vm3946, %v4547, %v12259
        %v12480 = vsel %vm3946, %v4548, %v12261
        %v12481 = vsel %vm3946, %v4549, %v12263
        %v12482 = vsel %vm3946, %v4550, %v12265
        %v12483 = vsel %vm3946, %v4551, %v12267
        %v12484 = vsel %vm3946, %v4552, %v12269
        %v12485 = vsel %vm3946, %v4553, %v12271
        %v12486 = vsel %vm3946, %v4554, %v12273
        %v12487 = vsel %vm3946, %v4555, %v12275
        %v12488 = vsel %vm3946, %v4556, %v12277
        %v12489 = vsel %vm3946, %v4557, %v12279
        %v12490 = vsel %vm3946, %v4558, %v12281
        %v12491 = vsel %vm3946, %v4559, %v12283
        %v12492 = vsel %vm3946, %v4560, %v12285
        %v12493 = vsel %vm3946, %v4561, %v12287
        %v12494 = vsel %vm3946, %v4562, %v12289
        %v12495 = vsel %vm3946, %v4563, %v12291
        %v12496 = vsel %vm3946, %v4564, %v12293
        %v12497 = vsel %vm3946, %v4565, %v12295
        %v12498 = vsel %vm3946, %v4566, %v12297
        %v12499 = vsel %vm3946, %v4567, %v12299
        %v12500 = vsel %vm3946, %v4568, %v12301
        %v12501 = vsel %vm3946, %v4569, %v12303
        %v12502 = vsel %vm3946, %v4570, %v12305
        %v12503 = vsel %vm3946, %v4571, %v12307
        %v12504 = vsel %vm3946, %v4572, %v12309
        %v12505 = vsel %vm3946, %v4573, %v12311
        %v12506 = vsel %vm3946, %v4574, %v12313
        %v12507 = vsel %vm3946, %v4575, %v12315
        %v12508 = vsel %vm3995, %v12476, %v12381
        %v12509 = vsel %vm3995, %v12477, %v12383
        %v12510 = vsel %vm3995, %v12478, %v12385
        %v12511 = vsel %vm3995, %v12479, %v12387
        %v12512 = vsel %vm3995, %v12480, %v12389
        %v12513 = vsel %vm3995, %v12481, %v12391
        %v12514 = vsel %vm3995, %v12482, %v12393
        %v12515 = vsel %vm3995, %v12483, %v12395
        %v12516 = vsel %vm3995, %v12484, %v12397
        %v12517 = vsel %vm3995, %v12485, %v12399
        %v12518 = vsel %vm3995, %v12486, %v12401
        %v12519 = vsel %vm3995, %v12487, %v12403
        %v12520 = vsel %vm3995, %v12488, %v12405
        %v12521 = vsel %vm3995, %v12489, %v12407
        %v12522 = vsel %vm3995, %v12490, %v12409
        %v12523 = vsel %vm3995, %v12491, %v12411
        %v12524 = vsel %vm3995, %v12492, %v12413
        %v12525 = vsel %vm3995, %v12493, %v12415
        %v12526 = vsel %vm3995, %v12494, %v12417
        %v12527 = vsel %vm3995, %v12495, %v12419
        %v12528 = vsel %vm3995, %v12496, %v12421
        %v12529 = vsel %vm3995, %v12497, %v12423
        %v12530 = vsel %vm3995, %v12498, %v12425
        %v12531 = vsel %vm3995, %v12499, %v12427
        %v12532 = vsel %vm3995, %v12500, %v12429
        %v12533 = vsel %vm3995, %v12501, %v12431
        %v12534 = vsel %vm3995, %v12502, %v12433
        %v12535 = vsel %vm3995, %v12503, %v12435
        %v12536 = vsel %vm3995, %v12504, %v12437
        %v12537 = vsel %vm3995, %v12505, %v12439
        %v12538 = vsel %vm3995, %v12506, %v12441
        %v12539 = vsel %vm3995, %v12507, %v12443
        %v12540 = vsel %vm4028, %v12508, %v730
        %v12541 = vsel %vm4028, %v12509, %v731
        %v12542 = vsel %vm4028, %v12510, %v732
        %v12543 = vsel %vm4028, %v12511, %v733
        %v12544 = vsel %vm4028, %v12512, %v734
        %v12545 = vsel %vm4028, %v12513, %v735
        %v12546 = vsel %vm4028, %v12514, %v736
        %v12547 = vsel %vm4028, %v12515, %v737
        %v12548 = vsel %vm4028, %v12516, %v738
        %v12549 = vsel %vm4028, %v12517, %v739
        %v12550 = vsel %vm4028, %v12518, %v740
        %v12551 = vsel %vm4028, %v12519, %v741
        %v12552 = vsel %vm4028, %v12520, %v742
        %v12553 = vsel %vm4028, %v12521, %v743
        %v12554 = vsel %vm4028, %v12522, %v744
        %v12555 = vsel %vm4028, %v12523, %v745
        %v12556 = vsel %vm4028, %v12524, %v746
        %v12557 = vsel %vm4028, %v12525, %v747
        %v12558 = vsel %vm4028, %v12526, %v748
        %v12559 = vsel %vm4028, %v12527, %v749
        %v12560 = vsel %vm4028, %v12528, %v750
        %v12561 = vsel %vm4028, %v12529, %v751
        %v12562 = vsel %vm4028, %v12530, %v752
        %v12563 = vsel %vm4028, %v12531, %v753
        %v12564 = vsel %vm4028, %v12532, %v754
        %v12565 = vsel %vm4028, %v12533, %v755
        %v12566 = vsel %vm4028, %v12534, %v756
        %v12567 = vsel %vm4028, %v12535, %v757
        %v12568 = vsel %vm4028, %v12536, %v758
        %v12569 = vsel %vm4028, %v12537, %v759
        %v12570 = vsel %vm4028, %v12538, %v760
        %v12571 = vsel %vm4028, %v12539, %v761
        %v12572 = vpack.c.bf16 %v12541, %v12540
        %v12573 = vpack.c.bf16 %v12543, %v12542
        %v12574 = vpack.c.bf16 %v12545, %v12544
        %v12575 = vpack.c.bf16 %v12547, %v12546
        %v12576 = vpack.c.bf16 %v12549, %v12548
        %v12577 = vpack.c.bf16 %v12551, %v12550
        %v12578 = vpack.c.bf16 %v12553, %v12552
        %v12579 = vpack.c.bf16 %v12555, %v12554
        %v12580 = vpack.c.bf16 %v12557, %v12556
        %v12581 = vpack.c.bf16 %v12559, %v12558
        %v12582 = vpack.c.bf16 %v12561, %v12560
        %v12583 = vpack.c.bf16 %v12563, %v12562
        %v12584 = vpack.c.bf16 %v12565, %v12564
        %v12585 = vpack.c.bf16 %v12567, %v12566
        %v12586 = vpack.c.bf16 %v12569, %v12568
        %v12587 = vpack.c.bf16 %v12571, %v12570
        %v12588 = vld [vmem:[%s7] sm:$0xf]
        %v12589 = vld [vmem:[%s7 + $0x4] sm:$0xf]
        %v12590 = vld [vmem:[%s7 + $0x8] sm:$0xf]
        %v12591 = vld [vmem:[%s7 + $0xc] sm:$0xf]
        %v12592 = vld [vmem:[%s7 + $0x10] sm:$0xf]
        %v12593 = vld [vmem:[%s7 + $0x14] sm:$0xf]
        %v12594 = vld [vmem:[%s7 + $0x18] sm:$0xf]
        %v12595 = vld [vmem:[%s7 + $0x1c] sm:$0xf]
        %v12604 = vunpack.c.l.b16 %v12588
        %v12605 = vunpack.c.l.b16 %v12589
        %v12606 = vunpack.c.l.b16 %v12590
        %v12607 = vunpack.c.l.b16 %v12591
        %v12608 = vunpack.c.l.b16 %v12592
        %v12609 = vunpack.c.l.b16 %v12593
        %v12610 = vunpack.c.l.b16 %v12594
        %v12611 = vunpack.c.l.b16 %v12595
        %v12612 = vpack.c.b16 %v12605, %v12604
        %v12613 = vpack.c.b16 %v12607, %v12606
        %v12614 = vpack.c.b16 %v12609, %v12608
        %v12615 = vpack.c.b16 %v12611, %v12610
        %v12621 = vsel %vm4061, %v12572, 0
        %v12624 = vsel %vm4061, %v12573, 0
        %v12627 = vsel %vm4061, %v12574, 0
        %v12630 = vsel %vm4061, %v12575, 0
        %v12633 = vsel %vm4061, %v12576, 0
        %v12636 = vsel %vm4061, %v12577, 0
        %v12639 = vsel %vm4061, %v12578, 0
        %v12642 = vsel %vm4061, %v12579, 0
        %v12645 = vsel %vm4061, %v12580, 0
        %v12648 = vsel %vm4061, %v12581, 0
        %v12651 = vsel %vm4061, %v12582, 0
        %v12654 = vsel %vm4061, %v12583, 0
        %v12657 = vsel %vm4061, %v12584, 0
        %v12660 = vsel %vm4061, %v12585, 0
        %v12663 = vsel %vm4061, %v12586, 0
        %v12666 = vsel %vm4061, %v12587, 0
        %12668 = vmatprep.subr.bf16.mxu0 0
        %12669 = vmatpush1.bf16.msra.mxu0 %v12612
        %12670 = vmatprep.subr.bf16.mxu0 0
        %12671 = vmatpush1.bf16.msra.mxu0 %v12613
        %12672 = vmatprep.subr.bf16.mxu0 0
        %12673 = vmatpush1.bf16.msra.mxu0 %v12614
        %12674 = vmatprep.subr.bf16.mxu0 0
        %12675 = vmatpush1.bf16.msra.mxu0 %v12615
        %12676 = vmatprep.subr.bf16.mxu0 0
        %12677 = vmatpush1.bf16.msra.mxu0 0
        %12678 = vmatprep.subr.bf16.mxu0 0
        %12679 = vmatpush1.bf16.msra.mxu0 0
        %12680 = vmatprep.subr.bf16.mxu0 0
        %12681 = vmatpush1.bf16.msra.mxu0 0
        %12682 = vmatprep.subr.bf16.mxu0 0
        %12683 = vmatpush1.bf16.msra.mxu0 0
        %12684 = vmatprep.subr.bf16.mxu0 0
        %12685 = vmatpush1.bf16.msra.mxu0 0
        %12686 = vmatprep.subr.bf16.mxu0 0
        %12687 = vmatpush1.bf16.msra.mxu0 0
        %12688 = vmatprep.subr.bf16.mxu0 0
        %12689 = vmatpush1.bf16.msra.mxu0 0
        %12690 = vmatprep.subr.bf16.mxu0 0
        %12691 = vmatpush1.bf16.msra.mxu0 0
        %12692 = vmatprep.subr.bf16.mxu0 0
        %12693 = vmatpush1.bf16.msra.mxu0 0
        %12694 = vmatprep.subr.bf16.mxu0 0
        %12695 = vmatpush1.bf16.msra.mxu0 0
        %12696 = vmatprep.subr.bf16.mxu0 0
        %12697 = vmatpush1.bf16.msra.mxu0 0
        %12698 = vmatprep.subr.bf16.mxu0 0
        %12699 = vmatpush1.bf16.msra.mxu0 0
        %12700 = vmatprep.mubr.bf16.mxu0 0
        %12701 = vmatmul.mubr.bf16.gmra.mrb[0].mxu0 %v12621
        %v12702 = vpop.f32.mrb[0].mxu0
        %v12703 = vadd.f32 0.0, %v12702
        %v12704 = vpop.f32.mrb[0].mxu0
        %v12705 = vpop.f32.mrb[0].mxu0
        %v12706 = vadd.f32 0.0, %v12705
        %v12707 = vpop.f32.mrb[0].mxu0
        %12708 = vmatprep.mubr.bf16.mxu0 0
        %12709 = vmatmul.mubr.bf16.gmra.mrb[0].mxu0 %v12624
        %v12710 = vpop.f32.mrb[0].mxu0
        %v12711 = vadd.f32 0.0, %v12710
        %v12712 = vpop.f32.mrb[0].mxu0
        %v12713 = vpop.f32.mrb[0].mxu0
        %v12714 = vadd.f32 0.0, %v12713
        %v12715 = vpop.f32.mrb[0].mxu0
        %12716 = vmatprep.mubr.bf16.mxu0 0
        %12717 = vmatmul.mubr.bf16.gmra.mrb[0].mxu0 %v12627
        %v12718 = vpop.f32.mrb[0].mxu0
        %v12719 = vadd.f32 0.0, %v12718
        %v12720 = vpop.f32.mrb[0].mxu0
        %v12721 = vpop.f32.mrb[0].mxu0
        %v12722 = vadd.f32 0.0, %v12721
        %v12723 = vpop.f32.mrb[0].mxu0
        %12724 = vmatprep.mubr.bf16.mxu0 0
        %12725 = vmatmul.mubr.bf16.gmra.mrb[0].mxu0 %v12630
        %v12726 = vpop.f32.mrb[0].mxu0
        %v12727 = vadd.f32 0.0, %v12726
        %v12728 = vpop.f32.mrb[0].mxu0
        %v12729 = vpop.f32.mrb[0].mxu0
        %v12730 = vadd.f32 0.0, %v12729
        %v12731 = vpop.f32.mrb[0].mxu0
        %12732 = vmatprep.mubr.bf16.mxu0 0
        %12733 = vmatmul.mubr.bf16.gmra.mrb[0].mxu0 %v12633
        %v12734 = vpop.f32.mrb[0].mxu0
        %v12735 = vadd.f32 0.0, %v12734
        %v12736 = vpop.f32.mrb[0].mxu0
        %v12737 = vpop.f32.mrb[0].mxu0
        %v12738 = vadd.f32 0.0, %v12737
        %v12739 = vpop.f32.mrb[0].mxu0
        %12740 = vmatprep.mubr.bf16.mxu0 0
        %12741 = vmatmul.mubr.bf16.gmra.mrb[0].mxu0 %v12636
        %v12742 = vpop.f32.mrb[0].mxu0
        %v12743 = vadd.f32 0.0, %v12742
        %v12744 = vpop.f32.mrb[0].mxu0
        %v12745 = vpop.f32.mrb[0].mxu0
        %v12746 = vadd.f32 0.0, %v12745
        %v12747 = vpop.f32.mrb[0].mxu0
        %12748 = vmatprep.mubr.bf16.mxu0 0
        %12749 = vmatmul.mubr.bf16.gmra.mrb[0].mxu0 %v12639
        %v12750 = vpop.f32.mrb[0].mxu0
        %v12751 = vadd.f32 0.0, %v12750
        %v12752 = vpop.f32.mrb[0].mxu0
        %v12753 = vpop.f32.mrb[0].mxu0
        %v12754 = vadd.f32 0.0, %v12753
        %v12755 = vpop.f32.mrb[0].mxu0
        %12756 = vmatprep.mubr.bf16.mxu0 0
        %12757 = vmatmul.mubr.bf16.gmra.mrb[0].mxu0 %v12642
        %v12758 = vpop.f32.mrb[0].mxu0
        %v12759 = vadd.f32 0.0, %v12758
        %v12760 = vpop.f32.mrb[0].mxu0
        %v12761 = vpop.f32.mrb[0].mxu0
        %v12762 = vadd.f32 0.0, %v12761
        %v12763 = vpop.f32.mrb[0].mxu0
        %12764 = vmatprep.mubr.bf16.mxu0 0
        %12765 = vmatmul.mubr.bf16.gmra.mrb[0].mxu0 %v12645
        %v12766 = vpop.f32.mrb[0].mxu0
        %v12767 = vadd.f32 0.0, %v12766
        %v12768 = vpop.f32.mrb[0].mxu0
        %v12769 = vpop.f32.mrb[0].mxu0
        %v12770 = vadd.f32 0.0, %v12769
        %v12771 = vpop.f32.mrb[0].mxu0
        %12772 = vmatprep.mubr.bf16.mxu0 0
        %12773 = vmatmul.mubr.bf16.gmra.mrb[0].mxu0 %v12648
        %v12774 = vpop.f32.mrb[0].mxu0
        %v12775 = vadd.f32 0.0, %v12774
        %v12776 = vpop.f32.mrb[0].mxu0
        %v12777 = vpop.f32.mrb[0].mxu0
        %v12778 = vadd.f32 0.0, %v12777
        %v12779 = vpop.f32.mrb[0].mxu0
        %12780 = vmatprep.mubr.bf16.mxu0 0
        %12781 = vmatmul.mubr.bf16.gmra.mrb[0].mxu0 %v12651
        %v12782 = vpop.f32.mrb[0].mxu0
        %v12783 = vadd.f32 0.0, %v12782
        %v12784 = vpop.f32.mrb[0].mxu0
        %v12785 = vpop.f32.mrb[0].mxu0
        %v12786 = vadd.f32 0.0, %v12785
        %v12787 = vpop.f32.mrb[0].mxu0
        %12788 = vmatprep.mubr.bf16.mxu0 0
        %12789 = vmatmul.mubr.bf16.gmra.mrb[0].mxu0 %v12654
        %v12790 = vpop.f32.mrb[0].mxu0
        %v12791 = vadd.f32 0.0, %v12790
        %v12792 = vpop.f32.mrb[0].mxu0
        %v12793 = vpop.f32.mrb[0].mxu0
        %v12794 = vadd.f32 0.0, %v12793
        %v12795 = vpop.f32.mrb[0].mxu0
        %12796 = vmatprep.mubr.bf16.mxu0 0
        %12797 = vmatmul.mubr.bf16.gmra.mrb[0].mxu0 %v12657
        %v12798 = vpop.f32.mrb[0].mxu0
        %v12799 = vadd.f32 0.0, %v12798
        %v12800 = vpop.f32.mrb[0].mxu0
        %v12801 = vpop.f32.mrb[0].mxu0
        %v12802 = vadd.f32 0.0, %v12801
        %v12803 = vpop.f32.mrb[0].mxu0
        %12804 = vmatprep.mubr.bf16.mxu0 0
        %12805 = vmatmul.mubr.bf16.gmra.mrb[0].mxu0 %v12660
        %v12806 = vpop.f32.mrb[0].mxu0
        %v12807 = vadd.f32 0.0, %v12806
        %v12808 = vpop.f32.mrb[0].mxu0
        %v12809 = vpop.f32.mrb[0].mxu0
        %v12810 = vadd.f32 0.0, %v12809
        %v12811 = vpop.f32.mrb[0].mxu0
        %12812 = vmatprep.mubr.bf16.mxu0 0
        %12813 = vmatmul.mubr.bf16.gmra.mrb[0].mxu0 %v12663
        %v12814 = vpop.f32.mrb[0].mxu0
        %v12815 = vadd.f32 0.0, %v12814
        %v12816 = vpop.f32.mrb[0].mxu0
        %v12817 = vpop.f32.mrb[0].mxu0
        %v12818 = vadd.f32 0.0, %v12817
        %v12819 = vpop.f32.mrb[0].mxu0
        %12820 = vmatprep.mubr.bf16.mxu0 0
        %12821 = vmatmul.mubr.bf16.gmra.mrb[0].mxu0 %v12666
        %v12822 = vpop.f32.mrb[0].mxu0
        %v12823 = vadd.f32 0.0, %v12822
        %v12824 = vpop.f32.mrb[0].mxu0
        %v12825 = vpop.f32.mrb[0].mxu0
        %v12826 = vadd.f32 0.0, %v12825
        %v12827 = vpop.f32.mrb[0].mxu0
        %12828 = vdwg.mxu0
        %v12829 = vld [vmem:[%s8] sm:$0x1]
        %v12831 = vlaneseq
        %v12832 = vshrl.u32 %v12831, 7
        %v12833 = vsub.s32 0, %v12832
        %v12834 = vrot.slane %v12829, %v12833
        %v12836 = vmul.f32 %v12703, %v12834
        %v12837 = vmul.f32 %v12706, %v12834
        %v12838 = vmul.f32 %v12711, %v12834
        %v12839 = vmul.f32 %v12714, %v12834
        %v12840 = vmul.f32 %v12719, %v12834
        %v12841 = vmul.f32 %v12722, %v12834
        %v12842 = vmul.f32 %v12727, %v12834
        %v12843 = vmul.f32 %v12730, %v12834
        %v12844 = vmul.f32 %v12735, %v12834
        %v12845 = vmul.f32 %v12738, %v12834
        %v12846 = vmul.f32 %v12743, %v12834
        %v12847 = vmul.f32 %v12746, %v12834
        %v12848 = vmul.f32 %v12751, %v12834
        %v12849 = vmul.f32 %v12754, %v12834
        %v12850 = vmul.f32 %v12759, %v12834
        %v12851 = vmul.f32 %v12762, %v12834
        %v12852 = vmul.f32 %v12767, %v12834
        %v12853 = vmul.f32 %v12770, %v12834
        %v12854 = vmul.f32 %v12775, %v12834
        %v12855 = vmul.f32 %v12778, %v12834
        %v12856 = vmul.f32 %v12783, %v12834
        %v12857 = vmul.f32 %v12786, %v12834
        %v12858 = vmul.f32 %v12791, %v12834
        %v12859 = vmul.f32 %v12794, %v12834
        %v12860 = vmul.f32 %v12799, %v12834
        %v12861 = vmul.f32 %v12802, %v12834
        %v12862 = vmul.f32 %v12807, %v12834
        %v12863 = vmul.f32 %v12810, %v12834
        %v12864 = vmul.f32 %v12815, %v12834
        %v12865 = vmul.f32 %v12818, %v12834
        %v12866 = vmul.f32 %v12823, %v12834
        %v12867 = vmul.f32 %v12826, %v12834
        %v12868 = vld [vmem:[%s9] sm:$0x1]
        %v12870 = vlaneseq
        %v12871 = vshrl.u32 %v12870, 7
        %v12872 = vsub.s32 0, %v12871
        %v12873 = vrot.slane %v12868, %v12872
        %v12875 = vadd.f32 %v12836, %v12873
        %v12876 = vadd.f32 %v12837, %v12873
        %v12877 = vadd.f32 %v12838, %v12873
        %v12878 = vadd.f32 %v12839, %v12873
        %v12879 = vadd.f32 %v12840, %v12873
        %v12880 = vadd.f32 %v12841, %v12873
        %v12881 = vadd.f32 %v12842, %v12873
        %v12882 = vadd.f32 %v12843, %v12873
        %v12883 = vadd.f32 %v12844, %v12873
        %v12884 = vadd.f32 %v12845, %v12873
        %v12885 = vadd.f32 %v12846, %v12873
        %v12886 = vadd.f32 %v12847, %v12873
        %v12887 = vadd.f32 %v12848, %v12873
        %v12888 = vadd.f32 %v12849, %v12873
        %v12889 = vadd.f32 %v12850, %v12873
        %v12890 = vadd.f32 %v12851, %v12873
        %v12891 = vadd.f32 %v12852, %v12873
        %v12892 = vadd.f32 %v12853, %v12873
        %v12893 = vadd.f32 %v12854, %v12873
        %v12894 = vadd.f32 %v12855, %v12873
        %v12895 = vadd.f32 %v12856, %v12873
        %v12896 = vadd.f32 %v12857, %v12873
        %v12897 = vadd.f32 %v12858, %v12873
        %v12898 = vadd.f32 %v12859, %v12873
        %v12899 = vadd.f32 %v12860, %v12873
        %v12900 = vadd.f32 %v12861, %v12873
        %v12901 = vadd.f32 %v12862, %v12873
        %v12902 = vadd.f32 %v12863, %v12873
        %v12903 = vadd.f32 %v12864, %v12873
        %v12904 = vadd.f32 %v12865, %v12873
        %v12905 = vadd.f32 %v12866, %v12873
        %v12906 = vadd.f32 %v12867, %v12873
        %v12907 = vadd.f32 %v12875, %v379
        %v12908 = vadd.f32 %v12876, %v380
        %v12909 = vadd.f32 %v12877, %v381
        %v12910 = vadd.f32 %v12878, %v382
        %v12911 = vadd.f32 %v12879, %v383
        %v12912 = vadd.f32 %v12880, %v384
        %v12913 = vadd.f32 %v12881, %v385
        %v12914 = vadd.f32 %v12882, %v386
        %v12915 = vadd.f32 %v12883, %v387
        %v12916 = vadd.f32 %v12884, %v388
        %v12917 = vadd.f32 %v12885, %v389
        %v12918 = vadd.f32 %v12886, %v390
        %v12919 = vadd.f32 %v12887, %v391
        %v12920 = vadd.f32 %v12888, %v392
        %v12921 = vadd.f32 %v12889, %v393
        %v12922 = vadd.f32 %v12890, %v394
        %v12923 = vadd.f32 %v12891, %v395
        %v12924 = vadd.f32 %v12892, %v396
        %v12925 = vadd.f32 %v12893, %v397
        %v12926 = vadd.f32 %v12894, %v398
        %v12927 = vadd.f32 %v12895, %v399
        %v12928 = vadd.f32 %v12896, %v400
        %v12929 = vadd.f32 %v12897, %v401
        %v12930 = vadd.f32 %v12898, %v402
        %v12931 = vadd.f32 %v12899, %v403
        %v12932 = vadd.f32 %v12900, %v404
        %v12933 = vadd.f32 %v12901, %v405
        %v12934 = vadd.f32 %v12902, %v406
        %v12935 = vadd.f32 %v12903, %v407
        %v12936 = vadd.f32 %v12904, %v408
        %v12937 = vadd.f32 %v12905, %v409
        %v12938 = vadd.f32 %v12906, %v410
        %v12939 = vmax.f32 %v12907, 0.0
        %v12940 = vmax.f32 %v12908, 0.0
        %v12941 = vmax.f32 %v12909, 0.0
        %v12942 = vmax.f32 %v12910, 0.0
        %v12943 = vmax.f32 %v12911, 0.0
        %v12944 = vmax.f32 %v12912, 0.0
        %v12945 = vmax.f32 %v12913, 0.0
        %v12946 = vmax.f32 %v12914, 0.0
        %v12947 = vmax.f32 %v12915, 0.0
        %v12948 = vmax.f32 %v12916, 0.0
        %v12949 = vmax.f32 %v12917, 0.0
        %v12950 = vmax.f32 %v12918, 0.0
        %v12951 = vmax.f32 %v12919, 0.0
        %v12952 = vmax.f32 %v12920, 0.0
        %v12953 = vmax.f32 %v12921, 0.0
        %v12954 = vmax.f32 %v12922, 0.0
        %v12955 = vmax.f32 %v12923, 0.0
        %v12956 = vmax.f32 %v12924, 0.0
        %v12957 = vmax.f32 %v12925, 0.0
        %v12958 = vmax.f32 %v12926, 0.0
        %v12959 = vmax.f32 %v12927, 0.0
        %v12960 = vmax.f32 %v12928, 0.0
        %v12961 = vmax.f32 %v12929, 0.0
        %v12962 = vmax.f32 %v12930, 0.0
        %v12963 = vmax.f32 %v12931, 0.0
        %v12964 = vmax.f32 %v12932, 0.0
        %v12965 = vmax.f32 %v12933, 0.0
        %v12966 = vmax.f32 %v12934, 0.0
        %v12967 = vmax.f32 %v12935, 0.0
        %v12968 = vmax.f32 %v12936, 0.0
        %v12969 = vmax.f32 %v12937, 0.0
        %v12970 = vmax.f32 %v12938, 0.0
        %12971 = vst [vmem:[%s377] sm:$0xff] %v12939
        %12972 = vst [vmem:[%s377 + $0x8] sm:$0xff] %v12940
        %12973 = vst [vmem:[%s377 + $0x10] sm:$0xff] %v12941
        %12974 = vst [vmem:[%s377 + $0x18] sm:$0xff] %v12942
        %12975 = vst [vmem:[%s377 + $0x20] sm:$0xff] %v12943
        %12976 = vst [vmem:[%s377 + $0x28] sm:$0xff] %v12944
        %12977 = vst [vmem:[%s377 + $0x30] sm:$0xff] %v12945
        %12978 = vst [vmem:[%s377 + $0x38] sm:$0xff] %v12946
        %12979 = vst [vmem:[%s377 + $0x40] sm:$0xff] %v12947
        %12980 = vst [vmem:[%s377 + $0x48] sm:$0xff] %v12948
        %12981 = vst [vmem:[%s377 + $0x50] sm:$0xff] %v12949
        %12982 = vst [vmem:[%s377 + $0x58] sm:$0xff] %v12950
        %12983 = vst [vmem:[%s377 + $0x60] sm:$0xff] %v12951
        %12984 = vst [vmem:[%s377 + $0x68] sm:$0xff] %v12952
        %12985 = vst [vmem:[%s377 + $0x70] sm:$0xff] %v12953
        %12986 = vst [vmem:[%s377 + $0x78] sm:$0xff] %v12954
        %12987 = vst [vmem:[%s377 + $0x80] sm:$0xff] %v12955
        %12988 = vst [vmem:[%s377 + $0x88] sm:$0xff] %v12956
        %12989 = vst [vmem:[%s377 + $0x90] sm:$0xff] %v12957
        %12990 = vst [vmem:[%s377 + $0x98] sm:$0xff] %v12958
        %12991 = vst [vmem:[%s377 + $0xa0] sm:$0xff] %v12959
        %12992 = vst [vmem:[%s377 + $0xa8] sm:$0xff] %v12960
        %12993 = vst [vmem:[%s377 + $0xb0] sm:$0xff] %v12961
        %12994 = vst [vmem:[%s377 + $0xb8] sm:$0xff] %v12962
        %12995 = vst [vmem:[%s377 + $0xc0] sm:$0xff] %v12963
        %12996 = vst [vmem:[%s377 + $0xc8] sm:$0xff] %v12964
        %12997 = vst [vmem:[%s377 + $0xd0] sm:$0xff] %v12965
        %12998 = vst [vmem:[%s377 + $0xd8] sm:$0xff] %v12966
        %12999 = vst [vmem:[%s377 + $0xe0] sm:$0xff] %v12967
        %13000 = vst [vmem:[%s377 + $0xe8] sm:$0xff] %v12968
        %13001 = vst [vmem:[%s377 + $0xf0] sm:$0xff] %v12969
        %13002 = vst [vmem:[%s377 + $0xf8] sm:$0xff] %v12970
        %s13003 = sand.u32 %s250, 1
        %s13004 = scalar_lea.sflag [#allocation5], %s13003
        %s13005 = sand.u32 %s250, 1
        %s13006 = smul.addr %s13005, 256
        %s13007 = scalar_lea.vmem [#allocation6], %s13006
        // Predicated region
        $region65: #{tpu_custom_call.1} parent=59 // pred_check
          %p13008 = pneg %p260
        $region66: #{tpu_custom_call.1} parent=59 // pred_check_branch
          %13010 = sbr.rel (%p13008) target = $region68
        $region67: #{tpu_custom_call.1} parent=59 // pred_region
          %s13012 = ssub.s32 4096, 4096
          %13013 = vsyncadd %s13004, %s13012
          %s13014 = smul.addr %s27, 32
          %s13015 = smul.addr %s13014, 128
          %s13016 = scalar_lea.hbm %s10, %s13015
          %s13017 = sshll.u32 %s13007, 4
          %s13018 = int_to_ptr.vmem [resolvable:$true] %s13017
          %13023 = dma.vmem_to_hbm [thread:$0]  %s13018, 4096, %s13016, %s13004, 128, 128, 8
        $region68: #{tpu_custom_call.1} parent=59 // pred_fallthru
          _
      $region60: #{tpu_custom_call.1} parent=5 // pred_fallthru
        _
      %p13024 = scmp.le.s32.totalorder 2, %s22
      // Predicated region
      $region69: #{tpu_custom_call.1} parent=5 // pred_check
        %p13025 = pneg %p13024
      $region70: #{tpu_custom_call.1} parent=5 // pred_check_branch
        %13027 = sbr.rel (%p13025) target = $region72
      $region71: #{tpu_custom_call.1} parent=5 // pred_region
        %s13028 = ssub.s32 %s22, 2
        // Predicated region
        $region73: #{tpu_custom_call.1} parent=71 // pred_check
          %p13029 = pneg %p266
        $region74: #{tpu_custom_call.1} parent=71 // pred_check_branch
          %13031 = sbr.rel (%p13029) target = $region76
        $region75: #{tpu_custom_call.1} parent=71 // pred_region
          %s13032 = sand.u32 %s251, 1
          %s13033 = scalar_lea.sflag [#allocation5], %s13032
          %s13034 = sand.u32 %s251, 1
          %s13035 = smul.addr %s13034, 256
          %s13036 = scalar_lea.vmem [#allocation6], %s13035
          %13037 = dma.done %s13033, 4096
        $region76: #{tpu_custom_call.1} parent=71 // pred_fallthru
          _
      $region72: #{tpu_custom_call.1} parent=5 // pred_fallthru
        _
    $region6: #{tpu_custom_call.1} parent=1 // loop_footer
      %s26 = sadd.s32 1, %s22
    $region7: #{tpu_custom_call.1} parent=1 // loop_footer_branch
      %21 = sbr.rel target = $region3
    $region8: #{tpu_custom_call.1} parent=1 // loop_exit
      _
    %13038 = vsyncpa [#allocation4], 1
    %s13039 = scalar_lea.sflag [#allocation4], 1
    %13040 = vsyncpa %s13039, 1
    %13041 = vsyncpa [#allocation5], 1
    %s13042 = scalar_lea.sflag [#allocation5], 1
    %13043 = vsyncpa %s13042, 1

</llo_original>
